<compile_context>
chip_gen: v5e
topology: v5e:2x2
jax: 0.10.0
libtpu: 0.0.40
codegen_flags: <defaults>
</compile_context>

<pallas_src>
import jax
import jax.numpy as jnp
from jax.experimental import pallas as pl
from jax.experimental.pallas import tpu as pltpu


# ----------------------------------------------------------------------------
# The fused kernel: one grid step == one image, everything stays in VMEM.
# ----------------------------------------------------------------------------
def _autoencoder_kernel(p1_ref, masks_ref,
                        w1_ref, b1_ref, w2_ref, b2_ref, w3_ref, b3_ref,
                        w4_ref, b4_ref, w5_ref, b5_ref, w6_ref, b6_ref,
                        w7_ref, b7_ref,
                        out_ref,
                        h1_ref, h2_ref, d1_ref, h6_ref):
    f32 = jnp.float32
    bf16 = jnp.bfloat16

    def dot(a, b):                                   # bf16 x bf16 -> f32 (MXU)
        return jnp.dot(a, b, preferred_element_type=f32)

    def relu(x):
        return jnp.maximum(x, 0.0)

    def lrelu(x):                                    # PyTorch LeakyReLU (0.01)
        return jnp.where(x >= 0.0, x, 0.01 * x)

    # Boundary masks over a flattened 7x7 block (precomputed, bf16, [1, 49]).
    mask_v0 = masks_ref[0:1, :]      # 0 where col == 0  (left  edge)
    mask_u0 = masks_ref[1:2, :]      # 0 where row == 0  (top   edge)
    mask_v6 = masks_ref[2:3, :]      # 0 where col == 6  (right edge)

    # -------- encoder conv1: 3x3 s2 p1, Cin -> 16, 28x28 -> 14x14 ------------
    # p1 is the patch matrix of the raw input, [9*Cin, 196]; its 196 output
    # columns are grouped by the (row, col) parity phase of the 14x14 output so
    # that conv2's stride-2 access below is contiguous.
    h1 = relu(dot(w1_ref[...], p1_ref[0]) + b1_ref[...])       # [16, 196] f32
    h1_ref[:, 0:8] = jnp.zeros((16, 8), bf16)                  # shared zero pad
    h1_ref[:, 8:204] = h1.astype(bf16)

    # -------- encoder conv2: 3x3 s2 p1, 16 -> 32, 14x14 -> 7x7 ---------------
    # Phase trick: tap (ky,kx) of a stride-2 conv reads exactly one parity
    # phase of h1, shifted by (di,dj) in {-1,0}; each tap is one contiguous
    # 49-lane slice plus boundary masks.
    acc2 = jnp.zeros((32, 49), f32)
    for ky in range(3):
        a, di = (0, 0) if ky == 1 else (1, -1 if ky == 0 else 0)
        for kx in range(3):
            b, dj = (0, 0) if kx == 1 else (1, -1 if kx == 0 else 0)
            start = 8 + (a * 2 + b) * 49 + di * 7 + dj
            x = h1_ref[:, start:start + 49]                    # [16, 49] bf16
            if di == -1:
                x = x * mask_u0
            if dj == -1:
                x = x * mask_v0
            acc2 = acc2 + dot(w2_ref[ky * 3 + kx], x)          # [32,16]@[16,49]
    h2_ref[...] = relu(acc2 + b2_ref[...]).astype(bf16)        # [32, 49]

    # -------- encoder conv3: 7x7 valid, 32 -> 64, 7x7 -> 1x1, LeakyReLU ------
    acc3 = jnp.zeros((1, 64), f32)
    for ci in range(32):
        acc3 = acc3 + dot(h2_ref[ci:ci + 1, :], w3_ref[ci])    # [1,49]@[49,64]
    h3 = lrelu(acc3 + b3_ref[...]).astype(bf16)                # [1, 64]

    # -------- bottleneck 1x1 conv, 64 -> 64, ReLU ----------------------------
    h4 = relu(dot(h3, w4_ref[...]) + b4_ref[...]).astype(bf16)  # [1, 64]

    # -------- decoder Tconv1: 7x7, 1x1 -> 7x7, 64 -> 32, ReLU ----------------
    for co in range(32):
        row = relu(dot(h4, w5_ref[co]) + b5_ref[co:co + 1, :])  # [1, 49]
        d1_ref[co:co + 1, 0:49] = row.astype(bf16)
    d1_ref[:, 49:64] = jnp.zeros((32, 15), bf16)                # bottom zero pad

    # -------- decoder Tconv2: 3x3 s2 p1 op1, 32 -> 16, 7x7 -> 14x14 ----------
    # Sub-pixel decomposition: the 14x14 output splits into 4 parity phases,
    # each a sum of 1/2/2/4 shifted 1x1 convs of the 7x7 input (9 taps total).
    x00 = d1_ref[:, 0:49]
    x01 = d1_ref[:, 1:50] * mask_v6
    x10 = d1_ref[:, 7:56]
    x11 = d1_ref[:, 8:57] * mask_v6

    def t6(ky, kx):
        return w6_ref[ky * 3 + kx]                              # [16, 32]

    b6 = b6_ref[...]
    p00 = relu(dot(t6(1, 1), x00) + b6)
    p01 = relu(dot(t6(1, 0), x01) + dot(t6(1, 2), x00) + b6)
    p10 = relu(dot(t6(0, 1), x10) + dot(t6(2, 1), x00) + b6)
    p11 = relu(dot(t6(0, 0), x11) + dot(t6(0, 2), x10)
               + dot(t6(2, 0), x01) + dot(t6(2, 2), x00) + b6)
    for idx, pgrid in enumerate((p00, p01, p10, p11)):
        h6_ref[idx, :, 0:49] = pgrid.astype(bf16)
        h6_ref[idx, :, 49:64] = jnp.zeros((16, 15), bf16)

    # -------- decoder Tconv3: 3x3 s2 p1 op1, 16 -> C, 14x14 -> 28x28 ---------
    # Same sub-pixel decomposition; combined with the phase-stored input this
    # yields the 28x28 LeakyReLU output as 16 mod-4 phase grids of 7x7.
    def t7(ky, kx):
        return w7_ref[ky * 3 + kx]                              # [C_out, 16]

    b7 = b7_ref[...]
    for A in range(2):
        for B in range(2):
            z00 = h6_ref[A * 2 + B, :, 0:49]
            if B == 0:
                z01 = h6_ref[A * 2 + 1, :, 0:49]
            else:
                z01 = h6_ref[A * 2, :, 1:50] * mask_v6
            if A == 0:
                z10 = h6_ref[2 + B, :, 0:49]
            else:
                z10 = h6_ref[B, :, 7:56]
            if A == 0 and B == 0:
                z11 = h6_ref[3, :, 0:49]
            elif A == 0 and B == 1:
                z11 = h6_ref[2, :, 1:50] * mask_v6
            elif A == 1 and B == 0:
                z11 = h6_ref[1, :, 7:56]
            else:
                z11 = h6_ref[0, :, 8:57] * mask_v6

            o00 = dot(t7(1, 1), z00)
            o01 = dot(t7(1, 0), z01) + dot(t7(1, 2), z00)
            o10 = dot(t7(0, 1), z10) + dot(t7(2, 1), z00)
            o11 = (dot(t7(0, 0), z11) + dot(t7(0, 2), z10)
                   + dot(t7(2, 0), z01) + dot(t7(2, 2), z00))
            for C in range(2):
                for D in range(2):
                    o = (o00, o01, o10, o11)[C * 2 + D]
                    phase = (2 * A + C) * 4 + (2 * B + D)
                    out_ref[0, phase, :, :] = lrelu(o + b7)


# ----------------------------------------------------------------------------
# Plain-JAX glue on the kernel's HBM ends (tiny, one shot).
# ----------------------------------------------------------------------------
def _build_patches(x):
    """im2col of the raw input for conv1, with the 196 output columns reordered
    into (row-parity, col-parity, 7, 7) phase order."""
    n, c, _, _ = x.shape
    xp = jnp.pad(x, ((0, 0), (0, 0), (1, 1), (1, 1)))
    taps = []
    for ky in range(3):
        for kx in range(3):
            for ci in range(c):
                taps.append(xp[:, ci, ky:ky + 28:2, kx:kx + 28:2])
    p = jnp.stack(taps, axis=1)                       # [N, 9c, 14, 14]
    p = p.reshape(n, 9 * c, 7, 2, 7, 2)               # (u, a, v, b)
    p = p.transpose(0, 1, 3, 5, 2, 4)                 # (a, b, u, v)
    return p.reshape(n, 9 * c, 196).astype(jnp.bfloat16)


def _assemble_output(o, c):
    """Interleave the 16 mod-4 phase grids back into NCHW [N, C, 28, 28]."""
    n = o.shape[0]
    o = o.reshape(n, 4, 4, c, 7, 7)                   # (py, px, c, m, n)
    o = o.transpose(0, 3, 4, 1, 5, 2)                 # (c, m, py, n, px)
    return o.reshape(n, c, 28, 28)


def _lane_masks():
    lane = jnp.arange(49)
    v, u = lane % 7, lane // 7
    return jnp.stack([(v != 0), (u != 0), (v != 6)]).astype(jnp.bfloat16)


# ----------------------------------------------------------------------------
# Parameters: deterministic init in PyTorch layouts + one-time packing.
# ----------------------------------------------------------------------------
def init_params(key, channels=1, frame_stacks=1):
    c = channels * frame_stacks
    specs = [
        ("enc1_w", (16, c, 3, 3)), ("enc1_b", (16,)),
        ("enc2_w", (32, 16, 3, 3)), ("enc2_b", (32,)),
        ("enc3_w", (64, 32, 7, 7)), ("enc3_b", (64,)),
        ("bot_w", (64, 64, 1, 1)), ("bot_b", (64,)),
        ("dec1_w", (64, 32, 7, 7)), ("dec1_b", (32,)),  # ConvTranspose: [Cin,Cout,kh,kw]
        ("dec2_w", (32, 16, 3, 3)), ("dec2_b", (16,)),
        ("dec3_w", (16, c, 3, 3)), ("dec3_b", (c,)),
    ]
    keys = jax.random.split(key, len(specs))
    return {name: jax.random.normal(k, shape, jnp.float32) * 0.05
            for (name, shape), k in zip(specs, keys)}


def pack_params(raw, channels=1, frame_stacks=1):
    """One-time repack into the matmul layouts the fused kernel consumes
    (bf16 weights, f32 biases) -- removed from the per-forward graph."""
    c = channels * frame_stacks
    bf, f32 = jnp.bfloat16, jnp.float32
    return {
        "w1": raw["enc1_w"].transpose(0, 2, 3, 1).reshape(16, 9 * c).astype(bf),
        "b1": raw["enc1_b"].reshape(16, 1).astype(f32),
        "w2": raw["enc2_w"].transpose(2, 3, 0, 1).reshape(9, 32, 16).astype(bf),
        "b2": raw["enc2_b"].reshape(32, 1).astype(f32),
        "w3": raw["enc3_w"].transpose(1, 2, 3, 0).reshape(32, 49, 64).astype(bf),
        "b3": raw["enc3_b"].reshape(1, 64).astype(f32),
        "w4": raw["bot_w"][:, :, 0, 0].T.astype(bf),
        "b4": raw["bot_b"].reshape(1, 64).astype(f32),
        "w5": raw["dec1_w"].transpose(1, 0, 2, 3).reshape(32, 64, 49).astype(bf),
        "b5": raw["dec1_b"].reshape(32, 1).astype(f32),
        "w6": raw["dec2_w"].transpose(2, 3, 1, 0).reshape(9, 16, 32).astype(bf),
        "b6": raw["dec2_b"].reshape(16, 1).astype(f32),
        "w7": raw["dec3_w"].transpose(2, 3, 1, 0).reshape(9, c, 16).astype(bf),
        "b7": raw["dec3_b"].reshape(c, 1).astype(f32),
    }


# ----------------------------------------------------------------------------
# Forward pass: single fused pallas_call, batch-parallel grid.
# ----------------------------------------------------------------------------
def context_autoencoder(params, x):
    n, c, h, w = x.shape
    assert (h, w) == (28, 28), "ContextAutoencoder is built for 28x28 inputs"
    kc = 9 * c
    p1 = _build_patches(x)
    masks = _lane_masks()

    def full(*shape):
        return pl.BlockSpec(shape, lambda i, _s=len(shape): (0,) * _s)

    out = pl.pallas_call(
        _autoencoder_kernel,
        out_shape=jax.ShapeDtypeStruct((n, 16, c, 49), jnp.float32),
        grid=(n,),
        in_specs=[
            pl.BlockSpec((1, kc, 196), lambda i: (i, 0, 0)),
            full(3, 49),
            full(16, kc), full(16, 1),
            full(9, 32, 16), full(32, 1),
            full(32, 49, 64), full(1, 64),
            full(64, 64), full(1, 64),
            full(32, 64, 49), full(32, 1),
            full(9, 16, 32), full(16, 1),
            full(9, c, 16), full(c, 1),
        ],
        out_specs=pl.BlockSpec((1, 16, c, 49), lambda i: (i, 0, 0, 0)),
        scratch_shapes=[
            pltpu.VMEM((16, 204), jnp.bfloat16),    # conv1 output (phase blocks)
            pltpu.VMEM((32, 49), jnp.bfloat16),     # conv2 output
            pltpu.VMEM((32, 64), jnp.bfloat16),     # Tconv1 output (+ zero pad)
            pltpu.VMEM((4, 16, 64), jnp.bfloat16),  # Tconv2 output phases
        ],
        compiler_params=pltpu.CompilerParams(
            dimension_semantics=("parallel",)),
    )(p1, masks,
      params["w1"], params["b1"], params["w2"], params["b2"],
      params["w3"], params["b3"], params["w4"], params["b4"],
      params["w5"], params["b5"], params["w6"], params["b6"],
      params["w7"], params["b7"])
    return _assemble_output(out, c)


if __name__ == "__main__":
    key = jax.random.PRNGKey(0)
    kp, kx = jax.random.split(key)
    raw = init_params(kp, channels=1, frame_stacks=1)
    params = pack_params(raw, channels=1, frame_stacks=1)

    # 28x28 input: 28 -> 14 -> 7 -> 1 (encoder) -> 1 -> 7 -> 14 -> 28 (decoder)
    x = jax.random.normal(kx, (2, 1, 28, 28), jnp.float32)

    fwd = jax.jit(context_autoencoder)
    y = fwd(params, x)
    jax.block_until_ready(y)

    assert y.shape == (2, 1, 28, 28), y.shape
    assert y.dtype == jnp.float32
    print("KERNEL_OK")
</pallas_src>

<mosaic_0001>
module attributes {stable_mosaic.version = 11 : i64} {
  func.func @_autoencoder_kernel(%arg0: i32, %arg1: memref<1x9x196xbf16, #tpu.memory_space<vmem>>, %arg2: memref<3x49xbf16, #tpu.memory_space<vmem>>, %arg3: memref<16x9xbf16, #tpu.memory_space<vmem>>, %arg4: memref<16x1xf32, #tpu.memory_space<vmem>>, %arg5: memref<9x32x16xbf16, #tpu.memory_space<vmem>>, %arg6: memref<32x1xf32, #tpu.memory_space<vmem>>, %arg7: memref<32x49x64xbf16, #tpu.memory_space<vmem>>, %arg8: memref<1x64xf32, #tpu.memory_space<vmem>>, %arg9: memref<64x64xbf16, #tpu.memory_space<vmem>>, %arg10: memref<1x64xf32, #tpu.memory_space<vmem>>, %arg11: memref<32x64x49xbf16, #tpu.memory_space<vmem>>, %arg12: memref<32x1xf32, #tpu.memory_space<vmem>>, %arg13: memref<9x16x32xbf16, #tpu.memory_space<vmem>>, %arg14: memref<16x1xf32, #tpu.memory_space<vmem>>, %arg15: memref<9x1x16xbf16, #tpu.memory_space<vmem>>, %arg16: memref<1x1xf32, #tpu.memory_space<vmem>>, %arg17: memref<1x16x1x49xf32, #tpu.memory_space<vmem>>, %arg18: memref<16x204xbf16, #tpu.memory_space<vmem>>, %arg19: memref<32x49xbf16, #tpu.memory_space<vmem>>, %arg20: memref<32x64xbf16, #tpu.memory_space<vmem>>, %arg21: memref<4x16x64xbf16, #tpu.memory_space<vmem>>) attributes {dimension_semantics = [#tpu.dimension_semantics<parallel>], iteration_bounds = array<i64: 2>, scalar_prefetch = 0 : i64, scratch_operands = 4 : i64, tpu.core_type = #tpu.core_type<tc>, window_params = [{transform_indices = @transform_0, window_bounds = array<i64: 1, 9, 196>}, {pipeline_mode = #tpu.pipeline_mode<synchronous>, transform_indices = @transform_1, window_bounds = array<i64: 3, 49>}, {pipeline_mode = #tpu.pipeline_mode<synchronous>, transform_indices = @transform_2, window_bounds = array<i64: 16, 9>}, {pipeline_mode = #tpu.pipeline_mode<synchronous>, transform_indices = @transform_3, window_bounds = array<i64: 16, 1>}, {pipeline_mode = #tpu.pipeline_mode<synchronous>, transform_indices = @transform_4, window_bounds = array<i64: 9, 32, 16>}, {pipeline_mode = #tpu.pipeline_mode<synchronous>, transform_indices = @transform_5, window_bounds = array<i64: 32, 1>}, {pipeline_mode = #tpu.pipeline_mode<synchronous>, transform_indices = @transform_6, window_bounds = array<i64: 32, 49, 64>}, {pipeline_mode = #tpu.pipeline_mode<synchronous>, transform_indices = @transform_7, window_bounds = array<i64: 1, 64>}, {pipeline_mode = #tpu.pipeline_mode<synchronous>, transform_indices = @transform_8, window_bounds = array<i64: 64, 64>}, {pipeline_mode = #tpu.pipeline_mode<synchronous>, transform_indices = @transform_9, window_bounds = array<i64: 1, 64>}, {pipeline_mode = #tpu.pipeline_mode<synchronous>, transform_indices = @transform_10, window_bounds = array<i64: 32, 64, 49>}, {pipeline_mode = #tpu.pipeline_mode<synchronous>, transform_indices = @transform_11, window_bounds = array<i64: 32, 1>}, {pipeline_mode = #tpu.pipeline_mode<synchronous>, transform_indices = @transform_12, window_bounds = array<i64: 9, 16, 32>}, {pipeline_mode = #tpu.pipeline_mode<synchronous>, transform_indices = @transform_13, window_bounds = array<i64: 16, 1>}, {pipeline_mode = #tpu.pipeline_mode<synchronous>, transform_indices = @transform_14, window_bounds = array<i64: 9, 1, 16>}, {pipeline_mode = #tpu.pipeline_mode<synchronous>, transform_indices = @transform_15, window_bounds = array<i64: 1, 1>}, {transform_indices = @transform_16, window_bounds = array<i64: 1, 16, 1, 49>}]} {
    %c0 = arith.constant 0 : index
    %c0_0 = arith.constant 0 : index
    %0 = vector.load %arg2[%c0, %c0_0] : memref<3x49xbf16, #tpu.memory_space<vmem>>, vector<1x49xbf16>
    %c1 = arith.constant 1 : index
    %c0_1 = arith.constant 0 : index
    %1 = vector.load %arg2[%c1, %c0_1] : memref<3x49xbf16, #tpu.memory_space<vmem>>, vector<1x49xbf16>
    %c2 = arith.constant 2 : index
    %c0_2 = arith.constant 0 : index
    %2 = vector.load %arg2[%c2, %c0_2] : memref<3x49xbf16, #tpu.memory_space<vmem>>, vector<1x49xbf16>
    %c0_3 = arith.constant 0 : index
    %c0_4 = arith.constant 0 : index
    %3 = vector.load %arg3[%c0_3, %c0_4] : memref<16x9xbf16, #tpu.memory_space<vmem>>, vector<16x9xbf16>
    %c0_5 = arith.constant 0 : index
    %c0_6 = arith.constant 0 : index
    %c0_7 = arith.constant 0 : index
    %4 = vector.load %arg1[%c0_5, %c0_6, %c0_7] : memref<1x9x196xbf16, #tpu.memory_space<vmem>>, vector<1x9x196xbf16>
    %5 = vector.shape_cast %4 : vector<1x9x196xbf16> to vector<9x196xbf16>
    %cst = arith.constant dense<0.000000e+00> : vector<16x196xf32>
    %6 = tpu.matmul %3, %5, %cst {dimension_numbers = #tpu.dot_dimension_numbers<[1], [0], [0], [1], [0, 0, 1, 1], [], []>} : vector<16x9xbf16>, vector<9x196xbf16>, vector<16x196xf32> -> vector<16x196xf32>
    %c0_8 = arith.constant 0 : index
    %c0_9 = arith.constant 0 : index
    %7 = vector.load %arg4[%c0_8, %c0_9] : memref<16x1xf32, #tpu.memory_space<vmem>>, vector<16x1xf32>
    %8 = vector.broadcast %7 : vector<16x1xf32> to vector<16x196xf32>
    %9 = arith.addf %6, %8 : vector<16x196xf32>
    %cst_10 = arith.constant 0.000000e+00 : f32
    %10 = vector.broadcast %cst_10 : f32 to vector<16x196xf32>
    %11 = arith.maximumf %9, %10 : vector<16x196xf32>
    %cst_11 = arith.constant 0.000000e+00 : bf16
    %12 = vector.broadcast %cst_11 : bf16 to vector<16x8xbf16>
    %c0_12 = arith.constant 0 : index
    %c0_13 = arith.constant 0 : index
    %13 = vector.load %arg18[%c0_12, %c0_13] : memref<16x204xbf16, #tpu.memory_space<vmem>>, vector<16x8xbf16>
    tpu.vector_store %arg18[%c0_12, %c0_13], %12 {strides = array<i32>} : memref<16x204xbf16, #tpu.memory_space<vmem>>, vector<16x8xbf16>,
    %14 = arith.truncf %11 : vector<16x196xf32> to vector<16x196xbf16>
    %c0_14 = arith.constant 0 : index
    %c8 = arith.constant 8 : index
    %15 = vector.load %arg18[%c0_14, %c8] : memref<16x204xbf16, #tpu.memory_space<vmem>>, vector<16x196xbf16>
    tpu.vector_store %arg18[%c0_14, %c8], %14 {strides = array<i32>} : memref<16x204xbf16, #tpu.memory_space<vmem>>, vector<16x196xbf16>,
    %cst_15 = arith.constant 0.000000e+00 : f32
    %16 = vector.broadcast %cst_15 : f32 to vector<32x49xf32>
    %c0_16 = arith.constant 0 : index
    %c147 = arith.constant 147 : index
    %17 = vector.load %arg18[%c0_16, %c147] : memref<16x204xbf16, #tpu.memory_space<vmem>>, vector<16x49xbf16>
    %18 = vector.broadcast %1 : vector<1x49xbf16> to vector<16x49xbf16>
    %19 = arith.mulf %17, %18 : vector<16x49xbf16>
    %20 = vector.broadcast %0 : vector<1x49xbf16> to vector<16x49xbf16>
    %21 = arith.mulf %19, %20 : vector<16x49xbf16>
    %c0_17 = arith.constant 0 : index
    %c0_18 = arith.constant 0 : index
    %c0_19 = arith.constant 0 : index
    %22 = vector.load %arg5[%c0_17, %c0_18, %c0_19] : memref<9x32x16xbf16, #tpu.memory_space<vmem>>, vector<1x32x16xbf16>
    %23 = vector.shape_cast %22 : vector<1x32x16xbf16> to vector<32x16xbf16>
    %cst_20 = arith.constant dense<0.000000e+00> : vector<32x49xf32>
    %24 = tpu.matmul %23, %21, %cst_20 {dimension_numbers = #tpu.dot_dimension_numbers<[1], [0], [0], [1], [0, 0, 1, 1], [], []>} : vector<32x16xbf16>, vector<16x49xbf16>, vector<32x49xf32> -> vector<32x49xf32>
    %25 = arith.addf %16, %24 : vector<32x49xf32>
    %c0_21 = arith.constant 0 : index
    %c99 = arith.constant 99 : index
    %26 = vector.load %arg18[%c0_21, %c99] : memref<16x204xbf16, #tpu.memory_space<vmem>>, vector<16x49xbf16>
    %27 = vector.broadcast %1 : vector<1x49xbf16> to vector<16x49xbf16>
    %28 = arith.mulf %26, %27 : vector<16x49xbf16>
    %c1_22 = arith.constant 1 : index
    %c0_23 = arith.constant 0 : index
    %c0_24 = arith.constant 0 : index
    %29 = vector.load %arg5[%c1_22, %c0_23, %c0_24] : memref<9x32x16xbf16, #tpu.memory_space<vmem>>, vector<1x32x16xbf16>
    %30 = vector.shape_cast %29 : vector<1x32x16xbf16> to vector<32x16xbf16>
    %cst_25 = arith.constant dense<0.000000e+00> : vector<32x49xf32>
    %31 = tpu.matmul %30, %28, %cst_25 {dimension_numbers = #tpu.dot_dimension_numbers<[1], [0], [0], [1], [0, 0, 1, 1], [], []>} : vector<32x16xbf16>, vector<16x49xbf16>, vector<32x49xf32> -> vector<32x49xf32>
    %32 = arith.addf %25, %31 : vector<32x49xf32>
    %c0_26 = arith.constant 0 : index
    %c148 = arith.constant 148 : index
    %33 = vector.load %arg18[%c0_26, %c148] : memref<16x204xbf16, #tpu.memory_space<vmem>>, vector<16x49xbf16>
    %34 = vector.broadcast %1 : vector<1x49xbf16> to vector<16x49xbf16>
    %35 = arith.mulf %33, %34 : vector<16x49xbf16>
    %c2_27 = arith.constant 2 : index
    %c0_28 = arith.constant 0 : index
    %c0_29 = arith.constant 0 : index
    %36 = vector.load %arg5[%c2_27, %c0_28, %c0_29] : memref<9x32x16xbf16, #tpu.memory_space<vmem>>, vector<1x32x16xbf16>
    %37 = vector.shape_cast %36 : vector<1x32x16xbf16> to vector<32x16xbf16>
    %cst_30 = arith.constant dense<0.000000e+00> : vector<32x49xf32>
    %38 = tpu.matmul %37, %35, %cst_30 {dimension_numbers = #tpu.dot_dimension_numbers<[1], [0], [0], [1], [0, 0, 1, 1], [], []>} : vector<32x16xbf16>, vector<16x49xbf16>, vector<32x49xf32> -> vector<32x49xf32>
    %39 = arith.addf %32, %38 : vector<32x49xf32>
    %c0_31 = arith.constant 0 : index
    %c56 = arith.constant 56 : index
    %40 = vector.load %arg18[%c0_31, %c56] : memref<16x204xbf16, #tpu.memory_space<vmem>>, vector<16x49xbf16>
    %41 = vector.broadcast %0 : vector<1x49xbf16> to vector<16x49xbf16>
    %42 = arith.mulf %40, %41 : vector<16x49xbf16>
    %c3 = arith.constant 3 : index
    %c0_32 = arith.constant 0 : index
    %c0_33 = arith.constant 0 : index
    %43 = vector.load %arg5[%c3, %c0_32, %c0_33] : memref<9x32x16xbf16, #tpu.memory_space<vmem>>, vector<1x32x16xbf16>
    %44 = vector.shape_cast %43 : vector<1x32x16xbf16> to vector<32x16xbf16>
    %cst_34 = arith.constant dense<0.000000e+00> : vector<32x49xf32>
    %45 = tpu.matmul %44, %42, %cst_34 {dimension_numbers = #tpu.dot_dimension_numbers<[1], [0], [0], [1], [0, 0, 1, 1], [], []>} : vector<32x16xbf16>, vector<16x49xbf16>, vector<32x49xf32> -> vector<32x49xf32>
    %46 = arith.addf %39, %45 : vector<32x49xf32>
    %c0_35 = arith.constant 0 : index
    %c8_36 = arith.constant 8 : index
    %47 = vector.load %arg18[%c0_35, %c8_36] : memref<16x204xbf16, #tpu.memory_space<vmem>>, vector<16x49xbf16>
    %c4 = arith.constant 4 : index
    %c0_37 = arith.constant 0 : index
    %c0_38 = arith.constant 0 : index
    %48 = vector.load %arg5[%c4, %c0_37, %c0_38] : memref<9x32x16xbf16, #tpu.memory_space<vmem>>, vector<1x32x16xbf16>
    %49 = vector.shape_cast %48 : vector<1x32x16xbf16> to vector<32x16xbf16>
    %cst_39 = arith.constant dense<0.000000e+00> : vector<32x49xf32>
    %50 = tpu.matmul %49, %47, %cst_39 {dimension_numbers = #tpu.dot_dimension_numbers<[1], [0], [0], [1], [0, 0, 1, 1], [], []>} : vector<32x16xbf16>, vector<16x49xbf16>, vector<32x49xf32> -> vector<32x49xf32>
    %51 = arith.addf %46, %50 : vector<32x49xf32>
    %c0_40 = arith.constant 0 : index
    %c57 = arith.constant 57 : index
    %52 = vector.load %arg18[%c0_40, %c57] : memref<16x204xbf16, #tpu.memory_space<vmem>>, vector<16x49xbf16>
    %c5 = arith.constant 5 : index
    %c0_41 = arith.constant 0 : index
    %c0_42 = arith.constant 0 : index
    %53 = vector.load %arg5[%c5, %c0_41, %c0_42] : memref<9x32x16xbf16, #tpu.memory_space<vmem>>, vector<1x32x16xbf16>
    %54 = vector.shape_cast %53 : vector<1x32x16xbf16> to vector<32x16xbf16>
    %cst_43 = arith.constant dense<0.000000e+00> : vector<32x49xf32>
    %55 = tpu.matmul %54, %52, %cst_43 {dimension_numbers = #tpu.dot_dimension_numbers<[1], [0], [0], [1], [0, 0, 1, 1], [], []>} : vector<32x16xbf16>, vector<16x49xbf16>, vector<32x49xf32> -> vector<32x49xf32>
    %56 = arith.addf %51, %55 : vector<32x49xf32>
    %c0_44 = arith.constant 0 : index
    %c154 = arith.constant 154 : index
    %57 = vector.load %arg18[%c0_44, %c154] : memref<16x204xbf16, #tpu.memory_space<vmem>>, vector<16x49xbf16>
    %58 = vector.broadcast %0 : vector<1x49xbf16> to vector<16x49xbf16>
    %59 = arith.mulf %57, %58 : vector<16x49xbf16>
    %c6 = arith.constant 6 : index
    %c0_45 = arith.constant 0 : index
    %c0_46 = arith.constant 0 : index
    %60 = vector.load %arg5[%c6, %c0_45, %c0_46] : memref<9x32x16xbf16, #tpu.memory_space<vmem>>, vector<1x32x16xbf16>
    %61 = vector.shape_cast %60 : vector<1x32x16xbf16> to vector<32x16xbf16>
    %cst_47 = arith.constant dense<0.000000e+00> : vector<32x49xf32>
    %62 = tpu.matmul %61, %59, %cst_47 {dimension_numbers = #tpu.dot_dimension_numbers<[1], [0], [0], [1], [0, 0, 1, 1], [], []>} : vector<32x16xbf16>, vector<16x49xbf16>, vector<32x49xf32> -> vector<32x49xf32>
    %63 = arith.addf %56, %62 : vector<32x49xf32>
    %c0_48 = arith.constant 0 : index
    %c106 = arith.constant 106 : index
    %64 = vector.load %arg18[%c0_48, %c106] : memref<16x204xbf16, #tpu.memory_space<vmem>>, vector<16x49xbf16>
    %c7 = arith.constant 7 : index
    %c0_49 = arith.constant 0 : index
    %c0_50 = arith.constant 0 : index
    %65 = vector.load %arg5[%c7, %c0_49, %c0_50] : memref<9x32x16xbf16, #tpu.memory_space<vmem>>, vector<1x32x16xbf16>
    %66 = vector.shape_cast %65 : vector<1x32x16xbf16> to vector<32x16xbf16>
    %cst_51 = arith.constant dense<0.000000e+00> : vector<32x49xf32>
    %67 = tpu.matmul %66, %64, %cst_51 {dimension_numbers = #tpu.dot_dimension_numbers<[1], [0], [0], [1], [0, 0, 1, 1], [], []>} : vector<32x16xbf16>, vector<16x49xbf16>, vector<32x49xf32> -> vector<32x49xf32>
    %68 = arith.addf %63, %67 : vector<32x49xf32>
    %c0_52 = arith.constant 0 : index
    %c155 = arith.constant 155 : index
    %69 = vector.load %arg18[%c0_52, %c155] : memref<16x204xbf16, #tpu.memory_space<vmem>>, vector<16x49xbf16>
    %c8_53 = arith.constant 8 : index
    %c0_54 = arith.constant 0 : index
    %c0_55 = arith.constant 0 : index
    %70 = vector.load %arg5[%c8_53, %c0_54, %c0_55] : memref<9x32x16xbf16, #tpu.memory_space<vmem>>, vector<1x32x16xbf16>
    %71 = vector.shape_cast %70 : vector<1x32x16xbf16> to vector<32x16xbf16>
    %cst_56 = arith.constant dense<0.000000e+00> : vector<32x49xf32>
    %72 = tpu.matmul %71, %69, %cst_56 {dimension_numbers = #tpu.dot_dimension_numbers<[1], [0], [0], [1], [0, 0, 1, 1], [], []>} : vector<32x16xbf16>, vector<16x49xbf16>, vector<32x49xf32> -> vector<32x49xf32>
    %73 = arith.addf %68, %72 : vector<32x49xf32>
    %c0_57 = arith.constant 0 : index
    %c0_58 = arith.constant 0 : index
    %74 = vector.load %arg6[%c0_57, %c0_58] : memref<32x1xf32, #tpu.memory_space<vmem>>, vector<32x1xf32>
    %75 = vector.broadcast %74 : vector<32x1xf32> to vector<32x49xf32>
    %76 = arith.addf %73, %75 : vector<32x49xf32>
    %cst_59 = arith.constant 0.000000e+00 : f32
    %77 = vector.broadcast %cst_59 : f32 to vector<32x49xf32>
    %78 = arith.maximumf %76, %77 : vector<32x49xf32>
    %79 = arith.truncf %78 : vector<32x49xf32> to vector<32x49xbf16>
    %c0_60 = arith.constant 0 : index
    %c0_61 = arith.constant 0 : index
    %80 = vector.load %arg19[%c0_60, %c0_61] : memref<32x49xbf16, #tpu.memory_space<vmem>>, vector<32x49xbf16>
    tpu.vector_store %arg19[%c0_60, %c0_61], %79 {strides = array<i32>} : memref<32x49xbf16, #tpu.memory_space<vmem>>, vector<32x49xbf16>,
    %cst_62 = arith.constant 0.000000e+00 : f32
    %81 = vector.broadcast %cst_62 : f32 to vector<1x64xf32>
    %c0_63 = arith.constant 0 : index
    %c0_64 = arith.constant 0 : index
    %82 = vector.load %arg19[%c0_63, %c0_64] : memref<32x49xbf16, #tpu.memory_space<vmem>>, vector<1x49xbf16>
    %c0_65 = arith.constant 0 : index
    %c0_66 = arith.constant 0 : index
    %c0_67 = arith.constant 0 : index
    %83 = vector.load %arg7[%c0_65, %c0_66, %c0_67] : memref<32x49x64xbf16, #tpu.memory_space<vmem>>, vector<1x49x64xbf16>
    %84 = vector.shape_cast %83 : vector<1x49x64xbf16> to vector<49x64xbf16>
    %cst_68 = arith.constant dense<0.000000e+00> : vector<1x64xf32>
    %85 = tpu.matmul %82, %84, %cst_68 {dimension_numbers = #tpu.dot_dimension_numbers<[1], [0], [0], [1], [0, 0, 1, 1], [], []>} : vector<1x49xbf16>, vector<49x64xbf16>, vector<1x64xf32> -> vector<1x64xf32>
    %86 = arith.addf %81, %85 : vector<1x64xf32>
    %c1_69 = arith.constant 1 : index
    %c0_70 = arith.constant 0 : index
    %87 = vector.load %arg19[%c1_69, %c0_70] : memref<32x49xbf16, #tpu.memory_space<vmem>>, vector<1x49xbf16>
    %c1_71 = arith.constant 1 : index
    %c0_72 = arith.constant 0 : index
    %c0_73 = arith.constant 0 : index
    %88 = vector.load %arg7[%c1_71, %c0_72, %c0_73] : memref<32x49x64xbf16, #tpu.memory_space<vmem>>, vector<1x49x64xbf16>
    %89 = vector.shape_cast %88 : vector<1x49x64xbf16> to vector<49x64xbf16>
    %cst_74 = arith.constant dense<0.000000e+00> : vector<1x64xf32>
    %90 = tpu.matmul %87, %89, %cst_74 {dimension_numbers = #tpu.dot_dimension_numbers<[1], [0], [0], [1], [0, 0, 1, 1], [], []>} : vector<1x49xbf16>, vector<49x64xbf16>, vector<1x64xf32> -> vector<1x64xf32>
    %91 = arith.addf %86, %90 : vector<1x64xf32>
    %c2_75 = arith.constant 2 : index
    %c0_76 = arith.constant 0 : index
    %92 = vector.load %arg19[%c2_75, %c0_76] : memref<32x49xbf16, #tpu.memory_space<vmem>>, vector<1x49xbf16>
    %c2_77 = arith.constant 2 : index
    %c0_78 = arith.constant 0 : index
    %c0_79 = arith.constant 0 : index
    %93 = vector.load %arg7[%c2_77, %c0_78, %c0_79] : memref<32x49x64xbf16, #tpu.memory_space<vmem>>, vector<1x49x64xbf16>
    %94 = vector.shape_cast %93 : vector<1x49x64xbf16> to vector<49x64xbf16>
    %cst_80 = arith.constant dense<0.000000e+00> : vector<1x64xf32>
    %95 = tpu.matmul %92, %94, %cst_80 {dimension_numbers = #tpu.dot_dimension_numbers<[1], [0], [0], [1], [0, 0, 1, 1], [], []>} : vector<1x49xbf16>, vector<49x64xbf16>, vector<1x64xf32> -> vector<1x64xf32>
    %96 = arith.addf %91, %95 : vector<1x64xf32>
    %c3_81 = arith.constant 3 : index
    %c0_82 = arith.constant 0 : index
    %97 = vector.load %arg19[%c3_81, %c0_82] : memref<32x49xbf16, #tpu.memory_space<vmem>>, vector<1x49xbf16>
    %c3_83 = arith.constant 3 : index
    %c0_84 = arith.constant 0 : index
    %c0_85 = arith.constant 0 : index
    %98 = vector.load %arg7[%c3_83, %c0_84, %c0_85] : memref<32x49x64xbf16, #tpu.memory_space<vmem>>, vector<1x49x64xbf16>
    %99 = vector.shape_cast %98 : vector<1x49x64xbf16> to vector<49x64xbf16>
    %cst_86 = arith.constant dense<0.000000e+00> : vector<1x64xf32>
    %100 = tpu.matmul %97, %99, %cst_86 {dimension_numbers = #tpu.dot_dimension_numbers<[1], [0], [0], [1], [0, 0, 1, 1], [], []>} : vector<1x49xbf16>, vector<49x64xbf16>, vector<1x64xf32> -> vector<1x64xf32>
    %101 = arith.addf %96, %100 : vector<1x64xf32>
    %c4_87 = arith.constant 4 : index
    %c0_88 = arith.constant 0 : index
    %102 = vector.load %arg19[%c4_87, %c0_88] : memref<32x49xbf16, #tpu.memory_space<vmem>>, vector<1x49xbf16>
    %c4_89 = arith.constant 4 : index
    %c0_90 = arith.constant 0 : index
    %c0_91 = arith.constant 0 : index
    %103 = vector.load %arg7[%c4_89, %c0_90, %c0_91] : memref<32x49x64xbf16, #tpu.memory_space<vmem>>, vector<1x49x64xbf16>
    %104 = vector.shape_cast %103 : vector<1x49x64xbf16> to vector<49x64xbf16>
    %cst_92 = arith.constant dense<0.000000e+00> : vector<1x64xf32>
    %105 = tpu.matmul %102, %104, %cst_92 {dimension_numbers = #tpu.dot_dimension_numbers<[1], [0], [0], [1], [0, 0, 1, 1], [], []>} : vector<1x49xbf16>, vector<49x64xbf16>, vector<1x64xf32> -> vector<1x64xf32>
    %106 = arith.addf %101, %105 : vector<1x64xf32>
    %c5_93 = arith.constant 5 : index
    %c0_94 = arith.constant 0 : index
    %107 = vector.load %arg19[%c5_93, %c0_94] : memref<32x49xbf16, #tpu.memory_space<vmem>>, vector<1x49xbf16>
    %c5_95 = arith.constant 5 : index
    %c0_96 = arith.constant 0 : index
    %c0_97 = arith.constant 0 : index
    %108 = vector.load %arg7[%c5_95, %c0_96, %c0_97] : memref<32x49x64xbf16, #tpu.memory_space<vmem>>, vector<1x49x64xbf16>
    %109 = vector.shape_cast %108 : vector<1x49x64xbf16> to vector<49x64xbf16>
    %cst_98 = arith.constant dense<0.000000e+00> : vector<1x64xf32>
    %110 = tpu.matmul %107, %109, %cst_98 {dimension_numbers = #tpu.dot_dimension_numbers<[1], [0], [0], [1], [0, 0, 1, 1], [], []>} : vector<1x49xbf16>, vector<49x64xbf16>, vector<1x64xf32> -> vector<1x64xf32>
    %111 = arith.addf %106, %110 : vector<1x64xf32>
    %c6_99 = arith.constant 6 : index
    %c0_100 = arith.constant 0 : index
    %112 = vector.load %arg19[%c6_99, %c0_100] : memref<32x49xbf16, #tpu.memory_space<vmem>>, vector<1x49xbf16>
    %c6_101 = arith.constant 6 : index
    %c0_102 = arith.constant 0 : index
    %c0_103 = arith.constant 0 : index
    %113 = vector.load %arg7[%c6_101, %c0_102, %c0_103] : memref<32x49x64xbf16, #tpu.memory_space<vmem>>, vector<1x49x64xbf16>
    %114 = vector.shape_cast %113 : vector<1x49x64xbf16> to vector<49x64xbf16>
    %cst_104 = arith.constant dense<0.000000e+00> : vector<1x64xf32>
    %115 = tpu.matmul %112, %114, %cst_104 {dimension_numbers = #tpu.dot_dimension_numbers<[1], [0], [0], [1], [0, 0, 1, 1], [], []>} : vector<1x49xbf16>, vector<49x64xbf16>, vector<1x64xf32> -> vector<1x64xf32>
    %116 = arith.addf %111, %115 : vector<1x64xf32>
    %c7_105 = arith.constant 7 : index
    %c0_106 = arith.constant 0 : index
    %117 = vector.load %arg19[%c7_105, %c0_106] : memref<32x49xbf16, #tpu.memory_space<vmem>>, vector<1x49xbf16>
    %c7_107 = arith.constant 7 : index
    %c0_108 = arith.constant 0 : index
    %c0_109 = arith.constant 0 : index
    %118 = vector.load %arg7[%c7_107, %c0_108, %c0_109] : memref<32x49x64xbf16, #tpu.memory_space<vmem>>, vector<1x49x64xbf16>
    %119 = vector.shape_cast %118 : vector<1x49x64xbf16> to vector<49x64xbf16>
    %cst_110 = arith.constant dense<0.000000e+00> : vector<1x64xf32>
    %120 = tpu.matmul %117, %119, %cst_110 {dimension_numbers = #tpu.dot_dimension_numbers<[1], [0], [0], [1], [0, 0, 1, 1], [], []>} : vector<1x49xbf16>, vector<49x64xbf16>, vector<1x64xf32> -> vector<1x64xf32>
    %121 = arith.addf %116, %120 : vector<1x64xf32>
    %c8_111 = arith.constant 8 : index
    %c0_112 = arith.constant 0 : index
    %122 = vector.load %arg19[%c8_111, %c0_112] : memref<32x49xbf16, #tpu.memory_space<vmem>>, vector<1x49xbf16>
    %c8_113 = arith.constant 8 : index
    %c0_114 = arith.constant 0 : index
    %c0_115 = arith.constant 0 : index
    %123 = vector.load %arg7[%c8_113, %c0_114, %c0_115] : memref<32x49x64xbf16, #tpu.memory_space<vmem>>, vector<1x49x64xbf16>
    %124 = vector.shape_cast %123 : vector<1x49x64xbf16> to vector<49x64xbf16>
    %cst_116 = arith.constant dense<0.000000e+00> : vector<1x64xf32>
    %125 = tpu.matmul %122, %124, %cst_116 {dimension_numbers = #tpu.dot_dimension_numbers<[1], [0], [0], [1], [0, 0, 1, 1], [], []>} : vector<1x49xbf16>, vector<49x64xbf16>, vector<1x64xf32> -> vector<1x64xf32>
    %126 = arith.addf %121, %125 : vector<1x64xf32>
    %c9 = arith.constant 9 : index
    %c0_117 = arith.constant 0 : index
    %127 = vector.load %arg19[%c9, %c0_117] : memref<32x49xbf16, #tpu.memory_space<vmem>>, vector<1x49xbf16>
    %c9_118 = arith.constant 9 : index
    %c0_119 = arith.constant 0 : index
    %c0_120 = arith.constant 0 : index
    %128 = vector.load %arg7[%c9_118, %c0_119, %c0_120] : memref<32x49x64xbf16, #tpu.memory_space<vmem>>, vector<1x49x64xbf16>
    %129 = vector.shape_cast %128 : vector<1x49x64xbf16> to vector<49x64xbf16>
    %cst_121 = arith.constant dense<0.000000e+00> : vector<1x64xf32>
    %130 = tpu.matmul %127, %129, %cst_121 {dimension_numbers = #tpu.dot_dimension_numbers<[1], [0], [0], [1], [0, 0, 1, 1], [], []>} : vector<1x49xbf16>, vector<49x64xbf16>, vector<1x64xf32> -> vector<1x64xf32>
    %131 = arith.addf %126, %130 : vector<1x64xf32>
    %c10 = arith.constant 10 : index
    %c0_122 = arith.constant 0 : index
    %132 = vector.load %arg19[%c10, %c0_122] : memref<32x49xbf16, #tpu.memory_space<vmem>>, vector<1x49xbf16>
    %c10_123 = arith.constant 10 : index
    %c0_124 = arith.constant 0 : index
    %c0_125 = arith.constant 0 : index
    %133 = vector.load %arg7[%c10_123, %c0_124, %c0_125] : memref<32x49x64xbf16, #tpu.memory_space<vmem>>, vector<1x49x64xbf16>
    %134 = vector.shape_cast %133 : vector<1x49x64xbf16> to vector<49x64xbf16>
    %cst_126 = arith.constant dense<0.000000e+00> : vector<1x64xf32>
    %135 = tpu.matmul %132, %134, %cst_126 {dimension_numbers = #tpu.dot_dimension_numbers<[1], [0], [0], [1], [0, 0, 1, 1], [], []>} : vector<1x49xbf16>, vector<49x64xbf16>, vector<1x64xf32> -> vector<1x64xf32>
    %136 = arith.addf %131, %135 : vector<1x64xf32>
    %c11 = arith.constant 11 : index
    %c0_127 = arith.constant 0 : index
    %137 = vector.load %arg19[%c11, %c0_127] : memref<32x49xbf16, #tpu.memory_space<vmem>>, vector<1x49xbf16>
    %c11_128 = arith.constant 11 : index
    %c0_129 = arith.constant 0 : index
    %c0_130 = arith.constant 0 : index
    %138 = vector.load %arg7[%c11_128, %c0_129, %c0_130] : memref<32x49x64xbf16, #tpu.memory_space<vmem>>, vector<1x49x64xbf16>
    %139 = vector.shape_cast %138 : vector<1x49x64xbf16> to vector<49x64xbf16>
    %cst_131 = arith.constant dense<0.000000e+00> : vector<1x64xf32>
    %140 = tpu.matmul %137, %139, %cst_131 {dimension_numbers = #tpu.dot_dimension_numbers<[1], [0], [0], [1], [0, 0, 1, 1], [], []>} : vector<1x49xbf16>, vector<49x64xbf16>, vector<1x64xf32> -> vector<1x64xf32>
    %141 = arith.addf %136, %140 : vector<1x64xf32>
    %c12 = arith.constant 12 : index
    %c0_132 = arith.constant 0 : index
    %142 = vector.load %arg19[%c12, %c0_132] : memref<32x49xbf16, #tpu.memory_space<vmem>>, vector<1x49xbf16>
    %c12_133 = arith.constant 12 : index
    %c0_134 = arith.constant 0 : index
    %c0_135 = arith.constant 0 : index
    %143 = vector.load %arg7[%c12_133, %c0_134, %c0_135] : memref<32x49x64xbf16, #tpu.memory_space<vmem>>, vector<1x49x64xbf16>
    %144 = vector.shape_cast %143 : vector<1x49x64xbf16> to vector<49x64xbf16>
    %cst_136 = arith.constant dense<0.000000e+00> : vector<1x64xf32>
    %145 = tpu.matmul %142, %144, %cst_136 {dimension_numbers = #tpu.dot_dimension_numbers<[1], [0], [0], [1], [0, 0, 1, 1], [], []>} : vector<1x49xbf16>, vector<49x64xbf16>, vector<1x64xf32> -> vector<1x64xf32>
    %146 = arith.addf %141, %145 : vector<1x64xf32>
    %c13 = arith.constant 13 : index
    %c0_137 = arith.constant 0 : index
    %147 = vector.load %arg19[%c13, %c0_137] : memref<32x49xbf16, #tpu.memory_space<vmem>>, vector<1x49xbf16>
    %c13_138 = arith.constant 13 : index
    %c0_139 = arith.constant 0 : index
    %c0_140 = arith.constant 0 : index
    %148 = vector.load %arg7[%c13_138, %c0_139, %c0_140] : memref<32x49x64xbf16, #tpu.memory_space<vmem>>, vector<1x49x64xbf16>
    %149 = vector.shape_cast %148 : vector<1x49x64xbf16> to vector<49x64xbf16>
    %cst_141 = arith.constant dense<0.000000e+00> : vector<1x64xf32>
    %150 = tpu.matmul %147, %149, %cst_141 {dimension_numbers = #tpu.dot_dimension_numbers<[1], [0], [0], [1], [0, 0, 1, 1], [], []>} : vector<1x49xbf16>, vector<49x64xbf16>, vector<1x64xf32> -> vector<1x64xf32>
    %151 = arith.addf %146, %150 : vector<1x64xf32>
    %c14 = arith.constant 14 : index
    %c0_142 = arith.constant 0 : index
    %152 = vector.load %arg19[%c14, %c0_142] : memref<32x49xbf16, #tpu.memory_space<vmem>>, vector<1x49xbf16>
    %c14_143 = arith.constant 14 : index
    %c0_144 = arith.constant 0 : index
    %c0_145 = arith.constant 0 : index
    %153 = vector.load %arg7[%c14_143, %c0_144, %c0_145] : memref<32x49x64xbf16, #tpu.memory_space<vmem>>, vector<1x49x64xbf16>
    %154 = vector.shape_cast %153 : vector<1x49x64xbf16> to vector<49x64xbf16>
    %cst_146 = arith.constant dense<0.000000e+00> : vector<1x64xf32>
    %155 = tpu.matmul %152, %154, %cst_146 {dimension_numbers = #tpu.dot_dimension_numbers<[1], [0], [0], [1], [0, 0, 1, 1], [], []>} : vector<1x49xbf16>, vector<49x64xbf16>, vector<1x64xf32> -> vector<1x64xf32>
    %156 = arith.addf %151, %155 : vector<1x64xf32>
    %c15 = arith.constant 15 : index
    %c0_147 = arith.constant 0 : index
    %157 = vector.load %arg19[%c15, %c0_147] : memref<32x49xbf16, #tpu.memory_space<vmem>>, vector<1x49xbf16>
    %c15_148 = arith.constant 15 : index
    %c0_149 = arith.constant 0 : index
    %c0_150 = arith.constant 0 : index
    %158 = vector.load %arg7[%c15_148, %c0_149, %c0_150] : memref<32x49x64xbf16, #tpu.memory_space<vmem>>, vector<1x49x64xbf16>
    %159 = vector.shape_cast %158 : vector<1x49x64xbf16> to vector<49x64xbf16>
    %cst_151 = arith.constant dense<0.000000e+00> : vector<1x64xf32>
    %160 = tpu.matmul %157, %159, %cst_151 {dimension_numbers = #tpu.dot_dimension_numbers<[1], [0], [0], [1], [0, 0, 1, 1], [], []>} : vector<1x49xbf16>, vector<49x64xbf16>, vector<1x64xf32> -> vector<1x64xf32>
    %161 = arith.addf %156, %160 : vector<1x64xf32>
    %c16 = arith.constant 16 : index
    %c0_152 = arith.constant 0 : index
    %162 = vector.load %arg19[%c16, %c0_152] : memref<32x49xbf16, #tpu.memory_space<vmem>>, vector<1x49xbf16>
    %c16_153 = arith.constant 16 : index
    %c0_154 = arith.constant 0 : index
    %c0_155 = arith.constant 0 : index
    %163 = vector.load %arg7[%c16_153, %c0_154, %c0_155] : memref<32x49x64xbf16, #tpu.memory_space<vmem>>, vector<1x49x64xbf16>
    %164 = vector.shape_cast %163 : vector<1x49x64xbf16> to vector<49x64xbf16>
    %cst_156 = arith.constant dense<0.000000e+00> : vector<1x64xf32>
    %165 = tpu.matmul %162, %164, %cst_156 {dimension_numbers = #tpu.dot_dimension_numbers<[1], [0], [0], [1], [0, 0, 1, 1], [], []>} : vector<1x49xbf16>, vector<49x64xbf16>, vector<1x64xf32> -> vector<1x64xf32>
    %166 = arith.addf %161, %165 : vector<1x64xf32>
    %c17 = arith.constant 17 : index
    %c0_157 = arith.constant 0 : index
    %167 = vector.load %arg19[%c17, %c0_157] : memref<32x49xbf16, #tpu.memory_space<vmem>>, vector<1x49xbf16>
    %c17_158 = arith.constant 17 : index
    %c0_159 = arith.constant 0 : index
    %c0_160 = arith.constant 0 : index
    %168 = vector.load %arg7[%c17_158, %c0_159, %c0_160] : memref<32x49x64xbf16, #tpu.memory_space<vmem>>, vector<1x49x64xbf16>
    %169 = vector.shape_cast %168 : vector<1x49x64xbf16> to vector<49x64xbf16>
    %cst_161 = arith.constant dense<0.000000e+00> : vector<1x64xf32>
    %170 = tpu.matmul %167, %169, %cst_161 {dimension_numbers = #tpu.dot_dimension_numbers<[1], [0], [0], [1], [0, 0, 1, 1], [], []>} : vector<1x49xbf16>, vector<49x64xbf16>, vector<1x64xf32> -> vector<1x64xf32>
    %171 = arith.addf %166, %170 : vector<1x64xf32>
    %c18 = arith.constant 18 : index
    %c0_162 = arith.constant 0 : index
    %172 = vector.load %arg19[%c18, %c0_162] : memref<32x49xbf16, #tpu.memory_space<vmem>>, vector<1x49xbf16>
    %c18_163 = arith.constant 18 : index
    %c0_164 = arith.constant 0 : index
    %c0_165 = arith.constant 0 : index
    %173 = vector.load %arg7[%c18_163, %c0_164, %c0_165] : memref<32x49x64xbf16, #tpu.memory_space<vmem>>, vector<1x49x64xbf16>
    %174 = vector.shape_cast %173 : vector<1x49x64xbf16> to vector<49x64xbf16>
    %cst_166 = arith.constant dense<0.000000e+00> : vector<1x64xf32>
    %175 = tpu.matmul %172, %174, %cst_166 {dimension_numbers = #tpu.dot_dimension_numbers<[1], [0], [0], [1], [0, 0, 1, 1], [], []>} : vector<1x49xbf16>, vector<49x64xbf16>, vector<1x64xf32> -> vector<1x64xf32>
    %176 = arith.addf %171, %175 : vector<1x64xf32>
    %c19 = arith.constant 19 : index
    %c0_167 = arith.constant 0 : index
    %177 = vector.load %arg19[%c19, %c0_167] : memref<32x49xbf16, #tpu.memory_space<vmem>>, vector<1x49xbf16>
    %c19_168 = arith.constant 19 : index
    %c0_169 = arith.constant 0 : index
    %c0_170 = arith.constant 0 : index
    %178 = vector.load %arg7[%c19_168, %c0_169, %c0_170] : memref<32x49x64xbf16, #tpu.memory_space<vmem>>, vector<1x49x64xbf16>
    %179 = vector.shape_cast %178 : vector<1x49x64xbf16> to vector<49x64xbf16>
    %cst_171 = arith.constant dense<0.000000e+00> : vector<1x64xf32>
    %180 = tpu.matmul %177, %179, %cst_171 {dimension_numbers = #tpu.dot_dimension_numbers<[1], [0], [0], [1], [0, 0, 1, 1], [], []>} : vector<1x49xbf16>, vector<49x64xbf16>, vector<1x64xf32> -> vector<1x64xf32>
    %181 = arith.addf %176, %180 : vector<1x64xf32>
    %c20 = arith.constant 20 : index
    %c0_172 = arith.constant 0 : index
    %182 = vector.load %arg19[%c20, %c0_172] : memref<32x49xbf16, #tpu.memory_space<vmem>>, vector<1x49xbf16>
    %c20_173 = arith.constant 20 : index
    %c0_174 = arith.constant 0 : index
    %c0_175 = arith.constant 0 : index
    %183 = vector.load %arg7[%c20_173, %c0_174, %c0_175] : memref<32x49x64xbf16, #tpu.memory_space<vmem>>, vector<1x49x64xbf16>
    %184 = vector.shape_cast %183 : vector<1x49x64xbf16> to vector<49x64xbf16>
    %cst_176 = arith.constant dense<0.000000e+00> : vector<1x64xf32>
    %185 = tpu.matmul %182, %184, %cst_176 {dimension_numbers = #tpu.dot_dimension_numbers<[1], [0], [0], [1], [0, 0, 1, 1], [], []>} : vector<1x49xbf16>, vector<49x64xbf16>, vector<1x64xf32> -> vector<1x64xf32>
    %186 = arith.addf %181, %185 : vector<1x64xf32>
    %c21 = arith.constant 21 : index
    %c0_177 = arith.constant 0 : index
    %187 = vector.load %arg19[%c21, %c0_177] : memref<32x49xbf16, #tpu.memory_space<vmem>>, vector<1x49xbf16>
    %c21_178 = arith.constant 21 : index
    %c0_179 = arith.constant 0 : index
    %c0_180 = arith.constant 0 : index
    %188 = vector.load %arg7[%c21_178, %c0_179, %c0_180] : memref<32x49x64xbf16, #tpu.memory_space<vmem>>, vector<1x49x64xbf16>
    %189 = vector.shape_cast %188 : vector<1x49x64xbf16> to vector<49x64xbf16>
    %cst_181 = arith.constant dense<0.000000e+00> : vector<1x64xf32>
    %190 = tpu.matmul %187, %189, %cst_181 {dimension_numbers = #tpu.dot_dimension_numbers<[1], [0], [0], [1], [0, 0, 1, 1], [], []>} : vector<1x49xbf16>, vector<49x64xbf16>, vector<1x64xf32> -> vector<1x64xf32>
    %191 = arith.addf %186, %190 : vector<1x64xf32>
    %c22 = arith.constant 22 : index
    %c0_182 = arith.constant 0 : index
    %192 = vector.load %arg19[%c22, %c0_182] : memref<32x49xbf16, #tpu.memory_space<vmem>>, vector<1x49xbf16>
    %c22_183 = arith.constant 22 : index
    %c0_184 = arith.constant 0 : index
    %c0_185 = arith.constant 0 : index
    %193 = vector.load %arg7[%c22_183, %c0_184, %c0_185] : memref<32x49x64xbf16, #tpu.memory_space<vmem>>, vector<1x49x64xbf16>
    %194 = vector.shape_cast %193 : vector<1x49x64xbf16> to vector<49x64xbf16>
    %cst_186 = arith.constant dense<0.000000e+00> : vector<1x64xf32>
    %195 = tpu.matmul %192, %194, %cst_186 {dimension_numbers = #tpu.dot_dimension_numbers<[1], [0], [0], [1], [0, 0, 1, 1], [], []>} : vector<1x49xbf16>, vector<49x64xbf16>, vector<1x64xf32> -> vector<1x64xf32>
    %196 = arith.addf %191, %195 : vector<1x64xf32>
    %c23 = arith.constant 23 : index
    %c0_187 = arith.constant 0 : index
    %197 = vector.load %arg19[%c23, %c0_187] : memref<32x49xbf16, #tpu.memory_space<vmem>>, vector<1x49xbf16>
    %c23_188 = arith.constant 23 : index
    %c0_189 = arith.constant 0 : index
    %c0_190 = arith.constant 0 : index
    %198 = vector.load %arg7[%c23_188, %c0_189, %c0_190] : memref<32x49x64xbf16, #tpu.memory_space<vmem>>, vector<1x49x64xbf16>
    %199 = vector.shape_cast %198 : vector<1x49x64xbf16> to vector<49x64xbf16>
    %cst_191 = arith.constant dense<0.000000e+00> : vector<1x64xf32>
    %200 = tpu.matmul %197, %199, %cst_191 {dimension_numbers = #tpu.dot_dimension_numbers<[1], [0], [0], [1], [0, 0, 1, 1], [], []>} : vector<1x49xbf16>, vector<49x64xbf16>, vector<1x64xf32> -> vector<1x64xf32>
    %201 = arith.addf %196, %200 : vector<1x64xf32>
    %c24 = arith.constant 24 : index
    %c0_192 = arith.constant 0 : index
    %202 = vector.load %arg19[%c24, %c0_192] : memref<32x49xbf16, #tpu.memory_space<vmem>>, vector<1x49xbf16>
    %c24_193 = arith.constant 24 : index
    %c0_194 = arith.constant 0 : index
    %c0_195 = arith.constant 0 : index
    %203 = vector.load %arg7[%c24_193, %c0_194, %c0_195] : memref<32x49x64xbf16, #tpu.memory_space<vmem>>, vector<1x49x64xbf16>
    %204 = vector.shape_cast %203 : vector<1x49x64xbf16> to vector<49x64xbf16>
    %cst_196 = arith.constant dense<0.000000e+00> : vector<1x64xf32>
    %205 = tpu.matmul %202, %204, %cst_196 {dimension_numbers = #tpu.dot_dimension_numbers<[1], [0], [0], [1], [0, 0, 1, 1], [], []>} : vector<1x49xbf16>, vector<49x64xbf16>, vector<1x64xf32> -> vector<1x64xf32>
    %206 = arith.addf %201, %205 : vector<1x64xf32>
    %c25 = arith.constant 25 : index
    %c0_197 = arith.constant 0 : index
    %207 = vector.load %arg19[%c25, %c0_197] : memref<32x49xbf16, #tpu.memory_space<vmem>>, vector<1x49xbf16>
    %c25_198 = arith.constant 25 : index
    %c0_199 = arith.constant 0 : index
    %c0_200 = arith.constant 0 : index
    %208 = vector.load %arg7[%c25_198, %c0_199, %c0_200] : memref<32x49x64xbf16, #tpu.memory_space<vmem>>, vector<1x49x64xbf16>
    %209 = vector.shape_cast %208 : vector<1x49x64xbf16> to vector<49x64xbf16>
    %cst_201 = arith.constant dense<0.000000e+00> : vector<1x64xf32>
    %210 = tpu.matmul %207, %209, %cst_201 {dimension_numbers = #tpu.dot_dimension_numbers<[1], [0], [0], [1], [0, 0, 1, 1], [], []>} : vector<1x49xbf16>, vector<49x64xbf16>, vector<1x64xf32> -> vector<1x64xf32>
    %211 = arith.addf %206, %210 : vector<1x64xf32>
    %c26 = arith.constant 26 : index
    %c0_202 = arith.constant 0 : index
    %212 = vector.load %arg19[%c26, %c0_202] : memref<32x49xbf16, #tpu.memory_space<vmem>>, vector<1x49xbf16>
    %c26_203 = arith.constant 26 : index
    %c0_204 = arith.constant 0 : index
    %c0_205 = arith.constant 0 : index
    %213 = vector.load %arg7[%c26_203, %c0_204, %c0_205] : memref<32x49x64xbf16, #tpu.memory_space<vmem>>, vector<1x49x64xbf16>
    %214 = vector.shape_cast %213 : vector<1x49x64xbf16> to vector<49x64xbf16>
    %cst_206 = arith.constant dense<0.000000e+00> : vector<1x64xf32>
    %215 = tpu.matmul %212, %214, %cst_206 {dimension_numbers = #tpu.dot_dimension_numbers<[1], [0], [0], [1], [0, 0, 1, 1], [], []>} : vector<1x49xbf16>, vector<49x64xbf16>, vector<1x64xf32> -> vector<1x64xf32>
    %216 = arith.addf %211, %215 : vector<1x64xf32>
    %c27 = arith.constant 27 : index
    %c0_207 = arith.constant 0 : index
    %217 = vector.load %arg19[%c27, %c0_207] : memref<32x49xbf16, #tpu.memory_space<vmem>>, vector<1x49xbf16>
    %c27_208 = arith.constant 27 : index
    %c0_209 = arith.constant 0 : index
    %c0_210 = arith.constant 0 : index
    %218 = vector.load %arg7[%c27_208, %c0_209, %c0_210] : memref<32x49x64xbf16, #tpu.memory_space<vmem>>, vector<1x49x64xbf16>
    %219 = vector.shape_cast %218 : vector<1x49x64xbf16> to vector<49x64xbf16>
    %cst_211 = arith.constant dense<0.000000e+00> : vector<1x64xf32>
    %220 = tpu.matmul %217, %219, %cst_211 {dimension_numbers = #tpu.dot_dimension_numbers<[1], [0], [0], [1], [0, 0, 1, 1], [], []>} : vector<1x49xbf16>, vector<49x64xbf16>, vector<1x64xf32> -> vector<1x64xf32>
    %221 = arith.addf %216, %220 : vector<1x64xf32>
    %c28 = arith.constant 28 : index
    %c0_212 = arith.constant 0 : index
    %222 = vector.load %arg19[%c28, %c0_212] : memref<32x49xbf16, #tpu.memory_space<vmem>>, vector<1x49xbf16>
    %c28_213 = arith.constant 28 : index
    %c0_214 = arith.constant 0 : index
    %c0_215 = arith.constant 0 : index
    %223 = vector.load %arg7[%c28_213, %c0_214, %c0_215] : memref<32x49x64xbf16, #tpu.memory_space<vmem>>, vector<1x49x64xbf16>
    %224 = vector.shape_cast %223 : vector<1x49x64xbf16> to vector<49x64xbf16>
    %cst_216 = arith.constant dense<0.000000e+00> : vector<1x64xf32>
    %225 = tpu.matmul %222, %224, %cst_216 {dimension_numbers = #tpu.dot_dimension_numbers<[1], [0], [0], [1], [0, 0, 1, 1], [], []>} : vector<1x49xbf16>, vector<49x64xbf16>, vector<1x64xf32> -> vector<1x64xf32>
    %226 = arith.addf %221, %225 : vector<1x64xf32>
    %c29 = arith.constant 29 : index
    %c0_217 = arith.constant 0 : index
    %227 = vector.load %arg19[%c29, %c0_217] : memref<32x49xbf16, #tpu.memory_space<vmem>>, vector<1x49xbf16>
    %c29_218 = arith.constant 29 : index
    %c0_219 = arith.constant 0 : index
    %c0_220 = arith.constant 0 : index
    %228 = vector.load %arg7[%c29_218, %c0_219, %c0_220] : memref<32x49x64xbf16, #tpu.memory_space<vmem>>, vector<1x49x64xbf16>
    %229 = vector.shape_cast %228 : vector<1x49x64xbf16> to vector<49x64xbf16>
    %cst_221 = arith.constant dense<0.000000e+00> : vector<1x64xf32>
    %230 = tpu.matmul %227, %229, %cst_221 {dimension_numbers = #tpu.dot_dimension_numbers<[1], [0], [0], [1], [0, 0, 1, 1], [], []>} : vector<1x49xbf16>, vector<49x64xbf16>, vector<1x64xf32> -> vector<1x64xf32>
    %231 = arith.addf %226, %230 : vector<1x64xf32>
    %c30 = arith.constant 30 : index
    %c0_222 = arith.constant 0 : index
    %232 = vector.load %arg19[%c30, %c0_222] : memref<32x49xbf16, #tpu.memory_space<vmem>>, vector<1x49xbf16>
    %c30_223 = arith.constant 30 : index
    %c0_224 = arith.constant 0 : index
    %c0_225 = arith.constant 0 : index
    %233 = vector.load %arg7[%c30_223, %c0_224, %c0_225] : memref<32x49x64xbf16, #tpu.memory_space<vmem>>, vector<1x49x64xbf16>
    %234 = vector.shape_cast %233 : vector<1x49x64xbf16> to vector<49x64xbf16>
    %cst_226 = arith.constant dense<0.000000e+00> : vector<1x64xf32>
    %235 = tpu.matmul %232, %234, %cst_226 {dimension_numbers = #tpu.dot_dimension_numbers<[1], [0], [0], [1], [0, 0, 1, 1], [], []>} : vector<1x49xbf16>, vector<49x64xbf16>, vector<1x64xf32> -> vector<1x64xf32>
    %236 = arith.addf %231, %235 : vector<1x64xf32>
    %c31 = arith.constant 31 : index
    %c0_227 = arith.constant 0 : index
    %237 = vector.load %arg19[%c31, %c0_227] : memref<32x49xbf16, #tpu.memory_space<vmem>>, vector<1x49xbf16>
    %c31_228 = arith.constant 31 : index
    %c0_229 = arith.constant 0 : index
    %c0_230 = arith.constant 0 : index
    %238 = vector.load %arg7[%c31_228, %c0_229, %c0_230] : memref<32x49x64xbf16, #tpu.memory_space<vmem>>, vector<1x49x64xbf16>
    %239 = vector.shape_cast %238 : vector<1x49x64xbf16> to vector<49x64xbf16>
    %cst_231 = arith.constant dense<0.000000e+00> : vector<1x64xf32>
    %240 = tpu.matmul %237, %239, %cst_231 {dimension_numbers = #tpu.dot_dimension_numbers<[1], [0], [0], [1], [0, 0, 1, 1], [], []>} : vector<1x49xbf16>, vector<49x64xbf16>, vector<1x64xf32> -> vector<1x64xf32>
    %241 = arith.addf %236, %240 : vector<1x64xf32>
    %c0_232 = arith.constant 0 : index
    %c0_233 = arith.constant 0 : index
    %242 = vector.load %arg8[%c0_232, %c0_233] : memref<1x64xf32, #tpu.memory_space<vmem>>, vector<1x64xf32>
    %243 = arith.addf %241, %242 : vector<1x64xf32>
    %cst_234 = arith.constant 0.000000e+00 : f32
    %244 = vector.broadcast %cst_234 : f32 to vector<1x64xf32>
    %245 = arith.cmpf oge, %243, %244 : vector<1x64xf32>
    %cst_235 = arith.constant 0.00999999977 : f32
    %246 = vector.broadcast %cst_235 : f32 to vector<1x64xf32>
    %247 = arith.mulf %246, %243 : vector<1x64xf32>
    %248 = arith.select %245, %243, %247 : vector<1x64xi1>, vector<1x64xf32>
    %249 = arith.truncf %248 : vector<1x64xf32> to vector<1x64xbf16>
    %c0_236 = arith.constant 0 : index
    %c0_237 = arith.constant 0 : index
    %250 = vector.load %arg9[%c0_236, %c0_237] : memref<64x64xbf16, #tpu.memory_space<vmem>>, vector<64x64xbf16>
    %cst_238 = arith.constant dense<0.000000e+00> : vector<1x64xf32>
    %251 = tpu.matmul %249, %250, %cst_238 {dimension_numbers = #tpu.dot_dimension_numbers<[1], [0], [0], [1], [0, 0, 1, 1], [], []>} : vector<1x64xbf16>, vector<64x64xbf16>, vector<1x64xf32> -> vector<1x64xf32>
    %c0_239 = arith.constant 0 : index
    %c0_240 = arith.constant 0 : index
    %252 = vector.load %arg10[%c0_239, %c0_240] : memref<1x64xf32, #tpu.memory_space<vmem>>, vector<1x64xf32>
    %253 = arith.addf %251, %252 : vector<1x64xf32>
    %cst_241 = arith.constant 0.000000e+00 : f32
    %254 = vector.broadcast %cst_241 : f32 to vector<1x64xf32>
    %255 = arith.maximumf %253, %254 : vector<1x64xf32>
    %256 = arith.truncf %255 : vector<1x64xf32> to vector<1x64xbf16>
    %c0_242 = arith.constant 0 : index
    %c0_243 = arith.constant 0 : index
    %c0_244 = arith.constant 0 : index
    %257 = vector.load %arg11[%c0_242, %c0_243, %c0_244] : memref<32x64x49xbf16, #tpu.memory_space<vmem>>, vector<1x64x49xbf16>
    %258 = vector.shape_cast %257 : vector<1x64x49xbf16> to vector<64x49xbf16>
    %cst_245 = arith.constant dense<0.000000e+00> : vector<1x49xf32>
    %259 = tpu.matmul %256, %258, %cst_245 {dimension_numbers = #tpu.dot_dimension_numbers<[1], [0], [0], [1], [0, 0, 1, 1], [], []>} : vector<1x64xbf16>, vector<64x49xbf16>, vector<1x49xf32> -> vector<1x49xf32>
    %c0_246 = arith.constant 0 : index
    %c0_247 = arith.constant 0 : index
    %260 = vector.load %arg12[%c0_246, %c0_247] : memref<32x1xf32, #tpu.memory_space<vmem>>, vector<1x1xf32>
    %261 = vector.broadcast %260 : vector<1x1xf32> to vector<1x49xf32>
    %262 = arith.addf %259, %261 : vector<1x49xf32>
    %cst_248 = arith.constant 0.000000e+00 : f32
    %263 = vector.broadcast %cst_248 : f32 to vector<1x49xf32>
    %264 = arith.maximumf %262, %263 : vector<1x49xf32>
    %265 = arith.truncf %264 : vector<1x49xf32> to vector<1x49xbf16>
    %c0_249 = arith.constant 0 : index
    %c0_250 = arith.constant 0 : index
    %266 = vector.load %arg20[%c0_249, %c0_250] : memref<32x64xbf16, #tpu.memory_space<vmem>>, vector<1x49xbf16>
    tpu.vector_store %arg20[%c0_249, %c0_250], %265 {strides = array<i32>} : memref<32x64xbf16, #tpu.memory_space<vmem>>, vector<1x49xbf16>,
    %c1_251 = arith.constant 1 : index
    %c0_252 = arith.constant 0 : index
    %c0_253 = arith.constant 0 : index
    %267 = vector.load %arg11[%c1_251, %c0_252, %c0_253] : memref<32x64x49xbf16, #tpu.memory_space<vmem>>, vector<1x64x49xbf16>
    %268 = vector.shape_cast %267 : vector<1x64x49xbf16> to vector<64x49xbf16>
    %cst_254 = arith.constant dense<0.000000e+00> : vector<1x49xf32>
    %269 = tpu.matmul %256, %268, %cst_254 {dimension_numbers = #tpu.dot_dimension_numbers<[1], [0], [0], [1], [0, 0, 1, 1], [], []>} : vector<1x64xbf16>, vector<64x49xbf16>, vector<1x49xf32> -> vector<1x49xf32>
    %c1_255 = arith.constant 1 : index
    %c0_256 = arith.constant 0 : index
    %270 = vector.load %arg12[%c1_255, %c0_256] : memref<32x1xf32, #tpu.memory_space<vmem>>, vector<1x1xf32>
    %271 = vector.broadcast %270 : vector<1x1xf32> to vector<1x49xf32>
    %272 = arith.addf %269, %271 : vector<1x49xf32>
    %cst_257 = arith.constant 0.000000e+00 : f32
    %273 = vector.broadcast %cst_257 : f32 to vector<1x49xf32>
    %274 = arith.maximumf %272, %273 : vector<1x49xf32>
    %275 = arith.truncf %274 : vector<1x49xf32> to vector<1x49xbf16>
    %c1_258 = arith.constant 1 : index
    %c0_259 = arith.constant 0 : index
    %276 = vector.load %arg20[%c1_258, %c0_259] : memref<32x64xbf16, #tpu.memory_space<vmem>>, vector<1x49xbf16>
    tpu.vector_store %arg20[%c1_258, %c0_259], %275 {strides = array<i32>} : memref<32x64xbf16, #tpu.memory_space<vmem>>, vector<1x49xbf16>,
    %c2_260 = arith.constant 2 : index
    %c0_261 = arith.constant 0 : index
    %c0_262 = arith.constant 0 : index
    %277 = vector.load %arg11[%c2_260, %c0_261, %c0_262] : memref<32x64x49xbf16, #tpu.memory_space<vmem>>, vector<1x64x49xbf16>
    %278 = vector.shape_cast %277 : vector<1x64x49xbf16> to vector<64x49xbf16>
    %cst_263 = arith.constant dense<0.000000e+00> : vector<1x49xf32>
    %279 = tpu.matmul %256, %278, %cst_263 {dimension_numbers = #tpu.dot_dimension_numbers<[1], [0], [0], [1], [0, 0, 1, 1], [], []>} : vector<1x64xbf16>, vector<64x49xbf16>, vector<1x49xf32> -> vector<1x49xf32>
    %c2_264 = arith.constant 2 : index
    %c0_265 = arith.constant 0 : index
    %280 = vector.load %arg12[%c2_264, %c0_265] : memref<32x1xf32, #tpu.memory_space<vmem>>, vector<1x1xf32>
    %281 = vector.broadcast %280 : vector<1x1xf32> to vector<1x49xf32>
    %282 = arith.addf %279, %281 : vector<1x49xf32>
    %cst_266 = arith.constant 0.000000e+00 : f32
    %283 = vector.broadcast %cst_266 : f32 to vector<1x49xf32>
    %284 = arith.maximumf %282, %283 : vector<1x49xf32>
    %285 = arith.truncf %284 : vector<1x49xf32> to vector<1x49xbf16>
    %c2_267 = arith.constant 2 : index
    %c0_268 = arith.constant 0 : index
    %286 = vector.load %arg20[%c2_267, %c0_268] : memref<32x64xbf16, #tpu.memory_space<vmem>>, vector<1x49xbf16>
    tpu.vector_store %arg20[%c2_267, %c0_268], %285 {strides = array<i32>} : memref<32x64xbf16, #tpu.memory_space<vmem>>, vector<1x49xbf16>,
    %c3_269 = arith.constant 3 : index
    %c0_270 = arith.constant 0 : index
    %c0_271 = arith.constant 0 : index
    %287 = vector.load %arg11[%c3_269, %c0_270, %c0_271] : memref<32x64x49xbf16, #tpu.memory_space<vmem>>, vector<1x64x49xbf16>
    %288 = vector.shape_cast %287 : vector<1x64x49xbf16> to vector<64x49xbf16>
    %cst_272 = arith.constant dense<0.000000e+00> : vector<1x49xf32>
    %289 = tpu.matmul %256, %288, %cst_272 {dimension_numbers = #tpu.dot_dimension_numbers<[1], [0], [0], [1], [0, 0, 1, 1], [], []>} : vector<1x64xbf16>, vector<64x49xbf16>, vector<1x49xf32> -> vector<1x49xf32>
    %c3_273 = arith.constant 3 : index
    %c0_274 = arith.constant 0 : index
    %290 = vector.load %arg12[%c3_273, %c0_274] : memref<32x1xf32, #tpu.memory_space<vmem>>, vector<1x1xf32>
    %291 = vector.broadcast %290 : vector<1x1xf32> to vector<1x49xf32>
    %292 = arith.addf %289, %291 : vector<1x49xf32>
    %cst_275 = arith.constant 0.000000e+00 : f32
    %293 = vector.broadcast %cst_275 : f32 to vector<1x49xf32>
    %294 = arith.maximumf %292, %293 : vector<1x49xf32>
    %295 = arith.truncf %294 : vector<1x49xf32> to vector<1x49xbf16>
    %c3_276 = arith.constant 3 : index
    %c0_277 = arith.constant 0 : index
    %296 = vector.load %arg20[%c3_276, %c0_277] : memref<32x64xbf16, #tpu.memory_space<vmem>>, vector<1x49xbf16>
    tpu.vector_store %arg20[%c3_276, %c0_277], %295 {strides = array<i32>} : memref<32x64xbf16, #tpu.memory_space<vmem>>, vector<1x49xbf16>,
    %c4_278 = arith.constant 4 : index
    %c0_279 = arith.constant 0 : index
    %c0_280 = arith.constant 0 : index
    %297 = vector.load %arg11[%c4_278, %c0_279, %c0_280] : memref<32x64x49xbf16, #tpu.memory_space<vmem>>, vector<1x64x49xbf16>
    %298 = vector.shape_cast %297 : vector<1x64x49xbf16> to vector<64x49xbf16>
    %cst_281 = arith.constant dense<0.000000e+00> : vector<1x49xf32>
    %299 = tpu.matmul %256, %298, %cst_281 {dimension_numbers = #tpu.dot_dimension_numbers<[1], [0], [0], [1], [0, 0, 1, 1], [], []>} : vector<1x64xbf16>, vector<64x49xbf16>, vector<1x49xf32> -> vector<1x49xf32>
    %c4_282 = arith.constant 4 : index
    %c0_283 = arith.constant 0 : index
    %300 = vector.load %arg12[%c4_282, %c0_283] : memref<32x1xf32, #tpu.memory_space<vmem>>, vector<1x1xf32>
    %301 = vector.broadcast %300 : vector<1x1xf32> to vector<1x49xf32>
    %302 = arith.addf %299, %301 : vector<1x49xf32>
    %cst_284 = arith.constant 0.000000e+00 : f32
    %303 = vector.broadcast %cst_284 : f32 to vector<1x49xf32>
    %304 = arith.maximumf %302, %303 : vector<1x49xf32>
    %305 = arith.truncf %304 : vector<1x49xf32> to vector<1x49xbf16>
    %c4_285 = arith.constant 4 : index
    %c0_286 = arith.constant 0 : index
    %306 = vector.load %arg20[%c4_285, %c0_286] : memref<32x64xbf16, #tpu.memory_space<vmem>>, vector<1x49xbf16>
    tpu.vector_store %arg20[%c4_285, %c0_286], %305 {strides = array<i32>} : memref<32x64xbf16, #tpu.memory_space<vmem>>, vector<1x49xbf16>,
    %c5_287 = arith.constant 5 : index
    %c0_288 = arith.constant 0 : index
    %c0_289 = arith.constant 0 : index
    %307 = vector.load %arg11[%c5_287, %c0_288, %c0_289] : memref<32x64x49xbf16, #tpu.memory_space<vmem>>, vector<1x64x49xbf16>
    %308 = vector.shape_cast %307 : vector<1x64x49xbf16> to vector<64x49xbf16>
    %cst_290 = arith.constant dense<0.000000e+00> : vector<1x49xf32>
    %309 = tpu.matmul %256, %308, %cst_290 {dimension_numbers = #tpu.dot_dimension_numbers<[1], [0], [0], [1], [0, 0, 1, 1], [], []>} : vector<1x64xbf16>, vector<64x49xbf16>, vector<1x49xf32> -> vector<1x49xf32>
    %c5_291 = arith.constant 5 : index
    %c0_292 = arith.constant 0 : index
    %310 = vector.load %arg12[%c5_291, %c0_292] : memref<32x1xf32, #tpu.memory_space<vmem>>, vector<1x1xf32>
    %311 = vector.broadcast %310 : vector<1x1xf32> to vector<1x49xf32>
    %312 = arith.addf %309, %311 : vector<1x49xf32>
    %cst_293 = arith.constant 0.000000e+00 : f32
    %313 = vector.broadcast %cst_293 : f32 to vector<1x49xf32>
    %314 = arith.maximumf %312, %313 : vector<1x49xf32>
    %315 = arith.truncf %314 : vector<1x49xf32> to vector<1x49xbf16>
    %c5_294 = arith.constant 5 : index
    %c0_295 = arith.constant 0 : index
    %316 = vector.load %arg20[%c5_294, %c0_295] : memref<32x64xbf16, #tpu.memory_space<vmem>>, vector<1x49xbf16>
    tpu.vector_store %arg20[%c5_294, %c0_295], %315 {strides = array<i32>} : memref<32x64xbf16, #tpu.memory_space<vmem>>, vector<1x49xbf16>,
    %c6_296 = arith.constant 6 : index
    %c0_297 = arith.constant 0 : index
    %c0_298 = arith.constant 0 : index
    %317 = vector.load %arg11[%c6_296, %c0_297, %c0_298] : memref<32x64x49xbf16, #tpu.memory_space<vmem>>, vector<1x64x49xbf16>
    %318 = vector.shape_cast %317 : vector<1x64x49xbf16> to vector<64x49xbf16>
    %cst_299 = arith.constant dense<0.000000e+00> : vector<1x49xf32>
    %319 = tpu.matmul %256, %318, %cst_299 {dimension_numbers = #tpu.dot_dimension_numbers<[1], [0], [0], [1], [0, 0, 1, 1], [], []>} : vector<1x64xbf16>, vector<64x49xbf16>, vector<1x49xf32> -> vector<1x49xf32>
    %c6_300 = arith.constant 6 : index
    %c0_301 = arith.constant 0 : index
    %320 = vector.load %arg12[%c6_300, %c0_301] : memref<32x1xf32, #tpu.memory_space<vmem>>, vector<1x1xf32>
    %321 = vector.broadcast %320 : vector<1x1xf32> to vector<1x49xf32>
    %322 = arith.addf %319, %321 : vector<1x49xf32>
    %cst_302 = arith.constant 0.000000e+00 : f32
    %323 = vector.broadcast %cst_302 : f32 to vector<1x49xf32>
    %324 = arith.maximumf %322, %323 : vector<1x49xf32>
    %325 = arith.truncf %324 : vector<1x49xf32> to vector<1x49xbf16>
    %c6_303 = arith.constant 6 : index
    %c0_304 = arith.constant 0 : index
    %326 = vector.load %arg20[%c6_303, %c0_304] : memref<32x64xbf16, #tpu.memory_space<vmem>>, vector<1x49xbf16>
    tpu.vector_store %arg20[%c6_303, %c0_304], %325 {strides = array<i32>} : memref<32x64xbf16, #tpu.memory_space<vmem>>, vector<1x49xbf16>,
    %c7_305 = arith.constant 7 : index
    %c0_306 = arith.constant 0 : index
    %c0_307 = arith.constant 0 : index
    %327 = vector.load %arg11[%c7_305, %c0_306, %c0_307] : memref<32x64x49xbf16, #tpu.memory_space<vmem>>, vector<1x64x49xbf16>
    %328 = vector.shape_cast %327 : vector<1x64x49xbf16> to vector<64x49xbf16>
    %cst_308 = arith.constant dense<0.000000e+00> : vector<1x49xf32>
    %329 = tpu.matmul %256, %328, %cst_308 {dimension_numbers = #tpu.dot_dimension_numbers<[1], [0], [0], [1], [0, 0, 1, 1], [], []>} : vector<1x64xbf16>, vector<64x49xbf16>, vector<1x49xf32> -> vector<1x49xf32>
    %c7_309 = arith.constant 7 : index
    %c0_310 = arith.constant 0 : index
    %330 = vector.load %arg12[%c7_309, %c0_310] : memref<32x1xf32, #tpu.memory_space<vmem>>, vector<1x1xf32>
    %331 = vector.broadcast %330 : vector<1x1xf32> to vector<1x49xf32>
    %332 = arith.addf %329, %331 : vector<1x49xf32>
    %cst_311 = arith.constant 0.000000e+00 : f32
    %333 = vector.broadcast %cst_311 : f32 to vector<1x49xf32>
    %334 = arith.maximumf %332, %333 : vector<1x49xf32>
    %335 = arith.truncf %334 : vector<1x49xf32> to vector<1x49xbf16>
    %c7_312 = arith.constant 7 : index
    %c0_313 = arith.constant 0 : index
    %336 = vector.load %arg20[%c7_312, %c0_313] : memref<32x64xbf16, #tpu.memory_space<vmem>>, vector<1x49xbf16>
    tpu.vector_store %arg20[%c7_312, %c0_313], %335 {strides = array<i32>} : memref<32x64xbf16, #tpu.memory_space<vmem>>, vector<1x49xbf16>,
    %c8_314 = arith.constant 8 : index
    %c0_315 = arith.constant 0 : index
    %c0_316 = arith.constant 0 : index
    %337 = vector.load %arg11[%c8_314, %c0_315, %c0_316] : memref<32x64x49xbf16, #tpu.memory_space<vmem>>, vector<1x64x49xbf16>
    %338 = vector.shape_cast %337 : vector<1x64x49xbf16> to vector<64x49xbf16>
    %cst_317 = arith.constant dense<0.000000e+00> : vector<1x49xf32>
    %339 = tpu.matmul %256, %338, %cst_317 {dimension_numbers = #tpu.dot_dimension_numbers<[1], [0], [0], [1], [0, 0, 1, 1], [], []>} : vector<1x64xbf16>, vector<64x49xbf16>, vector<1x49xf32> -> vector<1x49xf32>
    %c8_318 = arith.constant 8 : index
    %c0_319 = arith.constant 0 : index
    %340 = vector.load %arg12[%c8_318, %c0_319] : memref<32x1xf32, #tpu.memory_space<vmem>>, vector<1x1xf32>
    %341 = vector.broadcast %340 : vector<1x1xf32> to vector<1x49xf32>
    %342 = arith.addf %339, %341 : vector<1x49xf32>
    %cst_320 = arith.constant 0.000000e+00 : f32
    %343 = vector.broadcast %cst_320 : f32 to vector<1x49xf32>
    %344 = arith.maximumf %342, %343 : vector<1x49xf32>
    %345 = arith.truncf %344 : vector<1x49xf32> to vector<1x49xbf16>
    %c8_321 = arith.constant 8 : index
    %c0_322 = arith.constant 0 : index
    %346 = vector.load %arg20[%c8_321, %c0_322] : memref<32x64xbf16, #tpu.memory_space<vmem>>, vector<1x49xbf16>
    tpu.vector_store %arg20[%c8_321, %c0_322], %345 {strides = array<i32>} : memref<32x64xbf16, #tpu.memory_space<vmem>>, vector<1x49xbf16>,
    %c9_323 = arith.constant 9 : index
    %c0_324 = arith.constant 0 : index
    %c0_325 = arith.constant 0 : index
    %347 = vector.load %arg11[%c9_323, %c0_324, %c0_325] : memref<32x64x49xbf16, #tpu.memory_space<vmem>>, vector<1x64x49xbf16>
    %348 = vector.shape_cast %347 : vector<1x64x49xbf16> to vector<64x49xbf16>
    %cst_326 = arith.constant dense<0.000000e+00> : vector<1x49xf32>
    %349 = tpu.matmul %256, %348, %cst_326 {dimension_numbers = #tpu.dot_dimension_numbers<[1], [0], [0], [1], [0, 0, 1, 1], [], []>} : vector<1x64xbf16>, vector<64x49xbf16>, vector<1x49xf32> -> vector<1x49xf32>
    %c9_327 = arith.constant 9 : index
    %c0_328 = arith.constant 0 : index
    %350 = vector.load %arg12[%c9_327, %c0_328] : memref<32x1xf32, #tpu.memory_space<vmem>>, vector<1x1xf32>
    %351 = vector.broadcast %350 : vector<1x1xf32> to vector<1x49xf32>
    %352 = arith.addf %349, %351 : vector<1x49xf32>
    %cst_329 = arith.constant 0.000000e+00 : f32
    %353 = vector.broadcast %cst_329 : f32 to vector<1x49xf32>
    %354 = arith.maximumf %352, %353 : vector<1x49xf32>
    %355 = arith.truncf %354 : vector<1x49xf32> to vector<1x49xbf16>
    %c9_330 = arith.constant 9 : index
    %c0_331 = arith.constant 0 : index
    %356 = vector.load %arg20[%c9_330, %c0_331] : memref<32x64xbf16, #tpu.memory_space<vmem>>, vector<1x49xbf16>
    tpu.vector_store %arg20[%c9_330, %c0_331], %355 {strides = array<i32>} : memref<32x64xbf16, #tpu.memory_space<vmem>>, vector<1x49xbf16>,
    %c10_332 = arith.constant 10 : index
    %c0_333 = arith.constant 0 : index
    %c0_334 = arith.constant 0 : index
    %357 = vector.load %arg11[%c10_332, %c0_333, %c0_334] : memref<32x64x49xbf16, #tpu.memory_space<vmem>>, vector<1x64x49xbf16>
    %358 = vector.shape_cast %357 : vector<1x64x49xbf16> to vector<64x49xbf16>
    %cst_335 = arith.constant dense<0.000000e+00> : vector<1x49xf32>
    %359 = tpu.matmul %256, %358, %cst_335 {dimension_numbers = #tpu.dot_dimension_numbers<[1], [0], [0], [1], [0, 0, 1, 1], [], []>} : vector<1x64xbf16>, vector<64x49xbf16>, vector<1x49xf32> -> vector<1x49xf32>
    %c10_336 = arith.constant 10 : index
    %c0_337 = arith.constant 0 : index
    %360 = vector.load %arg12[%c10_336, %c0_337] : memref<32x1xf32, #tpu.memory_space<vmem>>, vector<1x1xf32>
    %361 = vector.broadcast %360 : vector<1x1xf32> to vector<1x49xf32>
    %362 = arith.addf %359, %361 : vector<1x49xf32>
    %cst_338 = arith.constant 0.000000e+00 : f32
    %363 = vector.broadcast %cst_338 : f32 to vector<1x49xf32>
    %364 = arith.maximumf %362, %363 : vector<1x49xf32>
    %365 = arith.truncf %364 : vector<1x49xf32> to vector<1x49xbf16>
    %c10_339 = arith.constant 10 : index
    %c0_340 = arith.constant 0 : index
    %366 = vector.load %arg20[%c10_339, %c0_340] : memref<32x64xbf16, #tpu.memory_space<vmem>>, vector<1x49xbf16>
    tpu.vector_store %arg20[%c10_339, %c0_340], %365 {strides = array<i32>} : memref<32x64xbf16, #tpu.memory_space<vmem>>, vector<1x49xbf16>,
    %c11_341 = arith.constant 11 : index
    %c0_342 = arith.constant 0 : index
    %c0_343 = arith.constant 0 : index
    %367 = vector.load %arg11[%c11_341, %c0_342, %c0_343] : memref<32x64x49xbf16, #tpu.memory_space<vmem>>, vector<1x64x49xbf16>
    %368 = vector.shape_cast %367 : vector<1x64x49xbf16> to vector<64x49xbf16>
    %cst_344 = arith.constant dense<0.000000e+00> : vector<1x49xf32>
    %369 = tpu.matmul %256, %368, %cst_344 {dimension_numbers = #tpu.dot_dimension_numbers<[1], [0], [0], [1], [0, 0, 1, 1], [], []>} : vector<1x64xbf16>, vector<64x49xbf16>, vector<1x49xf32> -> vector<1x49xf32>
    %c11_345 = arith.constant 11 : index
    %c0_346 = arith.constant 0 : index
    %370 = vector.load %arg12[%c11_345, %c0_346] : memref<32x1xf32, #tpu.memory_space<vmem>>, vector<1x1xf32>
    %371 = vector.broadcast %370 : vector<1x1xf32> to vector<1x49xf32>
    %372 = arith.addf %369, %371 : vector<1x49xf32>
    %cst_347 = arith.constant 0.000000e+00 : f32
    %373 = vector.broadcast %cst_347 : f32 to vector<1x49xf32>
    %374 = arith.maximumf %372, %373 : vector<1x49xf32>
    %375 = arith.truncf %374 : vector<1x49xf32> to vector<1x49xbf16>
    %c11_348 = arith.constant 11 : index
    %c0_349 = arith.constant 0 : index
    %376 = vector.load %arg20[%c11_348, %c0_349] : memref<32x64xbf16, #tpu.memory_space<vmem>>, vector<1x49xbf16>
    tpu.vector_store %arg20[%c11_348, %c0_349], %375 {strides = array<i32>} : memref<32x64xbf16, #tpu.memory_space<vmem>>, vector<1x49xbf16>,
    %c12_350 = arith.constant 12 : index
    %c0_351 = arith.constant 0 : index
    %c0_352 = arith.constant 0 : index
    %377 = vector.load %arg11[%c12_350, %c0_351, %c0_352] : memref<32x64x49xbf16, #tpu.memory_space<vmem>>, vector<1x64x49xbf16>
    %378 = vector.shape_cast %377 : vector<1x64x49xbf16> to vector<64x49xbf16>
    %cst_353 = arith.constant dense<0.000000e+00> : vector<1x49xf32>
    %379 = tpu.matmul %256, %378, %cst_353 {dimension_numbers = #tpu.dot_dimension_numbers<[1], [0], [0], [1], [0, 0, 1, 1], [], []>} : vector<1x64xbf16>, vector<64x49xbf16>, vector<1x49xf32> -> vector<1x49xf32>
    %c12_354 = arith.constant 12 : index
    %c0_355 = arith.constant 0 : index
    %380 = vector.load %arg12[%c12_354, %c0_355] : memref<32x1xf32, #tpu.memory_space<vmem>>, vector<1x1xf32>
    %381 = vector.broadcast %380 : vector<1x1xf32> to vector<1x49xf32>
    %382 = arith.addf %379, %381 : vector<1x49xf32>
    %cst_356 = arith.constant 0.000000e+00 : f32
    %383 = vector.broadcast %cst_356 : f32 to vector<1x49xf32>
    %384 = arith.maximumf %382, %383 : vector<1x49xf32>
    %385 = arith.truncf %384 : vector<1x49xf32> to vector<1x49xbf16>
    %c12_357 = arith.constant 12 : index
    %c0_358 = arith.constant 0 : index
    %386 = vector.load %arg20[%c12_357, %c0_358] : memref<32x64xbf16, #tpu.memory_space<vmem>>, vector<1x49xbf16>
    tpu.vector_store %arg20[%c12_357, %c0_358], %385 {strides = array<i32>} : memref<32x64xbf16, #tpu.memory_space<vmem>>, vector<1x49xbf16>,
    %c13_359 = arith.constant 13 : index
    %c0_360 = arith.constant 0 : index
    %c0_361 = arith.constant 0 : index
    %387 = vector.load %arg11[%c13_359, %c0_360, %c0_361] : memref<32x64x49xbf16, #tpu.memory_space<vmem>>, vector<1x64x49xbf16>
    %388 = vector.shape_cast %387 : vector<1x64x49xbf16> to vector<64x49xbf16>
    %cst_362 = arith.constant dense<0.000000e+00> : vector<1x49xf32>
    %389 = tpu.matmul %256, %388, %cst_362 {dimension_numbers = #tpu.dot_dimension_numbers<[1], [0], [0], [1], [0, 0, 1, 1], [], []>} : vector<1x64xbf16>, vector<64x49xbf16>, vector<1x49xf32> -> vector<1x49xf32>
    %c13_363 = arith.constant 13 : index
    %c0_364 = arith.constant 0 : index
    %390 = vector.load %arg12[%c13_363, %c0_364] : memref<32x1xf32, #tpu.memory_space<vmem>>, vector<1x1xf32>
    %391 = vector.broadcast %390 : vector<1x1xf32> to vector<1x49xf32>
    %392 = arith.addf %389, %391 : vector<1x49xf32>
    %cst_365 = arith.constant 0.000000e+00 : f32
    %393 = vector.broadcast %cst_365 : f32 to vector<1x49xf32>
    %394 = arith.maximumf %392, %393 : vector<1x49xf32>
    %395 = arith.truncf %394 : vector<1x49xf32> to vector<1x49xbf16>
    %c13_366 = arith.constant 13 : index
    %c0_367 = arith.constant 0 : index
    %396 = vector.load %arg20[%c13_366, %c0_367] : memref<32x64xbf16, #tpu.memory_space<vmem>>, vector<1x49xbf16>
    tpu.vector_store %arg20[%c13_366, %c0_367], %395 {strides = array<i32>} : memref<32x64xbf16, #tpu.memory_space<vmem>>, vector<1x49xbf16>,
    %c14_368 = arith.constant 14 : index
    %c0_369 = arith.constant 0 : index
    %c0_370 = arith.constant 0 : index
    %397 = vector.load %arg11[%c14_368, %c0_369, %c0_370] : memref<32x64x49xbf16, #tpu.memory_space<vmem>>, vector<1x64x49xbf16>
    %398 = vector.shape_cast %397 : vector<1x64x49xbf16> to vector<64x49xbf16>
    %cst_371 = arith.constant dense<0.000000e+00> : vector<1x49xf32>
    %399 = tpu.matmul %256, %398, %cst_371 {dimension_numbers = #tpu.dot_dimension_numbers<[1], [0], [0], [1], [0, 0, 1, 1], [], []>} : vector<1x64xbf16>, vector<64x49xbf16>, vector<1x49xf32> -> vector<1x49xf32>
    %c14_372 = arith.constant 14 : index
    %c0_373 = arith.constant 0 : index
    %400 = vector.load %arg12[%c14_372, %c0_373] : memref<32x1xf32, #tpu.memory_space<vmem>>, vector<1x1xf32>
    %401 = vector.broadcast %400 : vector<1x1xf32> to vector<1x49xf32>
    %402 = arith.addf %399, %401 : vector<1x49xf32>
    %cst_374 = arith.constant 0.000000e+00 : f32
    %403 = vector.broadcast %cst_374 : f32 to vector<1x49xf32>
    %404 = arith.maximumf %402, %403 : vector<1x49xf32>
    %405 = arith.truncf %404 : vector<1x49xf32> to vector<1x49xbf16>
    %c14_375 = arith.constant 14 : index
    %c0_376 = arith.constant 0 : index
    %406 = vector.load %arg20[%c14_375, %c0_376] : memref<32x64xbf16, #tpu.memory_space<vmem>>, vector<1x49xbf16>
    tpu.vector_store %arg20[%c14_375, %c0_376], %405 {strides = array<i32>} : memref<32x64xbf16, #tpu.memory_space<vmem>>, vector<1x49xbf16>,
    %c15_377 = arith.constant 15 : index
    %c0_378 = arith.constant 0 : index
    %c0_379 = arith.constant 0 : index
    %407 = vector.load %arg11[%c15_377, %c0_378, %c0_379] : memref<32x64x49xbf16, #tpu.memory_space<vmem>>, vector<1x64x49xbf16>
    %408 = vector.shape_cast %407 : vector<1x64x49xbf16> to vector<64x49xbf16>
    %cst_380 = arith.constant dense<0.000000e+00> : vector<1x49xf32>
    %409 = tpu.matmul %256, %408, %cst_380 {dimension_numbers = #tpu.dot_dimension_numbers<[1], [0], [0], [1], [0, 0, 1, 1], [], []>} : vector<1x64xbf16>, vector<64x49xbf16>, vector<1x49xf32> -> vector<1x49xf32>
    %c15_381 = arith.constant 15 : index
    %c0_382 = arith.constant 0 : index
    %410 = vector.load %arg12[%c15_381, %c0_382] : memref<32x1xf32, #tpu.memory_space<vmem>>, vector<1x1xf32>
    %411 = vector.broadcast %410 : vector<1x1xf32> to vector<1x49xf32>
    %412 = arith.addf %409, %411 : vector<1x49xf32>
    %cst_383 = arith.constant 0.000000e+00 : f32
    %413 = vector.broadcast %cst_383 : f32 to vector<1x49xf32>
    %414 = arith.maximumf %412, %413 : vector<1x49xf32>
    %415 = arith.truncf %414 : vector<1x49xf32> to vector<1x49xbf16>
    %c15_384 = arith.constant 15 : index
    %c0_385 = arith.constant 0 : index
    %416 = vector.load %arg20[%c15_384, %c0_385] : memref<32x64xbf16, #tpu.memory_space<vmem>>, vector<1x49xbf16>
    tpu.vector_store %arg20[%c15_384, %c0_385], %415 {strides = array<i32>} : memref<32x64xbf16, #tpu.memory_space<vmem>>, vector<1x49xbf16>,
    %c16_386 = arith.constant 16 : index
    %c0_387 = arith.constant 0 : index
    %c0_388 = arith.constant 0 : index
    %417 = vector.load %arg11[%c16_386, %c0_387, %c0_388] : memref<32x64x49xbf16, #tpu.memory_space<vmem>>, vector<1x64x49xbf16>
    %418 = vector.shape_cast %417 : vector<1x64x49xbf16> to vector<64x49xbf16>
    %cst_389 = arith.constant dense<0.000000e+00> : vector<1x49xf32>
    %419 = tpu.matmul %256, %418, %cst_389 {dimension_numbers = #tpu.dot_dimension_numbers<[1], [0], [0], [1], [0, 0, 1, 1], [], []>} : vector<1x64xbf16>, vector<64x49xbf16>, vector<1x49xf32> -> vector<1x49xf32>
    %c16_390 = arith.constant 16 : index
    %c0_391 = arith.constant 0 : index
    %420 = vector.load %arg12[%c16_390, %c0_391] : memref<32x1xf32, #tpu.memory_space<vmem>>, vector<1x1xf32>
    %421 = vector.broadcast %420 : vector<1x1xf32> to vector<1x49xf32>
    %422 = arith.addf %419, %421 : vector<1x49xf32>
    %cst_392 = arith.constant 0.000000e+00 : f32
    %423 = vector.broadcast %cst_392 : f32 to vector<1x49xf32>
    %424 = arith.maximumf %422, %423 : vector<1x49xf32>
    %425 = arith.truncf %424 : vector<1x49xf32> to vector<1x49xbf16>
    %c16_393 = arith.constant 16 : index
    %c0_394 = arith.constant 0 : index
    %426 = vector.load %arg20[%c16_393, %c0_394] : memref<32x64xbf16, #tpu.memory_space<vmem>>, vector<1x49xbf16>
    tpu.vector_store %arg20[%c16_393, %c0_394], %425 {strides = array<i32>} : memref<32x64xbf16, #tpu.memory_space<vmem>>, vector<1x49xbf16>,
    %c17_395 = arith.constant 17 : index
    %c0_396 = arith.constant 0 : index
    %c0_397 = arith.constant 0 : index
    %427 = vector.load %arg11[%c17_395, %c0_396, %c0_397] : memref<32x64x49xbf16, #tpu.memory_space<vmem>>, vector<1x64x49xbf16>
    %428 = vector.shape_cast %427 : vector<1x64x49xbf16> to vector<64x49xbf16>
    %cst_398 = arith.constant dense<0.000000e+00> : vector<1x49xf32>
    %429 = tpu.matmul %256, %428, %cst_398 {dimension_numbers = #tpu.dot_dimension_numbers<[1], [0], [0], [1], [0, 0, 1, 1], [], []>} : vector<1x64xbf16>, vector<64x49xbf16>, vector<1x49xf32> -> vector<1x49xf32>
    %c17_399 = arith.constant 17 : index
    %c0_400 = arith.constant 0 : index
    %430 = vector.load %arg12[%c17_399, %c0_400] : memref<32x1xf32, #tpu.memory_space<vmem>>, vector<1x1xf32>
    %431 = vector.broadcast %430 : vector<1x1xf32> to vector<1x49xf32>
    %432 = arith.addf %429, %431 : vector<1x49xf32>
    %cst_401 = arith.constant 0.000000e+00 : f32
    %433 = vector.broadcast %cst_401 : f32 to vector<1x49xf32>
    %434 = arith.maximumf %432, %433 : vector<1x49xf32>
    %435 = arith.truncf %434 : vector<1x49xf32> to vector<1x49xbf16>
    %c17_402 = arith.constant 17 : index
    %c0_403 = arith.constant 0 : index
    %436 = vector.load %arg20[%c17_402, %c0_403] : memref<32x64xbf16, #tpu.memory_space<vmem>>, vector<1x49xbf16>
    tpu.vector_store %arg20[%c17_402, %c0_403], %435 {strides = array<i32>} : memref<32x64xbf16, #tpu.memory_space<vmem>>, vector<1x49xbf16>,
    %c18_404 = arith.constant 18 : index
    %c0_405 = arith.constant 0 : index
    %c0_406 = arith.constant 0 : index
    %437 = vector.load %arg11[%c18_404, %c0_405, %c0_406] : memref<32x64x49xbf16, #tpu.memory_space<vmem>>, vector<1x64x49xbf16>
    %438 = vector.shape_cast %437 : vector<1x64x49xbf16> to vector<64x49xbf16>
    %cst_407 = arith.constant dense<0.000000e+00> : vector<1x49xf32>
    %439 = tpu.matmul %256, %438, %cst_407 {dimension_numbers = #tpu.dot_dimension_numbers<[1], [0], [0], [1], [0, 0, 1, 1], [], []>} : vector<1x64xbf16>, vector<64x49xbf16>, vector<1x49xf32> -> vector<1x49xf32>
    %c18_408 = arith.constant 18 : index
    %c0_409 = arith.constant 0 : index
    %440 = vector.load %arg12[%c18_408, %c0_409] : memref<32x1xf32, #tpu.memory_space<vmem>>, vector<1x1xf32>
    %441 = vector.broadcast %440 : vector<1x1xf32> to vector<1x49xf32>
    %442 = arith.addf %439, %441 : vector<1x49xf32>
    %cst_410 = arith.constant 0.000000e+00 : f32
    %443 = vector.broadcast %cst_410 : f32 to vector<1x49xf32>
    %444 = arith.maximumf %442, %443 : vector<1x49xf32>
    %445 = arith.truncf %444 : vector<1x49xf32> to vector<1x49xbf16>
    %c18_411 = arith.constant 18 : index
    %c0_412 = arith.constant 0 : index
    %446 = vector.load %arg20[%c18_411, %c0_412] : memref<32x64xbf16, #tpu.memory_space<vmem>>, vector<1x49xbf16>
    tpu.vector_store %arg20[%c18_411, %c0_412], %445 {strides = array<i32>} : memref<32x64xbf16, #tpu.memory_space<vmem>>, vector<1x49xbf16>,
    %c19_413 = arith.constant 19 : index
    %c0_414 = arith.constant 0 : index
    %c0_415 = arith.constant 0 : index
    %447 = vector.load %arg11[%c19_413, %c0_414, %c0_415] : memref<32x64x49xbf16, #tpu.memory_space<vmem>>, vector<1x64x49xbf16>
    %448 = vector.shape_cast %447 : vector<1x64x49xbf16> to vector<64x49xbf16>
    %cst_416 = arith.constant dense<0.000000e+00> : vector<1x49xf32>
    %449 = tpu.matmul %256, %448, %cst_416 {dimension_numbers = #tpu.dot_dimension_numbers<[1], [0], [0], [1], [0, 0, 1, 1], [], []>} : vector<1x64xbf16>, vector<64x49xbf16>, vector<1x49xf32> -> vector<1x49xf32>
    %c19_417 = arith.constant 19 : index
    %c0_418 = arith.constant 0 : index
    %450 = vector.load %arg12[%c19_417, %c0_418] : memref<32x1xf32, #tpu.memory_space<vmem>>, vector<1x1xf32>
    %451 = vector.broadcast %450 : vector<1x1xf32> to vector<1x49xf32>
    %452 = arith.addf %449, %451 : vector<1x49xf32>
    %cst_419 = arith.constant 0.000000e+00 : f32
    %453 = vector.broadcast %cst_419 : f32 to vector<1x49xf32>
    %454 = arith.maximumf %452, %453 : vector<1x49xf32>
    %455 = arith.truncf %454 : vector<1x49xf32> to vector<1x49xbf16>
    %c19_420 = arith.constant 19 : index
    %c0_421 = arith.constant 0 : index
    %456 = vector.load %arg20[%c19_420, %c0_421] : memref<32x64xbf16, #tpu.memory_space<vmem>>, vector<1x49xbf16>
    tpu.vector_store %arg20[%c19_420, %c0_421], %455 {strides = array<i32>} : memref<32x64xbf16, #tpu.memory_space<vmem>>, vector<1x49xbf16>,
    %c20_422 = arith.constant 20 : index
    %c0_423 = arith.constant 0 : index
    %c0_424 = arith.constant 0 : index
    %457 = vector.load %arg11[%c20_422, %c0_423, %c0_424] : memref<32x64x49xbf16, #tpu.memory_space<vmem>>, vector<1x64x49xbf16>
    %458 = vector.shape_cast %457 : vector<1x64x49xbf16> to vector<64x49xbf16>
    %cst_425 = arith.constant dense<0.000000e+00> : vector<1x49xf32>
    %459 = tpu.matmul %256, %458, %cst_425 {dimension_numbers = #tpu.dot_dimension_numbers<[1], [0], [0], [1], [0, 0, 1, 1], [], []>} : vector<1x64xbf16>, vector<64x49xbf16>, vector<1x49xf32> -> vector<1x49xf32>
    %c20_426 = arith.constant 20 : index
    %c0_427 = arith.constant 0 : index
    %460 = vector.load %arg12[%c20_426, %c0_427] : memref<32x1xf32, #tpu.memory_space<vmem>>, vector<1x1xf32>
    %461 = vector.broadcast %460 : vector<1x1xf32> to vector<1x49xf32>
    %462 = arith.addf %459, %461 : vector<1x49xf32>
    %cst_428 = arith.constant 0.000000e+00 : f32
    %463 = vector.broadcast %cst_428 : f32 to vector<1x49xf32>
    %464 = arith.maximumf %462, %463 : vector<1x49xf32>
    %465 = arith.truncf %464 : vector<1x49xf32> to vector<1x49xbf16>
    %c20_429 = arith.constant 20 : index
    %c0_430 = arith.constant 0 : index
    %466 = vector.load %arg20[%c20_429, %c0_430] : memref<32x64xbf16, #tpu.memory_space<vmem>>, vector<1x49xbf16>
    tpu.vector_store %arg20[%c20_429, %c0_430], %465 {strides = array<i32>} : memref<32x64xbf16, #tpu.memory_space<vmem>>, vector<1x49xbf16>,
    %c21_431 = arith.constant 21 : index
    %c0_432 = arith.constant 0 : index
    %c0_433 = arith.constant 0 : index
    %467 = vector.load %arg11[%c21_431, %c0_432, %c0_433] : memref<32x64x49xbf16, #tpu.memory_space<vmem>>, vector<1x64x49xbf16>
    %468 = vector.shape_cast %467 : vector<1x64x49xbf16> to vector<64x49xbf16>
    %cst_434 = arith.constant dense<0.000000e+00> : vector<1x49xf32>
    %469 = tpu.matmul %256, %468, %cst_434 {dimension_numbers = #tpu.dot_dimension_numbers<[1], [0], [0], [1], [0, 0, 1, 1], [], []>} : vector<1x64xbf16>, vector<64x49xbf16>, vector<1x49xf32> -> vector<1x49xf32>
    %c21_435 = arith.constant 21 : index
    %c0_436 = arith.constant 0 : index
    %470 = vector.load %arg12[%c21_435, %c0_436] : memref<32x1xf32, #tpu.memory_space<vmem>>, vector<1x1xf32>
    %471 = vector.broadcast %470 : vector<1x1xf32> to vector<1x49xf32>
    %472 = arith.addf %469, %471 : vector<1x49xf32>
    %cst_437 = arith.constant 0.000000e+00 : f32
    %473 = vector.broadcast %cst_437 : f32 to vector<1x49xf32>
    %474 = arith.maximumf %472, %473 : vector<1x49xf32>
    %475 = arith.truncf %474 : vector<1x49xf32> to vector<1x49xbf16>
    %c21_438 = arith.constant 21 : index
    %c0_439 = arith.constant 0 : index
    %476 = vector.load %arg20[%c21_438, %c0_439] : memref<32x64xbf16, #tpu.memory_space<vmem>>, vector<1x49xbf16>
    tpu.vector_store %arg20[%c21_438, %c0_439], %475 {strides = array<i32>} : memref<32x64xbf16, #tpu.memory_space<vmem>>, vector<1x49xbf16>,
    %c22_440 = arith.constant 22 : index
    %c0_441 = arith.constant 0 : index
    %c0_442 = arith.constant 0 : index
    %477 = vector.load %arg11[%c22_440, %c0_441, %c0_442] : memref<32x64x49xbf16, #tpu.memory_space<vmem>>, vector<1x64x49xbf16>
    %478 = vector.shape_cast %477 : vector<1x64x49xbf16> to vector<64x49xbf16>
    %cst_443 = arith.constant dense<0.000000e+00> : vector<1x49xf32>
    %479 = tpu.matmul %256, %478, %cst_443 {dimension_numbers = #tpu.dot_dimension_numbers<[1], [0], [0], [1], [0, 0, 1, 1], [], []>} : vector<1x64xbf16>, vector<64x49xbf16>, vector<1x49xf32> -> vector<1x49xf32>
    %c22_444 = arith.constant 22 : index
    %c0_445 = arith.constant 0 : index
    %480 = vector.load %arg12[%c22_444, %c0_445] : memref<32x1xf32, #tpu.memory_space<vmem>>, vector<1x1xf32>
    %481 = vector.broadcast %480 : vector<1x1xf32> to vector<1x49xf32>
    %482 = arith.addf %479, %481 : vector<1x49xf32>
    %cst_446 = arith.constant 0.000000e+00 : f32
    %483 = vector.broadcast %cst_446 : f32 to vector<1x49xf32>
    %484 = arith.maximumf %482, %483 : vector<1x49xf32>
    %485 = arith.truncf %484 : vector<1x49xf32> to vector<1x49xbf16>
    %c22_447 = arith.constant 22 : index
    %c0_448 = arith.constant 0 : index
    %486 = vector.load %arg20[%c22_447, %c0_448] : memref<32x64xbf16, #tpu.memory_space<vmem>>, vector<1x49xbf16>
    tpu.vector_store %arg20[%c22_447, %c0_448], %485 {strides = array<i32>} : memref<32x64xbf16, #tpu.memory_space<vmem>>, vector<1x49xbf16>,
    %c23_449 = arith.constant 23 : index
    %c0_450 = arith.constant 0 : index
    %c0_451 = arith.constant 0 : index
    %487 = vector.load %arg11[%c23_449, %c0_450, %c0_451] : memref<32x64x49xbf16, #tpu.memory_space<vmem>>, vector<1x64x49xbf16>
    %488 = vector.shape_cast %487 : vector<1x64x49xbf16> to vector<64x49xbf16>
    %cst_452 = arith.constant dense<0.000000e+00> : vector<1x49xf32>
    %489 = tpu.matmul %256, %488, %cst_452 {dimension_numbers = #tpu.dot_dimension_numbers<[1], [0], [0], [1], [0, 0, 1, 1], [], []>} : vector<1x64xbf16>, vector<64x49xbf16>, vector<1x49xf32> -> vector<1x49xf32>
    %c23_453 = arith.constant 23 : index
    %c0_454 = arith.constant 0 : index
    %490 = vector.load %arg12[%c23_453, %c0_454] : memref<32x1xf32, #tpu.memory_space<vmem>>, vector<1x1xf32>
    %491 = vector.broadcast %490 : vector<1x1xf32> to vector<1x49xf32>
    %492 = arith.addf %489, %491 : vector<1x49xf32>
    %cst_455 = arith.constant 0.000000e+00 : f32
    %493 = vector.broadcast %cst_455 : f32 to vector<1x49xf32>
    %494 = arith.maximumf %492, %493 : vector<1x49xf32>
    %495 = arith.truncf %494 : vector<1x49xf32> to vector<1x49xbf16>
    %c23_456 = arith.constant 23 : index
    %c0_457 = arith.constant 0 : index
    %496 = vector.load %arg20[%c23_456, %c0_457] : memref<32x64xbf16, #tpu.memory_space<vmem>>, vector<1x49xbf16>
    tpu.vector_store %arg20[%c23_456, %c0_457], %495 {strides = array<i32>} : memref<32x64xbf16, #tpu.memory_space<vmem>>, vector<1x49xbf16>,
    %c24_458 = arith.constant 24 : index
    %c0_459 = arith.constant 0 : index
    %c0_460 = arith.constant 0 : index
    %497 = vector.load %arg11[%c24_458, %c0_459, %c0_460] : memref<32x64x49xbf16, #tpu.memory_space<vmem>>, vector<1x64x49xbf16>
    %498 = vector.shape_cast %497 : vector<1x64x49xbf16> to vector<64x49xbf16>
    %cst_461 = arith.constant dense<0.000000e+00> : vector<1x49xf32>
    %499 = tpu.matmul %256, %498, %cst_461 {dimension_numbers = #tpu.dot_dimension_numbers<[1], [0], [0], [1], [0, 0, 1, 1], [], []>} : vector<1x64xbf16>, vector<64x49xbf16>, vector<1x49xf32> -> vector<1x49xf32>
    %c24_462 = arith.constant 24 : index
    %c0_463 = arith.constant 0 : index
    %500 = vector.load %arg12[%c24_462, %c0_463] : memref<32x1xf32, #tpu.memory_space<vmem>>, vector<1x1xf32>
    %501 = vector.broadcast %500 : vector<1x1xf32> to vector<1x49xf32>
    %502 = arith.addf %499, %501 : vector<1x49xf32>
    %cst_464 = arith.constant 0.000000e+00 : f32
    %503 = vector.broadcast %cst_464 : f32 to vector<1x49xf32>
    %504 = arith.maximumf %502, %503 : vector<1x49xf32>
    %505 = arith.truncf %504 : vector<1x49xf32> to vector<1x49xbf16>
    %c24_465 = arith.constant 24 : index
    %c0_466 = arith.constant 0 : index
    %506 = vector.load %arg20[%c24_465, %c0_466] : memref<32x64xbf16, #tpu.memory_space<vmem>>, vector<1x49xbf16>
    tpu.vector_store %arg20[%c24_465, %c0_466], %505 {strides = array<i32>} : memref<32x64xbf16, #tpu.memory_space<vmem>>, vector<1x49xbf16>,
    %c25_467 = arith.constant 25 : index
    %c0_468 = arith.constant 0 : index
    %c0_469 = arith.constant 0 : index
    %507 = vector.load %arg11[%c25_467, %c0_468, %c0_469] : memref<32x64x49xbf16, #tpu.memory_space<vmem>>, vector<1x64x49xbf16>
    %508 = vector.shape_cast %507 : vector<1x64x49xbf16> to vector<64x49xbf16>
    %cst_470 = arith.constant dense<0.000000e+00> : vector<1x49xf32>
    %509 = tpu.matmul %256, %508, %cst_470 {dimension_numbers = #tpu.dot_dimension_numbers<[1], [0], [0], [1], [0, 0, 1, 1], [], []>} : vector<1x64xbf16>, vector<64x49xbf16>, vector<1x49xf32> -> vector<1x49xf32>
    %c25_471 = arith.constant 25 : index
    %c0_472 = arith.constant 0 : index
    %510 = vector.load %arg12[%c25_471, %c0_472] : memref<32x1xf32, #tpu.memory_space<vmem>>, vector<1x1xf32>
    %511 = vector.broadcast %510 : vector<1x1xf32> to vector<1x49xf32>
    %512 = arith.addf %509, %511 : vector<1x49xf32>
    %cst_473 = arith.constant 0.000000e+00 : f32
    %513 = vector.broadcast %cst_473 : f32 to vector<1x49xf32>
    %514 = arith.maximumf %512, %513 : vector<1x49xf32>
    %515 = arith.truncf %514 : vector<1x49xf32> to vector<1x49xbf16>
    %c25_474 = arith.constant 25 : index
    %c0_475 = arith.constant 0 : index
    %516 = vector.load %arg20[%c25_474, %c0_475] : memref<32x64xbf16, #tpu.memory_space<vmem>>, vector<1x49xbf16>
    tpu.vector_store %arg20[%c25_474, %c0_475], %515 {strides = array<i32>} : memref<32x64xbf16, #tpu.memory_space<vmem>>, vector<1x49xbf16>,
    %c26_476 = arith.constant 26 : index
    %c0_477 = arith.constant 0 : index
    %c0_478 = arith.constant 0 : index
    %517 = vector.load %arg11[%c26_476, %c0_477, %c0_478] : memref<32x64x49xbf16, #tpu.memory_space<vmem>>, vector<1x64x49xbf16>
    %518 = vector.shape_cast %517 : vector<1x64x49xbf16> to vector<64x49xbf16>
    %cst_479 = arith.constant dense<0.000000e+00> : vector<1x49xf32>
    %519 = tpu.matmul %256, %518, %cst_479 {dimension_numbers = #tpu.dot_dimension_numbers<[1], [0], [0], [1], [0, 0, 1, 1], [], []>} : vector<1x64xbf16>, vector<64x49xbf16>, vector<1x49xf32> -> vector<1x49xf32>
    %c26_480 = arith.constant 26 : index
    %c0_481 = arith.constant 0 : index
    %520 = vector.load %arg12[%c26_480, %c0_481] : memref<32x1xf32, #tpu.memory_space<vmem>>, vector<1x1xf32>
    %521 = vector.broadcast %520 : vector<1x1xf32> to vector<1x49xf32>
    %522 = arith.addf %519, %521 : vector<1x49xf32>
    %cst_482 = arith.constant 0.000000e+00 : f32
    %523 = vector.broadcast %cst_482 : f32 to vector<1x49xf32>
    %524 = arith.maximumf %522, %523 : vector<1x49xf32>
    %525 = arith.truncf %524 : vector<1x49xf32> to vector<1x49xbf16>
    %c26_483 = arith.constant 26 : index
    %c0_484 = arith.constant 0 : index
    %526 = vector.load %arg20[%c26_483, %c0_484] : memref<32x64xbf16, #tpu.memory_space<vmem>>, vector<1x49xbf16>
    tpu.vector_store %arg20[%c26_483, %c0_484], %525 {strides = array<i32>} : memref<32x64xbf16, #tpu.memory_space<vmem>>, vector<1x49xbf16>,
    %c27_485 = arith.constant 27 : index
    %c0_486 = arith.constant 0 : index
    %c0_487 = arith.constant 0 : index
    %527 = vector.load %arg11[%c27_485, %c0_486, %c0_487] : memref<32x64x49xbf16, #tpu.memory_space<vmem>>, vector<1x64x49xbf16>
    %528 = vector.shape_cast %527 : vector<1x64x49xbf16> to vector<64x49xbf16>
    %cst_488 = arith.constant dense<0.000000e+00> : vector<1x49xf32>
    %529 = tpu.matmul %256, %528, %cst_488 {dimension_numbers = #tpu.dot_dimension_numbers<[1], [0], [0], [1], [0, 0, 1, 1], [], []>} : vector<1x64xbf16>, vector<64x49xbf16>, vector<1x49xf32> -> vector<1x49xf32>
    %c27_489 = arith.constant 27 : index
    %c0_490 = arith.constant 0 : index
    %530 = vector.load %arg12[%c27_489, %c0_490] : memref<32x1xf32, #tpu.memory_space<vmem>>, vector<1x1xf32>
    %531 = vector.broadcast %530 : vector<1x1xf32> to vector<1x49xf32>
    %532 = arith.addf %529, %531 : vector<1x49xf32>
    %cst_491 = arith.constant 0.000000e+00 : f32
    %533 = vector.broadcast %cst_491 : f32 to vector<1x49xf32>
    %534 = arith.maximumf %532, %533 : vector<1x49xf32>
    %535 = arith.truncf %534 : vector<1x49xf32> to vector<1x49xbf16>
    %c27_492 = arith.constant 27 : index
    %c0_493 = arith.constant 0 : index
    %536 = vector.load %arg20[%c27_492, %c0_493] : memref<32x64xbf16, #tpu.memory_space<vmem>>, vector<1x49xbf16>
    tpu.vector_store %arg20[%c27_492, %c0_493], %535 {strides = array<i32>} : memref<32x64xbf16, #tpu.memory_space<vmem>>, vector<1x49xbf16>,
    %c28_494 = arith.constant 28 : index
    %c0_495 = arith.constant 0 : index
    %c0_496 = arith.constant 0 : index
    %537 = vector.load %arg11[%c28_494, %c0_495, %c0_496] : memref<32x64x49xbf16, #tpu.memory_space<vmem>>, vector<1x64x49xbf16>
    %538 = vector.shape_cast %537 : vector<1x64x49xbf16> to vector<64x49xbf16>
    %cst_497 = arith.constant dense<0.000000e+00> : vector<1x49xf32>
    %539 = tpu.matmul %256, %538, %cst_497 {dimension_numbers = #tpu.dot_dimension_numbers<[1], [0], [0], [1], [0, 0, 1, 1], [], []>} : vector<1x64xbf16>, vector<64x49xbf16>, vector<1x49xf32> -> vector<1x49xf32>
    %c28_498 = arith.constant 28 : index
    %c0_499 = arith.constant 0 : index
    %540 = vector.load %arg12[%c28_498, %c0_499] : memref<32x1xf32, #tpu.memory_space<vmem>>, vector<1x1xf32>
    %541 = vector.broadcast %540 : vector<1x1xf32> to vector<1x49xf32>
    %542 = arith.addf %539, %541 : vector<1x49xf32>
    %cst_500 = arith.constant 0.000000e+00 : f32
    %543 = vector.broadcast %cst_500 : f32 to vector<1x49xf32>
    %544 = arith.maximumf %542, %543 : vector<1x49xf32>
    %545 = arith.truncf %544 : vector<1x49xf32> to vector<1x49xbf16>
    %c28_501 = arith.constant 28 : index
    %c0_502 = arith.constant 0 : index
    %546 = vector.load %arg20[%c28_501, %c0_502] : memref<32x64xbf16, #tpu.memory_space<vmem>>, vector<1x49xbf16>
    tpu.vector_store %arg20[%c28_501, %c0_502], %545 {strides = array<i32>} : memref<32x64xbf16, #tpu.memory_space<vmem>>, vector<1x49xbf16>,
    %c29_503 = arith.constant 29 : index
    %c0_504 = arith.constant 0 : index
    %c0_505 = arith.constant 0 : index
    %547 = vector.load %arg11[%c29_503, %c0_504, %c0_505] : memref<32x64x49xbf16, #tpu.memory_space<vmem>>, vector<1x64x49xbf16>
    %548 = vector.shape_cast %547 : vector<1x64x49xbf16> to vector<64x49xbf16>
    %cst_506 = arith.constant dense<0.000000e+00> : vector<1x49xf32>
    %549 = tpu.matmul %256, %548, %cst_506 {dimension_numbers = #tpu.dot_dimension_numbers<[1], [0], [0], [1], [0, 0, 1, 1], [], []>} : vector<1x64xbf16>, vector<64x49xbf16>, vector<1x49xf32> -> vector<1x49xf32>
    %c29_507 = arith.constant 29 : index
    %c0_508 = arith.constant 0 : index
    %550 = vector.load %arg12[%c29_507, %c0_508] : memref<32x1xf32, #tpu.memory_space<vmem>>, vector<1x1xf32>
    %551 = vector.broadcast %550 : vector<1x1xf32> to vector<1x49xf32>
    %552 = arith.addf %549, %551 : vector<1x49xf32>
    %cst_509 = arith.constant 0.000000e+00 : f32
    %553 = vector.broadcast %cst_509 : f32 to vector<1x49xf32>
    %554 = arith.maximumf %552, %553 : vector<1x49xf32>
    %555 = arith.truncf %554 : vector<1x49xf32> to vector<1x49xbf16>
    %c29_510 = arith.constant 29 : index
    %c0_511 = arith.constant 0 : index
    %556 = vector.load %arg20[%c29_510, %c0_511] : memref<32x64xbf16, #tpu.memory_space<vmem>>, vector<1x49xbf16>
    tpu.vector_store %arg20[%c29_510, %c0_511], %555 {strides = array<i32>} : memref<32x64xbf16, #tpu.memory_space<vmem>>, vector<1x49xbf16>,
    %c30_512 = arith.constant 30 : index
    %c0_513 = arith.constant 0 : index
    %c0_514 = arith.constant 0 : index
    %557 = vector.load %arg11[%c30_512, %c0_513, %c0_514] : memref<32x64x49xbf16, #tpu.memory_space<vmem>>, vector<1x64x49xbf16>
    %558 = vector.shape_cast %557 : vector<1x64x49xbf16> to vector<64x49xbf16>
    %cst_515 = arith.constant dense<0.000000e+00> : vector<1x49xf32>
    %559 = tpu.matmul %256, %558, %cst_515 {dimension_numbers = #tpu.dot_dimension_numbers<[1], [0], [0], [1], [0, 0, 1, 1], [], []>} : vector<1x64xbf16>, vector<64x49xbf16>, vector<1x49xf32> -> vector<1x49xf32>
    %c30_516 = arith.constant 30 : index
    %c0_517 = arith.constant 0 : index
    %560 = vector.load %arg12[%c30_516, %c0_517] : memref<32x1xf32, #tpu.memory_space<vmem>>, vector<1x1xf32>
    %561 = vector.broadcast %560 : vector<1x1xf32> to vector<1x49xf32>
    %562 = arith.addf %559, %561 : vector<1x49xf32>
    %cst_518 = arith.constant 0.000000e+00 : f32
    %563 = vector.broadcast %cst_518 : f32 to vector<1x49xf32>
    %564 = arith.maximumf %562, %563 : vector<1x49xf32>
    %565 = arith.truncf %564 : vector<1x49xf32> to vector<1x49xbf16>
    %c30_519 = arith.constant 30 : index
    %c0_520 = arith.constant 0 : index
    %566 = vector.load %arg20[%c30_519, %c0_520] : memref<32x64xbf16, #tpu.memory_space<vmem>>, vector<1x49xbf16>
    tpu.vector_store %arg20[%c30_519, %c0_520], %565 {strides = array<i32>} : memref<32x64xbf16, #tpu.memory_space<vmem>>, vector<1x49xbf16>,
    %c31_521 = arith.constant 31 : index
    %c0_522 = arith.constant 0 : index
    %c0_523 = arith.constant 0 : index
    %567 = vector.load %arg11[%c31_521, %c0_522, %c0_523] : memref<32x64x49xbf16, #tpu.memory_space<vmem>>, vector<1x64x49xbf16>
    %568 = vector.shape_cast %567 : vector<1x64x49xbf16> to vector<64x49xbf16>
    %cst_524 = arith.constant dense<0.000000e+00> : vector<1x49xf32>
    %569 = tpu.matmul %256, %568, %cst_524 {dimension_numbers = #tpu.dot_dimension_numbers<[1], [0], [0], [1], [0, 0, 1, 1], [], []>} : vector<1x64xbf16>, vector<64x49xbf16>, vector<1x49xf32> -> vector<1x49xf32>
    %c31_525 = arith.constant 31 : index
    %c0_526 = arith.constant 0 : index
    %570 = vector.load %arg12[%c31_525, %c0_526] : memref<32x1xf32, #tpu.memory_space<vmem>>, vector<1x1xf32>
    %571 = vector.broadcast %570 : vector<1x1xf32> to vector<1x49xf32>
    %572 = arith.addf %569, %571 : vector<1x49xf32>
    %cst_527 = arith.constant 0.000000e+00 : f32
    %573 = vector.broadcast %cst_527 : f32 to vector<1x49xf32>
    %574 = arith.maximumf %572, %573 : vector<1x49xf32>
    %575 = arith.truncf %574 : vector<1x49xf32> to vector<1x49xbf16>
    %c31_528 = arith.constant 31 : index
    %c0_529 = arith.constant 0 : index
    %576 = vector.load %arg20[%c31_528, %c0_529] : memref<32x64xbf16, #tpu.memory_space<vmem>>, vector<1x49xbf16>
    tpu.vector_store %arg20[%c31_528, %c0_529], %575 {strides = array<i32>} : memref<32x64xbf16, #tpu.memory_space<vmem>>, vector<1x49xbf16>,
    %cst_530 = arith.constant 0.000000e+00 : bf16
    %577 = vector.broadcast %cst_530 : bf16 to vector<32x15xbf16>
    %c0_531 = arith.constant 0 : index
    %c49 = arith.constant 49 : index
    %578 = vector.load %arg20[%c0_531, %c49] : memref<32x64xbf16, #tpu.memory_space<vmem>>, vector<32x15xbf16>
    tpu.vector_store %arg20[%c0_531, %c49], %577 {strides = array<i32>} : memref<32x64xbf16, #tpu.memory_space<vmem>>, vector<32x15xbf16>,
    %c0_532 = arith.constant 0 : index
    %c0_533 = arith.constant 0 : index
    %579 = vector.load %arg20[%c0_532, %c0_533] : memref<32x64xbf16, #tpu.memory_space<vmem>>, vector<32x49xbf16>
    %c0_534 = arith.constant 0 : index
    %c1_535 = arith.constant 1 : index
    %580 = vector.load %arg20[%c0_534, %c1_535] : memref<32x64xbf16, #tpu.memory_space<vmem>>, vector<32x49xbf16>
    %581 = vector.broadcast %2 : vector<1x49xbf16> to vector<32x49xbf16>
    %582 = arith.mulf %580, %581 : vector<32x49xbf16>
    %c0_536 = arith.constant 0 : index
    %c7_537 = arith.constant 7 : index
    %583 = vector.load %arg20[%c0_536, %c7_537] : memref<32x64xbf16, #tpu.memory_space<vmem>>, vector<32x49xbf16>
    %c0_538 = arith.constant 0 : index
    %c8_539 = arith.constant 8 : index
    %584 = vector.load %arg20[%c0_538, %c8_539] : memref<32x64xbf16, #tpu.memory_space<vmem>>, vector<32x49xbf16>
    %585 = vector.broadcast %2 : vector<1x49xbf16> to vector<32x49xbf16>
    %586 = arith.mulf %584, %585 : vector<32x49xbf16>
    %c0_540 = arith.constant 0 : index
    %c0_541 = arith.constant 0 : index
    %587 = vector.load %arg14[%c0_540, %c0_541] : memref<16x1xf32, #tpu.memory_space<vmem>>, vector<16x1xf32>
    %c4_542 = arith.constant 4 : index
    %c0_543 = arith.constant 0 : index
    %c0_544 = arith.constant 0 : index
    %588 = vector.load %arg13[%c4_542, %c0_543, %c0_544] : memref<9x16x32xbf16, #tpu.memory_space<vmem>>, vector<1x16x32xbf16>
    %589 = vector.shape_cast %588 : vector<1x16x32xbf16> to vector<16x32xbf16>
    %cst_545 = arith.constant dense<0.000000e+00> : vector<16x49xf32>
    %590 = tpu.matmul %589, %579, %cst_545 {dimension_numbers = #tpu.dot_dimension_numbers<[1], [0], [0], [1], [0, 0, 1, 1], [], []>} : vector<16x32xbf16>, vector<32x49xbf16>, vector<16x49xf32> -> vector<16x49xf32>
    %591 = vector.broadcast %587 : vector<16x1xf32> to vector<16x49xf32>
    %592 = arith.addf %590, %591 : vector<16x49xf32>
    %cst_546 = arith.constant 0.000000e+00 : f32
    %593 = vector.broadcast %cst_546 : f32 to vector<16x49xf32>
    %594 = arith.maximumf %592, %593 : vector<16x49xf32>
    %c3_547 = arith.constant 3 : index
    %c0_548 = arith.constant 0 : index
    %c0_549 = arith.constant 0 : index
    %595 = vector.load %arg13[%c3_547, %c0_548, %c0_549] : memref<9x16x32xbf16, #tpu.memory_space<vmem>>, vector<1x16x32xbf16>
    %596 = vector.shape_cast %595 : vector<1x16x32xbf16> to vector<16x32xbf16>
    %cst_550 = arith.constant dense<0.000000e+00> : vector<16x49xf32>
    %597 = tpu.matmul %596, %582, %cst_550 {dimension_numbers = #tpu.dot_dimension_numbers<[1], [0], [0], [1], [0, 0, 1, 1], [], []>} : vector<16x32xbf16>, vector<32x49xbf16>, vector<16x49xf32> -> vector<16x49xf32>
    %c5_551 = arith.constant 5 : index
    %c0_552 = arith.constant 0 : index
    %c0_553 = arith.constant 0 : index
    %598 = vector.load %arg13[%c5_551, %c0_552, %c0_553] : memref<9x16x32xbf16, #tpu.memory_space<vmem>>, vector<1x16x32xbf16>
    %599 = vector.shape_cast %598 : vector<1x16x32xbf16> to vector<16x32xbf16>
    %cst_554 = arith.constant dense<0.000000e+00> : vector<16x49xf32>
    %600 = tpu.matmul %599, %579, %cst_554 {dimension_numbers = #tpu.dot_dimension_numbers<[1], [0], [0], [1], [0, 0, 1, 1], [], []>} : vector<16x32xbf16>, vector<32x49xbf16>, vector<16x49xf32> -> vector<16x49xf32>
    %601 = arith.addf %597, %600 : vector<16x49xf32>
    %602 = vector.broadcast %587 : vector<16x1xf32> to vector<16x49xf32>
    %603 = arith.addf %601, %602 : vector<16x49xf32>
    %cst_555 = arith.constant 0.000000e+00 : f32
    %604 = vector.broadcast %cst_555 : f32 to vector<16x49xf32>
    %605 = arith.maximumf %603, %604 : vector<16x49xf32>
    %c1_556 = arith.constant 1 : index
    %c0_557 = arith.constant 0 : index
    %c0_558 = arith.constant 0 : index
    %606 = vector.load %arg13[%c1_556, %c0_557, %c0_558] : memref<9x16x32xbf16, #tpu.memory_space<vmem>>, vector<1x16x32xbf16>
    %607 = vector.shape_cast %606 : vector<1x16x32xbf16> to vector<16x32xbf16>
    %cst_559 = arith.constant dense<0.000000e+00> : vector<16x49xf32>
    %608 = tpu.matmul %607, %583, %cst_559 {dimension_numbers = #tpu.dot_dimension_numbers<[1], [0], [0], [1], [0, 0, 1, 1], [], []>} : vector<16x32xbf16>, vector<32x49xbf16>, vector<16x49xf32> -> vector<16x49xf32>
    %c7_560 = arith.constant 7 : index
    %c0_561 = arith.constant 0 : index
    %c0_562 = arith.constant 0 : index
    %609 = vector.load %arg13[%c7_560, %c0_561, %c0_562] : memref<9x16x32xbf16, #tpu.memory_space<vmem>>, vector<1x16x32xbf16>
    %610 = vector.shape_cast %609 : vector<1x16x32xbf16> to vector<16x32xbf16>
    %cst_563 = arith.constant dense<0.000000e+00> : vector<16x49xf32>
    %611 = tpu.matmul %610, %579, %cst_563 {dimension_numbers = #tpu.dot_dimension_numbers<[1], [0], [0], [1], [0, 0, 1, 1], [], []>} : vector<16x32xbf16>, vector<32x49xbf16>, vector<16x49xf32> -> vector<16x49xf32>
    %612 = arith.addf %608, %611 : vector<16x49xf32>
    %613 = vector.broadcast %587 : vector<16x1xf32> to vector<16x49xf32>
    %614 = arith.addf %612, %613 : vector<16x49xf32>
    %cst_564 = arith.constant 0.000000e+00 : f32
    %615 = vector.broadcast %cst_564 : f32 to vector<16x49xf32>
    %616 = arith.maximumf %614, %615 : vector<16x49xf32>
    %c0_565 = arith.constant 0 : index
    %c0_566 = arith.constant 0 : index
    %c0_567 = arith.constant 0 : index
    %617 = vector.load %arg13[%c0_565, %c0_566, %c0_567] : memref<9x16x32xbf16, #tpu.memory_space<vmem>>, vector<1x16x32xbf16>
    %618 = vector.shape_cast %617 : vector<1x16x32xbf16> to vector<16x32xbf16>
    %cst_568 = arith.constant dense<0.000000e+00> : vector<16x49xf32>
    %619 = tpu.matmul %618, %586, %cst_568 {dimension_numbers = #tpu.dot_dimension_numbers<[1], [0], [0], [1], [0, 0, 1, 1], [], []>} : vector<16x32xbf16>, vector<32x49xbf16>, vector<16x49xf32> -> vector<16x49xf32>
    %c2_569 = arith.constant 2 : index
    %c0_570 = arith.constant 0 : index
    %c0_571 = arith.constant 0 : index
    %620 = vector.load %arg13[%c2_569, %c0_570, %c0_571] : memref<9x16x32xbf16, #tpu.memory_space<vmem>>, vector<1x16x32xbf16>
    %621 = vector.shape_cast %620 : vector<1x16x32xbf16> to vector<16x32xbf16>
    %cst_572 = arith.constant dense<0.000000e+00> : vector<16x49xf32>
    %622 = tpu.matmul %621, %583, %cst_572 {dimension_numbers = #tpu.dot_dimension_numbers<[1], [0], [0], [1], [0, 0, 1, 1], [], []>} : vector<16x32xbf16>, vector<32x49xbf16>, vector<16x49xf32> -> vector<16x49xf32>
    %623 = arith.addf %619, %622 : vector<16x49xf32>
    %c6_573 = arith.constant 6 : index
    %c0_574 = arith.constant 0 : index
    %c0_575 = arith.constant 0 : index
    %624 = vector.load %arg13[%c6_573, %c0_574, %c0_575] : memref<9x16x32xbf16, #tpu.memory_space<vmem>>, vector<1x16x32xbf16>
    %625 = vector.shape_cast %624 : vector<1x16x32xbf16> to vector<16x32xbf16>
    %cst_576 = arith.constant dense<0.000000e+00> : vector<16x49xf32>
    %626 = tpu.matmul %625, %582, %cst_576 {dimension_numbers = #tpu.dot_dimension_numbers<[1], [0], [0], [1], [0, 0, 1, 1], [], []>} : vector<16x32xbf16>, vector<32x49xbf16>, vector<16x49xf32> -> vector<16x49xf32>
    %627 = arith.addf %623, %626 : vector<16x49xf32>
    %c8_577 = arith.constant 8 : index
    %c0_578 = arith.constant 0 : index
    %c0_579 = arith.constant 0 : index
    %628 = vector.load %arg13[%c8_577, %c0_578, %c0_579] : memref<9x16x32xbf16, #tpu.memory_space<vmem>>, vector<1x16x32xbf16>
    %629 = vector.shape_cast %628 : vector<1x16x32xbf16> to vector<16x32xbf16>
    %cst_580 = arith.constant dense<0.000000e+00> : vector<16x49xf32>
    %630 = tpu.matmul %629, %579, %cst_580 {dimension_numbers = #tpu.dot_dimension_numbers<[1], [0], [0], [1], [0, 0, 1, 1], [], []>} : vector<16x32xbf16>, vector<32x49xbf16>, vector<16x49xf32> -> vector<16x49xf32>
    %631 = arith.addf %627, %630 : vector<16x49xf32>
    %632 = vector.broadcast %587 : vector<16x1xf32> to vector<16x49xf32>
    %633 = arith.addf %631, %632 : vector<16x49xf32>
    %cst_581 = arith.constant 0.000000e+00 : f32
    %634 = vector.broadcast %cst_581 : f32 to vector<16x49xf32>
    %635 = arith.maximumf %633, %634 : vector<16x49xf32>
    %636 = arith.truncf %594 : vector<16x49xf32> to vector<16x49xbf16>
    %c0_582 = arith.constant 0 : index
    %c0_583 = arith.constant 0 : index
    %c0_584 = arith.constant 0 : index
    %637 = vector.load %arg21[%c0_582, %c0_583, %c0_584] : memref<4x16x64xbf16, #tpu.memory_space<vmem>>, vector<1x16x49xbf16>
    %638 = vector.shape_cast %637 : vector<1x16x49xbf16> to vector<16x49xbf16>
    %639 = vector.shape_cast %636 : vector<16x49xbf16> to vector<1x16x49xbf16>
    tpu.vector_store %arg21[%c0_582, %c0_583, %c0_584], %639 {strides = array<i32>} : memref<4x16x64xbf16, #tpu.memory_space<vmem>>, vector<1x16x49xbf16>,
    %cst_585 = arith.constant 0.000000e+00 : bf16
    %640 = vector.broadcast %cst_585 : bf16 to vector<16x15xbf16>
    %c0_586 = arith.constant 0 : index
    %c0_587 = arith.constant 0 : index
    %c49_588 = arith.constant 49 : index
    %641 = vector.load %arg21[%c0_586, %c0_587, %c49_588] : memref<4x16x64xbf16, #tpu.memory_space<vmem>>, vector<1x16x15xbf16>
    %642 = vector.shape_cast %641 : vector<1x16x15xbf16> to vector<16x15xbf16>
    %643 = vector.shape_cast %640 : vector<16x15xbf16> to vector<1x16x15xbf16>
    tpu.vector_store %arg21[%c0_586, %c0_587, %c49_588], %643 {strides = array<i32>} : memref<4x16x64xbf16, #tpu.memory_space<vmem>>, vector<1x16x15xbf16>,
    %644 = arith.truncf %605 : vector<16x49xf32> to vector<16x49xbf16>
    %c1_589 = arith.constant 1 : index
    %c0_590 = arith.constant 0 : index
    %c0_591 = arith.constant 0 : index
    %645 = vector.load %arg21[%c1_589, %c0_590, %c0_591] : memref<4x16x64xbf16, #tpu.memory_space<vmem>>, vector<1x16x49xbf16>
    %646 = vector.shape_cast %645 : vector<1x16x49xbf16> to vector<16x49xbf16>
    %647 = vector.shape_cast %644 : vector<16x49xbf16> to vector<1x16x49xbf16>
    tpu.vector_store %arg21[%c1_589, %c0_590, %c0_591], %647 {strides = array<i32>} : memref<4x16x64xbf16, #tpu.memory_space<vmem>>, vector<1x16x49xbf16>,
    %cst_592 = arith.constant 0.000000e+00 : bf16
    %648 = vector.broadcast %cst_592 : bf16 to vector<16x15xbf16>
    %c1_593 = arith.constant 1 : index
    %c0_594 = arith.constant 0 : index
    %c49_595 = arith.constant 49 : index
    %649 = vector.load %arg21[%c1_593, %c0_594, %c49_595] : memref<4x16x64xbf16, #tpu.memory_space<vmem>>, vector<1x16x15xbf16>
    %650 = vector.shape_cast %649 : vector<1x16x15xbf16> to vector<16x15xbf16>
    %651 = vector.shape_cast %648 : vector<16x15xbf16> to vector<1x16x15xbf16>
    tpu.vector_store %arg21[%c1_593, %c0_594, %c49_595], %651 {strides = array<i32>} : memref<4x16x64xbf16, #tpu.memory_space<vmem>>, vector<1x16x15xbf16>,
    %652 = arith.truncf %616 : vector<16x49xf32> to vector<16x49xbf16>
    %c2_596 = arith.constant 2 : index
    %c0_597 = arith.constant 0 : index
    %c0_598 = arith.constant 0 : index
    %653 = vector.load %arg21[%c2_596, %c0_597, %c0_598] : memref<4x16x64xbf16, #tpu.memory_space<vmem>>, vector<1x16x49xbf16>
    %654 = vector.shape_cast %653 : vector<1x16x49xbf16> to vector<16x49xbf16>
    %655 = vector.shape_cast %652 : vector<16x49xbf16> to vector<1x16x49xbf16>
    tpu.vector_store %arg21[%c2_596, %c0_597, %c0_598], %655 {strides = array<i32>} : memref<4x16x64xbf16, #tpu.memory_space<vmem>>, vector<1x16x49xbf16>,
    %cst_599 = arith.constant 0.000000e+00 : bf16
    %656 = vector.broadcast %cst_599 : bf16 to vector<16x15xbf16>
    %c2_600 = arith.constant 2 : index
    %c0_601 = arith.constant 0 : index
    %c49_602 = arith.constant 49 : index
    %657 = vector.load %arg21[%c2_600, %c0_601, %c49_602] : memref<4x16x64xbf16, #tpu.memory_space<vmem>>, vector<1x16x15xbf16>
    %658 = vector.shape_cast %657 : vector<1x16x15xbf16> to vector<16x15xbf16>
    %659 = vector.shape_cast %656 : vector<16x15xbf16> to vector<1x16x15xbf16>
    tpu.vector_store %arg21[%c2_600, %c0_601, %c49_602], %659 {strides = array<i32>} : memref<4x16x64xbf16, #tpu.memory_space<vmem>>, vector<1x16x15xbf16>,
    %660 = arith.truncf %635 : vector<16x49xf32> to vector<16x49xbf16>
    %c3_603 = arith.constant 3 : index
    %c0_604 = arith.constant 0 : index
    %c0_605 = arith.constant 0 : index
    %661 = vector.load %arg21[%c3_603, %c0_604, %c0_605] : memref<4x16x64xbf16, #tpu.memory_space<vmem>>, vector<1x16x49xbf16>
    %662 = vector.shape_cast %661 : vector<1x16x49xbf16> to vector<16x49xbf16>
    %663 = vector.shape_cast %660 : vector<16x49xbf16> to vector<1x16x49xbf16>
    tpu.vector_store %arg21[%c3_603, %c0_604, %c0_605], %663 {strides = array<i32>} : memref<4x16x64xbf16, #tpu.memory_space<vmem>>, vector<1x16x49xbf16>,
    %cst_606 = arith.constant 0.000000e+00 : bf16
    %664 = vector.broadcast %cst_606 : bf16 to vector<16x15xbf16>
    %c3_607 = arith.constant 3 : index
    %c0_608 = arith.constant 0 : index
    %c49_609 = arith.constant 49 : index
    %665 = vector.load %arg21[%c3_607, %c0_608, %c49_609] : memref<4x16x64xbf16, #tpu.memory_space<vmem>>, vector<1x16x15xbf16>
    %666 = vector.shape_cast %665 : vector<1x16x15xbf16> to vector<16x15xbf16>
    %667 = vector.shape_cast %664 : vector<16x15xbf16> to vector<1x16x15xbf16>
    tpu.vector_store %arg21[%c3_607, %c0_608, %c49_609], %667 {strides = array<i32>} : memref<4x16x64xbf16, #tpu.memory_space<vmem>>, vector<1x16x15xbf16>,
    %c0_610 = arith.constant 0 : index
    %c0_611 = arith.constant 0 : index
    %668 = vector.load %arg16[%c0_610, %c0_611] : memref<1x1xf32, #tpu.memory_space<vmem>>, vector<1x1xf32>
    %c0_612 = arith.constant 0 : index
    %c0_613 = arith.constant 0 : index
    %c0_614 = arith.constant 0 : index
    %669 = vector.load %arg21[%c0_612, %c0_613, %c0_614] : memref<4x16x64xbf16, #tpu.memory_space<vmem>>, vector<1x16x49xbf16>
    %670 = vector.shape_cast %669 : vector<1x16x49xbf16> to vector<16x49xbf16>
    %c1_615 = arith.constant 1 : index
    %c0_616 = arith.constant 0 : index
    %c0_617 = arith.constant 0 : index
    %671 = vector.load %arg21[%c1_615, %c0_616, %c0_617] : memref<4x16x64xbf16, #tpu.memory_space<vmem>>, vector<1x16x49xbf16>
    %672 = vector.shape_cast %671 : vector<1x16x49xbf16> to vector<16x49xbf16>
    %c2_618 = arith.constant 2 : index
    %c0_619 = arith.constant 0 : index
    %c0_620 = arith.constant 0 : index
    %673 = vector.load %arg21[%c2_618, %c0_619, %c0_620] : memref<4x16x64xbf16, #tpu.memory_space<vmem>>, vector<1x16x49xbf16>
    %674 = vector.shape_cast %673 : vector<1x16x49xbf16> to vector<16x49xbf16>
    %c3_621 = arith.constant 3 : index
    %c0_622 = arith.constant 0 : index
    %c0_623 = arith.constant 0 : index
    %675 = vector.load %arg21[%c3_621, %c0_622, %c0_623] : memref<4x16x64xbf16, #tpu.memory_space<vmem>>, vector<1x16x49xbf16>
    %676 = vector.shape_cast %675 : vector<1x16x49xbf16> to vector<16x49xbf16>
    %c4_624 = arith.constant 4 : index
    %c0_625 = arith.constant 0 : index
    %c0_626 = arith.constant 0 : index
    %677 = vector.load %arg15[%c4_624, %c0_625, %c0_626] : memref<9x1x16xbf16, #tpu.memory_space<vmem>>, vector<1x1x16xbf16>
    %678 = vector.shape_cast %677 : vector<1x1x16xbf16> to vector<1x16xbf16>
    %cst_627 = arith.constant dense<0.000000e+00> : vector<1x49xf32>
    %679 = tpu.matmul %678, %670, %cst_627 {dimension_numbers = #tpu.dot_dimension_numbers<[1], [0], [0], [1], [0, 0, 1, 1], [], []>} : vector<1x16xbf16>, vector<16x49xbf16>, vector<1x49xf32> -> vector<1x49xf32>
    %c3_628 = arith.constant 3 : index
    %c0_629 = arith.constant 0 : index
    %c0_630 = arith.constant 0 : index
    %680 = vector.load %arg15[%c3_628, %c0_629, %c0_630] : memref<9x1x16xbf16, #tpu.memory_space<vmem>>, vector<1x1x16xbf16>
    %681 = vector.shape_cast %680 : vector<1x1x16xbf16> to vector<1x16xbf16>
    %cst_631 = arith.constant dense<0.000000e+00> : vector<1x49xf32>
    %682 = tpu.matmul %681, %672, %cst_631 {dimension_numbers = #tpu.dot_dimension_numbers<[1], [0], [0], [1], [0, 0, 1, 1], [], []>} : vector<1x16xbf16>, vector<16x49xbf16>, vector<1x49xf32> -> vector<1x49xf32>
    %c5_632 = arith.constant 5 : index
    %c0_633 = arith.constant 0 : index
    %c0_634 = arith.constant 0 : index
    %683 = vector.load %arg15[%c5_632, %c0_633, %c0_634] : memref<9x1x16xbf16, #tpu.memory_space<vmem>>, vector<1x1x16xbf16>
    %684 = vector.shape_cast %683 : vector<1x1x16xbf16> to vector<1x16xbf16>
    %cst_635 = arith.constant dense<0.000000e+00> : vector<1x49xf32>
    %685 = tpu.matmul %684, %670, %cst_635 {dimension_numbers = #tpu.dot_dimension_numbers<[1], [0], [0], [1], [0, 0, 1, 1], [], []>} : vector<1x16xbf16>, vector<16x49xbf16>, vector<1x49xf32> -> vector<1x49xf32>
    %686 = arith.addf %682, %685 : vector<1x49xf32>
    %c1_636 = arith.constant 1 : index
    %c0_637 = arith.constant 0 : index
    %c0_638 = arith.constant 0 : index
    %687 = vector.load %arg15[%c1_636, %c0_637, %c0_638] : memref<9x1x16xbf16, #tpu.memory_space<vmem>>, vector<1x1x16xbf16>
    %688 = vector.shape_cast %687 : vector<1x1x16xbf16> to vector<1x16xbf16>
    %cst_639 = arith.constant dense<0.000000e+00> : vector<1x49xf32>
    %689 = tpu.matmul %688, %674, %cst_639 {dimension_numbers = #tpu.dot_dimension_numbers<[1], [0], [0], [1], [0, 0, 1, 1], [], []>} : vector<1x16xbf16>, vector<16x49xbf16>, vector<1x49xf32> -> vector<1x49xf32>
    %c7_640 = arith.constant 7 : index
    %c0_641 = arith.constant 0 : index
    %c0_642 = arith.constant 0 : index
    %690 = vector.load %arg15[%c7_640, %c0_641, %c0_642] : memref<9x1x16xbf16, #tpu.memory_space<vmem>>, vector<1x1x16xbf16>
    %691 = vector.shape_cast %690 : vector<1x1x16xbf16> to vector<1x16xbf16>
    %cst_643 = arith.constant dense<0.000000e+00> : vector<1x49xf32>
    %692 = tpu.matmul %691, %670, %cst_643 {dimension_numbers = #tpu.dot_dimension_numbers<[1], [0], [0], [1], [0, 0, 1, 1], [], []>} : vector<1x16xbf16>, vector<16x49xbf16>, vector<1x49xf32> -> vector<1x49xf32>
    %693 = arith.addf %689, %692 : vector<1x49xf32>
    %c0_644 = arith.constant 0 : index
    %c0_645 = arith.constant 0 : index
    %c0_646 = arith.constant 0 : index
    %694 = vector.load %arg15[%c0_644, %c0_645, %c0_646] : memref<9x1x16xbf16, #tpu.memory_space<vmem>>, vector<1x1x16xbf16>
    %695 = vector.shape_cast %694 : vector<1x1x16xbf16> to vector<1x16xbf16>
    %cst_647 = arith.constant dense<0.000000e+00> : vector<1x49xf32>
    %696 = tpu.matmul %695, %676, %cst_647 {dimension_numbers = #tpu.dot_dimension_numbers<[1], [0], [0], [1], [0, 0, 1, 1], [], []>} : vector<1x16xbf16>, vector<16x49xbf16>, vector<1x49xf32> -> vector<1x49xf32>
    %c2_648 = arith.constant 2 : index
    %c0_649 = arith.constant 0 : index
    %c0_650 = arith.constant 0 : index
    %697 = vector.load %arg15[%c2_648, %c0_649, %c0_650] : memref<9x1x16xbf16, #tpu.memory_space<vmem>>, vector<1x1x16xbf16>
    %698 = vector.shape_cast %697 : vector<1x1x16xbf16> to vector<1x16xbf16>
    %cst_651 = arith.constant dense<0.000000e+00> : vector<1x49xf32>
    %699 = tpu.matmul %698, %674, %cst_651 {dimension_numbers = #tpu.dot_dimension_numbers<[1], [0], [0], [1], [0, 0, 1, 1], [], []>} : vector<1x16xbf16>, vector<16x49xbf16>, vector<1x49xf32> -> vector<1x49xf32>
    %700 = arith.addf %696, %699 : vector<1x49xf32>
    %c6_652 = arith.constant 6 : index
    %c0_653 = arith.constant 0 : index
    %c0_654 = arith.constant 0 : index
    %701 = vector.load %arg15[%c6_652, %c0_653, %c0_654] : memref<9x1x16xbf16, #tpu.memory_space<vmem>>, vector<1x1x16xbf16>
    %702 = vector.shape_cast %701 : vector<1x1x16xbf16> to vector<1x16xbf16>
    %cst_655 = arith.constant dense<0.000000e+00> : vector<1x49xf32>
    %703 = tpu.matmul %702, %672, %cst_655 {dimension_numbers = #tpu.dot_dimension_numbers<[1], [0], [0], [1], [0, 0, 1, 1], [], []>} : vector<1x16xbf16>, vector<16x49xbf16>, vector<1x49xf32> -> vector<1x49xf32>
    %704 = arith.addf %700, %703 : vector<1x49xf32>
    %c8_656 = arith.constant 8 : index
    %c0_657 = arith.constant 0 : index
    %c0_658 = arith.constant 0 : index
    %705 = vector.load %arg15[%c8_656, %c0_657, %c0_658] : memref<9x1x16xbf16, #tpu.memory_space<vmem>>, vector<1x1x16xbf16>
    %706 = vector.shape_cast %705 : vector<1x1x16xbf16> to vector<1x16xbf16>
    %cst_659 = arith.constant dense<0.000000e+00> : vector<1x49xf32>
    %707 = tpu.matmul %706, %670, %cst_659 {dimension_numbers = #tpu.dot_dimension_numbers<[1], [0], [0], [1], [0, 0, 1, 1], [], []>} : vector<1x16xbf16>, vector<16x49xbf16>, vector<1x49xf32> -> vector<1x49xf32>
    %708 = arith.addf %704, %707 : vector<1x49xf32>
    %709 = vector.broadcast %668 : vector<1x1xf32> to vector<1x49xf32>
    %710 = arith.addf %679, %709 : vector<1x49xf32>
    %cst_660 = arith.constant 0.000000e+00 : f32
    %711 = vector.broadcast %cst_660 : f32 to vector<1x49xf32>
    %712 = arith.cmpf oge, %710, %711 : vector<1x49xf32>
    %cst_661 = arith.constant 0.00999999977 : f32
    %713 = vector.broadcast %cst_661 : f32 to vector<1x49xf32>
    %714 = arith.mulf %713, %710 : vector<1x49xf32>
    %715 = arith.select %712, %710, %714 : vector<1x49xi1>, vector<1x49xf32>
    %c0_662 = arith.constant 0 : index
    %c0_663 = arith.constant 0 : index
    %c0_664 = arith.constant 0 : index
    %c0_665 = arith.constant 0 : index
    %716 = vector.load %arg17[%c0_662, %c0_663, %c0_664, %c0_665] : memref<1x16x1x49xf32, #tpu.memory_space<vmem>>, vector<1x1x1x49xf32>
    %717 = vector.shape_cast %716 : vector<1x1x1x49xf32> to vector<1x49xf32>
    %718 = vector.shape_cast %715 : vector<1x49xf32> to vector<1x1x1x49xf32>
    tpu.vector_store %arg17[%c0_662, %c0_663, %c0_664, %c0_665], %718 {strides = array<i32>} : memref<1x16x1x49xf32, #tpu.memory_space<vmem>>, vector<1x1x1x49xf32>,
    %719 = vector.broadcast %668 : vector<1x1xf32> to vector<1x49xf32>
    %720 = arith.addf %686, %719 : vector<1x49xf32>
    %cst_666 = arith.constant 0.000000e+00 : f32
    %721 = vector.broadcast %cst_666 : f32 to vector<1x49xf32>
    %722 = arith.cmpf oge, %720, %721 : vector<1x49xf32>
    %cst_667 = arith.constant 0.00999999977 : f32
    %723 = vector.broadcast %cst_667 : f32 to vector<1x49xf32>
    %724 = arith.mulf %723, %720 : vector<1x49xf32>
    %725 = arith.select %722, %720, %724 : vector<1x49xi1>, vector<1x49xf32>
    %c0_668 = arith.constant 0 : index
    %c1_669 = arith.constant 1 : index
    %c0_670 = arith.constant 0 : index
    %c0_671 = arith.constant 0 : index
    %726 = vector.load %arg17[%c0_668, %c1_669, %c0_670, %c0_671] : memref<1x16x1x49xf32, #tpu.memory_space<vmem>>, vector<1x1x1x49xf32>
    %727 = vector.shape_cast %726 : vector<1x1x1x49xf32> to vector<1x49xf32>
    %728 = vector.shape_cast %725 : vector<1x49xf32> to vector<1x1x1x49xf32>
    tpu.vector_store %arg17[%c0_668, %c1_669, %c0_670, %c0_671], %728 {strides = array<i32>} : memref<1x16x1x49xf32, #tpu.memory_space<vmem>>, vector<1x1x1x49xf32>,
    %729 = vector.broadcast %668 : vector<1x1xf32> to vector<1x49xf32>
    %730 = arith.addf %693, %729 : vector<1x49xf32>
    %cst_672 = arith.constant 0.000000e+00 : f32
    %731 = vector.broadcast %cst_672 : f32 to vector<1x49xf32>
    %732 = arith.cmpf oge, %730, %731 : vector<1x49xf32>
    %cst_673 = arith.constant 0.00999999977 : f32
    %733 = vector.broadcast %cst_673 : f32 to vector<1x49xf32>
    %734 = arith.mulf %733, %730 : vector<1x49xf32>
    %735 = arith.select %732, %730, %734 : vector<1x49xi1>, vector<1x49xf32>
    %c0_674 = arith.constant 0 : index
    %c4_675 = arith.constant 4 : index
    %c0_676 = arith.constant 0 : index
    %c0_677 = arith.constant 0 : index
    %736 = vector.load %arg17[%c0_674, %c4_675, %c0_676, %c0_677] : memref<1x16x1x49xf32, #tpu.memory_space<vmem>>, vector<1x1x1x49xf32>
    %737 = vector.shape_cast %736 : vector<1x1x1x49xf32> to vector<1x49xf32>
    %738 = vector.shape_cast %735 : vector<1x49xf32> to vector<1x1x1x49xf32>
    tpu.vector_store %arg17[%c0_674, %c4_675, %c0_676, %c0_677], %738 {strides = array<i32>} : memref<1x16x1x49xf32, #tpu.memory_space<vmem>>, vector<1x1x1x49xf32>,
    %739 = vector.broadcast %668 : vector<1x1xf32> to vector<1x49xf32>
    %740 = arith.addf %708, %739 : vector<1x49xf32>
    %cst_678 = arith.constant 0.000000e+00 : f32
    %741 = vector.broadcast %cst_678 : f32 to vector<1x49xf32>
    %742 = arith.cmpf oge, %740, %741 : vector<1x49xf32>
    %cst_679 = arith.constant 0.00999999977 : f32
    %743 = vector.broadcast %cst_679 : f32 to vector<1x49xf32>
    %744 = arith.mulf %743, %740 : vector<1x49xf32>
    %745 = arith.select %742, %740, %744 : vector<1x49xi1>, vector<1x49xf32>
    %c0_680 = arith.constant 0 : index
    %c5_681 = arith.constant 5 : index
    %c0_682 = arith.constant 0 : index
    %c0_683 = arith.constant 0 : index
    %746 = vector.load %arg17[%c0_680, %c5_681, %c0_682, %c0_683] : memref<1x16x1x49xf32, #tpu.memory_space<vmem>>, vector<1x1x1x49xf32>
    %747 = vector.shape_cast %746 : vector<1x1x1x49xf32> to vector<1x49xf32>
    %748 = vector.shape_cast %745 : vector<1x49xf32> to vector<1x1x1x49xf32>
    tpu.vector_store %arg17[%c0_680, %c5_681, %c0_682, %c0_683], %748 {strides = array<i32>} : memref<1x16x1x49xf32, #tpu.memory_space<vmem>>, vector<1x1x1x49xf32>,
    %c1_684 = arith.constant 1 : index
    %c0_685 = arith.constant 0 : index
    %c0_686 = arith.constant 0 : index
    %749 = vector.load %arg21[%c1_684, %c0_685, %c0_686] : memref<4x16x64xbf16, #tpu.memory_space<vmem>>, vector<1x16x49xbf16>
    %750 = vector.shape_cast %749 : vector<1x16x49xbf16> to vector<16x49xbf16>
    %c0_687 = arith.constant 0 : index
    %c0_688 = arith.constant 0 : index
    %c1_689 = arith.constant 1 : index
    %751 = vector.load %arg21[%c0_687, %c0_688, %c1_689] : memref<4x16x64xbf16, #tpu.memory_space<vmem>>, vector<1x16x49xbf16>
    %752 = vector.shape_cast %751 : vector<1x16x49xbf16> to vector<16x49xbf16>
    %753 = vector.broadcast %2 : vector<1x49xbf16> to vector<16x49xbf16>
    %754 = arith.mulf %752, %753 : vector<16x49xbf16>
    %c3_690 = arith.constant 3 : index
    %c0_691 = arith.constant 0 : index
    %c0_692 = arith.constant 0 : index
    %755 = vector.load %arg21[%c3_690, %c0_691, %c0_692] : memref<4x16x64xbf16, #tpu.memory_space<vmem>>, vector<1x16x49xbf16>
    %756 = vector.shape_cast %755 : vector<1x16x49xbf16> to vector<16x49xbf16>
    %c2_693 = arith.constant 2 : index
    %c0_694 = arith.constant 0 : index
    %c1_695 = arith.constant 1 : index
    %757 = vector.load %arg21[%c2_693, %c0_694, %c1_695] : memref<4x16x64xbf16, #tpu.memory_space<vmem>>, vector<1x16x49xbf16>
    %758 = vector.shape_cast %757 : vector<1x16x49xbf16> to vector<16x49xbf16>
    %759 = vector.broadcast %2 : vector<1x49xbf16> to vector<16x49xbf16>
    %760 = arith.mulf %758, %759 : vector<16x49xbf16>
    %c4_696 = arith.constant 4 : index
    %c0_697 = arith.constant 0 : index
    %c0_698 = arith.constant 0 : index
    %761 = vector.load %arg15[%c4_696, %c0_697, %c0_698] : memref<9x1x16xbf16, #tpu.memory_space<vmem>>, vector<1x1x16xbf16>
    %762 = vector.shape_cast %761 : vector<1x1x16xbf16> to vector<1x16xbf16>
    %cst_699 = arith.constant dense<0.000000e+00> : vector<1x49xf32>
    %763 = tpu.matmul %762, %750, %cst_699 {dimension_numbers = #tpu.dot_dimension_numbers<[1], [0], [0], [1], [0, 0, 1, 1], [], []>} : vector<1x16xbf16>, vector<16x49xbf16>, vector<1x49xf32> -> vector<1x49xf32>
    %c3_700 = arith.constant 3 : index
    %c0_701 = arith.constant 0 : index
    %c0_702 = arith.constant 0 : index
    %764 = vector.load %arg15[%c3_700, %c0_701, %c0_702] : memref<9x1x16xbf16, #tpu.memory_space<vmem>>, vector<1x1x16xbf16>
    %765 = vector.shape_cast %764 : vector<1x1x16xbf16> to vector<1x16xbf16>
    %cst_703 = arith.constant dense<0.000000e+00> : vector<1x49xf32>
    %766 = tpu.matmul %765, %754, %cst_703 {dimension_numbers = #tpu.dot_dimension_numbers<[1], [0], [0], [1], [0, 0, 1, 1], [], []>} : vector<1x16xbf16>, vector<16x49xbf16>, vector<1x49xf32> -> vector<1x49xf32>
    %c5_704 = arith.constant 5 : index
    %c0_705 = arith.constant 0 : index
    %c0_706 = arith.constant 0 : index
    %767 = vector.load %arg15[%c5_704, %c0_705, %c0_706] : memref<9x1x16xbf16, #tpu.memory_space<vmem>>, vector<1x1x16xbf16>
    %768 = vector.shape_cast %767 : vector<1x1x16xbf16> to vector<1x16xbf16>
    %cst_707 = arith.constant dense<0.000000e+00> : vector<1x49xf32>
    %769 = tpu.matmul %768, %750, %cst_707 {dimension_numbers = #tpu.dot_dimension_numbers<[1], [0], [0], [1], [0, 0, 1, 1], [], []>} : vector<1x16xbf16>, vector<16x49xbf16>, vector<1x49xf32> -> vector<1x49xf32>
    %770 = arith.addf %766, %769 : vector<1x49xf32>
    %c1_708 = arith.constant 1 : index
    %c0_709 = arith.constant 0 : index
    %c0_710 = arith.constant 0 : index
    %771 = vector.load %arg15[%c1_708, %c0_709, %c0_710] : memref<9x1x16xbf16, #tpu.memory_space<vmem>>, vector<1x1x16xbf16>
    %772 = vector.shape_cast %771 : vector<1x1x16xbf16> to vector<1x16xbf16>
    %cst_711 = arith.constant dense<0.000000e+00> : vector<1x49xf32>
    %773 = tpu.matmul %772, %756, %cst_711 {dimension_numbers = #tpu.dot_dimension_numbers<[1], [0], [0], [1], [0, 0, 1, 1], [], []>} : vector<1x16xbf16>, vector<16x49xbf16>, vector<1x49xf32> -> vector<1x49xf32>
    %c7_712 = arith.constant 7 : index
    %c0_713 = arith.constant 0 : index
    %c0_714 = arith.constant 0 : index
    %774 = vector.load %arg15[%c7_712, %c0_713, %c0_714] : memref<9x1x16xbf16, #tpu.memory_space<vmem>>, vector<1x1x16xbf16>
    %775 = vector.shape_cast %774 : vector<1x1x16xbf16> to vector<1x16xbf16>
    %cst_715 = arith.constant dense<0.000000e+00> : vector<1x49xf32>
    %776 = tpu.matmul %775, %750, %cst_715 {dimension_numbers = #tpu.dot_dimension_numbers<[1], [0], [0], [1], [0, 0, 1, 1], [], []>} : vector<1x16xbf16>, vector<16x49xbf16>, vector<1x49xf32> -> vector<1x49xf32>
    %777 = arith.addf %773, %776 : vector<1x49xf32>
    %c0_716 = arith.constant 0 : index
    %c0_717 = arith.constant 0 : index
    %c0_718 = arith.constant 0 : index
    %778 = vector.load %arg15[%c0_716, %c0_717, %c0_718] : memref<9x1x16xbf16, #tpu.memory_space<vmem>>, vector<1x1x16xbf16>
    %779 = vector.shape_cast %778 : vector<1x1x16xbf16> to vector<1x16xbf16>
    %cst_719 = arith.constant dense<0.000000e+00> : vector<1x49xf32>
    %780 = tpu.matmul %779, %760, %cst_719 {dimension_numbers = #tpu.dot_dimension_numbers<[1], [0], [0], [1], [0, 0, 1, 1], [], []>} : vector<1x16xbf16>, vector<16x49xbf16>, vector<1x49xf32> -> vector<1x49xf32>
    %c2_720 = arith.constant 2 : index
    %c0_721 = arith.constant 0 : index
    %c0_722 = arith.constant 0 : index
    %781 = vector.load %arg15[%c2_720, %c0_721, %c0_722] : memref<9x1x16xbf16, #tpu.memory_space<vmem>>, vector<1x1x16xbf16>
    %782 = vector.shape_cast %781 : vector<1x1x16xbf16> to vector<1x16xbf16>
    %cst_723 = arith.constant dense<0.000000e+00> : vector<1x49xf32>
    %783 = tpu.matmul %782, %756, %cst_723 {dimension_numbers = #tpu.dot_dimension_numbers<[1], [0], [0], [1], [0, 0, 1, 1], [], []>} : vector<1x16xbf16>, vector<16x49xbf16>, vector<1x49xf32> -> vector<1x49xf32>
    %784 = arith.addf %780, %783 : vector<1x49xf32>
    %c6_724 = arith.constant 6 : index
    %c0_725 = arith.constant 0 : index
    %c0_726 = arith.constant 0 : index
    %785 = vector.load %arg15[%c6_724, %c0_725, %c0_726] : memref<9x1x16xbf16, #tpu.memory_space<vmem>>, vector<1x1x16xbf16>
    %786 = vector.shape_cast %785 : vector<1x1x16xbf16> to vector<1x16xbf16>
    %cst_727 = arith.constant dense<0.000000e+00> : vector<1x49xf32>
    %787 = tpu.matmul %786, %754, %cst_727 {dimension_numbers = #tpu.dot_dimension_numbers<[1], [0], [0], [1], [0, 0, 1, 1], [], []>} : vector<1x16xbf16>, vector<16x49xbf16>, vector<1x49xf32> -> vector<1x49xf32>
    %788 = arith.addf %784, %787 : vector<1x49xf32>
    %c8_728 = arith.constant 8 : index
    %c0_729 = arith.constant 0 : index
    %c0_730 = arith.constant 0 : index
    %789 = vector.load %arg15[%c8_728, %c0_729, %c0_730] : memref<9x1x16xbf16, #tpu.memory_space<vmem>>, vector<1x1x16xbf16>
    %790 = vector.shape_cast %789 : vector<1x1x16xbf16> to vector<1x16xbf16>
    %cst_731 = arith.constant dense<0.000000e+00> : vector<1x49xf32>
    %791 = tpu.matmul %790, %750, %cst_731 {dimension_numbers = #tpu.dot_dimension_numbers<[1], [0], [0], [1], [0, 0, 1, 1], [], []>} : vector<1x16xbf16>, vector<16x49xbf16>, vector<1x49xf32> -> vector<1x49xf32>
    %792 = arith.addf %788, %791 : vector<1x49xf32>
    %793 = vector.broadcast %668 : vector<1x1xf32> to vector<1x49xf32>
    %794 = arith.addf %763, %793 : vector<1x49xf32>
    %cst_732 = arith.constant 0.000000e+00 : f32
    %795 = vector.broadcast %cst_732 : f32 to vector<1x49xf32>
    %796 = arith.cmpf oge, %794, %795 : vector<1x49xf32>
    %cst_733 = arith.constant 0.00999999977 : f32
    %797 = vector.broadcast %cst_733 : f32 to vector<1x49xf32>
    %798 = arith.mulf %797, %794 : vector<1x49xf32>
    %799 = arith.select %796, %794, %798 : vector<1x49xi1>, vector<1x49xf32>
    %c0_734 = arith.constant 0 : index
    %c2_735 = arith.constant 2 : index
    %c0_736 = arith.constant 0 : index
    %c0_737 = arith.constant 0 : index
    %800 = vector.load %arg17[%c0_734, %c2_735, %c0_736, %c0_737] : memref<1x16x1x49xf32, #tpu.memory_space<vmem>>, vector<1x1x1x49xf32>
    %801 = vector.shape_cast %800 : vector<1x1x1x49xf32> to vector<1x49xf32>
    %802 = vector.shape_cast %799 : vector<1x49xf32> to vector<1x1x1x49xf32>
    tpu.vector_store %arg17[%c0_734, %c2_735, %c0_736, %c0_737], %802 {strides = array<i32>} : memref<1x16x1x49xf32, #tpu.memory_space<vmem>>, vector<1x1x1x49xf32>,
    %803 = vector.broadcast %668 : vector<1x1xf32> to vector<1x49xf32>
    %804 = arith.addf %770, %803 : vector<1x49xf32>
    %cst_738 = arith.constant 0.000000e+00 : f32
    %805 = vector.broadcast %cst_738 : f32 to vector<1x49xf32>
    %806 = arith.cmpf oge, %804, %805 : vector<1x49xf32>
    %cst_739 = arith.constant 0.00999999977 : f32
    %807 = vector.broadcast %cst_739 : f32 to vector<1x49xf32>
    %808 = arith.mulf %807, %804 : vector<1x49xf32>
    %809 = arith.select %806, %804, %808 : vector<1x49xi1>, vector<1x49xf32>
    %c0_740 = arith.constant 0 : index
    %c3_741 = arith.constant 3 : index
    %c0_742 = arith.constant 0 : index
    %c0_743 = arith.constant 0 : index
    %810 = vector.load %arg17[%c0_740, %c3_741, %c0_742, %c0_743] : memref<1x16x1x49xf32, #tpu.memory_space<vmem>>, vector<1x1x1x49xf32>
    %811 = vector.shape_cast %810 : vector<1x1x1x49xf32> to vector<1x49xf32>
    %812 = vector.shape_cast %809 : vector<1x49xf32> to vector<1x1x1x49xf32>
    tpu.vector_store %arg17[%c0_740, %c3_741, %c0_742, %c0_743], %812 {strides = array<i32>} : memref<1x16x1x49xf32, #tpu.memory_space<vmem>>, vector<1x1x1x49xf32>,
    %813 = vector.broadcast %668 : vector<1x1xf32> to vector<1x49xf32>
    %814 = arith.addf %777, %813 : vector<1x49xf32>
    %cst_744 = arith.constant 0.000000e+00 : f32
    %815 = vector.broadcast %cst_744 : f32 to vector<1x49xf32>
    %816 = arith.cmpf oge, %814, %815 : vector<1x49xf32>
    %cst_745 = arith.constant 0.00999999977 : f32
    %817 = vector.broadcast %cst_745 : f32 to vector<1x49xf32>
    %818 = arith.mulf %817, %814 : vector<1x49xf32>
    %819 = arith.select %816, %814, %818 : vector<1x49xi1>, vector<1x49xf32>
    %c0_746 = arith.constant 0 : index
    %c6_747 = arith.constant 6 : index
    %c0_748 = arith.constant 0 : index
    %c0_749 = arith.constant 0 : index
    %820 = vector.load %arg17[%c0_746, %c6_747, %c0_748, %c0_749] : memref<1x16x1x49xf32, #tpu.memory_space<vmem>>, vector<1x1x1x49xf32>
    %821 = vector.shape_cast %820 : vector<1x1x1x49xf32> to vector<1x49xf32>
    %822 = vector.shape_cast %819 : vector<1x49xf32> to vector<1x1x1x49xf32>
    tpu.vector_store %arg17[%c0_746, %c6_747, %c0_748, %c0_749], %822 {strides = array<i32>} : memref<1x16x1x49xf32, #tpu.memory_space<vmem>>, vector<1x1x1x49xf32>,
    %823 = vector.broadcast %668 : vector<1x1xf32> to vector<1x49xf32>
    %824 = arith.addf %792, %823 : vector<1x49xf32>
    %cst_750 = arith.constant 0.000000e+00 : f32
    %825 = vector.broadcast %cst_750 : f32 to vector<1x49xf32>
    %826 = arith.cmpf oge, %824, %825 : vector<1x49xf32>
    %cst_751 = arith.constant 0.00999999977 : f32
    %827 = vector.broadcast %cst_751 : f32 to vector<1x49xf32>
    %828 = arith.mulf %827, %824 : vector<1x49xf32>
    %829 = arith.select %826, %824, %828 : vector<1x49xi1>, vector<1x49xf32>
    %c0_752 = arith.constant 0 : index
    %c7_753 = arith.constant 7 : index
    %c0_754 = arith.constant 0 : index
    %c0_755 = arith.constant 0 : index
    %830 = vector.load %arg17[%c0_752, %c7_753, %c0_754, %c0_755] : memref<1x16x1x49xf32, #tpu.memory_space<vmem>>, vector<1x1x1x49xf32>
    %831 = vector.shape_cast %830 : vector<1x1x1x49xf32> to vector<1x49xf32>
    %832 = vector.shape_cast %829 : vector<1x49xf32> to vector<1x1x1x49xf32>
    tpu.vector_store %arg17[%c0_752, %c7_753, %c0_754, %c0_755], %832 {strides = array<i32>} : memref<1x16x1x49xf32, #tpu.memory_space<vmem>>, vector<1x1x1x49xf32>,
    %c2_756 = arith.constant 2 : index
    %c0_757 = arith.constant 0 : index
    %c0_758 = arith.constant 0 : index
    %833 = vector.load %arg21[%c2_756, %c0_757, %c0_758] : memref<4x16x64xbf16, #tpu.memory_space<vmem>>, vector<1x16x49xbf16>
    %834 = vector.shape_cast %833 : vector<1x16x49xbf16> to vector<16x49xbf16>
    %c3_759 = arith.constant 3 : index
    %c0_760 = arith.constant 0 : index
    %c0_761 = arith.constant 0 : index
    %835 = vector.load %arg21[%c3_759, %c0_760, %c0_761] : memref<4x16x64xbf16, #tpu.memory_space<vmem>>, vector<1x16x49xbf16>
    %836 = vector.shape_cast %835 : vector<1x16x49xbf16> to vector<16x49xbf16>
    %c0_762 = arith.constant 0 : index
    %c0_763 = arith.constant 0 : index
    %c7_764 = arith.constant 7 : index
    %837 = vector.load %arg21[%c0_762, %c0_763, %c7_764] : memref<4x16x64xbf16, #tpu.memory_space<vmem>>, vector<1x16x49xbf16>
    %838 = vector.shape_cast %837 : vector<1x16x49xbf16> to vector<16x49xbf16>
    %c1_765 = arith.constant 1 : index
    %c0_766 = arith.constant 0 : index
    %c7_767 = arith.constant 7 : index
    %839 = vector.load %arg21[%c1_765, %c0_766, %c7_767] : memref<4x16x64xbf16, #tpu.memory_space<vmem>>, vector<1x16x49xbf16>
    %840 = vector.shape_cast %839 : vector<1x16x49xbf16> to vector<16x49xbf16>
    %c4_768 = arith.constant 4 : index
    %c0_769 = arith.constant 0 : index
    %c0_770 = arith.constant 0 : index
    %841 = vector.load %arg15[%c4_768, %c0_769, %c0_770] : memref<9x1x16xbf16, #tpu.memory_space<vmem>>, vector<1x1x16xbf16>
    %842 = vector.shape_cast %841 : vector<1x1x16xbf16> to vector<1x16xbf16>
    %cst_771 = arith.constant dense<0.000000e+00> : vector<1x49xf32>
    %843 = tpu.matmul %842, %834, %cst_771 {dimension_numbers = #tpu.dot_dimension_numbers<[1], [0], [0], [1], [0, 0, 1, 1], [], []>} : vector<1x16xbf16>, vector<16x49xbf16>, vector<1x49xf32> -> vector<1x49xf32>
    %c3_772 = arith.constant 3 : index
    %c0_773 = arith.constant 0 : index
    %c0_774 = arith.constant 0 : index
    %844 = vector.load %arg15[%c3_772, %c0_773, %c0_774] : memref<9x1x16xbf16, #tpu.memory_space<vmem>>, vector<1x1x16xbf16>
    %845 = vector.shape_cast %844 : vector<1x1x16xbf16> to vector<1x16xbf16>
    %cst_775 = arith.constant dense<0.000000e+00> : vector<1x49xf32>
    %846 = tpu.matmul %845, %836, %cst_775 {dimension_numbers = #tpu.dot_dimension_numbers<[1], [0], [0], [1], [0, 0, 1, 1], [], []>} : vector<1x16xbf16>, vector<16x49xbf16>, vector<1x49xf32> -> vector<1x49xf32>
    %c5_776 = arith.constant 5 : index
    %c0_777 = arith.constant 0 : index
    %c0_778 = arith.constant 0 : index
    %847 = vector.load %arg15[%c5_776, %c0_777, %c0_778] : memref<9x1x16xbf16, #tpu.memory_space<vmem>>, vector<1x1x16xbf16>
    %848 = vector.shape_cast %847 : vector<1x1x16xbf16> to vector<1x16xbf16>
    %cst_779 = arith.constant dense<0.000000e+00> : vector<1x49xf32>
    %849 = tpu.matmul %848, %834, %cst_779 {dimension_numbers = #tpu.dot_dimension_numbers<[1], [0], [0], [1], [0, 0, 1, 1], [], []>} : vector<1x16xbf16>, vector<16x49xbf16>, vector<1x49xf32> -> vector<1x49xf32>
    %850 = arith.addf %846, %849 : vector<1x49xf32>
    %c1_780 = arith.constant 1 : index
    %c0_781 = arith.constant 0 : index
    %c0_782 = arith.constant 0 : index
    %851 = vector.load %arg15[%c1_780, %c0_781, %c0_782] : memref<9x1x16xbf16, #tpu.memory_space<vmem>>, vector<1x1x16xbf16>
    %852 = vector.shape_cast %851 : vector<1x1x16xbf16> to vector<1x16xbf16>
    %cst_783 = arith.constant dense<0.000000e+00> : vector<1x49xf32>
    %853 = tpu.matmul %852, %838, %cst_783 {dimension_numbers = #tpu.dot_dimension_numbers<[1], [0], [0], [1], [0, 0, 1, 1], [], []>} : vector<1x16xbf16>, vector<16x49xbf16>, vector<1x49xf32> -> vector<1x49xf32>
    %c7_784 = arith.constant 7 : index
    %c0_785 = arith.constant 0 : index
    %c0_786 = arith.constant 0 : index
    %854 = vector.load %arg15[%c7_784, %c0_785, %c0_786] : memref<9x1x16xbf16, #tpu.memory_space<vmem>>, vector<1x1x16xbf16>
    %855 = vector.shape_cast %854 : vector<1x1x16xbf16> to vector<1x16xbf16>
    %cst_787 = arith.constant dense<0.000000e+00> : vector<1x49xf32>
    %856 = tpu.matmul %855, %834, %cst_787 {dimension_numbers = #tpu.dot_dimension_numbers<[1], [0], [0], [1], [0, 0, 1, 1], [], []>} : vector<1x16xbf16>, vector<16x49xbf16>, vector<1x49xf32> -> vector<1x49xf32>
    %857 = arith.addf %853, %856 : vector<1x49xf32>
    %c0_788 = arith.constant 0 : index
    %c0_789 = arith.constant 0 : index
    %c0_790 = arith.constant 0 : index
    %858 = vector.load %arg15[%c0_788, %c0_789, %c0_790] : memref<9x1x16xbf16, #tpu.memory_space<vmem>>, vector<1x1x16xbf16>
    %859 = vector.shape_cast %858 : vector<1x1x16xbf16> to vector<1x16xbf16>
    %cst_791 = arith.constant dense<0.000000e+00> : vector<1x49xf32>
    %860 = tpu.matmul %859, %840, %cst_791 {dimension_numbers = #tpu.dot_dimension_numbers<[1], [0], [0], [1], [0, 0, 1, 1], [], []>} : vector<1x16xbf16>, vector<16x49xbf16>, vector<1x49xf32> -> vector<1x49xf32>
    %c2_792 = arith.constant 2 : index
    %c0_793 = arith.constant 0 : index
    %c0_794 = arith.constant 0 : index
    %861 = vector.load %arg15[%c2_792, %c0_793, %c0_794] : memref<9x1x16xbf16, #tpu.memory_space<vmem>>, vector<1x1x16xbf16>
    %862 = vector.shape_cast %861 : vector<1x1x16xbf16> to vector<1x16xbf16>
    %cst_795 = arith.constant dense<0.000000e+00> : vector<1x49xf32>
    %863 = tpu.matmul %862, %838, %cst_795 {dimension_numbers = #tpu.dot_dimension_numbers<[1], [0], [0], [1], [0, 0, 1, 1], [], []>} : vector<1x16xbf16>, vector<16x49xbf16>, vector<1x49xf32> -> vector<1x49xf32>
    %864 = arith.addf %860, %863 : vector<1x49xf32>
    %c6_796 = arith.constant 6 : index
    %c0_797 = arith.constant 0 : index
    %c0_798 = arith.constant 0 : index
    %865 = vector.load %arg15[%c6_796, %c0_797, %c0_798] : memref<9x1x16xbf16, #tpu.memory_space<vmem>>, vector<1x1x16xbf16>
    %866 = vector.shape_cast %865 : vector<1x1x16xbf16> to vector<1x16xbf16>
    %cst_799 = arith.constant dense<0.000000e+00> : vector<1x49xf32>
    %867 = tpu.matmul %866, %836, %cst_799 {dimension_numbers = #tpu.dot_dimension_numbers<[1], [0], [0], [1], [0, 0, 1, 1], [], []>} : vector<1x16xbf16>, vector<16x49xbf16>, vector<1x49xf32> -> vector<1x49xf32>
    %868 = arith.addf %864, %867 : vector<1x49xf32>
    %c8_800 = arith.constant 8 : index
    %c0_801 = arith.constant 0 : index
    %c0_802 = arith.constant 0 : index
    %869 = vector.load %arg15[%c8_800, %c0_801, %c0_802] : memref<9x1x16xbf16, #tpu.memory_space<vmem>>, vector<1x1x16xbf16>
    %870 = vector.shape_cast %869 : vector<1x1x16xbf16> to vector<1x16xbf16>
    %cst_803 = arith.constant dense<0.000000e+00> : vector<1x49xf32>
    %871 = tpu.matmul %870, %834, %cst_803 {dimension_numbers = #tpu.dot_dimension_numbers<[1], [0], [0], [1], [0, 0, 1, 1], [], []>} : vector<1x16xbf16>, vector<16x49xbf16>, vector<1x49xf32> -> vector<1x49xf32>
    %872 = arith.addf %868, %871 : vector<1x49xf32>
    %873 = vector.broadcast %668 : vector<1x1xf32> to vector<1x49xf32>
    %874 = arith.addf %843, %873 : vector<1x49xf32>
    %cst_804 = arith.constant 0.000000e+00 : f32
    %875 = vector.broadcast %cst_804 : f32 to vector<1x49xf32>
    %876 = arith.cmpf oge, %874, %875 : vector<1x49xf32>
    %cst_805 = arith.constant 0.00999999977 : f32
    %877 = vector.broadcast %cst_805 : f32 to vector<1x49xf32>
    %878 = arith.mulf %877, %874 : vector<1x49xf32>
    %879 = arith.select %876, %874, %878 : vector<1x49xi1>, vector<1x49xf32>
    %c0_806 = arith.constant 0 : index
    %c8_807 = arith.constant 8 : index
    %c0_808 = arith.constant 0 : index
    %c0_809 = arith.constant 0 : index
    %880 = vector.load %arg17[%c0_806, %c8_807, %c0_808, %c0_809] : memref<1x16x1x49xf32, #tpu.memory_space<vmem>>, vector<1x1x1x49xf32>
    %881 = vector.shape_cast %880 : vector<1x1x1x49xf32> to vector<1x49xf32>
    %882 = vector.shape_cast %879 : vector<1x49xf32> to vector<1x1x1x49xf32>
    tpu.vector_store %arg17[%c0_806, %c8_807, %c0_808, %c0_809], %882 {strides = array<i32>} : memref<1x16x1x49xf32, #tpu.memory_space<vmem>>, vector<1x1x1x49xf32>,
    %883 = vector.broadcast %668 : vector<1x1xf32> to vector<1x49xf32>
    %884 = arith.addf %850, %883 : vector<1x49xf32>
    %cst_810 = arith.constant 0.000000e+00 : f32
    %885 = vector.broadcast %cst_810 : f32 to vector<1x49xf32>
    %886 = arith.cmpf oge, %884, %885 : vector<1x49xf32>
    %cst_811 = arith.constant 0.00999999977 : f32
    %887 = vector.broadcast %cst_811 : f32 to vector<1x49xf32>
    %888 = arith.mulf %887, %884 : vector<1x49xf32>
    %889 = arith.select %886, %884, %888 : vector<1x49xi1>, vector<1x49xf32>
    %c0_812 = arith.constant 0 : index
    %c9_813 = arith.constant 9 : index
    %c0_814 = arith.constant 0 : index
    %c0_815 = arith.constant 0 : index
    %890 = vector.load %arg17[%c0_812, %c9_813, %c0_814, %c0_815] : memref<1x16x1x49xf32, #tpu.memory_space<vmem>>, vector<1x1x1x49xf32>
    %891 = vector.shape_cast %890 : vector<1x1x1x49xf32> to vector<1x49xf32>
    %892 = vector.shape_cast %889 : vector<1x49xf32> to vector<1x1x1x49xf32>
    tpu.vector_store %arg17[%c0_812, %c9_813, %c0_814, %c0_815], %892 {strides = array<i32>} : memref<1x16x1x49xf32, #tpu.memory_space<vmem>>, vector<1x1x1x49xf32>,
    %893 = vector.broadcast %668 : vector<1x1xf32> to vector<1x49xf32>
    %894 = arith.addf %857, %893 : vector<1x49xf32>
    %cst_816 = arith.constant 0.000000e+00 : f32
    %895 = vector.broadcast %cst_816 : f32 to vector<1x49xf32>
    %896 = arith.cmpf oge, %894, %895 : vector<1x49xf32>
    %cst_817 = arith.constant 0.00999999977 : f32
    %897 = vector.broadcast %cst_817 : f32 to vector<1x49xf32>
    %898 = arith.mulf %897, %894 : vector<1x49xf32>
    %899 = arith.select %896, %894, %898 : vector<1x49xi1>, vector<1x49xf32>
    %c0_818 = arith.constant 0 : index
    %c12_819 = arith.constant 12 : index
    %c0_820 = arith.constant 0 : index
    %c0_821 = arith.constant 0 : index
    %900 = vector.load %arg17[%c0_818, %c12_819, %c0_820, %c0_821] : memref<1x16x1x49xf32, #tpu.memory_space<vmem>>, vector<1x1x1x49xf32>
    %901 = vector.shape_cast %900 : vector<1x1x1x49xf32> to vector<1x49xf32>
    %902 = vector.shape_cast %899 : vector<1x49xf32> to vector<1x1x1x49xf32>
    tpu.vector_store %arg17[%c0_818, %c12_819, %c0_820, %c0_821], %902 {strides = array<i32>} : memref<1x16x1x49xf32, #tpu.memory_space<vmem>>, vector<1x1x1x49xf32>,
    %903 = vector.broadcast %668 : vector<1x1xf32> to vector<1x49xf32>
    %904 = arith.addf %872, %903 : vector<1x49xf32>
    %cst_822 = arith.constant 0.000000e+00 : f32
    %905 = vector.broadcast %cst_822 : f32 to vector<1x49xf32>
    %906 = arith.cmpf oge, %904, %905 : vector<1x49xf32>
    %cst_823 = arith.constant 0.00999999977 : f32
    %907 = vector.broadcast %cst_823 : f32 to vector<1x49xf32>
    %908 = arith.mulf %907, %904 : vector<1x49xf32>
    %909 = arith.select %906, %904, %908 : vector<1x49xi1>, vector<1x49xf32>
    %c0_824 = arith.constant 0 : index
    %c13_825 = arith.constant 13 : index
    %c0_826 = arith.constant 0 : index
    %c0_827 = arith.constant 0 : index
    %910 = vector.load %arg17[%c0_824, %c13_825, %c0_826, %c0_827] : memref<1x16x1x49xf32, #tpu.memory_space<vmem>>, vector<1x1x1x49xf32>
    %911 = vector.shape_cast %910 : vector<1x1x1x49xf32> to vector<1x49xf32>
    %912 = vector.shape_cast %909 : vector<1x49xf32> to vector<1x1x1x49xf32>
    tpu.vector_store %arg17[%c0_824, %c13_825, %c0_826, %c0_827], %912 {strides = array<i32>} : memref<1x16x1x49xf32, #tpu.memory_space<vmem>>, vector<1x1x1x49xf32>,
    %c3_828 = arith.constant 3 : index
    %c0_829 = arith.constant 0 : index
    %c0_830 = arith.constant 0 : index
    %913 = vector.load %arg21[%c3_828, %c0_829, %c0_830] : memref<4x16x64xbf16, #tpu.memory_space<vmem>>, vector<1x16x49xbf16>
    %914 = vector.shape_cast %913 : vector<1x16x49xbf16> to vector<16x49xbf16>
    %c2_831 = arith.constant 2 : index
    %c0_832 = arith.constant 0 : index
    %c1_833 = arith.constant 1 : index
    %915 = vector.load %arg21[%c2_831, %c0_832, %c1_833] : memref<4x16x64xbf16, #tpu.memory_space<vmem>>, vector<1x16x49xbf16>
    %916 = vector.shape_cast %915 : vector<1x16x49xbf16> to vector<16x49xbf16>
    %917 = vector.broadcast %2 : vector<1x49xbf16> to vector<16x49xbf16>
    %918 = arith.mulf %916, %917 : vector<16x49xbf16>
    %c1_834 = arith.constant 1 : index
    %c0_835 = arith.constant 0 : index
    %c7_836 = arith.constant 7 : index
    %919 = vector.load %arg21[%c1_834, %c0_835, %c7_836] : memref<4x16x64xbf16, #tpu.memory_space<vmem>>, vector<1x16x49xbf16>
    %920 = vector.shape_cast %919 : vector<1x16x49xbf16> to vector<16x49xbf16>
    %c0_837 = arith.constant 0 : index
    %c0_838 = arith.constant 0 : index
    %c8_839 = arith.constant 8 : index
    %921 = vector.load %arg21[%c0_837, %c0_838, %c8_839] : memref<4x16x64xbf16, #tpu.memory_space<vmem>>, vector<1x16x49xbf16>
    %922 = vector.shape_cast %921 : vector<1x16x49xbf16> to vector<16x49xbf16>
    %923 = vector.broadcast %2 : vector<1x49xbf16> to vector<16x49xbf16>
    %924 = arith.mulf %922, %923 : vector<16x49xbf16>
    %c4_840 = arith.constant 4 : index
    %c0_841 = arith.constant 0 : index
    %c0_842 = arith.constant 0 : index
    %925 = vector.load %arg15[%c4_840, %c0_841, %c0_842] : memref<9x1x16xbf16, #tpu.memory_space<vmem>>, vector<1x1x16xbf16>
    %926 = vector.shape_cast %925 : vector<1x1x16xbf16> to vector<1x16xbf16>
    %cst_843 = arith.constant dense<0.000000e+00> : vector<1x49xf32>
    %927 = tpu.matmul %926, %914, %cst_843 {dimension_numbers = #tpu.dot_dimension_numbers<[1], [0], [0], [1], [0, 0, 1, 1], [], []>} : vector<1x16xbf16>, vector<16x49xbf16>, vector<1x49xf32> -> vector<1x49xf32>
    %c3_844 = arith.constant 3 : index
    %c0_845 = arith.constant 0 : index
    %c0_846 = arith.constant 0 : index
    %928 = vector.load %arg15[%c3_844, %c0_845, %c0_846] : memref<9x1x16xbf16, #tpu.memory_space<vmem>>, vector<1x1x16xbf16>
    %929 = vector.shape_cast %928 : vector<1x1x16xbf16> to vector<1x16xbf16>
    %cst_847 = arith.constant dense<0.000000e+00> : vector<1x49xf32>
    %930 = tpu.matmul %929, %918, %cst_847 {dimension_numbers = #tpu.dot_dimension_numbers<[1], [0], [0], [1], [0, 0, 1, 1], [], []>} : vector<1x16xbf16>, vector<16x49xbf16>, vector<1x49xf32> -> vector<1x49xf32>
    %c5_848 = arith.constant 5 : index
    %c0_849 = arith.constant 0 : index
    %c0_850 = arith.constant 0 : index
    %931 = vector.load %arg15[%c5_848, %c0_849, %c0_850] : memref<9x1x16xbf16, #tpu.memory_space<vmem>>, vector<1x1x16xbf16>
    %932 = vector.shape_cast %931 : vector<1x1x16xbf16> to vector<1x16xbf16>
    %cst_851 = arith.constant dense<0.000000e+00> : vector<1x49xf32>
    %933 = tpu.matmul %932, %914, %cst_851 {dimension_numbers = #tpu.dot_dimension_numbers<[1], [0], [0], [1], [0, 0, 1, 1], [], []>} : vector<1x16xbf16>, vector<16x49xbf16>, vector<1x49xf32> -> vector<1x49xf32>
    %934 = arith.addf %930, %933 : vector<1x49xf32>
    %c1_852 = arith.constant 1 : index
    %c0_853 = arith.constant 0 : index
    %c0_854 = arith.constant 0 : index
    %935 = vector.load %arg15[%c1_852, %c0_853, %c0_854] : memref<9x1x16xbf16, #tpu.memory_space<vmem>>, vector<1x1x16xbf16>
    %936 = vector.shape_cast %935 : vector<1x1x16xbf16> to vector<1x16xbf16>
    %cst_855 = arith.constant dense<0.000000e+00> : vector<1x49xf32>
    %937 = tpu.matmul %936, %920, %cst_855 {dimension_numbers = #tpu.dot_dimension_numbers<[1], [0], [0], [1], [0, 0, 1, 1], [], []>} : vector<1x16xbf16>, vector<16x49xbf16>, vector<1x49xf32> -> vector<1x49xf32>
    %c7_856 = arith.constant 7 : index
    %c0_857 = arith.constant 0 : index
    %c0_858 = arith.constant 0 : index
    %938 = vector.load %arg15[%c7_856, %c0_857, %c0_858] : memref<9x1x16xbf16, #tpu.memory_space<vmem>>, vector<1x1x16xbf16>
    %939 = vector.shape_cast %938 : vector<1x1x16xbf16> to vector<1x16xbf16>
    %cst_859 = arith.constant dense<0.000000e+00> : vector<1x49xf32>
    %940 = tpu.matmul %939, %914, %cst_859 {dimension_numbers = #tpu.dot_dimension_numbers<[1], [0], [0], [1], [0, 0, 1, 1], [], []>} : vector<1x16xbf16>, vector<16x49xbf16>, vector<1x49xf32> -> vector<1x49xf32>
    %941 = arith.addf %937, %940 : vector<1x49xf32>
    %c0_860 = arith.constant 0 : index
    %c0_861 = arith.constant 0 : index
    %c0_862 = arith.constant 0 : index
    %942 = vector.load %arg15[%c0_860, %c0_861, %c0_862] : memref<9x1x16xbf16, #tpu.memory_space<vmem>>, vector<1x1x16xbf16>
    %943 = vector.shape_cast %942 : vector<1x1x16xbf16> to vector<1x16xbf16>
    %cst_863 = arith.constant dense<0.000000e+00> : vector<1x49xf32>
    %944 = tpu.matmul %943, %924, %cst_863 {dimension_numbers = #tpu.dot_dimension_numbers<[1], [0], [0], [1], [0, 0, 1, 1], [], []>} : vector<1x16xbf16>, vector<16x49xbf16>, vector<1x49xf32> -> vector<1x49xf32>
    %c2_864 = arith.constant 2 : index
    %c0_865 = arith.constant 0 : index
    %c0_866 = arith.constant 0 : index
    %945 = vector.load %arg15[%c2_864, %c0_865, %c0_866] : memref<9x1x16xbf16, #tpu.memory_space<vmem>>, vector<1x1x16xbf16>
    %946 = vector.shape_cast %945 : vector<1x1x16xbf16> to vector<1x16xbf16>
    %cst_867 = arith.constant dense<0.000000e+00> : vector<1x49xf32>
    %947 = tpu.matmul %946, %920, %cst_867 {dimension_numbers = #tpu.dot_dimension_numbers<[1], [0], [0], [1], [0, 0, 1, 1], [], []>} : vector<1x16xbf16>, vector<16x49xbf16>, vector<1x49xf32> -> vector<1x49xf32>
    %948 = arith.addf %944, %947 : vector<1x49xf32>
    %c6_868 = arith.constant 6 : index
    %c0_869 = arith.constant 0 : index
    %c0_870 = arith.constant 0 : index
    %949 = vector.load %arg15[%c6_868, %c0_869, %c0_870] : memref<9x1x16xbf16, #tpu.memory_space<vmem>>, vector<1x1x16xbf16>
    %950 = vector.shape_cast %949 : vector<1x1x16xbf16> to vector<1x16xbf16>
    %cst_871 = arith.constant dense<0.000000e+00> : vector<1x49xf32>
    %951 = tpu.matmul %950, %918, %cst_871 {dimension_numbers = #tpu.dot_dimension_numbers<[1], [0], [0], [1], [0, 0, 1, 1], [], []>} : vector<1x16xbf16>, vector<16x49xbf16>, vector<1x49xf32> -> vector<1x49xf32>
    %952 = arith.addf %948, %951 : vector<1x49xf32>
    %c8_872 = arith.constant 8 : index
    %c0_873 = arith.constant 0 : index
    %c0_874 = arith.constant 0 : index
    %953 = vector.load %arg15[%c8_872, %c0_873, %c0_874] : memref<9x1x16xbf16, #tpu.memory_space<vmem>>, vector<1x1x16xbf16>
    %954 = vector.shape_cast %953 : vector<1x1x16xbf16> to vector<1x16xbf16>
    %cst_875 = arith.constant dense<0.000000e+00> : vector<1x49xf32>
    %955 = tpu.matmul %954, %914, %cst_875 {dimension_numbers = #tpu.dot_dimension_numbers<[1], [0], [0], [1], [0, 0, 1, 1], [], []>} : vector<1x16xbf16>, vector<16x49xbf16>, vector<1x49xf32> -> vector<1x49xf32>
    %956 = arith.addf %952, %955 : vector<1x49xf32>
    %957 = vector.broadcast %668 : vector<1x1xf32> to vector<1x49xf32>
    %958 = arith.addf %927, %957 : vector<1x49xf32>
    %cst_876 = arith.constant 0.000000e+00 : f32
    %959 = vector.broadcast %cst_876 : f32 to vector<1x49xf32>
    %960 = arith.cmpf oge, %958, %959 : vector<1x49xf32>
    %cst_877 = arith.constant 0.00999999977 : f32
    %961 = vector.broadcast %cst_877 : f32 to vector<1x49xf32>
    %962 = arith.mulf %961, %958 : vector<1x49xf32>
    %963 = arith.select %960, %958, %962 : vector<1x49xi1>, vector<1x49xf32>
    %c0_878 = arith.constant 0 : index
    %c10_879 = arith.constant 10 : index
    %c0_880 = arith.constant 0 : index
    %c0_881 = arith.constant 0 : index
    %964 = vector.load %arg17[%c0_878, %c10_879, %c0_880, %c0_881] : memref<1x16x1x49xf32, #tpu.memory_space<vmem>>, vector<1x1x1x49xf32>
    %965 = vector.shape_cast %964 : vector<1x1x1x49xf32> to vector<1x49xf32>
    %966 = vector.shape_cast %963 : vector<1x49xf32> to vector<1x1x1x49xf32>
    tpu.vector_store %arg17[%c0_878, %c10_879, %c0_880, %c0_881], %966 {strides = array<i32>} : memref<1x16x1x49xf32, #tpu.memory_space<vmem>>, vector<1x1x1x49xf32>,
    %967 = vector.broadcast %668 : vector<1x1xf32> to vector<1x49xf32>
    %968 = arith.addf %934, %967 : vector<1x49xf32>
    %cst_882 = arith.constant 0.000000e+00 : f32
    %969 = vector.broadcast %cst_882 : f32 to vector<1x49xf32>
    %970 = arith.cmpf oge, %968, %969 : vector<1x49xf32>
    %cst_883 = arith.constant 0.00999999977 : f32
    %971 = vector.broadcast %cst_883 : f32 to vector<1x49xf32>
    %972 = arith.mulf %971, %968 : vector<1x49xf32>
    %973 = arith.select %970, %968, %972 : vector<1x49xi1>, vector<1x49xf32>
    %c0_884 = arith.constant 0 : index
    %c11_885 = arith.constant 11 : index
    %c0_886 = arith.constant 0 : index
    %c0_887 = arith.constant 0 : index
    %974 = vector.load %arg17[%c0_884, %c11_885, %c0_886, %c0_887] : memref<1x16x1x49xf32, #tpu.memory_space<vmem>>, vector<1x1x1x49xf32>
    %975 = vector.shape_cast %974 : vector<1x1x1x49xf32> to vector<1x49xf32>
    %976 = vector.shape_cast %973 : vector<1x49xf32> to vector<1x1x1x49xf32>
    tpu.vector_store %arg17[%c0_884, %c11_885, %c0_886, %c0_887], %976 {strides = array<i32>} : memref<1x16x1x49xf32, #tpu.memory_space<vmem>>, vector<1x1x1x49xf32>,
    %977 = vector.broadcast %668 : vector<1x1xf32> to vector<1x49xf32>
    %978 = arith.addf %941, %977 : vector<1x49xf32>
    %cst_888 = arith.constant 0.000000e+00 : f32
    %979 = vector.broadcast %cst_888 : f32 to vector<1x49xf32>
    %980 = arith.cmpf oge, %978, %979 : vector<1x49xf32>
    %cst_889 = arith.constant 0.00999999977 : f32
    %981 = vector.broadcast %cst_889 : f32 to vector<1x49xf32>
    %982 = arith.mulf %981, %978 : vector<1x49xf32>
    %983 = arith.select %980, %978, %982 : vector<1x49xi1>, vector<1x49xf32>
    %c0_890 = arith.constant 0 : index
    %c14_891 = arith.constant 14 : index
    %c0_892 = arith.constant 0 : index
    %c0_893 = arith.constant 0 : index
    %984 = vector.load %arg17[%c0_890, %c14_891, %c0_892, %c0_893] : memref<1x16x1x49xf32, #tpu.memory_space<vmem>>, vector<1x1x1x49xf32>
    %985 = vector.shape_cast %984 : vector<1x1x1x49xf32> to vector<1x49xf32>
    %986 = vector.shape_cast %983 : vector<1x49xf32> to vector<1x1x1x49xf32>
    tpu.vector_store %arg17[%c0_890, %c14_891, %c0_892, %c0_893], %986 {strides = array<i32>} : memref<1x16x1x49xf32, #tpu.memory_space<vmem>>, vector<1x1x1x49xf32>,
    %987 = vector.broadcast %668 : vector<1x1xf32> to vector<1x49xf32>
    %988 = arith.addf %956, %987 : vector<1x49xf32>
    %cst_894 = arith.constant 0.000000e+00 : f32
    %989 = vector.broadcast %cst_894 : f32 to vector<1x49xf32>
    %990 = arith.cmpf oge, %988, %989 : vector<1x49xf32>
    %cst_895 = arith.constant 0.00999999977 : f32
    %991 = vector.broadcast %cst_895 : f32 to vector<1x49xf32>
    %992 = arith.mulf %991, %988 : vector<1x49xf32>
    %993 = arith.select %990, %988, %992 : vector<1x49xi1>, vector<1x49xf32>
    %c0_896 = arith.constant 0 : index
    %c15_897 = arith.constant 15 : index
    %c0_898 = arith.constant 0 : index
    %c0_899 = arith.constant 0 : index
    %994 = vector.load %arg17[%c0_896, %c15_897, %c0_898, %c0_899] : memref<1x16x1x49xf32, #tpu.memory_space<vmem>>, vector<1x1x1x49xf32>
    %995 = vector.shape_cast %994 : vector<1x1x1x49xf32> to vector<1x49xf32>
    %996 = vector.shape_cast %993 : vector<1x49xf32> to vector<1x1x1x49xf32>
    tpu.vector_store %arg17[%c0_896, %c15_897, %c0_898, %c0_899], %996 {strides = array<i32>} : memref<1x16x1x49xf32, #tpu.memory_space<vmem>>, vector<1x1x1x49xf32>,
    return
  }
  func.func @transform_0(%arg0: i32) -> (i32, i32, i32) {
    %c0_i32 = arith.constant 0 : i32
    %c0_i32_0 = arith.constant 0 : i32
    %c0_i32_1 = arith.constant 0 : i32
    return %arg0, %c0_i32, %c0_i32_0 : i32, i32, i32
  }
  func.func @transform_1(%arg0: i32) -> (i32, i32) {
    %c0_i32 = arith.constant 0 : i32
    %c0_i32_0 = arith.constant 0 : i32
    %c0_i32_1 = arith.constant 0 : i32
    return %c0_i32, %c0_i32_0 : i32, i32
  }
  func.func @transform_2(%arg0: i32) -> (i32, i32) {
    %c0_i32 = arith.constant 0 : i32
    %c0_i32_0 = arith.constant 0 : i32
    %c0_i32_1 = arith.constant 0 : i32
    return %c0_i32, %c0_i32_0 : i32, i32
  }
  func.func @transform_3(%arg0: i32) -> (i32, i32) {
    %c0_i32 = arith.constant 0 : i32
    %c0_i32_0 = arith.constant 0 : i32
    %c0_i32_1 = arith.constant 0 : i32
    return %c0_i32, %c0_i32_0 : i32, i32
  }
  func.func @transform_4(%arg0: i32) -> (i32, i32, i32) {
    %c0_i32 = arith.constant 0 : i32
    %c0_i32_0 = arith.constant 0 : i32
    %c0_i32_1 = arith.constant 0 : i32
    %c0_i32_2 = arith.constant 0 : i32
    return %c0_i32, %c0_i32_0, %c0_i32_1 : i32, i32, i32
  }
  func.func @transform_5(%arg0: i32) -> (i32, i32) {
    %c0_i32 = arith.constant 0 : i32
    %c0_i32_0 = arith.constant 0 : i32
    %c0_i32_1 = arith.constant 0 : i32
    return %c0_i32, %c0_i32_0 : i32, i32
  }
  func.func @transform_6(%arg0: i32) -> (i32, i32, i32) {
    %c0_i32 = arith.constant 0 : i32
    %c0_i32_0 = arith.constant 0 : i32
    %c0_i32_1 = arith.constant 0 : i32
    %c0_i32_2 = arith.constant 0 : i32
    return %c0_i32, %c0_i32_0, %c0_i32_1 : i32, i32, i32
  }
  func.func @transform_7(%arg0: i32) -> (i32, i32) {
    %c0_i32 = arith.constant 0 : i32
    %c0_i32_0 = arith.constant 0 : i32
    %c0_i32_1 = arith.constant 0 : i32
    return %c0_i32, %c0_i32_0 : i32, i32
  }
  func.func @transform_8(%arg0: i32) -> (i32, i32) {
    %c0_i32 = arith.constant 0 : i32
    %c0_i32_0 = arith.constant 0 : i32
    %c0_i32_1 = arith.constant 0 : i32
    return %c0_i32, %c0_i32_0 : i32, i32
  }
  func.func @transform_9(%arg0: i32) -> (i32, i32) {
    %c0_i32 = arith.constant 0 : i32
    %c0_i32_0 = arith.constant 0 : i32
    %c0_i32_1 = arith.constant 0 : i32
    return %c0_i32, %c0_i32_0 : i32, i32
  }
  func.func @transform_10(%arg0: i32) -> (i32, i32, i32) {
    %c0_i32 = arith.constant 0 : i32
    %c0_i32_0 = arith.constant 0 : i32
    %c0_i32_1 = arith.constant 0 : i32
    %c0_i32_2 = arith.constant 0 : i32
    return %c0_i32, %c0_i32_0, %c0_i32_1 : i32, i32, i32
  }
  func.func @transform_11(%arg0: i32) -> (i32, i32) {
    %c0_i32 = arith.constant 0 : i32
    %c0_i32_0 = arith.constant 0 : i32
    %c0_i32_1 = arith.constant 0 : i32
    return %c0_i32, %c0_i32_0 : i32, i32
  }
  func.func @transform_12(%arg0: i32) -> (i32, i32, i32) {
    %c0_i32 = arith.constant 0 : i32
    %c0_i32_0 = arith.constant 0 : i32
    %c0_i32_1 = arith.constant 0 : i32
    %c0_i32_2 = arith.constant 0 : i32
    return %c0_i32, %c0_i32_0, %c0_i32_1 : i32, i32, i32
  }
  func.func @transform_13(%arg0: i32) -> (i32, i32) {
    %c0_i32 = arith.constant 0 : i32
    %c0_i32_0 = arith.constant 0 : i32
    %c0_i32_1 = arith.constant 0 : i32
    return %c0_i32, %c0_i32_0 : i32, i32
  }
  func.func @transform_14(%arg0: i32) -> (i32, i32, i32) {
    %c0_i32 = arith.constant 0 : i32
    %c0_i32_0 = arith.constant 0 : i32
    %c0_i32_1 = arith.constant 0 : i32
    %c0_i32_2 = arith.constant 0 : i32
    return %c0_i32, %c0_i32_0, %c0_i32_1 : i32, i32, i32
  }
  func.func @transform_15(%arg0: i32) -> (i32, i32) {
    %c0_i32 = arith.constant 0 : i32
    %c0_i32_0 = arith.constant 0 : i32
    %c0_i32_1 = arith.constant 0 : i32
    return %c0_i32, %c0_i32_0 : i32, i32
  }
  func.func @transform_16(%arg0: i32) -> (i32, i32, i32, i32) {
    %c0_i32 = arith.constant 0 : i32
    %c0_i32_0 = arith.constant 0 : i32
    %c0_i32_1 = arith.constant 0 : i32
    %c0_i32_2 = arith.constant 0 : i32
    return %arg0, %c0_i32, %c0_i32_0, %c0_i32_1 : i32, i32, i32, i32
  }
}

</mosaic_0001>

<llo_original>
// kernel: context_autoencoder.1
$region0: #{context_autoencoder.1}
  #allocation0 [shape = 'u32[]', space=smem, size = 0x4, offset = 0x4, fixed_abs, tag = 'smem constant byte address 0x4 - core index']
  #allocation1 [shape = 'u32[72,128]{1,0:T(1,128)}', space=vmem, size = 0x9000, scoped, tag = 'internal scratch']
  #allocation2 [shape = 'bf16[16,204]{1,0:T(8,128)(2,1)}', space=vmem, size = 0x2000, scoped, tag = 'scratch operand']
  #allocation3 [shape = 'bf16[32,49]{1,0:T(8,128)(2,1)}', space=vmem, size = 0x2000, scoped, tag = 'scratch operand']
  #allocation4 [shape = 'bf16[32,64]{1,0:T(8,128)(2,1)}', space=vmem, size = 0x2000, scoped, tag = 'scratch operand']
  #allocation5 [shape = 'bf16[4,16,64]{2,1,0:T(8,128)(2,1)}', space=vmem, size = 0x4000, scoped, tag = 'scratch operand']
  #allocation6 [shape = 'f32[1,1]{1,0:T(1,128)S(1)}', space=vmem, size = 0x200, scoped, tag = 'scoped memory for context_autoencoder.1']
  %s0 = inlined_call_operand.vmem [shape: bf16[2,9,196], index: 0, kind: input, shape index: {}]
  %s1 = inlined_call_operand.vmem [shape: bf16[3,49], index: 1, kind: input, shape index: {}]
  %s2 = inlined_call_operand.vmem [shape: bf16[16,9], index: 2, kind: input, shape index: {}]
  %s3 = inlined_call_operand.vmem [shape: f32[16,1], index: 3, kind: input, shape index: {}]
  %s4 = inlined_call_operand.vmem [shape: bf16[9,32,16], index: 4, kind: input, shape index: {}]
  %s5 = inlined_call_operand.vmem [shape: f32[32,1], index: 5, kind: input, shape index: {}]
  %s6 = inlined_call_operand.vmem [shape: bf16[32,49,64], index: 6, kind: input, shape index: {}]
  %s7 = inlined_call_operand.vmem [shape: f32[1,64], index: 7, kind: input, shape index: {}]
  %s8 = inlined_call_operand.vmem [shape: bf16[64,64], index: 8, kind: input, shape index: {}]
  %s9 = inlined_call_operand.vmem [shape: f32[1,64], index: 9, kind: input, shape index: {}]
  %s10 = inlined_call_operand.vmem [shape: bf16[32,64,49], index: 10, kind: input, shape index: {}]
  %s11 = inlined_call_operand.vmem [shape: f32[32,1], index: 11, kind: input, shape index: {}]
  %s12 = inlined_call_operand.vmem [shape: bf16[9,16,32], index: 12, kind: input, shape index: {}]
  %s13 = inlined_call_operand.vmem [shape: f32[16,1], index: 13, kind: input, shape index: {}]
  %s14 = inlined_call_operand.vmem [shape: bf16[9,1,16], index: 14, kind: input, shape index: {}]
  %s15 = inlined_call_operand.<no memory space> [shape: f32[1,1], index: 15, kind: input, shape index: {}]
  %s16 = inlined_call_operand.vmem [shape: f32[2,16,1,49], index: 16, kind: output, shape index: {}]
  %s17 = sld [smem:[#allocation0]]
  $region97: #{context_autoencoder.1} parent=0
    _
  %s19 = ssub.s32 1, %s17
  %s20 = scalar_select 0, %s19, %s17
  %v21 = vstv %s15
  %22 = vst [vmem:[#allocation6] sm:$0x1] %v21
  loop: start=0, step=1, limit=4
  $region2: #{context_autoencoder.1} parent=0 // loop_pre_header
    _
  $region3: #{context_autoencoder.1} parent=0 // loop_header
    %s24 = sphi 0, %s28
    %p25 = scmp.ge.s32.totalorder %s24, 4
    %s34 = sphi 0, %s36
    %s37 = sphi 0, %s34
    %s38 = sphi 0, %s37
    %s54 = sphi 0, %s38
    %s58 = sphi 0, %s58
    %s60 = sphi 0, %s58
    %s61 = sphi 0, %s60
    %s75 = sphi 0, %s61
    %s79 = sphi 0, %s79
    %s81 = sphi 0, %s79
    %s82 = sphi 0, %s81
    %s96 = sphi 0, %s82
    %s100 = sphi 0, %s100
    %s102 = sphi 0, %s100
    %s103 = sphi 0, %s102
    %s117 = sphi 0, %s103
    %s121 = sphi 0, %s121
    %s123 = sphi 0, %s121
    %s124 = sphi 0, %s123
    %s138 = sphi 0, %s124
    %s142 = sphi 0, %s142
    %s144 = sphi 0, %s142
    %s145 = sphi 0, %s144
    %s159 = sphi 0, %s145
    %s163 = sphi 0, %s163
    %s165 = sphi 0, %s163
    %s166 = sphi 0, %s165
    %s180 = sphi 0, %s166
    %s184 = sphi 0, %s184
    %s186 = sphi 0, %s184
    %s187 = sphi 0, %s186
    %s201 = sphi 0, %s187
    %s205 = sphi 0, %s205
    %s207 = sphi 0, %s205
    %s208 = sphi 0, %s207
    %s222 = sphi 0, %s208
    %s226 = sphi 0, %s226
    %s228 = sphi 0, %s226
    %s229 = sphi 0, %s228
    %s243 = sphi 0, %s229
    %s247 = sphi 0, %s247
    %s249 = sphi 0, %s247
    %s250 = sphi 0, %s249
    %s264 = sphi 0, %s250
    %s268 = sphi 0, %s268
    %s270 = sphi 0, %s268
    %s271 = sphi 0, %s270
    %s285 = sphi 0, %s271
    %s289 = sphi 0, %s289
    %s291 = sphi 0, %s289
    %s292 = sphi 0, %s291
    %s306 = sphi 0, %s292
    %s310 = sphi 0, %s310
    %s312 = sphi 0, %s310
    %s313 = sphi 0, %s312
    %s327 = sphi 0, %s313
    %s331 = sphi 0, %s331
    %s333 = sphi 0, %s331
    %s334 = sphi 0, %s333
    %s348 = sphi 0, %s334
    %s352 = sphi 0, %s352
    %s354 = sphi 0, %s352
    %s355 = sphi 0, %s354
    %s369 = sphi 0, %s355
    %s375 = sphi 0, %s377
    %s378 = sphi 0, %s375
    %s379 = sphi 0, %s378
    %s395 = sphi 0, %s379
  $region4: #{context_autoencoder.1} parent=0 // loop_header_branch
    %27 = sbr.rel (%p25) target = $region8
  $region5: #{context_autoencoder.1} parent=0 // loop_body
    %s29 = ssub.s32 %s24, 1
    %s30 = ssub.s32 %s24, 2
    %s31 = sadd.s32 %s24, 1
    %s32 = ssub.s32 %s24, %s31
    %p33 = scmp.eq.s32.totalorder %s32, 0
    %s35 = sadd.s32 %s34, 1
    %s36 = scalar_select %p33, %s34, %s35
    %p39 = pneg %p33
    %p40 = scmp.eq.s32.totalorder %s24, 1
    %p41 = por %p39, %p40
    %p42 = scmp.ne.s32.totalorder %s34, %s37
    %p43 = scmp.eq.s32.totalorder %s24, 0
    %p44 = por %p42, %p43
    %p45 = scmp.ne.s32.totalorder %s34, %s37
    %p46 = scmp.eq.s32.totalorder %s29, 1
    %p47 = por %p45, %p46
    %p48 = scmp.ne.s32.totalorder %s37, %s38
    %p49 = scmp.eq.s32.totalorder %s29, 0
    %p50 = por %p48, %p49
    %p51 = scmp.ne.s32.totalorder %s37, %s38
    %p52 = scmp.eq.s32.totalorder %s30, 1
    %p53 = por %p51, %p52
    %p55 = scmp.ne.s32.totalorder %s38, %s54
    %p56 = scmp.eq.s32.totalorder %s30, 0
    %p57 = por %p55, %p56
    %s59 = sadd.s32 %s58, 1
    %p62 = scmp.eq.s32.totalorder %s24, 1
    %p63 = scmp.ne.s32.totalorder %s58, %s60
    %p64 = scmp.eq.s32.totalorder %s24, 0
    %p65 = por %p63, %p64
    %p66 = scmp.ne.s32.totalorder %s58, %s60
    %p67 = scmp.eq.s32.totalorder %s29, 1
    %p68 = por %p66, %p67
    %p69 = scmp.ne.s32.totalorder %s60, %s61
    %p70 = scmp.eq.s32.totalorder %s29, 0
    %p71 = por %p69, %p70
    %p72 = scmp.ne.s32.totalorder %s60, %s61
    %p73 = scmp.eq.s32.totalorder %s30, 1
    %p74 = por %p72, %p73
    %p76 = scmp.ne.s32.totalorder %s61, %s75
    %p77 = scmp.eq.s32.totalorder %s30, 0
    %p78 = por %p76, %p77
    %s80 = sadd.s32 %s79, 1
    %p83 = scmp.eq.s32.totalorder %s24, 1
    %p84 = scmp.ne.s32.totalorder %s79, %s81
    %p85 = scmp.eq.s32.totalorder %s24, 0
    %p86 = por %p84, %p85
    %p87 = scmp.ne.s32.totalorder %s79, %s81
    %p88 = scmp.eq.s32.totalorder %s29, 1
    %p89 = por %p87, %p88
    %p90 = scmp.ne.s32.totalorder %s81, %s82
    %p91 = scmp.eq.s32.totalorder %s29, 0
    %p92 = por %p90, %p91
    %p93 = scmp.ne.s32.totalorder %s81, %s82
    %p94 = scmp.eq.s32.totalorder %s30, 1
    %p95 = por %p93, %p94
    %p97 = scmp.ne.s32.totalorder %s82, %s96
    %p98 = scmp.eq.s32.totalorder %s30, 0
    %p99 = por %p97, %p98
    %s101 = sadd.s32 %s100, 1
    %p104 = scmp.eq.s32.totalorder %s24, 1
    %p105 = scmp.ne.s32.totalorder %s100, %s102
    %p106 = scmp.eq.s32.totalorder %s24, 0
    %p107 = por %p105, %p106
    %p108 = scmp.ne.s32.totalorder %s100, %s102
    %p109 = scmp.eq.s32.totalorder %s29, 1
    %p110 = por %p108, %p109
    %p111 = scmp.ne.s32.totalorder %s102, %s103
    %p112 = scmp.eq.s32.totalorder %s29, 0
    %p113 = por %p111, %p112
    %p114 = scmp.ne.s32.totalorder %s102, %s103
    %p115 = scmp.eq.s32.totalorder %s30, 1
    %p116 = por %p114, %p115
    %p118 = scmp.ne.s32.totalorder %s103, %s117
    %p119 = scmp.eq.s32.totalorder %s30, 0
    %p120 = por %p118, %p119
    %s122 = sadd.s32 %s121, 1
    %p125 = scmp.eq.s32.totalorder %s24, 1
    %p126 = scmp.ne.s32.totalorder %s121, %s123
    %p127 = scmp.eq.s32.totalorder %s24, 0
    %p128 = por %p126, %p127
    %p129 = scmp.ne.s32.totalorder %s121, %s123
    %p130 = scmp.eq.s32.totalorder %s29, 1
    %p131 = por %p129, %p130
    %p132 = scmp.ne.s32.totalorder %s123, %s124
    %p133 = scmp.eq.s32.totalorder %s29, 0
    %p134 = por %p132, %p133
    %p135 = scmp.ne.s32.totalorder %s123, %s124
    %p136 = scmp.eq.s32.totalorder %s30, 1
    %p137 = por %p135, %p136
    %p139 = scmp.ne.s32.totalorder %s124, %s138
    %p140 = scmp.eq.s32.totalorder %s30, 0
    %p141 = por %p139, %p140
    %s143 = sadd.s32 %s142, 1
    %p146 = scmp.eq.s32.totalorder %s24, 1
    %p147 = scmp.ne.s32.totalorder %s142, %s144
    %p148 = scmp.eq.s32.totalorder %s24, 0
    %p149 = por %p147, %p148
    %p150 = scmp.ne.s32.totalorder %s142, %s144
    %p151 = scmp.eq.s32.totalorder %s29, 1
    %p152 = por %p150, %p151
    %p153 = scmp.ne.s32.totalorder %s144, %s145
    %p154 = scmp.eq.s32.totalorder %s29, 0
    %p155 = por %p153, %p154
    %p156 = scmp.ne.s32.totalorder %s144, %s145
    %p157 = scmp.eq.s32.totalorder %s30, 1
    %p158 = por %p156, %p157
    %p160 = scmp.ne.s32.totalorder %s145, %s159
    %p161 = scmp.eq.s32.totalorder %s30, 0
    %p162 = por %p160, %p161
    %s164 = sadd.s32 %s163, 1
    %p167 = scmp.eq.s32.totalorder %s24, 1
    %p168 = scmp.ne.s32.totalorder %s163, %s165
    %p169 = scmp.eq.s32.totalorder %s24, 0
    %p170 = por %p168, %p169
    %p171 = scmp.ne.s32.totalorder %s163, %s165
    %p172 = scmp.eq.s32.totalorder %s29, 1
    %p173 = por %p171, %p172
    %p174 = scmp.ne.s32.totalorder %s165, %s166
    %p175 = scmp.eq.s32.totalorder %s29, 0
    %p176 = por %p174, %p175
    %p177 = scmp.ne.s32.totalorder %s165, %s166
    %p178 = scmp.eq.s32.totalorder %s30, 1
    %p179 = por %p177, %p178
    %p181 = scmp.ne.s32.totalorder %s166, %s180
    %p182 = scmp.eq.s32.totalorder %s30, 0
    %p183 = por %p181, %p182
    %s185 = sadd.s32 %s184, 1
    %p188 = scmp.eq.s32.totalorder %s24, 1
    %p189 = scmp.ne.s32.totalorder %s184, %s186
    %p190 = scmp.eq.s32.totalorder %s24, 0
    %p191 = por %p189, %p190
    %p192 = scmp.ne.s32.totalorder %s184, %s186
    %p193 = scmp.eq.s32.totalorder %s29, 1
    %p194 = por %p192, %p193
    %p195 = scmp.ne.s32.totalorder %s186, %s187
    %p196 = scmp.eq.s32.totalorder %s29, 0
    %p197 = por %p195, %p196
    %p198 = scmp.ne.s32.totalorder %s186, %s187
    %p199 = scmp.eq.s32.totalorder %s30, 1
    %p200 = por %p198, %p199
    %p202 = scmp.ne.s32.totalorder %s187, %s201
    %p203 = scmp.eq.s32.totalorder %s30, 0
    %p204 = por %p202, %p203
    %s206 = sadd.s32 %s205, 1
    %p209 = scmp.eq.s32.totalorder %s24, 1
    %p210 = scmp.ne.s32.totalorder %s205, %s207
    %p211 = scmp.eq.s32.totalorder %s24, 0
    %p212 = por %p210, %p211
    %p213 = scmp.ne.s32.totalorder %s205, %s207
    %p214 = scmp.eq.s32.totalorder %s29, 1
    %p215 = por %p213, %p214
    %p216 = scmp.ne.s32.totalorder %s207, %s208
    %p217 = scmp.eq.s32.totalorder %s29, 0
    %p218 = por %p216, %p217
    %p219 = scmp.ne.s32.totalorder %s207, %s208
    %p220 = scmp.eq.s32.totalorder %s30, 1
    %p221 = por %p219, %p220
    %p223 = scmp.ne.s32.totalorder %s208, %s222
    %p224 = scmp.eq.s32.totalorder %s30, 0
    %p225 = por %p223, %p224
    %s227 = sadd.s32 %s226, 1
    %p230 = scmp.eq.s32.totalorder %s24, 1
    %p231 = scmp.ne.s32.totalorder %s226, %s228
    %p232 = scmp.eq.s32.totalorder %s24, 0
    %p233 = por %p231, %p232
    %p234 = scmp.ne.s32.totalorder %s226, %s228
    %p235 = scmp.eq.s32.totalorder %s29, 1
    %p236 = por %p234, %p235
    %p237 = scmp.ne.s32.totalorder %s228, %s229
    %p238 = scmp.eq.s32.totalorder %s29, 0
    %p239 = por %p237, %p238
    %p240 = scmp.ne.s32.totalorder %s228, %s229
    %p241 = scmp.eq.s32.totalorder %s30, 1
    %p242 = por %p240, %p241
    %p244 = scmp.ne.s32.totalorder %s229, %s243
    %p245 = scmp.eq.s32.totalorder %s30, 0
    %p246 = por %p244, %p245
    %s248 = sadd.s32 %s247, 1
    %p251 = scmp.eq.s32.totalorder %s24, 1
    %p252 = scmp.ne.s32.totalorder %s247, %s249
    %p253 = scmp.eq.s32.totalorder %s24, 0
    %p254 = por %p252, %p253
    %p255 = scmp.ne.s32.totalorder %s247, %s249
    %p256 = scmp.eq.s32.totalorder %s29, 1
    %p257 = por %p255, %p256
    %p258 = scmp.ne.s32.totalorder %s249, %s250
    %p259 = scmp.eq.s32.totalorder %s29, 0
    %p260 = por %p258, %p259
    %p261 = scmp.ne.s32.totalorder %s249, %s250
    %p262 = scmp.eq.s32.totalorder %s30, 1
    %p263 = por %p261, %p262
    %p265 = scmp.ne.s32.totalorder %s250, %s264
    %p266 = scmp.eq.s32.totalorder %s30, 0
    %p267 = por %p265, %p266
    %s269 = sadd.s32 %s268, 1
    %p272 = scmp.eq.s32.totalorder %s24, 1
    %p273 = scmp.ne.s32.totalorder %s268, %s270
    %p274 = scmp.eq.s32.totalorder %s24, 0
    %p275 = por %p273, %p274
    %p276 = scmp.ne.s32.totalorder %s268, %s270
    %p277 = scmp.eq.s32.totalorder %s29, 1
    %p278 = por %p276, %p277
    %p279 = scmp.ne.s32.totalorder %s270, %s271
    %p280 = scmp.eq.s32.totalorder %s29, 0
    %p281 = por %p279, %p280
    %p282 = scmp.ne.s32.totalorder %s270, %s271
    %p283 = scmp.eq.s32.totalorder %s30, 1
    %p284 = por %p282, %p283
    %p286 = scmp.ne.s32.totalorder %s271, %s285
    %p287 = scmp.eq.s32.totalorder %s30, 0
    %p288 = por %p286, %p287
    %s290 = sadd.s32 %s289, 1
    %p293 = scmp.eq.s32.totalorder %s24, 1
    %p294 = scmp.ne.s32.totalorder %s289, %s291
    %p295 = scmp.eq.s32.totalorder %s24, 0
    %p296 = por %p294, %p295
    %p297 = scmp.ne.s32.totalorder %s289, %s291
    %p298 = scmp.eq.s32.totalorder %s29, 1
    %p299 = por %p297, %p298
    %p300 = scmp.ne.s32.totalorder %s291, %s292
    %p301 = scmp.eq.s32.totalorder %s29, 0
    %p302 = por %p300, %p301
    %p303 = scmp.ne.s32.totalorder %s291, %s292
    %p304 = scmp.eq.s32.totalorder %s30, 1
    %p305 = por %p303, %p304
    %p307 = scmp.ne.s32.totalorder %s292, %s306
    %p308 = scmp.eq.s32.totalorder %s30, 0
    %p309 = por %p307, %p308
    %s311 = sadd.s32 %s310, 1
    %p314 = scmp.eq.s32.totalorder %s24, 1
    %p315 = scmp.ne.s32.totalorder %s310, %s312
    %p316 = scmp.eq.s32.totalorder %s24, 0
    %p317 = por %p315, %p316
    %p318 = scmp.ne.s32.totalorder %s310, %s312
    %p319 = scmp.eq.s32.totalorder %s29, 1
    %p320 = por %p318, %p319
    %p321 = scmp.ne.s32.totalorder %s312, %s313
    %p322 = scmp.eq.s32.totalorder %s29, 0
    %p323 = por %p321, %p322
    %p324 = scmp.ne.s32.totalorder %s312, %s313
    %p325 = scmp.eq.s32.totalorder %s30, 1
    %p326 = por %p324, %p325
    %p328 = scmp.ne.s32.totalorder %s313, %s327
    %p329 = scmp.eq.s32.totalorder %s30, 0
    %p330 = por %p328, %p329
    %s332 = sadd.s32 %s331, 1
    %p335 = scmp.eq.s32.totalorder %s24, 1
    %p336 = scmp.ne.s32.totalorder %s331, %s333
    %p337 = scmp.eq.s32.totalorder %s24, 0
    %p338 = por %p336, %p337
    %p339 = scmp.ne.s32.totalorder %s331, %s333
    %p340 = scmp.eq.s32.totalorder %s29, 1
    %p341 = por %p339, %p340
    %p342 = scmp.ne.s32.totalorder %s333, %s334
    %p343 = scmp.eq.s32.totalorder %s29, 0
    %p344 = por %p342, %p343
    %p345 = scmp.ne.s32.totalorder %s333, %s334
    %p346 = scmp.eq.s32.totalorder %s30, 1
    %p347 = por %p345, %p346
    %p349 = scmp.ne.s32.totalorder %s334, %s348
    %p350 = scmp.eq.s32.totalorder %s30, 0
    %p351 = por %p349, %p350
    %s353 = sadd.s32 %s352, 1
    %p356 = scmp.eq.s32.totalorder %s24, 1
    %p357 = scmp.ne.s32.totalorder %s352, %s354
    %p358 = scmp.eq.s32.totalorder %s24, 0
    %p359 = por %p357, %p358
    %p360 = scmp.ne.s32.totalorder %s352, %s354
    %p361 = scmp.eq.s32.totalorder %s29, 1
    %p362 = por %p360, %p361
    %p363 = scmp.ne.s32.totalorder %s354, %s355
    %p364 = scmp.eq.s32.totalorder %s29, 0
    %p365 = por %p363, %p364
    %p366 = scmp.ne.s32.totalorder %s354, %s355
    %p367 = scmp.eq.s32.totalorder %s30, 1
    %p368 = por %p366, %p367
    %p370 = scmp.ne.s32.totalorder %s355, %s369
    %p371 = scmp.eq.s32.totalorder %s30, 0
    %p372 = por %p370, %p371
    %s373 = ssub.s32 %s24, %s31
    %p374 = scmp.eq.s32.totalorder %s373, 0
    %s376 = sadd.s32 %s375, 1
    %s377 = scalar_select %p374, %s375, %s376
    %p380 = pneg %p374
    %p381 = scmp.eq.s32.totalorder %s24, 1
    %p382 = por %p380, %p381
    %p383 = scmp.ne.s32.totalorder %s375, %s378
    %p384 = scmp.eq.s32.totalorder %s24, 0
    %p385 = por %p383, %p384
    %p386 = scmp.ne.s32.totalorder %s375, %s378
    %p387 = scmp.eq.s32.totalorder %s29, 1
    %p388 = por %p386, %p387
    %p389 = scmp.ne.s32.totalorder %s378, %s379
    %p390 = scmp.eq.s32.totalorder %s29, 0
    %p391 = por %p389, %p390
    %p392 = scmp.ne.s32.totalorder %s378, %s379
    %p393 = scmp.eq.s32.totalorder %s30, 1
    %p394 = por %p392, %p393
    %p396 = scmp.ne.s32.totalorder %s379, %s395
    %p397 = scmp.eq.s32.totalorder %s30, 0
    %p398 = por %p396, %p397
    %p399 = scmp.le.s32.totalorder 1, %s24
    %p400 = scmp.lt.s32.totalorder %s24, 3
    %p401 = pnand %p399, %p400
    %p402 = pneg %p401
    // Predicated region
    $region9: #{context_autoencoder.1} parent=5 // pred_check
      _
    $region10: #{context_autoencoder.1} parent=5 // pred_check_branch
      %404 = sbr.rel (%p401) target = $region12
    $region11: #{context_autoencoder.1} parent=5 // pred_region
      %s405 = ssub.s32 %s24, 1
      // Predicated region
      $region13: #{context_autoencoder.1} parent=11 // pred_check
        %p406 = pneg %p71
      $region14: #{context_autoencoder.1} parent=11 // pred_check_branch
        %408 = sbr.rel (%p406) target = $region16
      $region15: #{context_autoencoder.1} parent=11 // pred_region
        _
      $region16: #{context_autoencoder.1} parent=11 // pred_fallthru
        _
      // Predicated region
      $region17: #{context_autoencoder.1} parent=11 // pred_check
        %p409 = pneg %p92
      $region18: #{context_autoencoder.1} parent=11 // pred_check_branch
        %411 = sbr.rel (%p409) target = $region20
      $region19: #{context_autoencoder.1} parent=11 // pred_region
        _
      $region20: #{context_autoencoder.1} parent=11 // pred_fallthru
        _
      // Predicated region
      $region21: #{context_autoencoder.1} parent=11 // pred_check
        %p412 = pneg %p113
      $region22: #{context_autoencoder.1} parent=11 // pred_check_branch
        %414 = sbr.rel (%p412) target = $region24
      $region23: #{context_autoencoder.1} parent=11 // pred_region
        _
      $region24: #{context_autoencoder.1} parent=11 // pred_fallthru
        _
      // Predicated region
      $region25: #{context_autoencoder.1} parent=11 // pred_check
        %p415 = pneg %p134
      $region26: #{context_autoencoder.1} parent=11 // pred_check_branch
        %417 = sbr.rel (%p415) target = $region28
      $region27: #{context_autoencoder.1} parent=11 // pred_region
        _
      $region28: #{context_autoencoder.1} parent=11 // pred_fallthru
        _
      // Predicated region
      $region29: #{context_autoencoder.1} parent=11 // pred_check
        %p418 = pneg %p155
      $region30: #{context_autoencoder.1} parent=11 // pred_check_branch
        %420 = sbr.rel (%p418) target = $region32
      $region31: #{context_autoencoder.1} parent=11 // pred_region
        _
      $region32: #{context_autoencoder.1} parent=11 // pred_fallthru
        _
      // Predicated region
      $region33: #{context_autoencoder.1} parent=11 // pred_check
        %p421 = pneg %p176
      $region34: #{context_autoencoder.1} parent=11 // pred_check_branch
        %423 = sbr.rel (%p421) target = $region36
      $region35: #{context_autoencoder.1} parent=11 // pred_region
        _
      $region36: #{context_autoencoder.1} parent=11 // pred_fallthru
        _
      // Predicated region
      $region37: #{context_autoencoder.1} parent=11 // pred_check
        %p424 = pneg %p197
      $region38: #{context_autoencoder.1} parent=11 // pred_check_branch
        %426 = sbr.rel (%p424) target = $region40
      $region39: #{context_autoencoder.1} parent=11 // pred_region
        _
      $region40: #{context_autoencoder.1} parent=11 // pred_fallthru
        _
      // Predicated region
      $region41: #{context_autoencoder.1} parent=11 // pred_check
        %p427 = pneg %p218
      $region42: #{context_autoencoder.1} parent=11 // pred_check_branch
        %429 = sbr.rel (%p427) target = $region44
      $region43: #{context_autoencoder.1} parent=11 // pred_region
        _
      $region44: #{context_autoencoder.1} parent=11 // pred_fallthru
        _
      // Predicated region
      $region45: #{context_autoencoder.1} parent=11 // pred_check
        %p430 = pneg %p239
      $region46: #{context_autoencoder.1} parent=11 // pred_check_branch
        %432 = sbr.rel (%p430) target = $region48
      $region47: #{context_autoencoder.1} parent=11 // pred_region
        _
      $region48: #{context_autoencoder.1} parent=11 // pred_fallthru
        _
      // Predicated region
      $region49: #{context_autoencoder.1} parent=11 // pred_check
        %p433 = pneg %p260
      $region50: #{context_autoencoder.1} parent=11 // pred_check_branch
        %435 = sbr.rel (%p433) target = $region52
      $region51: #{context_autoencoder.1} parent=11 // pred_region
        _
      $region52: #{context_autoencoder.1} parent=11 // pred_fallthru
        _
      // Predicated region
      $region53: #{context_autoencoder.1} parent=11 // pred_check
        %p436 = pneg %p281
      $region54: #{context_autoencoder.1} parent=11 // pred_check_branch
        %438 = sbr.rel (%p436) target = $region56
      $region55: #{context_autoencoder.1} parent=11 // pred_region
        _
      $region56: #{context_autoencoder.1} parent=11 // pred_fallthru
        _
      // Predicated region
      $region57: #{context_autoencoder.1} parent=11 // pred_check
        %p439 = pneg %p302
      $region58: #{context_autoencoder.1} parent=11 // pred_check_branch
        %441 = sbr.rel (%p439) target = $region60
      $region59: #{context_autoencoder.1} parent=11 // pred_region
        _
      $region60: #{context_autoencoder.1} parent=11 // pred_fallthru
        _
      // Predicated region
      $region61: #{context_autoencoder.1} parent=11 // pred_check
        %p442 = pneg %p323
      $region62: #{context_autoencoder.1} parent=11 // pred_check_branch
        %444 = sbr.rel (%p442) target = $region64
      $region63: #{context_autoencoder.1} parent=11 // pred_region
        _
      $region64: #{context_autoencoder.1} parent=11 // pred_fallthru
        _
      // Predicated region
      $region65: #{context_autoencoder.1} parent=11 // pred_check
        %p445 = pneg %p344
      $region66: #{context_autoencoder.1} parent=11 // pred_check_branch
        %447 = sbr.rel (%p445) target = $region68
      $region67: #{context_autoencoder.1} parent=11 // pred_region
        _
      $region68: #{context_autoencoder.1} parent=11 // pred_fallthru
        _
      // Predicated region
      $region69: #{context_autoencoder.1} parent=11 // pred_check
        %p448 = pneg %p365
      $region70: #{context_autoencoder.1} parent=11 // pred_check_branch
        %450 = sbr.rel (%p448) target = $region72
      $region71: #{context_autoencoder.1} parent=11 // pred_region
        _
      $region72: #{context_autoencoder.1} parent=11 // pred_fallthru
        _
    $region12: #{context_autoencoder.1} parent=5 // pred_fallthru
      _
    %p451 = scmp.lt.s32.totalorder %s24, 2
    // Predicated region
    $region73: #{context_autoencoder.1} parent=5 // pred_check
      %p452 = pneg %p451
    $region74: #{context_autoencoder.1} parent=5 // pred_check_branch
      %454 = sbr.rel (%p452) target = $region76
    $region75: #{context_autoencoder.1} parent=5 // pred_region
      // Predicated region
      $region77: #{context_autoencoder.1} parent=75 // pred_check
        %p455 = pneg %p44
      $region78: #{context_autoencoder.1} parent=75 // pred_check_branch
        %457 = sbr.rel (%p455) target = $region80
      $region79: #{context_autoencoder.1} parent=75 // pred_region
        %p458 = scmp.lt.s32.totalorder %s24, 1
        %s459 = scalar_select %p458, %s24, 1
        %s460 = smul.addr %s459, 4
        %s461 = smul.addr %s460, 4
        %s462 = scalar_lea.vmem %s0, %s461
      $region80: #{context_autoencoder.1} parent=75 // pred_fallthru
        _
    $region76: #{context_autoencoder.1} parent=5 // pred_fallthru
      _
    %p463 = scmp.le.s32.totalorder 1, %s24
    %p464 = scmp.lt.s32.totalorder %s24, 3
    %p465 = pnand %p463, %p464
    %p466 = pneg %p465
    // Predicated region
    $region81: #{context_autoencoder.1} parent=5 // pred_check
      _
    $region82: #{context_autoencoder.1} parent=5 // pred_check_branch
      %468 = sbr.rel (%p465) target = $region84
    $region83: #{context_autoencoder.1} parent=5 // pred_region
      %s469 = ssub.s32 %s24, 1
      %p470 = scmp.lt.s32.totalorder %s29, 1
      %s471 = scalar_select %p470, %s29, 1
      %s472 = smul.addr %s471, 4
      %s473 = smul.addr %s472, 4
      %s474 = scalar_lea.vmem %s0, %s473
      %p475 = pneg %p50
      %p476 = pneg %p47
      %p477 = pneg %p71
      %p478 = pneg %p68
      %p479 = pneg %p92
      %p480 = pneg %p89
      %p481 = pneg %p113
      %p482 = pneg %p110
      %p483 = pneg %p134
      %p484 = pneg %p131
      %p485 = pneg %p155
      %p486 = pneg %p152
      %p487 = pneg %p176
      %p488 = pneg %p173
      %p489 = pneg %p197
      %p490 = pneg %p194
      %p491 = pneg %p218
      %p492 = pneg %p215
      %p493 = pneg %p239
      %p494 = pneg %p236
      %p495 = pneg %p260
      %p496 = pneg %p257
      %p497 = pneg %p281
      %p498 = pneg %p278
      %p499 = pneg %p302
      %p500 = pneg %p299
      %p501 = pneg %p323
      %p502 = pneg %p320
      %p503 = pneg %p344
      %p504 = pneg %p341
      %p505 = pneg %p365
      %p506 = pneg %p362
      %p507 = pneg %p391
      %p508 = pneg %p388
      %p509 = scmp.lt.s32.totalorder %s29, 1
      %s510 = scalar_select %p509, %s29, 1
      %s511 = smul.addr %s510, 16
      %s512 = scalar_lea.vmem %s16, %s511
      %p513 = scmp.lt.s32.totalorder %s29, 1
      %s514 = scalar_select %p513, %s29, 1
      %s515 = smul.addr %s514, 4
      %s516 = smul.addr %s515, 4
      %s517 = scalar_lea.vmem %s0, %s516
      %p518 = scmp.lt.s32.totalorder %s29, 1
      %s519 = scalar_select %p518, %s29, 1
      %s520 = smul.addr %s519, 16
      %s521 = scalar_lea.vmem %s16, %s520
      %v523 = vld [vmem:[%s1] sm:$0x1]
      %v524 = vld [vmem:[%s1] sm:$0x2]
      %v525 = vld [vmem:[%s2] sm:$0xf]
      %v526 = vld [vmem:[%s2 + $0x4] sm:$0xf]
      %v527 = vld [vmem:[%s517] sm:$0xff]
      %v528 = vld [vmem:[%s517 + $0x8] sm:$0x11]
      %v529 = vld [vmem:[%s3] sm:$0xff]
      %v530 = vld [vmem:[%s3 + $0x8] sm:$0xff]
      %532 = vset.pattern.permute.xlu0 0
      %533 = vperm.xlu0 %532, %v529
      %v534 = vpop.permute.xlu0 %533
      %537 = vset.pattern.permute.xlu0 0
      %538 = vperm.xlu0 %537, %v530
      %v539 = vpop.permute.xlu0 %538
      %v543 = vunpack.c.l.b16 %v525
      %v544 = vunpack.c.l.b16 %v526
      %v545 = vpack.c.b16 %v544, %v543
      %v548 = vunpack.c.l.b16 %v527
      %v549 = vunpack.c.h.b16 %v527
      %v550 = vunpack.c.l.b16 %v528
      %v551 = vunpack.c.h.b16 %v528
      %v552 = vpack.c.b16 %v550, %v548
      %v553 = vpack.c.b16 %v551, %v549
      %vm554 = vcmask 72704
      %v556 = vsel %vm554, %v545, 0
      %vm558 = vcmask 1043456
      %vm559 = vcmask 1044480
      %v560 = vsel %vm558, 4294967295, 65535
      %v561 = vsel %vm559, %v560, 0
      %v563 = vand.u32 %v552, %v561
      %v566 = vand.u32 %v553, %v561
      %568 = vmatpush.bf16.msra.mxu0 0
      %569 = vmatpush.bf16.msra.mxu0 0
      %570 = vmatpush.bf16.msra.mxu0 0
      %571 = vmatpush.bf16.msra.mxu0 0
      %572 = vmatpush.bf16.msra.mxu0 0
      %573 = vmatpush.bf16.msra.mxu0 0
      %574 = vmatpush.bf16.msra.mxu0 0
      %575 = vmatpush.bf16.msra.mxu0 %v563
      %576 = vmatmul.bf16.gmra.mxu0 %v556
      %v577 = vpop.f32.mrf.mxu0
      %v578 = vadd.f32 %v534, %v577
      %v579 = vpop.f32.mrf.mxu0
      %v580 = vadd.f32 %v539, %v579
      %581 = vdwg.mxu0
      %582 = vmatpush.bf16.msra.mxu0 0
      %583 = vmatpush.bf16.msra.mxu0 0
      %584 = vmatpush.bf16.msra.mxu0 0
      %585 = vmatpush.bf16.msra.mxu0 0
      %586 = vmatpush.bf16.msra.mxu0 0
      %587 = vmatpush.bf16.msra.mxu0 0
      %588 = vmatpush.bf16.msra.mxu0 0
      %589 = vmatpush.bf16.msra.mxu0 %v566
      %590 = vmatmul.bf16.gmra.mxu0 %v556
      %v591 = vpop.f32.mrf.mxu0
      %v592 = vadd.f32 %v534, %v591
      %v593 = vpop.f32.mrf.mxu0
      %v594 = vadd.f32 %v539, %v593
      %595 = vdwg.mxu0
      %v596 = vmax.f32 %v578, 0.0
      %v597 = vmax.f32 %v592, 0.0
      %v598 = vmax.f32 %v580, 0.0
      %v599 = vmax.f32 %v594, 0.0
      %vm600 = vcmask 60416
      %601 = vst.msk [vmem:[#allocation2] sm:$0xf] %vm600, 0
      %602 = vst.msk [vmem:[#allocation2 + $0x8] sm:$0xf] %vm600, 0
      %v603 = vpack.c.bf16 %v597, %v596
      %v604 = vpack.c.bf16 %v599, %v598
      %607 = vrot.lane.b32.xlu0 %v603, 8
      %v608 = vpop.permute.xlu0 %607
      %609 = vrot.lane.b32.xlu0 %v604, 8
      %v610 = vpop.permute.xlu0 %609
      %v611 = vrot.slane %v608, 4
      %v612 = vrot.slane %v610, 4
      %vm613 = vcmask 64512
      %v614 = vsel %vm613, %v611, %v608
      %v615 = vsel %vm613, %v612, %v610
      %vm618 = vcmask 1043520
      %vm619 = vcmask 621572
      %vm620 = vmor %vm619, %vm618
      %621 = vst.msk [vmem:[#allocation2] sm:$0xff] %vm620, %v614
      %622 = vst.msk [vmem:[#allocation2 + $0x8] sm:$0xff] %vm620, %v615
      %v623 = vld [vmem:[#allocation2 + $0x4] sm:$0xf]
      %v624 = vld [vmem:[#allocation2 + $0xc] sm:$0xf]
      %v626 = vshrl.u32 %v523, 16
      %v627 = vpack.i.b16 %v626, %v626
      %v629 = vperm.slane %v627, 0
      %v630 = vunpack.c.l.bf16 %v623
      %v631 = vunpack.c.l.bf16 %v624
      %v632 = vunpack.c.l.bf16 %v629
      %634 = vrot.lane.b32.xlu0 %v632, 19
      %v635 = vpop.permute.xlu0 %634
      %v637 = vmul.f32 %v630, %v635
      %v638 = vmul.f32 %v631, %v635
      %v639 = vpack.c.bf16 %v637, %v637
      %v640 = vpack.c.bf16 %v638, %v638
      %v641 = vpack.i.b16 %v523, %v523
      %v643 = vperm.slane %v641, 0
      %v644 = vunpack.c.l.bf16 %v639
      %v645 = vunpack.c.l.bf16 %v640
      %v646 = vunpack.c.l.bf16 %v643
      %648 = vrot.lane.b32.xlu0 %v646, 19
      %v649 = vpop.permute.xlu0 %648
      %v651 = vmul.f32 %v644, %v649
      %v652 = vmul.f32 %v645, %v649
      %v653 = vpack.c.bf16 %v652, %v651
      %v654 = vld [vmem:[%s4] sm:$0xf]
      %v655 = vld [vmem:[%s4 + $0x4] sm:$0xf]
      %v656 = vld [vmem:[%s4 + $0x8] sm:$0xf]
      %v657 = vld [vmem:[%s4 + $0xc] sm:$0xf]
      %v658 = vld [vmem:[#allocation2] sm:$0xff]
      %v659 = vld [vmem:[#allocation2 + $0x8] sm:$0xff]
      %v660 = vunpack.c.l.bf16 %v658
      %v661 = vunpack.c.h.bf16 %v658
      %v662 = vunpack.c.l.bf16 %v659
      %v663 = vunpack.c.h.bf16 %v659
      %664 = vrot.lane.b32.xlu0 %v632, 99
      %v665 = vpop.permute.xlu0 %664
      %v667 = vmul.f32 %v660, %v665
      %v668 = vmul.f32 %v661, %v665
      %v669 = vmul.f32 %v662, %v665
      %v670 = vmul.f32 %v663, %v665
      %v671 = vpack.c.bf16 %v669, %v667
      %v672 = vpack.c.bf16 %v670, %v668
      %s673 = scalar_lea.vmem %s4, 16
      %v674 = vld [vmem:[%s673] sm:$0xf]
      %v675 = vld [vmem:[%s673 + $0x4] sm:$0xf]
      %v676 = vld [vmem:[%s673 + $0x8] sm:$0xf]
      %v677 = vld [vmem:[%s673 + $0xc] sm:$0xf]
      %v682 = vunpack.c.l.b16 %v674
      %v683 = vunpack.c.l.b16 %v675
      %v684 = vunpack.c.l.b16 %v676
      %v685 = vunpack.c.l.b16 %v677
      %v686 = vpack.c.b16 %v683, %v682
      %v687 = vpack.c.b16 %v685, %v684
      %690 = vrot.lane.b32.xlu0 %v671, 29
      %v691 = vpop.permute.xlu0 %690
      %692 = vrot.lane.b32.xlu0 %v672, 29
      %v693 = vpop.permute.xlu0 %692
      %vm694 = vcmask 236544
      %v695 = vsel %vm694, %v691, %v693
      %vm697 = vcmask 130048
      %v699 = vsel %vm697, %v686, 0
      %v702 = vsel %vm697, %v687, 0
      %704 = vmatpush.bf16.msra.mxu0 0
      %705 = vmatpush.bf16.msra.mxu0 0
      %706 = vmatpush.bf16.msra.mxu0 0
      %707 = vmatpush.bf16.msra.mxu0 0
      %708 = vmatpush.bf16.msra.mxu0 0
      %709 = vmatpush.bf16.msra.mxu0 0
      %710 = vmatpush.bf16.msra.mxu0 0
      %711 = vmatpush.bf16.msra.mxu0 %v695
      %712 = vmatmul.bf16.gmra.mxu0 %v699
      %v713 = vpop.f32.mrf.mxu0
      %v714 = vadd.f32 0.0, %v713
      %v715 = vpop.f32.mrf.mxu0
      %v716 = vadd.f32 0.0, %v715
      %717 = vmatmul.bf16.gmra.mxu0 %v702
      %v718 = vpop.f32.mrf.mxu0
      %v719 = vadd.f32 0.0, %v718
      %v720 = vpop.f32.mrf.mxu0
      %v721 = vadd.f32 0.0, %v720
      %722 = vdwg.mxu0
      %v727 = vunpack.c.l.b16 %v654
      %v728 = vunpack.c.l.b16 %v655
      %v729 = vunpack.c.l.b16 %v656
      %v730 = vunpack.c.l.b16 %v657
      %v731 = vpack.c.b16 %v728, %v727
      %v732 = vpack.c.b16 %v730, %v729
      %734 = vrot.lane.b32.xlu0 %v653, 109
      %v735 = vpop.permute.xlu0 %734
      %v738 = vsel %vm697, %v731, 0
      %v741 = vsel %vm697, %v732, 0
      %743 = vmatpush.bf16.msra.mxu0 0
      %744 = vmatpush.bf16.msra.mxu0 0
      %745 = vmatpush.bf16.msra.mxu0 0
      %746 = vmatpush.bf16.msra.mxu0 0
      %747 = vmatpush.bf16.msra.mxu0 0
      %748 = vmatpush.bf16.msra.mxu0 0
      %749 = vmatpush.bf16.msra.mxu0 0
      %750 = vmatpush.bf16.msra.mxu0 %v735
      %751 = vmatmul.bf16.gmra.mxu0 %v738
      %v752 = vpop.f32.mrf.mxu0
      %v753 = vadd.f32 %v714, %v752
      %v754 = vpop.f32.mrf.mxu0
      %v755 = vadd.f32 %v716, %v754
      %756 = vmatmul.bf16.gmra.mxu0 %v741
      %v757 = vpop.f32.mrf.mxu0
      %v758 = vadd.f32 %v719, %v757
      %v759 = vpop.f32.mrf.mxu0
      %v760 = vadd.f32 %v721, %v759
      %761 = vdwg.mxu0
      %762 = vrot.lane.b32.xlu0 %v632, 20
      %v763 = vpop.permute.xlu0 %762
      %v765 = vmul.f32 %v630, %v763
      %v766 = vmul.f32 %v631, %v763
      %v767 = vpack.c.bf16 %v766, %v765
      %s768 = scalar_lea.vmem %s4, 32
      %v769 = vld [vmem:[%s768] sm:$0xf]
      %v770 = vld [vmem:[%s768 + $0x4] sm:$0xf]
      %v771 = vld [vmem:[%s768 + $0x8] sm:$0xf]
      %v772 = vld [vmem:[%s768 + $0xc] sm:$0xf]
      %v777 = vunpack.c.l.b16 %v769
      %v778 = vunpack.c.l.b16 %v770
      %v779 = vunpack.c.l.b16 %v771
      %v780 = vunpack.c.l.b16 %v772
      %v781 = vpack.c.b16 %v778, %v777
      %v782 = vpack.c.b16 %v780, %v779
      %784 = vrot.lane.b32.xlu0 %v767, 108
      %v785 = vpop.permute.xlu0 %784
      %v788 = vsel %vm697, %v781, 0
      %v791 = vsel %vm697, %v782, 0
      %793 = vmatpush.bf16.msra.mxu0 0
      %794 = vmatpush.bf16.msra.mxu0 0
      %795 = vmatpush.bf16.msra.mxu0 0
      %796 = vmatpush.bf16.msra.mxu0 0
      %797 = vmatpush.bf16.msra.mxu0 0
      %798 = vmatpush.bf16.msra.mxu0 0
      %799 = vmatpush.bf16.msra.mxu0 0
      %800 = vmatpush.bf16.msra.mxu0 %v785
      %801 = vmatmul.bf16.gmra.mxu0 %v788
      %v802 = vpop.f32.mrf.mxu0
      %v803 = vadd.f32 0.0, %v802
      %v804 = vpop.f32.mrf.mxu0
      %v805 = vadd.f32 0.0, %v804
      %806 = vmatmul.bf16.gmra.mxu0 %v791
      %v807 = vpop.f32.mrf.mxu0
      %v808 = vadd.f32 0.0, %v807
      %v809 = vpop.f32.mrf.mxu0
      %v810 = vadd.f32 0.0, %v809
      %811 = vdwg.mxu0
      %v812 = vadd.f32 %v753, %v803
      %v813 = vadd.f32 %v755, %v805
      %v814 = vadd.f32 %v758, %v808
      %v815 = vadd.f32 %v760, %v810
      %v816 = vld [vmem:[#allocation2] sm:$0xf]
      %v817 = vld [vmem:[#allocation2 + $0x8] sm:$0xf]
      %v818 = vunpack.c.l.bf16 %v816
      %v819 = vunpack.c.l.bf16 %v817
      %820 = vrot.lane.b32.xlu0 %v646, 56
      %v821 = vpop.permute.xlu0 %820
      %v823 = vmul.f32 %v818, %v821
      %v824 = vmul.f32 %v819, %v821
      %v825 = vpack.c.bf16 %v824, %v823
      %s826 = scalar_lea.vmem %s4, 48
      %v827 = vld [vmem:[%s826] sm:$0xf]
      %v828 = vld [vmem:[%s826 + $0x4] sm:$0xf]
      %v829 = vld [vmem:[%s826 + $0x8] sm:$0xf]
      %v830 = vld [vmem:[%s826 + $0xc] sm:$0xf]
      %v835 = vunpack.c.l.b16 %v827
      %v836 = vunpack.c.l.b16 %v828
      %v837 = vunpack.c.l.b16 %v829
      %v838 = vunpack.c.l.b16 %v830
      %v839 = vpack.c.b16 %v836, %v835
      %v840 = vpack.c.b16 %v838, %v837
      %842 = vrot.lane.b32.xlu0 %v825, 72
      %v843 = vpop.permute.xlu0 %842
      %v846 = vsel %vm697, %v839, 0
      %v849 = vsel %vm697, %v840, 0
      %851 = vmatpush.bf16.msra.mxu0 0
      %852 = vmatpush.bf16.msra.mxu0 0
      %853 = vmatpush.bf16.msra.mxu0 0
      %854 = vmatpush.bf16.msra.mxu0 0
      %855 = vmatpush.bf16.msra.mxu0 0
      %856 = vmatpush.bf16.msra.mxu0 0
      %857 = vmatpush.bf16.msra.mxu0 0
      %858 = vmatpush.bf16.msra.mxu0 %v843
      %859 = vmatmul.bf16.gmra.mxu0 %v846
      %v860 = vpop.f32.mrf.mxu0
      %v861 = vadd.f32 0.0, %v860
      %v862 = vpop.f32.mrf.mxu0
      %v863 = vadd.f32 0.0, %v862
      %864 = vmatmul.bf16.gmra.mxu0 %v849
      %v865 = vpop.f32.mrf.mxu0
      %v866 = vadd.f32 0.0, %v865
      %v867 = vpop.f32.mrf.mxu0
      %v868 = vadd.f32 0.0, %v867
      %869 = vdwg.mxu0
      %v870 = vadd.f32 %v812, %v861
      %v871 = vadd.f32 %v813, %v863
      %v872 = vadd.f32 %v814, %v866
      %v873 = vadd.f32 %v815, %v868
      %s874 = scalar_lea.vmem %s4, 64
      %v875 = vld [vmem:[%s874] sm:$0xf]
      %v876 = vld [vmem:[%s874 + $0x4] sm:$0xf]
      %v877 = vld [vmem:[%s874 + $0x8] sm:$0xf]
      %v878 = vld [vmem:[%s874 + $0xc] sm:$0xf]
      %v883 = vunpack.c.l.b16 %v875
      %v884 = vunpack.c.l.b16 %v876
      %v885 = vunpack.c.l.b16 %v877
      %v886 = vunpack.c.l.b16 %v878
      %v887 = vpack.c.b16 %v884, %v883
      %v888 = vpack.c.b16 %v886, %v885
      %v891 = vunpack.c.l.b16 %v816
      %v892 = vunpack.c.l.b16 %v817
      %v893 = vpack.c.b16 %v892, %v891
      %894 = vrot.lane.b32.xlu0 %v893, 120
      %v895 = vpop.permute.xlu0 %894
      %v898 = vsel %vm697, %v887, 0
      %v901 = vsel %vm697, %v888, 0
      %903 = vmatpush.bf16.msra.mxu0 0
      %904 = vmatpush.bf16.msra.mxu0 0
      %905 = vmatpush.bf16.msra.mxu0 0
      %906 = vmatpush.bf16.msra.mxu0 0
      %907 = vmatpush.bf16.msra.mxu0 0
      %908 = vmatpush.bf16.msra.mxu0 0
      %909 = vmatpush.bf16.msra.mxu0 0
      %910 = vmatpush.bf16.msra.mxu0 %v895
      %911 = vmatmul.bf16.gmra.mxu0 %v898
      %v912 = vpop.f32.mrf.mxu0
      %v913 = vadd.f32 0.0, %v912
      %v914 = vpop.f32.mrf.mxu0
      %v915 = vadd.f32 0.0, %v914
      %916 = vmatmul.bf16.gmra.mxu0 %v901
      %v917 = vpop.f32.mrf.mxu0
      %v918 = vadd.f32 0.0, %v917
      %v919 = vpop.f32.mrf.mxu0
      %v920 = vadd.f32 0.0, %v919
      %921 = vdwg.mxu0
      %v922 = vadd.f32 %v870, %v913
      %v923 = vadd.f32 %v871, %v915
      %v924 = vadd.f32 %v872, %v918
      %v925 = vadd.f32 %v873, %v920
      %s926 = scalar_lea.vmem %s4, 80
      %v927 = vld [vmem:[%s926] sm:$0xf]
      %v928 = vld [vmem:[%s926 + $0x4] sm:$0xf]
      %v929 = vld [vmem:[%s926 + $0x8] sm:$0xf]
      %v930 = vld [vmem:[%s926 + $0xc] sm:$0xf]
      %v935 = vunpack.c.l.b16 %v927
      %v936 = vunpack.c.l.b16 %v928
      %v937 = vunpack.c.l.b16 %v929
      %v938 = vunpack.c.l.b16 %v930
      %v939 = vpack.c.b16 %v936, %v935
      %v940 = vpack.c.b16 %v938, %v937
      %941 = vrot.lane.b32.xlu0 %v893, 71
      %v942 = vpop.permute.xlu0 %941
      %v945 = vsel %vm697, %v939, 0
      %v948 = vsel %vm697, %v940, 0
      %950 = vmatpush.bf16.msra.mxu0 0
      %951 = vmatpush.bf16.msra.mxu0 0
      %952 = vmatpush.bf16.msra.mxu0 0
      %953 = vmatpush.bf16.msra.mxu0 0
      %954 = vmatpush.bf16.msra.mxu0 0
      %955 = vmatpush.bf16.msra.mxu0 0
      %956 = vmatpush.bf16.msra.mxu0 0
      %957 = vmatpush.bf16.msra.mxu0 %v942
      %958 = vmatmul.bf16.gmra.mxu0 %v945
      %v959 = vpop.f32.mrf.mxu0
      %v960 = vadd.f32 0.0, %v959
      %v961 = vpop.f32.mrf.mxu0
      %v962 = vadd.f32 0.0, %v961
      %963 = vmatmul.bf16.gmra.mxu0 %v948
      %v964 = vpop.f32.mrf.mxu0
      %v965 = vadd.f32 0.0, %v964
      %v966 = vpop.f32.mrf.mxu0
      %v967 = vadd.f32 0.0, %v966
      %968 = vdwg.mxu0
      %v969 = vadd.f32 %v922, %v960
      %v970 = vadd.f32 %v923, %v962
      %v971 = vadd.f32 %v924, %v965
      %v972 = vadd.f32 %v925, %v967
      %973 = vrot.lane.b32.xlu0 %v646, 26
      %v974 = vpop.permute.xlu0 %973
      %v976 = vmul.f32 %v630, %v974
      %v977 = vmul.f32 %v631, %v974
      %v978 = vpack.c.bf16 %v977, %v976
      %s979 = scalar_lea.vmem %s4, 96
      %v980 = vld [vmem:[%s979] sm:$0xf]
      %v981 = vld [vmem:[%s979 + $0x4] sm:$0xf]
      %v982 = vld [vmem:[%s979 + $0x8] sm:$0xf]
      %v983 = vld [vmem:[%s979 + $0xc] sm:$0xf]
      %v988 = vunpack.c.l.b16 %v980
      %v989 = vunpack.c.l.b16 %v981
      %v990 = vunpack.c.l.b16 %v982
      %v991 = vunpack.c.l.b16 %v983
      %v992 = vpack.c.b16 %v989, %v988
      %v993 = vpack.c.b16 %v991, %v990
      %995 = vrot.lane.b32.xlu0 %v978, 102
      %v996 = vpop.permute.xlu0 %995
      %v999 = vsel %vm697, %v992, 0
      %v1002 = vsel %vm697, %v993, 0
      %1004 = vmatpush.bf16.msra.mxu0 0
      %1005 = vmatpush.bf16.msra.mxu0 0
      %1006 = vmatpush.bf16.msra.mxu0 0
      %1007 = vmatpush.bf16.msra.mxu0 0
      %1008 = vmatpush.bf16.msra.mxu0 0
      %1009 = vmatpush.bf16.msra.mxu0 0
      %1010 = vmatpush.bf16.msra.mxu0 0
      %1011 = vmatpush.bf16.msra.mxu0 %v996
      %1012 = vmatmul.bf16.gmra.mxu0 %v999
      %v1013 = vpop.f32.mrf.mxu0
      %v1014 = vadd.f32 0.0, %v1013
      %v1015 = vpop.f32.mrf.mxu0
      %v1016 = vadd.f32 0.0, %v1015
      %1017 = vmatmul.bf16.gmra.mxu0 %v1002
      %v1018 = vpop.f32.mrf.mxu0
      %v1019 = vadd.f32 0.0, %v1018
      %v1020 = vpop.f32.mrf.mxu0
      %v1021 = vadd.f32 0.0, %v1020
      %1022 = vdwg.mxu0
      %v1023 = vadd.f32 %v969, %v1014
      %v1024 = vadd.f32 %v970, %v1016
      %v1025 = vadd.f32 %v971, %v1019
      %v1026 = vadd.f32 %v972, %v1021
      %s1027 = scalar_lea.vmem %s4, 112
      %v1028 = vld [vmem:[%s1027] sm:$0xf]
      %v1029 = vld [vmem:[%s1027 + $0x4] sm:$0xf]
      %v1030 = vld [vmem:[%s1027 + $0x8] sm:$0xf]
      %v1031 = vld [vmem:[%s1027 + $0xc] sm:$0xf]
      %v1036 = vunpack.c.l.b16 %v1028
      %v1037 = vunpack.c.l.b16 %v1029
      %v1038 = vunpack.c.l.b16 %v1030
      %v1039 = vunpack.c.l.b16 %v1031
      %v1040 = vpack.c.b16 %v1037, %v1036
      %v1041 = vpack.c.b16 %v1039, %v1038
      %v1044 = vunpack.c.l.b16 %v658
      %v1045 = vunpack.c.h.b16 %v658
      %v1046 = vunpack.c.l.b16 %v659
      %v1047 = vunpack.c.h.b16 %v659
      %v1048 = vpack.c.b16 %v1046, %v1044
      %v1049 = vpack.c.b16 %v1047, %v1045
      %1050 = vrot.lane.b32.xlu0 %v1048, 22
      %v1051 = vpop.permute.xlu0 %1050
      %1052 = vrot.lane.b32.xlu0 %v1049, 22
      %v1053 = vpop.permute.xlu0 %1052
      %vm1054 = vcmask 179200
      %v1055 = vsel %vm1054, %v1051, %v1053
      %v1058 = vsel %vm697, %v1040, 0
      %v1061 = vsel %vm697, %v1041, 0
      %1063 = vmatpush.bf16.msra.mxu0 0
      %1064 = vmatpush.bf16.msra.mxu0 0
      %1065 = vmatpush.bf16.msra.mxu0 0
      %1066 = vmatpush.bf16.msra.mxu0 0
      %1067 = vmatpush.bf16.msra.mxu0 0
      %1068 = vmatpush.bf16.msra.mxu0 0
      %1069 = vmatpush.bf16.msra.mxu0 0
      %1070 = vmatpush.bf16.msra.mxu0 %v1055
      %1071 = vmatmul.bf16.gmra.mxu0 %v1058
      %v1072 = vpop.f32.mrf.mxu0
      %v1073 = vadd.f32 0.0, %v1072
      %v1074 = vpop.f32.mrf.mxu0
      %v1075 = vadd.f32 0.0, %v1074
      %1076 = vmatmul.bf16.gmra.mxu0 %v1061
      %v1077 = vpop.f32.mrf.mxu0
      %v1078 = vadd.f32 0.0, %v1077
      %v1079 = vpop.f32.mrf.mxu0
      %v1080 = vadd.f32 0.0, %v1079
      %1081 = vdwg.mxu0
      %v1082 = vadd.f32 %v1023, %v1073
      %v1083 = vadd.f32 %v1024, %v1075
      %v1084 = vadd.f32 %v1025, %v1078
      %v1085 = vadd.f32 %v1026, %v1080
      %s1086 = scalar_lea.vmem %s4, 128
      %v1087 = vld [vmem:[%s1086] sm:$0xf]
      %v1088 = vld [vmem:[%s1086 + $0x4] sm:$0xf]
      %v1089 = vld [vmem:[%s1086 + $0x8] sm:$0xf]
      %v1090 = vld [vmem:[%s1086 + $0xc] sm:$0xf]
      %v1095 = vunpack.c.l.b16 %v1087
      %v1096 = vunpack.c.l.b16 %v1088
      %v1097 = vunpack.c.l.b16 %v1089
      %v1098 = vunpack.c.l.b16 %v1090
      %v1099 = vpack.c.b16 %v1096, %v1095
      %v1100 = vpack.c.b16 %v1098, %v1097
      %v1103 = vunpack.c.l.b16 %v623
      %v1104 = vunpack.c.l.b16 %v624
      %v1105 = vpack.c.b16 %v1104, %v1103
      %1106 = vrot.lane.b32.xlu0 %v1105, 101
      %v1107 = vpop.permute.xlu0 %1106
      %v1110 = vsel %vm697, %v1099, 0
      %v1113 = vsel %vm697, %v1100, 0
      %1115 = vmatpush.bf16.msra.mxu0 0
      %1116 = vmatpush.bf16.msra.mxu0 0
      %1117 = vmatpush.bf16.msra.mxu0 0
      %1118 = vmatpush.bf16.msra.mxu0 0
      %1119 = vmatpush.bf16.msra.mxu0 0
      %1120 = vmatpush.bf16.msra.mxu0 0
      %1121 = vmatpush.bf16.msra.mxu0 0
      %1122 = vmatpush.bf16.msra.mxu0 %v1107
      %1123 = vmatmul.bf16.gmra.mxu0 %v1110
      %v1124 = vpop.f32.mrf.mxu0
      %v1125 = vadd.f32 0.0, %v1124
      %v1126 = vpop.f32.mrf.mxu0
      %v1127 = vadd.f32 0.0, %v1126
      %1128 = vmatmul.bf16.gmra.mxu0 %v1113
      %v1129 = vpop.f32.mrf.mxu0
      %v1130 = vadd.f32 0.0, %v1129
      %v1131 = vpop.f32.mrf.mxu0
      %v1132 = vadd.f32 0.0, %v1131
      %1133 = vdwg.mxu0
      %v1134 = vadd.f32 %v1082, %v1125
      %v1135 = vadd.f32 %v1083, %v1127
      %v1136 = vadd.f32 %v1084, %v1130
      %v1137 = vadd.f32 %v1085, %v1132
      %v1138 = vld [vmem:[%s5] sm:$0xff]
      %v1139 = vld [vmem:[%s5 + $0x8] sm:$0xff]
      %v1140 = vld [vmem:[%s5 + $0x10] sm:$0xff]
      %v1141 = vld [vmem:[%s5 + $0x18] sm:$0xff]
      %1143 = vset.pattern.permute.xlu0 0
      %1144 = vperm.xlu0 %1143, %v1138
      %v1145 = vpop.permute.xlu0 %1144
      %1148 = vset.pattern.permute.xlu0 0
      %1149 = vperm.xlu0 %1148, %v1139
      %v1150 = vpop.permute.xlu0 %1149
      %1153 = vset.pattern.permute.xlu0 0
      %1154 = vperm.xlu0 %1153, %v1140
      %v1155 = vpop.permute.xlu0 %1154
      %1158 = vset.pattern.permute.xlu0 0
      %1159 = vperm.xlu0 %1158, %v1141
      %v1160 = vpop.permute.xlu0 %1159
      %v1162 = vadd.f32 %v1134, %v1145
      %v1163 = vadd.f32 %v1135, %v1150
      %v1164 = vadd.f32 %v1136, %v1155
      %v1165 = vadd.f32 %v1137, %v1160
      %v1166 = vmax.f32 %v1162, 0.0
      %v1167 = vmax.f32 %v1163, 0.0
      %v1168 = vmax.f32 %v1164, 0.0
      %v1169 = vmax.f32 %v1165, 0.0
      %v1170 = vpack.c.bf16 %v1166, %v1166
      %v1171 = vpack.c.bf16 %v1167, %v1167
      %v1172 = vpack.c.bf16 %v1168, %v1168
      %v1173 = vpack.c.bf16 %v1169, %v1169
      %vm1174 = vcmask 396288
      %1175 = vst.msk [vmem:[#allocation3] sm:$0xf] %vm1174, %v1170
      %1176 = vst.msk [vmem:[#allocation3 + $0x4] sm:$0xf] %vm1174, %v1171
      %1177 = vst.msk [vmem:[#allocation3 + $0x8] sm:$0xf] %vm1174, %v1172
      %1178 = vst.msk [vmem:[#allocation3 + $0xc] sm:$0xf] %vm1174, %v1173
      %v1179 = vld [vmem:[#allocation3] sm:$0x1]
      %v1180 = vld [vmem:[%s6] sm:$0xf]
      %v1181 = vld [vmem:[%s6 + $0x4] sm:$0xf]
      %v1182 = vld [vmem:[%s6 + $0x8] sm:$0xf]
      %v1183 = vld [vmem:[%s6 + $0xc] sm:$0xf]
      %v1184 = vld [vmem:[%s6 + $0x10] sm:$0xf]
      %v1185 = vld [vmem:[%s6 + $0x14] sm:$0xf]
      %v1186 = vld [vmem:[%s6 + $0x18] sm:$0x1]
      %s1187 = scalar_lea.vmem %s6, 28
      %v1188 = vld [vmem:[%s1187] sm:$0xf]
      %v1189 = vld [vmem:[%s1187 + $0x4] sm:$0xf]
      %v1190 = vld [vmem:[%s1187 + $0x8] sm:$0xf]
      %v1191 = vld [vmem:[%s1187 + $0xc] sm:$0xf]
      %v1192 = vld [vmem:[%s1187 + $0x10] sm:$0xf]
      %v1193 = vld [vmem:[%s1187 + $0x14] sm:$0xf]
      %v1194 = vld [vmem:[%s1187 + $0x18] sm:$0x1]
      %v1196 = vunpack.c.l.b16 %v1179
      %v1197 = vpack.c.b16 %v1196, %v1196
      %v1199 = vshrl.u32 %v1197, 16
      %v1208 = vunpack.c.l.b16 %v1188
      %v1209 = vunpack.c.l.b16 %v1189
      %v1210 = vunpack.c.l.b16 %v1190
      %v1211 = vunpack.c.l.b16 %v1191
      %v1212 = vunpack.c.l.b16 %v1192
      %v1213 = vunpack.c.l.b16 %v1193
      %v1214 = vunpack.c.l.b16 %v1194
      %v1215 = vpack.c.b16 %v1209, %v1208
      %v1216 = vpack.c.b16 %v1211, %v1210
      %v1217 = vpack.c.b16 %v1213, %v1212
      %v1218 = vpack.c.b16 %v1214, %v1214
      %vm1222 = vcmask 400384
      %v1224 = vsel %vm1222, %v1199, 0
      %vm1226 = vcmask 1040384
      %v1227 = vsel 0, 4294967295, 65535
      %v1228 = vsel %vm1226, %v1227, 0
      %v1230 = vand.u32 %v1218, %v1228
      %1232 = vmatpush.bf16.msra.mxu0 0
      %1233 = vmatpush.bf16.msra.mxu0 0
      %1234 = vmatpush.bf16.msra.mxu0 0
      %1235 = vmatpush.bf16.msra.mxu0 0
      %1236 = vmatpush.bf16.msra.mxu0 %v1230
      %1237 = vmatpush.bf16.msra.mxu0 %v1217
      %1238 = vmatpush.bf16.msra.mxu0 %v1216
      %1239 = vmatpush.bf16.msra.mxu0 %v1215
      %1240 = vmatmul.bf16.gmra.mxu0 %v1224
      %v1241 = vpop.f32.mrf.mxu0
      %v1242 = vadd.f32 0.0, %v1241
      %v1243 = vpop.f32.mrf.mxu0
      %1244 = vdwg.mxu0
      %v1252 = vunpack.c.l.b16 %v1180
      %v1253 = vunpack.c.l.b16 %v1181
      %v1254 = vunpack.c.l.b16 %v1182
      %v1255 = vunpack.c.l.b16 %v1183
      %v1256 = vunpack.c.l.b16 %v1184
      %v1257 = vunpack.c.l.b16 %v1185
      %v1258 = vunpack.c.l.b16 %v1186
      %v1259 = vpack.c.b16 %v1253, %v1252
      %v1260 = vpack.c.b16 %v1255, %v1254
      %v1261 = vpack.c.b16 %v1257, %v1256
      %v1262 = vpack.c.b16 %v1258, %v1258
      %v1267 = vsel %vm1222, %v1179, 0
      %v1270 = vand.u32 %v1262, %v1228
      %1272 = vmatpush.bf16.msra.mxu0 0
      %1273 = vmatpush.bf16.msra.mxu0 0
      %1274 = vmatpush.bf16.msra.mxu0 0
      %1275 = vmatpush.bf16.msra.mxu0 0
      %1276 = vmatpush.bf16.msra.mxu0 %v1270
      %1277 = vmatpush.bf16.msra.mxu0 %v1261
      %1278 = vmatpush.bf16.msra.mxu0 %v1260
      %1279 = vmatpush.bf16.msra.mxu0 %v1259
      %1280 = vmatmul.bf16.gmra.mxu0 %v1267
      %v1281 = vpop.f32.mrf.mxu0
      %v1282 = vadd.f32 %v1242, %v1281
      %v1283 = vpop.f32.mrf.mxu0
      %1284 = vdwg.mxu0
      %v1285 = vld [vmem:[#allocation3] sm:$0x2]
      %s1286 = scalar_lea.vmem %s6, 56
      %v1287 = vld [vmem:[%s1286] sm:$0xf]
      %v1288 = vld [vmem:[%s1286 + $0x4] sm:$0xf]
      %v1289 = vld [vmem:[%s1286 + $0x8] sm:$0xf]
      %v1290 = vld [vmem:[%s1286 + $0xc] sm:$0xf]
      %v1291 = vld [vmem:[%s1286 + $0x10] sm:$0xf]
      %v1292 = vld [vmem:[%s1286 + $0x14] sm:$0xf]
      %v1293 = vld [vmem:[%s1286 + $0x18] sm:$0x1]
      %v1295 = vunpack.c.l.b16 %v1285
      %v1296 = vpack.c.b16 %v1295, %v1295
      %v1297 = vrot.slane %v1296, 1
      %v1305 = vunpack.c.l.b16 %v1287
      %v1306 = vunpack.c.l.b16 %v1288
      %v1307 = vunpack.c.l.b16 %v1289
      %v1308 = vunpack.c.l.b16 %v1290
      %v1309 = vunpack.c.l.b16 %v1291
      %v1310 = vunpack.c.l.b16 %v1292
      %v1311 = vunpack.c.l.b16 %v1293
      %v1312 = vpack.c.b16 %v1306, %v1305
      %v1313 = vpack.c.b16 %v1308, %v1307
      %v1314 = vpack.c.b16 %v1310, %v1309
      %v1315 = vpack.c.b16 %v1311, %v1311
      %v1320 = vsel %vm1222, %v1297, 0
      %v1323 = vand.u32 %v1315, %v1228
      %1325 = vmatpush.bf16.msra.mxu0 0
      %1326 = vmatpush.bf16.msra.mxu0 0
      %1327 = vmatpush.bf16.msra.mxu0 0
      %1328 = vmatpush.bf16.msra.mxu0 0
      %1329 = vmatpush.bf16.msra.mxu0 %v1323
      %1330 = vmatpush.bf16.msra.mxu0 %v1314
      %1331 = vmatpush.bf16.msra.mxu0 %v1313
      %1332 = vmatpush.bf16.msra.mxu0 %v1312
      %1333 = vmatmul.bf16.gmra.mxu0 %v1320
      %v1334 = vpop.f32.mrf.mxu0
      %v1335 = vadd.f32 0.0, %v1334
      %v1336 = vpop.f32.mrf.mxu0
      %1337 = vdwg.mxu0
      %v1338 = vadd.f32 %v1282, %v1335
      %s1339 = scalar_lea.vmem %s6, 84
      %v1340 = vld [vmem:[%s1339] sm:$0xf]
      %v1341 = vld [vmem:[%s1339 + $0x4] sm:$0xf]
      %v1342 = vld [vmem:[%s1339 + $0x8] sm:$0xf]
      %v1343 = vld [vmem:[%s1339 + $0xc] sm:$0xf]
      %v1344 = vld [vmem:[%s1339 + $0x10] sm:$0xf]
      %v1345 = vld [vmem:[%s1339 + $0x14] sm:$0xf]
      %v1346 = vld [vmem:[%s1339 + $0x18] sm:$0x1]
      %v1348 = vshrl.u32 %v1296, 16
      %v1350 = vrot.slane %v1348, 1
      %v1358 = vunpack.c.l.b16 %v1340
      %v1359 = vunpack.c.l.b16 %v1341
      %v1360 = vunpack.c.l.b16 %v1342
      %v1361 = vunpack.c.l.b16 %v1343
      %v1362 = vunpack.c.l.b16 %v1344
      %v1363 = vunpack.c.l.b16 %v1345
      %v1364 = vunpack.c.l.b16 %v1346
      %v1365 = vpack.c.b16 %v1359, %v1358
      %v1366 = vpack.c.b16 %v1361, %v1360
      %v1367 = vpack.c.b16 %v1363, %v1362
      %v1368 = vpack.c.b16 %v1364, %v1364
      %v1373 = vsel %vm1222, %v1350, 0
      %v1376 = vand.u32 %v1368, %v1228
      %1378 = vmatpush.bf16.msra.mxu0 0
      %1379 = vmatpush.bf16.msra.mxu0 0
      %1380 = vmatpush.bf16.msra.mxu0 0
      %1381 = vmatpush.bf16.msra.mxu0 0
      %1382 = vmatpush.bf16.msra.mxu0 %v1376
      %1383 = vmatpush.bf16.msra.mxu0 %v1367
      %1384 = vmatpush.bf16.msra.mxu0 %v1366
      %1385 = vmatpush.bf16.msra.mxu0 %v1365
      %1386 = vmatmul.bf16.gmra.mxu0 %v1373
      %v1387 = vpop.f32.mrf.mxu0
      %v1388 = vadd.f32 0.0, %v1387
      %v1389 = vpop.f32.mrf.mxu0
      %1390 = vdwg.mxu0
      %v1391 = vadd.f32 %v1338, %v1388
      %v1392 = vld [vmem:[#allocation3] sm:$0x4]
      %s1393 = scalar_lea.vmem %s6, 112
      %v1394 = vld [vmem:[%s1393] sm:$0xf]
      %v1395 = vld [vmem:[%s1393 + $0x4] sm:$0xf]
      %v1396 = vld [vmem:[%s1393 + $0x8] sm:$0xf]
      %v1397 = vld [vmem:[%s1393 + $0xc] sm:$0xf]
      %v1398 = vld [vmem:[%s1393 + $0x10] sm:$0xf]
      %v1399 = vld [vmem:[%s1393 + $0x14] sm:$0xf]
      %v1400 = vld [vmem:[%s1393 + $0x18] sm:$0x1]
      %v1402 = vunpack.c.l.b16 %v1392
      %v1403 = vpack.c.b16 %v1402, %v1402
      %v1404 = vrot.slane %v1403, 2
      %v1412 = vunpack.c.l.b16 %v1394
      %v1413 = vunpack.c.l.b16 %v1395
      %v1414 = vunpack.c.l.b16 %v1396
      %v1415 = vunpack.c.l.b16 %v1397
      %v1416 = vunpack.c.l.b16 %v1398
      %v1417 = vunpack.c.l.b16 %v1399
      %v1418 = vunpack.c.l.b16 %v1400
      %v1419 = vpack.c.b16 %v1413, %v1412
      %v1420 = vpack.c.b16 %v1415, %v1414
      %v1421 = vpack.c.b16 %v1417, %v1416
      %v1422 = vpack.c.b16 %v1418, %v1418
      %v1427 = vsel %vm1222, %v1404, 0
      %v1430 = vand.u32 %v1422, %v1228
      %1432 = vmatpush.bf16.msra.mxu0 0
      %1433 = vmatpush.bf16.msra.mxu0 0
      %1434 = vmatpush.bf16.msra.mxu0 0
      %1435 = vmatpush.bf16.msra.mxu0 0
      %1436 = vmatpush.bf16.msra.mxu0 %v1430
      %1437 = vmatpush.bf16.msra.mxu0 %v1421
      %1438 = vmatpush.bf16.msra.mxu0 %v1420
      %1439 = vmatpush.bf16.msra.mxu0 %v1419
      %1440 = vmatmul.bf16.gmra.mxu0 %v1427
      %v1441 = vpop.f32.mrf.mxu0
      %v1442 = vadd.f32 0.0, %v1441
      %v1443 = vpop.f32.mrf.mxu0
      %1444 = vdwg.mxu0
      %v1445 = vadd.f32 %v1391, %v1442
      %s1446 = scalar_lea.vmem %s6, 140
      %v1447 = vld [vmem:[%s1446] sm:$0xf]
      %v1448 = vld [vmem:[%s1446 + $0x4] sm:$0xf]
      %v1449 = vld [vmem:[%s1446 + $0x8] sm:$0xf]
      %v1450 = vld [vmem:[%s1446 + $0xc] sm:$0xf]
      %v1451 = vld [vmem:[%s1446 + $0x10] sm:$0xf]
      %v1452 = vld [vmem:[%s1446 + $0x14] sm:$0xf]
      %v1453 = vld [vmem:[%s1446 + $0x18] sm:$0x1]
      %v1455 = vshrl.u32 %v1403, 16
      %v1457 = vrot.slane %v1455, 2
      %v1465 = vunpack.c.l.b16 %v1447
      %v1466 = vunpack.c.l.b16 %v1448
      %v1467 = vunpack.c.l.b16 %v1449
      %v1468 = vunpack.c.l.b16 %v1450
      %v1469 = vunpack.c.l.b16 %v1451
      %v1470 = vunpack.c.l.b16 %v1452
      %v1471 = vunpack.c.l.b16 %v1453
      %v1472 = vpack.c.b16 %v1466, %v1465
      %v1473 = vpack.c.b16 %v1468, %v1467
      %v1474 = vpack.c.b16 %v1470, %v1469
      %v1475 = vpack.c.b16 %v1471, %v1471
      %v1480 = vsel %vm1222, %v1457, 0
      %v1483 = vand.u32 %v1475, %v1228
      %1485 = vmatpush.bf16.msra.mxu0 0
      %1486 = vmatpush.bf16.msra.mxu0 0
      %1487 = vmatpush.bf16.msra.mxu0 0
      %1488 = vmatpush.bf16.msra.mxu0 0
      %1489 = vmatpush.bf16.msra.mxu0 %v1483
      %1490 = vmatpush.bf16.msra.mxu0 %v1474
      %1491 = vmatpush.bf16.msra.mxu0 %v1473
      %1492 = vmatpush.bf16.msra.mxu0 %v1472
      %1493 = vmatmul.bf16.gmra.mxu0 %v1480
      %v1494 = vpop.f32.mrf.mxu0
      %v1495 = vadd.f32 0.0, %v1494
      %v1496 = vpop.f32.mrf.mxu0
      %1497 = vdwg.mxu0
      %v1498 = vadd.f32 %v1445, %v1495
      %v1499 = vld [vmem:[#allocation3] sm:$0x8]
      %s1500 = scalar_lea.vmem %s6, 168
      %v1501 = vld [vmem:[%s1500] sm:$0xf]
      %v1502 = vld [vmem:[%s1500 + $0x4] sm:$0xf]
      %v1503 = vld [vmem:[%s1500 + $0x8] sm:$0xf]
      %v1504 = vld [vmem:[%s1500 + $0xc] sm:$0xf]
      %v1505 = vld [vmem:[%s1500 + $0x10] sm:$0xf]
      %v1506 = vld [vmem:[%s1500 + $0x14] sm:$0xf]
      %v1507 = vld [vmem:[%s1500 + $0x18] sm:$0x1]
      %v1509 = vunpack.c.l.b16 %v1499
      %v1510 = vpack.c.b16 %v1509, %v1509
      %v1511 = vrot.slane %v1510, 3
      %v1519 = vunpack.c.l.b16 %v1501
      %v1520 = vunpack.c.l.b16 %v1502
      %v1521 = vunpack.c.l.b16 %v1503
      %v1522 = vunpack.c.l.b16 %v1504
      %v1523 = vunpack.c.l.b16 %v1505
      %v1524 = vunpack.c.l.b16 %v1506
      %v1525 = vunpack.c.l.b16 %v1507
      %v1526 = vpack.c.b16 %v1520, %v1519
      %v1527 = vpack.c.b16 %v1522, %v1521
      %v1528 = vpack.c.b16 %v1524, %v1523
      %v1529 = vpack.c.b16 %v1525, %v1525
      %v1534 = vsel %vm1222, %v1511, 0
      %v1537 = vand.u32 %v1529, %v1228
      %1539 = vmatpush.bf16.msra.mxu0 0
      %1540 = vmatpush.bf16.msra.mxu0 0
      %1541 = vmatpush.bf16.msra.mxu0 0
      %1542 = vmatpush.bf16.msra.mxu0 0
      %1543 = vmatpush.bf16.msra.mxu0 %v1537
      %1544 = vmatpush.bf16.msra.mxu0 %v1528
      %1545 = vmatpush.bf16.msra.mxu0 %v1527
      %1546 = vmatpush.bf16.msra.mxu0 %v1526
      %1547 = vmatmul.bf16.gmra.mxu0 %v1534
      %v1548 = vpop.f32.mrf.mxu0
      %v1549 = vadd.f32 0.0, %v1548
      %v1550 = vpop.f32.mrf.mxu0
      %1551 = vdwg.mxu0
      %v1552 = vadd.f32 %v1498, %v1549
      %s1553 = scalar_lea.vmem %s6, 196
      %v1554 = vld [vmem:[%s1553] sm:$0xf]
      %v1555 = vld [vmem:[%s1553 + $0x4] sm:$0xf]
      %v1556 = vld [vmem:[%s1553 + $0x8] sm:$0xf]
      %v1557 = vld [vmem:[%s1553 + $0xc] sm:$0xf]
      %v1558 = vld [vmem:[%s1553 + $0x10] sm:$0xf]
      %v1559 = vld [vmem:[%s1553 + $0x14] sm:$0xf]
      %v1560 = vld [vmem:[%s1553 + $0x18] sm:$0x1]
      %v1562 = vshrl.u32 %v1510, 16
      %v1564 = vrot.slane %v1562, 3
      %v1572 = vunpack.c.l.b16 %v1554
      %v1573 = vunpack.c.l.b16 %v1555
      %v1574 = vunpack.c.l.b16 %v1556
      %v1575 = vunpack.c.l.b16 %v1557
      %v1576 = vunpack.c.l.b16 %v1558
      %v1577 = vunpack.c.l.b16 %v1559
      %v1578 = vunpack.c.l.b16 %v1560
      %v1579 = vpack.c.b16 %v1573, %v1572
      %v1580 = vpack.c.b16 %v1575, %v1574
      %v1581 = vpack.c.b16 %v1577, %v1576
      %v1582 = vpack.c.b16 %v1578, %v1578
      %v1587 = vsel %vm1222, %v1564, 0
      %v1590 = vand.u32 %v1582, %v1228
      %1592 = vmatpush.bf16.msra.mxu0 0
      %1593 = vmatpush.bf16.msra.mxu0 0
      %1594 = vmatpush.bf16.msra.mxu0 0
      %1595 = vmatpush.bf16.msra.mxu0 0
      %1596 = vmatpush.bf16.msra.mxu0 %v1590
      %1597 = vmatpush.bf16.msra.mxu0 %v1581
      %1598 = vmatpush.bf16.msra.mxu0 %v1580
      %1599 = vmatpush.bf16.msra.mxu0 %v1579
      %1600 = vmatmul.bf16.gmra.mxu0 %v1587
      %v1601 = vpop.f32.mrf.mxu0
      %v1602 = vadd.f32 0.0, %v1601
      %v1603 = vpop.f32.mrf.mxu0
      %1604 = vdwg.mxu0
      %v1605 = vadd.f32 %v1552, %v1602
      %v1606 = vld [vmem:[#allocation3 + $0x4] sm:$0x1]
      %s1607 = scalar_lea.vmem %s6, 224
      %v1608 = vld [vmem:[%s1607] sm:$0xf]
      %v1609 = vld [vmem:[%s1607 + $0x4] sm:$0xf]
      %v1610 = vld [vmem:[%s1607 + $0x8] sm:$0xf]
      %v1611 = vld [vmem:[%s1607 + $0xc] sm:$0xf]
      %v1612 = vld [vmem:[%s1607 + $0x10] sm:$0xf]
      %v1613 = vld [vmem:[%s1607 + $0x14] sm:$0xf]
      %v1614 = vld [vmem:[%s1607 + $0x18] sm:$0x1]
      %v1622 = vunpack.c.l.b16 %v1608
      %v1623 = vunpack.c.l.b16 %v1609
      %v1624 = vunpack.c.l.b16 %v1610
      %v1625 = vunpack.c.l.b16 %v1611
      %v1626 = vunpack.c.l.b16 %v1612
      %v1627 = vunpack.c.l.b16 %v1613
      %v1628 = vunpack.c.l.b16 %v1614
      %v1629 = vpack.c.b16 %v1623, %v1622
      %v1630 = vpack.c.b16 %v1625, %v1624
      %v1631 = vpack.c.b16 %v1627, %v1626
      %v1632 = vpack.c.b16 %v1628, %v1628
      %v1637 = vsel %vm1222, %v1606, 0
      %v1640 = vand.u32 %v1632, %v1228
      %1642 = vmatpush.bf16.msra.mxu0 0
      %1643 = vmatpush.bf16.msra.mxu0 0
      %1644 = vmatpush.bf16.msra.mxu0 0
      %1645 = vmatpush.bf16.msra.mxu0 0
      %1646 = vmatpush.bf16.msra.mxu0 %v1640
      %1647 = vmatpush.bf16.msra.mxu0 %v1631
      %1648 = vmatpush.bf16.msra.mxu0 %v1630
      %1649 = vmatpush.bf16.msra.mxu0 %v1629
      %1650 = vmatmul.bf16.gmra.mxu0 %v1637
      %v1651 = vpop.f32.mrf.mxu0
      %v1652 = vadd.f32 0.0, %v1651
      %v1653 = vpop.f32.mrf.mxu0
      %1654 = vdwg.mxu0
      %v1655 = vadd.f32 %v1605, %v1652
      %s1656 = scalar_lea.vmem %s6, 252
      %v1657 = vld [vmem:[%s1656] sm:$0xf]
      %v1658 = vld [vmem:[%s1656 + $0x4] sm:$0xf]
      %v1659 = vld [vmem:[%s1656 + $0x8] sm:$0xf]
      %v1660 = vld [vmem:[%s1656 + $0xc] sm:$0xf]
      %v1661 = vld [vmem:[%s1656 + $0x10] sm:$0xf]
      %v1662 = vld [vmem:[%s1656 + $0x14] sm:$0xf]
      %v1663 = vld [vmem:[%s1656 + $0x18] sm:$0x1]
      %v1665 = vunpack.c.l.b16 %v1606
      %v1666 = vpack.c.b16 %v1665, %v1665
      %v1668 = vshrl.u32 %v1666, 16
      %v1677 = vunpack.c.l.b16 %v1657
      %v1678 = vunpack.c.l.b16 %v1658
      %v1679 = vunpack.c.l.b16 %v1659
      %v1680 = vunpack.c.l.b16 %v1660
      %v1681 = vunpack.c.l.b16 %v1661
      %v1682 = vunpack.c.l.b16 %v1662
      %v1683 = vunpack.c.l.b16 %v1663
      %v1684 = vpack.c.b16 %v1678, %v1677
      %v1685 = vpack.c.b16 %v1680, %v1679
      %v1686 = vpack.c.b16 %v1682, %v1681
      %v1687 = vpack.c.b16 %v1683, %v1683
      %v1692 = vsel %vm1222, %v1668, 0
      %v1695 = vand.u32 %v1687, %v1228
      %1697 = vmatpush.bf16.msra.mxu0 0
      %1698 = vmatpush.bf16.msra.mxu0 0
      %1699 = vmatpush.bf16.msra.mxu0 0
      %1700 = vmatpush.bf16.msra.mxu0 0
      %1701 = vmatpush.bf16.msra.mxu0 %v1695
      %1702 = vmatpush.bf16.msra.mxu0 %v1686
      %1703 = vmatpush.bf16.msra.mxu0 %v1685
      %1704 = vmatpush.bf16.msra.mxu0 %v1684
      %1705 = vmatmul.bf16.gmra.mxu0 %v1692
      %v1706 = vpop.f32.mrf.mxu0
      %v1707 = vadd.f32 0.0, %v1706
      %v1708 = vpop.f32.mrf.mxu0
      %1709 = vdwg.mxu0
      %v1710 = vadd.f32 %v1655, %v1707
      %v1711 = vld [vmem:[#allocation3 + $0x4] sm:$0x2]
      %s1712 = scalar_lea.vmem %s6, 280
      %v1713 = vld [vmem:[%s1712] sm:$0xf]
      %v1714 = vld [vmem:[%s1712 + $0x4] sm:$0xf]
      %v1715 = vld [vmem:[%s1712 + $0x8] sm:$0xf]
      %v1716 = vld [vmem:[%s1712 + $0xc] sm:$0xf]
      %v1717 = vld [vmem:[%s1712 + $0x10] sm:$0xf]
      %v1718 = vld [vmem:[%s1712 + $0x14] sm:$0xf]
      %v1719 = vld [vmem:[%s1712 + $0x18] sm:$0x1]
      %v1721 = vunpack.c.l.b16 %v1711
      %v1722 = vpack.c.b16 %v1721, %v1721
      %v1723 = vrot.slane %v1722, 1
      %v1731 = vunpack.c.l.b16 %v1713
      %v1732 = vunpack.c.l.b16 %v1714
      %v1733 = vunpack.c.l.b16 %v1715
      %v1734 = vunpack.c.l.b16 %v1716
      %v1735 = vunpack.c.l.b16 %v1717
      %v1736 = vunpack.c.l.b16 %v1718
      %v1737 = vunpack.c.l.b16 %v1719
      %v1738 = vpack.c.b16 %v1732, %v1731
      %v1739 = vpack.c.b16 %v1734, %v1733
      %v1740 = vpack.c.b16 %v1736, %v1735
      %v1741 = vpack.c.b16 %v1737, %v1737
      %v1746 = vsel %vm1222, %v1723, 0
      %v1749 = vand.u32 %v1741, %v1228
      %1751 = vmatpush.bf16.msra.mxu0 0
      %1752 = vmatpush.bf16.msra.mxu0 0
      %1753 = vmatpush.bf16.msra.mxu0 0
      %1754 = vmatpush.bf16.msra.mxu0 0
      %1755 = vmatpush.bf16.msra.mxu0 %v1749
      %1756 = vmatpush.bf16.msra.mxu0 %v1740
      %1757 = vmatpush.bf16.msra.mxu0 %v1739
      %1758 = vmatpush.bf16.msra.mxu0 %v1738
      %1759 = vmatmul.bf16.gmra.mxu0 %v1746
      %v1760 = vpop.f32.mrf.mxu0
      %v1761 = vadd.f32 0.0, %v1760
      %v1762 = vpop.f32.mrf.mxu0
      %1763 = vdwg.mxu0
      %v1764 = vadd.f32 %v1710, %v1761
      %s1765 = scalar_lea.vmem %s6, 308
      %v1766 = vld [vmem:[%s1765] sm:$0xf]
      %v1767 = vld [vmem:[%s1765 + $0x4] sm:$0xf]
      %v1768 = vld [vmem:[%s1765 + $0x8] sm:$0xf]
      %v1769 = vld [vmem:[%s1765 + $0xc] sm:$0xf]
      %v1770 = vld [vmem:[%s1765 + $0x10] sm:$0xf]
      %v1771 = vld [vmem:[%s1765 + $0x14] sm:$0xf]
      %v1772 = vld [vmem:[%s1765 + $0x18] sm:$0x1]
      %v1774 = vshrl.u32 %v1722, 16
      %v1776 = vrot.slane %v1774, 1
      %v1784 = vunpack.c.l.b16 %v1766
      %v1785 = vunpack.c.l.b16 %v1767
      %v1786 = vunpack.c.l.b16 %v1768
      %v1787 = vunpack.c.l.b16 %v1769
      %v1788 = vunpack.c.l.b16 %v1770
      %v1789 = vunpack.c.l.b16 %v1771
      %v1790 = vunpack.c.l.b16 %v1772
      %v1791 = vpack.c.b16 %v1785, %v1784
      %v1792 = vpack.c.b16 %v1787, %v1786
      %v1793 = vpack.c.b16 %v1789, %v1788
      %v1794 = vpack.c.b16 %v1790, %v1790
      %v1799 = vsel %vm1222, %v1776, 0
      %v1802 = vand.u32 %v1794, %v1228
      %1804 = vmatpush.bf16.msra.mxu0 0
      %1805 = vmatpush.bf16.msra.mxu0 0
      %1806 = vmatpush.bf16.msra.mxu0 0
      %1807 = vmatpush.bf16.msra.mxu0 0
      %1808 = vmatpush.bf16.msra.mxu0 %v1802
      %1809 = vmatpush.bf16.msra.mxu0 %v1793
      %1810 = vmatpush.bf16.msra.mxu0 %v1792
      %1811 = vmatpush.bf16.msra.mxu0 %v1791
      %1812 = vmatmul.bf16.gmra.mxu0 %v1799
      %v1813 = vpop.f32.mrf.mxu0
      %v1814 = vadd.f32 0.0, %v1813
      %v1815 = vpop.f32.mrf.mxu0
      %1816 = vdwg.mxu0
      %v1817 = vadd.f32 %v1764, %v1814
      %v1818 = vld [vmem:[#allocation3 + $0x4] sm:$0x4]
      %s1819 = scalar_lea.vmem %s6, 336
      %v1820 = vld [vmem:[%s1819] sm:$0xf]
      %v1821 = vld [vmem:[%s1819 + $0x4] sm:$0xf]
      %v1822 = vld [vmem:[%s1819 + $0x8] sm:$0xf]
      %v1823 = vld [vmem:[%s1819 + $0xc] sm:$0xf]
      %v1824 = vld [vmem:[%s1819 + $0x10] sm:$0xf]
      %v1825 = vld [vmem:[%s1819 + $0x14] sm:$0xf]
      %v1826 = vld [vmem:[%s1819 + $0x18] sm:$0x1]
      %v1828 = vunpack.c.l.b16 %v1818
      %v1829 = vpack.c.b16 %v1828, %v1828
      %v1830 = vrot.slane %v1829, 2
      %v1838 = vunpack.c.l.b16 %v1820
      %v1839 = vunpack.c.l.b16 %v1821
      %v1840 = vunpack.c.l.b16 %v1822
      %v1841 = vunpack.c.l.b16 %v1823
      %v1842 = vunpack.c.l.b16 %v1824
      %v1843 = vunpack.c.l.b16 %v1825
      %v1844 = vunpack.c.l.b16 %v1826
      %v1845 = vpack.c.b16 %v1839, %v1838
      %v1846 = vpack.c.b16 %v1841, %v1840
      %v1847 = vpack.c.b16 %v1843, %v1842
      %v1848 = vpack.c.b16 %v1844, %v1844
      %v1853 = vsel %vm1222, %v1830, 0
      %v1856 = vand.u32 %v1848, %v1228
      %1858 = vmatpush.bf16.msra.mxu0 0
      %1859 = vmatpush.bf16.msra.mxu0 0
      %1860 = vmatpush.bf16.msra.mxu0 0
      %1861 = vmatpush.bf16.msra.mxu0 0
      %1862 = vmatpush.bf16.msra.mxu0 %v1856
      %1863 = vmatpush.bf16.msra.mxu0 %v1847
      %1864 = vmatpush.bf16.msra.mxu0 %v1846
      %1865 = vmatpush.bf16.msra.mxu0 %v1845
      %1866 = vmatmul.bf16.gmra.mxu0 %v1853
      %v1867 = vpop.f32.mrf.mxu0
      %v1868 = vadd.f32 0.0, %v1867
      %v1869 = vpop.f32.mrf.mxu0
      %1870 = vdwg.mxu0
      %v1871 = vadd.f32 %v1817, %v1868
      %s1872 = scalar_lea.vmem %s6, 364
      %v1873 = vld [vmem:[%s1872] sm:$0xf]
      %v1874 = vld [vmem:[%s1872 + $0x4] sm:$0xf]
      %v1875 = vld [vmem:[%s1872 + $0x8] sm:$0xf]
      %v1876 = vld [vmem:[%s1872 + $0xc] sm:$0xf]
      %v1877 = vld [vmem:[%s1872 + $0x10] sm:$0xf]
      %v1878 = vld [vmem:[%s1872 + $0x14] sm:$0xf]
      %v1879 = vld [vmem:[%s1872 + $0x18] sm:$0x1]
      %v1881 = vshrl.u32 %v1829, 16
      %v1883 = vrot.slane %v1881, 2
      %v1891 = vunpack.c.l.b16 %v1873
      %v1892 = vunpack.c.l.b16 %v1874
      %v1893 = vunpack.c.l.b16 %v1875
      %v1894 = vunpack.c.l.b16 %v1876
      %v1895 = vunpack.c.l.b16 %v1877
      %v1896 = vunpack.c.l.b16 %v1878
      %v1897 = vunpack.c.l.b16 %v1879
      %v1898 = vpack.c.b16 %v1892, %v1891
      %v1899 = vpack.c.b16 %v1894, %v1893
      %v1900 = vpack.c.b16 %v1896, %v1895
      %v1901 = vpack.c.b16 %v1897, %v1897
      %v1906 = vsel %vm1222, %v1883, 0
      %v1909 = vand.u32 %v1901, %v1228
      %1911 = vmatpush.bf16.msra.mxu0 0
      %1912 = vmatpush.bf16.msra.mxu0 0
      %1913 = vmatpush.bf16.msra.mxu0 0
      %1914 = vmatpush.bf16.msra.mxu0 0
      %1915 = vmatpush.bf16.msra.mxu0 %v1909
      %1916 = vmatpush.bf16.msra.mxu0 %v1900
      %1917 = vmatpush.bf16.msra.mxu0 %v1899
      %1918 = vmatpush.bf16.msra.mxu0 %v1898
      %1919 = vmatmul.bf16.gmra.mxu0 %v1906
      %v1920 = vpop.f32.mrf.mxu0
      %v1921 = vadd.f32 0.0, %v1920
      %v1922 = vpop.f32.mrf.mxu0
      %1923 = vdwg.mxu0
      %v1924 = vadd.f32 %v1871, %v1921
      %v1925 = vld [vmem:[#allocation3 + $0x4] sm:$0x8]
      %s1926 = scalar_lea.vmem %s6, 392
      %v1927 = vld [vmem:[%s1926] sm:$0xf]
      %v1928 = vld [vmem:[%s1926 + $0x4] sm:$0xf]
      %v1929 = vld [vmem:[%s1926 + $0x8] sm:$0xf]
      %v1930 = vld [vmem:[%s1926 + $0xc] sm:$0xf]
      %v1931 = vld [vmem:[%s1926 + $0x10] sm:$0xf]
      %v1932 = vld [vmem:[%s1926 + $0x14] sm:$0xf]
      %v1933 = vld [vmem:[%s1926 + $0x18] sm:$0x1]
      %v1935 = vunpack.c.l.b16 %v1925
      %v1936 = vpack.c.b16 %v1935, %v1935
      %v1937 = vrot.slane %v1936, 3
      %v1945 = vunpack.c.l.b16 %v1927
      %v1946 = vunpack.c.l.b16 %v1928
      %v1947 = vunpack.c.l.b16 %v1929
      %v1948 = vunpack.c.l.b16 %v1930
      %v1949 = vunpack.c.l.b16 %v1931
      %v1950 = vunpack.c.l.b16 %v1932
      %v1951 = vunpack.c.l.b16 %v1933
      %v1952 = vpack.c.b16 %v1946, %v1945
      %v1953 = vpack.c.b16 %v1948, %v1947
      %v1954 = vpack.c.b16 %v1950, %v1949
      %v1955 = vpack.c.b16 %v1951, %v1951
      %v1960 = vsel %vm1222, %v1937, 0
      %v1963 = vand.u32 %v1955, %v1228
      %1965 = vmatpush.bf16.msra.mxu0 0
      %1966 = vmatpush.bf16.msra.mxu0 0
      %1967 = vmatpush.bf16.msra.mxu0 0
      %1968 = vmatpush.bf16.msra.mxu0 0
      %1969 = vmatpush.bf16.msra.mxu0 %v1963
      %1970 = vmatpush.bf16.msra.mxu0 %v1954
      %1971 = vmatpush.bf16.msra.mxu0 %v1953
      %1972 = vmatpush.bf16.msra.mxu0 %v1952
      %1973 = vmatmul.bf16.gmra.mxu0 %v1960
      %v1974 = vpop.f32.mrf.mxu0
      %v1975 = vadd.f32 0.0, %v1974
      %v1976 = vpop.f32.mrf.mxu0
      %1977 = vdwg.mxu0
      %v1978 = vadd.f32 %v1924, %v1975
      %s1979 = scalar_lea.vmem %s6, 420
      %v1980 = vld [vmem:[%s1979] sm:$0xf]
      %v1981 = vld [vmem:[%s1979 + $0x4] sm:$0xf]
      %v1982 = vld [vmem:[%s1979 + $0x8] sm:$0xf]
      %v1983 = vld [vmem:[%s1979 + $0xc] sm:$0xf]
      %v1984 = vld [vmem:[%s1979 + $0x10] sm:$0xf]
      %v1985 = vld [vmem:[%s1979 + $0x14] sm:$0xf]
      %v1986 = vld [vmem:[%s1979 + $0x18] sm:$0x1]
      %v1988 = vshrl.u32 %v1936, 16
      %v1990 = vrot.slane %v1988, 3
      %v1998 = vunpack.c.l.b16 %v1980
      %v1999 = vunpack.c.l.b16 %v1981
      %v2000 = vunpack.c.l.b16 %v1982
      %v2001 = vunpack.c.l.b16 %v1983
      %v2002 = vunpack.c.l.b16 %v1984
      %v2003 = vunpack.c.l.b16 %v1985
      %v2004 = vunpack.c.l.b16 %v1986
      %v2005 = vpack.c.b16 %v1999, %v1998
      %v2006 = vpack.c.b16 %v2001, %v2000
      %v2007 = vpack.c.b16 %v2003, %v2002
      %v2008 = vpack.c.b16 %v2004, %v2004
      %v2013 = vsel %vm1222, %v1990, 0
      %v2016 = vand.u32 %v2008, %v1228
      %2018 = vmatpush.bf16.msra.mxu0 0
      %2019 = vmatpush.bf16.msra.mxu0 0
      %2020 = vmatpush.bf16.msra.mxu0 0
      %2021 = vmatpush.bf16.msra.mxu0 0
      %2022 = vmatpush.bf16.msra.mxu0 %v2016
      %2023 = vmatpush.bf16.msra.mxu0 %v2007
      %2024 = vmatpush.bf16.msra.mxu0 %v2006
      %2025 = vmatpush.bf16.msra.mxu0 %v2005
      %2026 = vmatmul.bf16.gmra.mxu0 %v2013
      %v2027 = vpop.f32.mrf.mxu0
      %v2028 = vadd.f32 0.0, %v2027
      %v2029 = vpop.f32.mrf.mxu0
      %2030 = vdwg.mxu0
      %v2031 = vadd.f32 %v1978, %v2028
      %v2032 = vld [vmem:[#allocation3 + $0x8] sm:$0x1]
      %s2033 = scalar_lea.vmem %s6, 448
      %v2034 = vld [vmem:[%s2033] sm:$0xf]
      %v2035 = vld [vmem:[%s2033 + $0x4] sm:$0xf]
      %v2036 = vld [vmem:[%s2033 + $0x8] sm:$0xf]
      %v2037 = vld [vmem:[%s2033 + $0xc] sm:$0xf]
      %v2038 = vld [vmem:[%s2033 + $0x10] sm:$0xf]
      %v2039 = vld [vmem:[%s2033 + $0x14] sm:$0xf]
      %v2040 = vld [vmem:[%s2033 + $0x18] sm:$0x1]
      %v2048 = vunpack.c.l.b16 %v2034
      %v2049 = vunpack.c.l.b16 %v2035
      %v2050 = vunpack.c.l.b16 %v2036
      %v2051 = vunpack.c.l.b16 %v2037
      %v2052 = vunpack.c.l.b16 %v2038
      %v2053 = vunpack.c.l.b16 %v2039
      %v2054 = vunpack.c.l.b16 %v2040
      %v2055 = vpack.c.b16 %v2049, %v2048
      %v2056 = vpack.c.b16 %v2051, %v2050
      %v2057 = vpack.c.b16 %v2053, %v2052
      %v2058 = vpack.c.b16 %v2054, %v2054
      %v2063 = vsel %vm1222, %v2032, 0
      %v2066 = vand.u32 %v2058, %v1228
      %2068 = vmatpush.bf16.msra.mxu0 0
      %2069 = vmatpush.bf16.msra.mxu0 0
      %2070 = vmatpush.bf16.msra.mxu0 0
      %2071 = vmatpush.bf16.msra.mxu0 0
      %2072 = vmatpush.bf16.msra.mxu0 %v2066
      %2073 = vmatpush.bf16.msra.mxu0 %v2057
      %2074 = vmatpush.bf16.msra.mxu0 %v2056
      %2075 = vmatpush.bf16.msra.mxu0 %v2055
      %2076 = vmatmul.bf16.gmra.mxu0 %v2063
      %v2077 = vpop.f32.mrf.mxu0
      %v2078 = vadd.f32 0.0, %v2077
      %v2079 = vpop.f32.mrf.mxu0
      %2080 = vdwg.mxu0
      %v2081 = vadd.f32 %v2031, %v2078
      %s2082 = scalar_lea.vmem %s6, 476
      %v2083 = vld [vmem:[%s2082] sm:$0xf]
      %v2084 = vld [vmem:[%s2082 + $0x4] sm:$0xf]
      %v2085 = vld [vmem:[%s2082 + $0x8] sm:$0xf]
      %v2086 = vld [vmem:[%s2082 + $0xc] sm:$0xf]
      %v2087 = vld [vmem:[%s2082 + $0x10] sm:$0xf]
      %v2088 = vld [vmem:[%s2082 + $0x14] sm:$0xf]
      %v2089 = vld [vmem:[%s2082 + $0x18] sm:$0x1]
      %v2091 = vunpack.c.l.b16 %v2032
      %v2092 = vpack.c.b16 %v2091, %v2091
      %v2094 = vshrl.u32 %v2092, 16
      %v2103 = vunpack.c.l.b16 %v2083
      %v2104 = vunpack.c.l.b16 %v2084
      %v2105 = vunpack.c.l.b16 %v2085
      %v2106 = vunpack.c.l.b16 %v2086
      %v2107 = vunpack.c.l.b16 %v2087
      %v2108 = vunpack.c.l.b16 %v2088
      %v2109 = vunpack.c.l.b16 %v2089
      %v2110 = vpack.c.b16 %v2104, %v2103
      %v2111 = vpack.c.b16 %v2106, %v2105
      %v2112 = vpack.c.b16 %v2108, %v2107
      %v2113 = vpack.c.b16 %v2109, %v2109
      %v2118 = vsel %vm1222, %v2094, 0
      %v2121 = vand.u32 %v2113, %v1228
      %2123 = vmatpush.bf16.msra.mxu0 0
      %2124 = vmatpush.bf16.msra.mxu0 0
      %2125 = vmatpush.bf16.msra.mxu0 0
      %2126 = vmatpush.bf16.msra.mxu0 0
      %2127 = vmatpush.bf16.msra.mxu0 %v2121
      %2128 = vmatpush.bf16.msra.mxu0 %v2112
      %2129 = vmatpush.bf16.msra.mxu0 %v2111
      %2130 = vmatpush.bf16.msra.mxu0 %v2110
      %2131 = vmatmul.bf16.gmra.mxu0 %v2118
      %v2132 = vpop.f32.mrf.mxu0
      %v2133 = vadd.f32 0.0, %v2132
      %v2134 = vpop.f32.mrf.mxu0
      %2135 = vdwg.mxu0
      %v2136 = vadd.f32 %v2081, %v2133
      %v2137 = vld [vmem:[#allocation3 + $0x8] sm:$0x2]
      %s2138 = scalar_lea.vmem %s6, 504
      %v2139 = vld [vmem:[%s2138] sm:$0xf]
      %v2140 = vld [vmem:[%s2138 + $0x4] sm:$0xf]
      %v2141 = vld [vmem:[%s2138 + $0x8] sm:$0xf]
      %v2142 = vld [vmem:[%s2138 + $0xc] sm:$0xf]
      %v2143 = vld [vmem:[%s2138 + $0x10] sm:$0xf]
      %v2144 = vld [vmem:[%s2138 + $0x14] sm:$0xf]
      %v2145 = vld [vmem:[%s2138 + $0x18] sm:$0x1]
      %v2147 = vunpack.c.l.b16 %v2137
      %v2148 = vpack.c.b16 %v2147, %v2147
      %v2149 = vrot.slane %v2148, 1
      %v2157 = vunpack.c.l.b16 %v2139
      %v2158 = vunpack.c.l.b16 %v2140
      %v2159 = vunpack.c.l.b16 %v2141
      %v2160 = vunpack.c.l.b16 %v2142
      %v2161 = vunpack.c.l.b16 %v2143
      %v2162 = vunpack.c.l.b16 %v2144
      %v2163 = vunpack.c.l.b16 %v2145
      %v2164 = vpack.c.b16 %v2158, %v2157
      %v2165 = vpack.c.b16 %v2160, %v2159
      %v2166 = vpack.c.b16 %v2162, %v2161
      %v2167 = vpack.c.b16 %v2163, %v2163
      %v2172 = vsel %vm1222, %v2149, 0
      %v2175 = vand.u32 %v2167, %v1228
      %2177 = vmatpush.bf16.msra.mxu0 0
      %2178 = vmatpush.bf16.msra.mxu0 0
      %2179 = vmatpush.bf16.msra.mxu0 0
      %2180 = vmatpush.bf16.msra.mxu0 0
      %2181 = vmatpush.bf16.msra.mxu0 %v2175
      %2182 = vmatpush.bf16.msra.mxu0 %v2166
      %2183 = vmatpush.bf16.msra.mxu0 %v2165
      %2184 = vmatpush.bf16.msra.mxu0 %v2164
      %2185 = vmatmul.bf16.gmra.mxu0 %v2172
      %v2186 = vpop.f32.mrf.mxu0
      %v2187 = vadd.f32 0.0, %v2186
      %v2188 = vpop.f32.mrf.mxu0
      %2189 = vdwg.mxu0
      %v2190 = vadd.f32 %v2136, %v2187
      %s2191 = scalar_lea.vmem %s6, 532
      %v2192 = vld [vmem:[%s2191] sm:$0xf]
      %v2193 = vld [vmem:[%s2191 + $0x4] sm:$0xf]
      %v2194 = vld [vmem:[%s2191 + $0x8] sm:$0xf]
      %v2195 = vld [vmem:[%s2191 + $0xc] sm:$0xf]
      %v2196 = vld [vmem:[%s2191 + $0x10] sm:$0xf]
      %v2197 = vld [vmem:[%s2191 + $0x14] sm:$0xf]
      %v2198 = vld [vmem:[%s2191 + $0x18] sm:$0x1]
      %v2200 = vshrl.u32 %v2148, 16
      %v2202 = vrot.slane %v2200, 1
      %v2210 = vunpack.c.l.b16 %v2192
      %v2211 = vunpack.c.l.b16 %v2193
      %v2212 = vunpack.c.l.b16 %v2194
      %v2213 = vunpack.c.l.b16 %v2195
      %v2214 = vunpack.c.l.b16 %v2196
      %v2215 = vunpack.c.l.b16 %v2197
      %v2216 = vunpack.c.l.b16 %v2198
      %v2217 = vpack.c.b16 %v2211, %v2210
      %v2218 = vpack.c.b16 %v2213, %v2212
      %v2219 = vpack.c.b16 %v2215, %v2214
      %v2220 = vpack.c.b16 %v2216, %v2216
      %v2225 = vsel %vm1222, %v2202, 0
      %v2228 = vand.u32 %v2220, %v1228
      %2230 = vmatpush.bf16.msra.mxu0 0
      %2231 = vmatpush.bf16.msra.mxu0 0
      %2232 = vmatpush.bf16.msra.mxu0 0
      %2233 = vmatpush.bf16.msra.mxu0 0
      %2234 = vmatpush.bf16.msra.mxu0 %v2228
      %2235 = vmatpush.bf16.msra.mxu0 %v2219
      %2236 = vmatpush.bf16.msra.mxu0 %v2218
      %2237 = vmatpush.bf16.msra.mxu0 %v2217
      %2238 = vmatmul.bf16.gmra.mxu0 %v2225
      %v2239 = vpop.f32.mrf.mxu0
      %v2240 = vadd.f32 0.0, %v2239
      %v2241 = vpop.f32.mrf.mxu0
      %2242 = vdwg.mxu0
      %v2243 = vadd.f32 %v2190, %v2240
      %v2244 = vld [vmem:[#allocation3 + $0x8] sm:$0x4]
      %s2245 = scalar_lea.vmem %s6, 560
      %v2246 = vld [vmem:[%s2245] sm:$0xf]
      %v2247 = vld [vmem:[%s2245 + $0x4] sm:$0xf]
      %v2248 = vld [vmem:[%s2245 + $0x8] sm:$0xf]
      %v2249 = vld [vmem:[%s2245 + $0xc] sm:$0xf]
      %v2250 = vld [vmem:[%s2245 + $0x10] sm:$0xf]
      %v2251 = vld [vmem:[%s2245 + $0x14] sm:$0xf]
      %v2252 = vld [vmem:[%s2245 + $0x18] sm:$0x1]
      %v2254 = vunpack.c.l.b16 %v2244
      %v2255 = vpack.c.b16 %v2254, %v2254
      %v2256 = vrot.slane %v2255, 2
      %v2264 = vunpack.c.l.b16 %v2246
      %v2265 = vunpack.c.l.b16 %v2247
      %v2266 = vunpack.c.l.b16 %v2248
      %v2267 = vunpack.c.l.b16 %v2249
      %v2268 = vunpack.c.l.b16 %v2250
      %v2269 = vunpack.c.l.b16 %v2251
      %v2270 = vunpack.c.l.b16 %v2252
      %v2271 = vpack.c.b16 %v2265, %v2264
      %v2272 = vpack.c.b16 %v2267, %v2266
      %v2273 = vpack.c.b16 %v2269, %v2268
      %v2274 = vpack.c.b16 %v2270, %v2270
      %v2279 = vsel %vm1222, %v2256, 0
      %v2282 = vand.u32 %v2274, %v1228
      %2284 = vmatpush.bf16.msra.mxu0 0
      %2285 = vmatpush.bf16.msra.mxu0 0
      %2286 = vmatpush.bf16.msra.mxu0 0
      %2287 = vmatpush.bf16.msra.mxu0 0
      %2288 = vmatpush.bf16.msra.mxu0 %v2282
      %2289 = vmatpush.bf16.msra.mxu0 %v2273
      %2290 = vmatpush.bf16.msra.mxu0 %v2272
      %2291 = vmatpush.bf16.msra.mxu0 %v2271
      %2292 = vmatmul.bf16.gmra.mxu0 %v2279
      %v2293 = vpop.f32.mrf.mxu0
      %v2294 = vadd.f32 0.0, %v2293
      %v2295 = vpop.f32.mrf.mxu0
      %2296 = vdwg.mxu0
      %v2297 = vadd.f32 %v2243, %v2294
      %s2298 = scalar_lea.vmem %s6, 588
      %v2299 = vld [vmem:[%s2298] sm:$0xf]
      %v2300 = vld [vmem:[%s2298 + $0x4] sm:$0xf]
      %v2301 = vld [vmem:[%s2298 + $0x8] sm:$0xf]
      %v2302 = vld [vmem:[%s2298 + $0xc] sm:$0xf]
      %v2303 = vld [vmem:[%s2298 + $0x10] sm:$0xf]
      %v2304 = vld [vmem:[%s2298 + $0x14] sm:$0xf]
      %v2305 = vld [vmem:[%s2298 + $0x18] sm:$0x1]
      %v2307 = vshrl.u32 %v2255, 16
      %v2309 = vrot.slane %v2307, 2
      %v2317 = vunpack.c.l.b16 %v2299
      %v2318 = vunpack.c.l.b16 %v2300
      %v2319 = vunpack.c.l.b16 %v2301
      %v2320 = vunpack.c.l.b16 %v2302
      %v2321 = vunpack.c.l.b16 %v2303
      %v2322 = vunpack.c.l.b16 %v2304
      %v2323 = vunpack.c.l.b16 %v2305
      %v2324 = vpack.c.b16 %v2318, %v2317
      %v2325 = vpack.c.b16 %v2320, %v2319
      %v2326 = vpack.c.b16 %v2322, %v2321
      %v2327 = vpack.c.b16 %v2323, %v2323
      %v2332 = vsel %vm1222, %v2309, 0
      %v2335 = vand.u32 %v2327, %v1228
      %2337 = vmatpush.bf16.msra.mxu0 0
      %2338 = vmatpush.bf16.msra.mxu0 0
      %2339 = vmatpush.bf16.msra.mxu0 0
      %2340 = vmatpush.bf16.msra.mxu0 0
      %2341 = vmatpush.bf16.msra.mxu0 %v2335
      %2342 = vmatpush.bf16.msra.mxu0 %v2326
      %2343 = vmatpush.bf16.msra.mxu0 %v2325
      %2344 = vmatpush.bf16.msra.mxu0 %v2324
      %2345 = vmatmul.bf16.gmra.mxu0 %v2332
      %v2346 = vpop.f32.mrf.mxu0
      %v2347 = vadd.f32 0.0, %v2346
      %v2348 = vpop.f32.mrf.mxu0
      %2349 = vdwg.mxu0
      %v2350 = vadd.f32 %v2297, %v2347
      %v2351 = vld [vmem:[#allocation3 + $0x8] sm:$0x8]
      %s2352 = scalar_lea.vmem %s6, 616
      %v2353 = vld [vmem:[%s2352] sm:$0xf]
      %v2354 = vld [vmem:[%s2352 + $0x4] sm:$0xf]
      %v2355 = vld [vmem:[%s2352 + $0x8] sm:$0xf]
      %v2356 = vld [vmem:[%s2352 + $0xc] sm:$0xf]
      %v2357 = vld [vmem:[%s2352 + $0x10] sm:$0xf]
      %v2358 = vld [vmem:[%s2352 + $0x14] sm:$0xf]
      %v2359 = vld [vmem:[%s2352 + $0x18] sm:$0x1]
      %v2361 = vunpack.c.l.b16 %v2351
      %v2362 = vpack.c.b16 %v2361, %v2361
      %v2363 = vrot.slane %v2362, 3
      %v2371 = vunpack.c.l.b16 %v2353
      %v2372 = vunpack.c.l.b16 %v2354
      %v2373 = vunpack.c.l.b16 %v2355
      %v2374 = vunpack.c.l.b16 %v2356
      %v2375 = vunpack.c.l.b16 %v2357
      %v2376 = vunpack.c.l.b16 %v2358
      %v2377 = vunpack.c.l.b16 %v2359
      %v2378 = vpack.c.b16 %v2372, %v2371
      %v2379 = vpack.c.b16 %v2374, %v2373
      %v2380 = vpack.c.b16 %v2376, %v2375
      %v2381 = vpack.c.b16 %v2377, %v2377
      %v2386 = vsel %vm1222, %v2363, 0
      %v2389 = vand.u32 %v2381, %v1228
      %2391 = vmatpush.bf16.msra.mxu0 0
      %2392 = vmatpush.bf16.msra.mxu0 0
      %2393 = vmatpush.bf16.msra.mxu0 0
      %2394 = vmatpush.bf16.msra.mxu0 0
      %2395 = vmatpush.bf16.msra.mxu0 %v2389
      %2396 = vmatpush.bf16.msra.mxu0 %v2380
      %2397 = vmatpush.bf16.msra.mxu0 %v2379
      %2398 = vmatpush.bf16.msra.mxu0 %v2378
      %2399 = vmatmul.bf16.gmra.mxu0 %v2386
      %v2400 = vpop.f32.mrf.mxu0
      %v2401 = vadd.f32 0.0, %v2400
      %v2402 = vpop.f32.mrf.mxu0
      %2403 = vdwg.mxu0
      %v2404 = vadd.f32 %v2350, %v2401
      %s2405 = scalar_lea.vmem %s6, 644
      %v2406 = vld [vmem:[%s2405] sm:$0xf]
      %v2407 = vld [vmem:[%s2405 + $0x4] sm:$0xf]
      %v2408 = vld [vmem:[%s2405 + $0x8] sm:$0xf]
      %v2409 = vld [vmem:[%s2405 + $0xc] sm:$0xf]
      %v2410 = vld [vmem:[%s2405 + $0x10] sm:$0xf]
      %v2411 = vld [vmem:[%s2405 + $0x14] sm:$0xf]
      %v2412 = vld [vmem:[%s2405 + $0x18] sm:$0x1]
      %v2414 = vshrl.u32 %v2362, 16
      %v2416 = vrot.slane %v2414, 3
      %v2424 = vunpack.c.l.b16 %v2406
      %v2425 = vunpack.c.l.b16 %v2407
      %v2426 = vunpack.c.l.b16 %v2408
      %v2427 = vunpack.c.l.b16 %v2409
      %v2428 = vunpack.c.l.b16 %v2410
      %v2429 = vunpack.c.l.b16 %v2411
      %v2430 = vunpack.c.l.b16 %v2412
      %v2431 = vpack.c.b16 %v2425, %v2424
      %v2432 = vpack.c.b16 %v2427, %v2426
      %v2433 = vpack.c.b16 %v2429, %v2428
      %v2434 = vpack.c.b16 %v2430, %v2430
      %v2439 = vsel %vm1222, %v2416, 0
      %v2442 = vand.u32 %v2434, %v1228
      %2444 = vmatpush.bf16.msra.mxu0 0
      %2445 = vmatpush.bf16.msra.mxu0 0
      %2446 = vmatpush.bf16.msra.mxu0 0
      %2447 = vmatpush.bf16.msra.mxu0 0
      %2448 = vmatpush.bf16.msra.mxu0 %v2442
      %2449 = vmatpush.bf16.msra.mxu0 %v2433
      %2450 = vmatpush.bf16.msra.mxu0 %v2432
      %2451 = vmatpush.bf16.msra.mxu0 %v2431
      %2452 = vmatmul.bf16.gmra.mxu0 %v2439
      %v2453 = vpop.f32.mrf.mxu0
      %v2454 = vadd.f32 0.0, %v2453
      %v2455 = vpop.f32.mrf.mxu0
      %2456 = vdwg.mxu0
      %v2457 = vadd.f32 %v2404, %v2454
      %v2458 = vld [vmem:[#allocation3 + $0xc] sm:$0x1]
      %s2459 = scalar_lea.vmem %s6, 672
      %v2460 = vld [vmem:[%s2459] sm:$0xf]
      %v2461 = vld [vmem:[%s2459 + $0x4] sm:$0xf]
      %v2462 = vld [vmem:[%s2459 + $0x8] sm:$0xf]
      %v2463 = vld [vmem:[%s2459 + $0xc] sm:$0xf]
      %v2464 = vld [vmem:[%s2459 + $0x10] sm:$0xf]
      %v2465 = vld [vmem:[%s2459 + $0x14] sm:$0xf]
      %v2466 = vld [vmem:[%s2459 + $0x18] sm:$0x1]
      %v2474 = vunpack.c.l.b16 %v2460
      %v2475 = vunpack.c.l.b16 %v2461
      %v2476 = vunpack.c.l.b16 %v2462
      %v2477 = vunpack.c.l.b16 %v2463
      %v2478 = vunpack.c.l.b16 %v2464
      %v2479 = vunpack.c.l.b16 %v2465
      %v2480 = vunpack.c.l.b16 %v2466
      %v2481 = vpack.c.b16 %v2475, %v2474
      %v2482 = vpack.c.b16 %v2477, %v2476
      %v2483 = vpack.c.b16 %v2479, %v2478
      %v2484 = vpack.c.b16 %v2480, %v2480
      %v2489 = vsel %vm1222, %v2458, 0
      %v2492 = vand.u32 %v2484, %v1228
      %2494 = vmatpush.bf16.msra.mxu0 0
      %2495 = vmatpush.bf16.msra.mxu0 0
      %2496 = vmatpush.bf16.msra.mxu0 0
      %2497 = vmatpush.bf16.msra.mxu0 0
      %2498 = vmatpush.bf16.msra.mxu0 %v2492
      %2499 = vmatpush.bf16.msra.mxu0 %v2483
      %2500 = vmatpush.bf16.msra.mxu0 %v2482
      %2501 = vmatpush.bf16.msra.mxu0 %v2481
      %2502 = vmatmul.bf16.gmra.mxu0 %v2489
      %v2503 = vpop.f32.mrf.mxu0
      %v2504 = vadd.f32 0.0, %v2503
      %v2505 = vpop.f32.mrf.mxu0
      %2506 = vdwg.mxu0
      %v2507 = vadd.f32 %v2457, %v2504
      %s2508 = scalar_lea.vmem %s6, 700
      %v2509 = vld [vmem:[%s2508] sm:$0xf]
      %v2510 = vld [vmem:[%s2508 + $0x4] sm:$0xf]
      %v2511 = vld [vmem:[%s2508 + $0x8] sm:$0xf]
      %v2512 = vld [vmem:[%s2508 + $0xc] sm:$0xf]
      %v2513 = vld [vmem:[%s2508 + $0x10] sm:$0xf]
      %v2514 = vld [vmem:[%s2508 + $0x14] sm:$0xf]
      %v2515 = vld [vmem:[%s2508 + $0x18] sm:$0x1]
      %v2517 = vunpack.c.l.b16 %v2458
      %v2518 = vpack.c.b16 %v2517, %v2517
      %v2520 = vshrl.u32 %v2518, 16
      %v2529 = vunpack.c.l.b16 %v2509
      %v2530 = vunpack.c.l.b16 %v2510
      %v2531 = vunpack.c.l.b16 %v2511
      %v2532 = vunpack.c.l.b16 %v2512
      %v2533 = vunpack.c.l.b16 %v2513
      %v2534 = vunpack.c.l.b16 %v2514
      %v2535 = vunpack.c.l.b16 %v2515
      %v2536 = vpack.c.b16 %v2530, %v2529
      %v2537 = vpack.c.b16 %v2532, %v2531
      %v2538 = vpack.c.b16 %v2534, %v2533
      %v2539 = vpack.c.b16 %v2535, %v2535
      %v2544 = vsel %vm1222, %v2520, 0
      %v2547 = vand.u32 %v2539, %v1228
      %2549 = vmatpush.bf16.msra.mxu0 0
      %2550 = vmatpush.bf16.msra.mxu0 0
      %2551 = vmatpush.bf16.msra.mxu0 0
      %2552 = vmatpush.bf16.msra.mxu0 0
      %2553 = vmatpush.bf16.msra.mxu0 %v2547
      %2554 = vmatpush.bf16.msra.mxu0 %v2538
      %2555 = vmatpush.bf16.msra.mxu0 %v2537
      %2556 = vmatpush.bf16.msra.mxu0 %v2536
      %2557 = vmatmul.bf16.gmra.mxu0 %v2544
      %v2558 = vpop.f32.mrf.mxu0
      %v2559 = vadd.f32 0.0, %v2558
      %v2560 = vpop.f32.mrf.mxu0
      %2561 = vdwg.mxu0
      %v2562 = vadd.f32 %v2507, %v2559
      %v2563 = vld [vmem:[#allocation3 + $0xc] sm:$0x2]
      %s2564 = scalar_lea.vmem %s6, 728
      %v2565 = vld [vmem:[%s2564] sm:$0xf]
      %v2566 = vld [vmem:[%s2564 + $0x4] sm:$0xf]
      %v2567 = vld [vmem:[%s2564 + $0x8] sm:$0xf]
      %v2568 = vld [vmem:[%s2564 + $0xc] sm:$0xf]
      %v2569 = vld [vmem:[%s2564 + $0x10] sm:$0xf]
      %v2570 = vld [vmem:[%s2564 + $0x14] sm:$0xf]
      %v2571 = vld [vmem:[%s2564 + $0x18] sm:$0x1]
      %v2573 = vunpack.c.l.b16 %v2563
      %v2574 = vpack.c.b16 %v2573, %v2573
      %v2575 = vrot.slane %v2574, 1
      %v2583 = vunpack.c.l.b16 %v2565
      %v2584 = vunpack.c.l.b16 %v2566
      %v2585 = vunpack.c.l.b16 %v2567
      %v2586 = vunpack.c.l.b16 %v2568
      %v2587 = vunpack.c.l.b16 %v2569
      %v2588 = vunpack.c.l.b16 %v2570
      %v2589 = vunpack.c.l.b16 %v2571
      %v2590 = vpack.c.b16 %v2584, %v2583
      %v2591 = vpack.c.b16 %v2586, %v2585
      %v2592 = vpack.c.b16 %v2588, %v2587
      %v2593 = vpack.c.b16 %v2589, %v2589
      %v2598 = vsel %vm1222, %v2575, 0
      %v2601 = vand.u32 %v2593, %v1228
      %2603 = vmatpush.bf16.msra.mxu0 0
      %2604 = vmatpush.bf16.msra.mxu0 0
      %2605 = vmatpush.bf16.msra.mxu0 0
      %2606 = vmatpush.bf16.msra.mxu0 0
      %2607 = vmatpush.bf16.msra.mxu0 %v2601
      %2608 = vmatpush.bf16.msra.mxu0 %v2592
      %2609 = vmatpush.bf16.msra.mxu0 %v2591
      %2610 = vmatpush.bf16.msra.mxu0 %v2590
      %2611 = vmatmul.bf16.gmra.mxu0 %v2598
      %v2612 = vpop.f32.mrf.mxu0
      %v2613 = vadd.f32 0.0, %v2612
      %v2614 = vpop.f32.mrf.mxu0
      %2615 = vdwg.mxu0
      %v2616 = vadd.f32 %v2562, %v2613
      %s2617 = scalar_lea.vmem %s6, 756
      %v2618 = vld [vmem:[%s2617] sm:$0xf]
      %v2619 = vld [vmem:[%s2617 + $0x4] sm:$0xf]
      %v2620 = vld [vmem:[%s2617 + $0x8] sm:$0xf]
      %v2621 = vld [vmem:[%s2617 + $0xc] sm:$0xf]
      %v2622 = vld [vmem:[%s2617 + $0x10] sm:$0xf]
      %v2623 = vld [vmem:[%s2617 + $0x14] sm:$0xf]
      %v2624 = vld [vmem:[%s2617 + $0x18] sm:$0x1]
      %v2626 = vshrl.u32 %v2574, 16
      %v2628 = vrot.slane %v2626, 1
      %v2636 = vunpack.c.l.b16 %v2618
      %v2637 = vunpack.c.l.b16 %v2619
      %v2638 = vunpack.c.l.b16 %v2620
      %v2639 = vunpack.c.l.b16 %v2621
      %v2640 = vunpack.c.l.b16 %v2622
      %v2641 = vunpack.c.l.b16 %v2623
      %v2642 = vunpack.c.l.b16 %v2624
      %v2643 = vpack.c.b16 %v2637, %v2636
      %v2644 = vpack.c.b16 %v2639, %v2638
      %v2645 = vpack.c.b16 %v2641, %v2640
      %v2646 = vpack.c.b16 %v2642, %v2642
      %v2651 = vsel %vm1222, %v2628, 0
      %v2654 = vand.u32 %v2646, %v1228
      %2656 = vmatpush.bf16.msra.mxu0 0
      %2657 = vmatpush.bf16.msra.mxu0 0
      %2658 = vmatpush.bf16.msra.mxu0 0
      %2659 = vmatpush.bf16.msra.mxu0 0
      %2660 = vmatpush.bf16.msra.mxu0 %v2654
      %2661 = vmatpush.bf16.msra.mxu0 %v2645
      %2662 = vmatpush.bf16.msra.mxu0 %v2644
      %2663 = vmatpush.bf16.msra.mxu0 %v2643
      %2664 = vmatmul.bf16.gmra.mxu0 %v2651
      %v2665 = vpop.f32.mrf.mxu0
      %v2666 = vadd.f32 0.0, %v2665
      %v2667 = vpop.f32.mrf.mxu0
      %2668 = vdwg.mxu0
      %v2669 = vadd.f32 %v2616, %v2666
      %v2670 = vld [vmem:[#allocation3 + $0xc] sm:$0x4]
      %s2671 = scalar_lea.vmem %s6, 784
      %v2672 = vld [vmem:[%s2671] sm:$0xf]
      %v2673 = vld [vmem:[%s2671 + $0x4] sm:$0xf]
      %v2674 = vld [vmem:[%s2671 + $0x8] sm:$0xf]
      %v2675 = vld [vmem:[%s2671 + $0xc] sm:$0xf]
      %v2676 = vld [vmem:[%s2671 + $0x10] sm:$0xf]
      %v2677 = vld [vmem:[%s2671 + $0x14] sm:$0xf]
      %v2678 = vld [vmem:[%s2671 + $0x18] sm:$0x1]
      %v2680 = vunpack.c.l.b16 %v2670
      %v2681 = vpack.c.b16 %v2680, %v2680
      %v2682 = vrot.slane %v2681, 2
      %v2690 = vunpack.c.l.b16 %v2672
      %v2691 = vunpack.c.l.b16 %v2673
      %v2692 = vunpack.c.l.b16 %v2674
      %v2693 = vunpack.c.l.b16 %v2675
      %v2694 = vunpack.c.l.b16 %v2676
      %v2695 = vunpack.c.l.b16 %v2677
      %v2696 = vunpack.c.l.b16 %v2678
      %v2697 = vpack.c.b16 %v2691, %v2690
      %v2698 = vpack.c.b16 %v2693, %v2692
      %v2699 = vpack.c.b16 %v2695, %v2694
      %v2700 = vpack.c.b16 %v2696, %v2696
      %v2705 = vsel %vm1222, %v2682, 0
      %v2708 = vand.u32 %v2700, %v1228
      %2710 = vmatpush.bf16.msra.mxu0 0
      %2711 = vmatpush.bf16.msra.mxu0 0
      %2712 = vmatpush.bf16.msra.mxu0 0
      %2713 = vmatpush.bf16.msra.mxu0 0
      %2714 = vmatpush.bf16.msra.mxu0 %v2708
      %2715 = vmatpush.bf16.msra.mxu0 %v2699
      %2716 = vmatpush.bf16.msra.mxu0 %v2698
      %2717 = vmatpush.bf16.msra.mxu0 %v2697
      %2718 = vmatmul.bf16.gmra.mxu0 %v2705
      %v2719 = vpop.f32.mrf.mxu0
      %v2720 = vadd.f32 0.0, %v2719
      %v2721 = vpop.f32.mrf.mxu0
      %2722 = vdwg.mxu0
      %v2723 = vadd.f32 %v2669, %v2720
      %s2724 = scalar_lea.vmem %s6, 812
      %v2725 = vld [vmem:[%s2724] sm:$0xf]
      %v2726 = vld [vmem:[%s2724 + $0x4] sm:$0xf]
      %v2727 = vld [vmem:[%s2724 + $0x8] sm:$0xf]
      %v2728 = vld [vmem:[%s2724 + $0xc] sm:$0xf]
      %v2729 = vld [vmem:[%s2724 + $0x10] sm:$0xf]
      %v2730 = vld [vmem:[%s2724 + $0x14] sm:$0xf]
      %v2731 = vld [vmem:[%s2724 + $0x18] sm:$0x1]
      %v2733 = vshrl.u32 %v2681, 16
      %v2735 = vrot.slane %v2733, 2
      %v2743 = vunpack.c.l.b16 %v2725
      %v2744 = vunpack.c.l.b16 %v2726
      %v2745 = vunpack.c.l.b16 %v2727
      %v2746 = vunpack.c.l.b16 %v2728
      %v2747 = vunpack.c.l.b16 %v2729
      %v2748 = vunpack.c.l.b16 %v2730
      %v2749 = vunpack.c.l.b16 %v2731
      %v2750 = vpack.c.b16 %v2744, %v2743
      %v2751 = vpack.c.b16 %v2746, %v2745
      %v2752 = vpack.c.b16 %v2748, %v2747
      %v2753 = vpack.c.b16 %v2749, %v2749
      %v2758 = vsel %vm1222, %v2735, 0
      %v2761 = vand.u32 %v2753, %v1228
      %2763 = vmatpush.bf16.msra.mxu0 0
      %2764 = vmatpush.bf16.msra.mxu0 0
      %2765 = vmatpush.bf16.msra.mxu0 0
      %2766 = vmatpush.bf16.msra.mxu0 0
      %2767 = vmatpush.bf16.msra.mxu0 %v2761
      %2768 = vmatpush.bf16.msra.mxu0 %v2752
      %2769 = vmatpush.bf16.msra.mxu0 %v2751
      %2770 = vmatpush.bf16.msra.mxu0 %v2750
      %2771 = vmatmul.bf16.gmra.mxu0 %v2758
      %v2772 = vpop.f32.mrf.mxu0
      %v2773 = vadd.f32 0.0, %v2772
      %v2774 = vpop.f32.mrf.mxu0
      %2775 = vdwg.mxu0
      %v2776 = vadd.f32 %v2723, %v2773
      %v2777 = vld [vmem:[#allocation3 + $0xc] sm:$0x8]
      %s2778 = scalar_lea.vmem %s6, 840
      %v2779 = vld [vmem:[%s2778] sm:$0xf]
      %v2780 = vld [vmem:[%s2778 + $0x4] sm:$0xf]
      %v2781 = vld [vmem:[%s2778 + $0x8] sm:$0xf]
      %v2782 = vld [vmem:[%s2778 + $0xc] sm:$0xf]
      %v2783 = vld [vmem:[%s2778 + $0x10] sm:$0xf]
      %v2784 = vld [vmem:[%s2778 + $0x14] sm:$0xf]
      %v2785 = vld [vmem:[%s2778 + $0x18] sm:$0x1]
      %v2787 = vunpack.c.l.b16 %v2777
      %v2788 = vpack.c.b16 %v2787, %v2787
      %v2789 = vrot.slane %v2788, 3
      %v2797 = vunpack.c.l.b16 %v2779
      %v2798 = vunpack.c.l.b16 %v2780
      %v2799 = vunpack.c.l.b16 %v2781
      %v2800 = vunpack.c.l.b16 %v2782
      %v2801 = vunpack.c.l.b16 %v2783
      %v2802 = vunpack.c.l.b16 %v2784
      %v2803 = vunpack.c.l.b16 %v2785
      %v2804 = vpack.c.b16 %v2798, %v2797
      %v2805 = vpack.c.b16 %v2800, %v2799
      %v2806 = vpack.c.b16 %v2802, %v2801
      %v2807 = vpack.c.b16 %v2803, %v2803
      %v2812 = vsel %vm1222, %v2789, 0
      %v2815 = vand.u32 %v2807, %v1228
      %2817 = vmatpush.bf16.msra.mxu0 0
      %2818 = vmatpush.bf16.msra.mxu0 0
      %2819 = vmatpush.bf16.msra.mxu0 0
      %2820 = vmatpush.bf16.msra.mxu0 0
      %2821 = vmatpush.bf16.msra.mxu0 %v2815
      %2822 = vmatpush.bf16.msra.mxu0 %v2806
      %2823 = vmatpush.bf16.msra.mxu0 %v2805
      %2824 = vmatpush.bf16.msra.mxu0 %v2804
      %2825 = vmatmul.bf16.gmra.mxu0 %v2812
      %v2826 = vpop.f32.mrf.mxu0
      %v2827 = vadd.f32 0.0, %v2826
      %v2828 = vpop.f32.mrf.mxu0
      %2829 = vdwg.mxu0
      %v2830 = vadd.f32 %v2776, %v2827
      %s2831 = scalar_lea.vmem %s6, 868
      %v2832 = vld [vmem:[%s2831] sm:$0xf]
      %v2833 = vld [vmem:[%s2831 + $0x4] sm:$0xf]
      %v2834 = vld [vmem:[%s2831 + $0x8] sm:$0xf]
      %v2835 = vld [vmem:[%s2831 + $0xc] sm:$0xf]
      %v2836 = vld [vmem:[%s2831 + $0x10] sm:$0xf]
      %v2837 = vld [vmem:[%s2831 + $0x14] sm:$0xf]
      %v2838 = vld [vmem:[%s2831 + $0x18] sm:$0x1]
      %v2840 = vshrl.u32 %v2788, 16
      %v2842 = vrot.slane %v2840, 3
      %v2850 = vunpack.c.l.b16 %v2832
      %v2851 = vunpack.c.l.b16 %v2833
      %v2852 = vunpack.c.l.b16 %v2834
      %v2853 = vunpack.c.l.b16 %v2835
      %v2854 = vunpack.c.l.b16 %v2836
      %v2855 = vunpack.c.l.b16 %v2837
      %v2856 = vunpack.c.l.b16 %v2838
      %v2857 = vpack.c.b16 %v2851, %v2850
      %v2858 = vpack.c.b16 %v2853, %v2852
      %v2859 = vpack.c.b16 %v2855, %v2854
      %v2860 = vpack.c.b16 %v2856, %v2856
      %v2865 = vsel %vm1222, %v2842, 0
      %v2868 = vand.u32 %v2860, %v1228
      %2870 = vmatpush.bf16.msra.mxu0 0
      %2871 = vmatpush.bf16.msra.mxu0 0
      %2872 = vmatpush.bf16.msra.mxu0 0
      %2873 = vmatpush.bf16.msra.mxu0 0
      %2874 = vmatpush.bf16.msra.mxu0 %v2868
      %2875 = vmatpush.bf16.msra.mxu0 %v2859
      %2876 = vmatpush.bf16.msra.mxu0 %v2858
      %2877 = vmatpush.bf16.msra.mxu0 %v2857
      %2878 = vmatmul.bf16.gmra.mxu0 %v2865
      %v2879 = vpop.f32.mrf.mxu0
      %v2880 = vadd.f32 0.0, %v2879
      %v2881 = vpop.f32.mrf.mxu0
      %2882 = vdwg.mxu0
      %v2883 = vadd.f32 %v2830, %v2880
      %v2884 = vld [vmem:[%s7] sm:$0x1]
      %v2885 = vadd.f32 %v2883, %v2884
      %vm2886 = vcmp.ge.f32.partialorder %v2885, 0.0
      %v2887 = vmul.f32 %v2885, 0.01
      %v2888 = vsel %vm2886, %v2885, %v2887
      %v2889 = vpack.c.bf16 %v2888, %v2888
      %v2890 = vld [vmem:[%s8] sm:$0xf]
      %v2891 = vld [vmem:[%s8 + $0x4] sm:$0xf]
      %v2892 = vld [vmem:[%s8 + $0x8] sm:$0xf]
      %v2893 = vld [vmem:[%s8 + $0xc] sm:$0xf]
      %v2894 = vld [vmem:[%s8 + $0x10] sm:$0xf]
      %v2895 = vld [vmem:[%s8 + $0x14] sm:$0xf]
      %v2896 = vld [vmem:[%s8 + $0x18] sm:$0xf]
      %v2897 = vld [vmem:[%s8 + $0x1c] sm:$0xf]
      %v2898 = vld [vmem:[%s9] sm:$0x1]
      %v2907 = vunpack.c.l.b16 %v2890
      %v2908 = vunpack.c.l.b16 %v2891
      %v2909 = vunpack.c.l.b16 %v2892
      %v2910 = vunpack.c.l.b16 %v2893
      %v2911 = vunpack.c.l.b16 %v2894
      %v2912 = vunpack.c.l.b16 %v2895
      %v2913 = vunpack.c.l.b16 %v2896
      %v2914 = vunpack.c.l.b16 %v2897
      %v2915 = vpack.c.b16 %v2908, %v2907
      %v2916 = vpack.c.b16 %v2910, %v2909
      %v2917 = vpack.c.b16 %v2912, %v2911
      %v2918 = vpack.c.b16 %v2914, %v2913
      %vm2923 = vcmask 523264
      %v2925 = vsel %vm2923, %v2889, 0
      %2927 = vmatpush.bf16.msra.mxu0 0
      %2928 = vmatpush.bf16.msra.mxu0 0
      %2929 = vmatpush.bf16.msra.mxu0 0
      %2930 = vmatpush.bf16.msra.mxu0 0
      %2931 = vmatpush.bf16.msra.mxu0 %v2918
      %2932 = vmatpush.bf16.msra.mxu0 %v2917
      %2933 = vmatpush.bf16.msra.mxu0 %v2916
      %2934 = vmatpush.bf16.msra.mxu0 %v2915
      %2935 = vmatmul.bf16.gmra.mxu0 %v2925
      %v2936 = vpop.f32.mrf.mxu0
      %v2937 = vadd.f32 %v2898, %v2936
      %v2938 = vpop.f32.mrf.mxu0
      %2939 = vdwg.mxu0
      %v2940 = vmax.f32 %v2937, 0.0
      %v2941 = vpack.c.bf16 %v2940, %v2940
      %v2942 = vld [vmem:[%s10] sm:$0xf]
      %v2943 = vld [vmem:[%s10 + $0x4] sm:$0xf]
      %v2944 = vld [vmem:[%s10 + $0x8] sm:$0xf]
      %v2945 = vld [vmem:[%s10 + $0xc] sm:$0xf]
      %v2946 = vld [vmem:[%s10 + $0x10] sm:$0xf]
      %v2947 = vld [vmem:[%s10 + $0x14] sm:$0xf]
      %v2948 = vld [vmem:[%s10 + $0x18] sm:$0xf]
      %v2949 = vld [vmem:[%s10 + $0x1c] sm:$0xf]
      %v2950 = vld [vmem:[%s11] sm:$0x1]
      %2952 = vset.pattern.permute.xlu0 0
      %2953 = vperm.xlu0 %2952, %v2950
      %v2954 = vpop.permute.xlu0 %2953
      %v2964 = vunpack.c.l.b16 %v2942
      %v2965 = vunpack.c.l.b16 %v2943
      %v2966 = vunpack.c.l.b16 %v2944
      %v2967 = vunpack.c.l.b16 %v2945
      %v2968 = vunpack.c.l.b16 %v2946
      %v2969 = vunpack.c.l.b16 %v2947
      %v2970 = vunpack.c.l.b16 %v2948
      %v2971 = vunpack.c.l.b16 %v2949
      %v2972 = vpack.c.b16 %v2965, %v2964
      %v2973 = vpack.c.b16 %v2967, %v2966
      %v2974 = vpack.c.b16 %v2969, %v2968
      %v2975 = vpack.c.b16 %v2971, %v2970
      %v2981 = vsel %vm2923, %v2941, 0
      %2983 = vmatpush.bf16.msra.mxu0 0
      %2984 = vmatpush.bf16.msra.mxu0 0
      %2985 = vmatpush.bf16.msra.mxu0 0
      %2986 = vmatpush.bf16.msra.mxu0 0
      %2987 = vmatpush.bf16.msra.mxu0 %v2975
      %2988 = vmatpush.bf16.msra.mxu0 %v2974
      %2989 = vmatpush.bf16.msra.mxu0 %v2973
      %2990 = vmatpush.bf16.msra.mxu0 %v2972
      %2991 = vmatmul.bf16.gmra.mxu0 %v2981
      %v2992 = vpop.f32.mrf.mxu0
      %v2993 = vadd.f32 %v2954, %v2992
      %v2994 = vpop.f32.mrf.mxu0
      %2995 = vdwg.mxu0
      %v2996 = vmax.f32 %v2993, 0.0
      %v2997 = vpack.c.bf16 %v2996, %v2996
      %vm2998 = vcmask 393216
      %vm2999 = vsmask.f32 256
      %vm3000 = vmand %vm2998, %vm2999
      %v3001 = vld [vmem:[#allocation4] sm:$0x1]
      %v3002 = vsel %vm3000, %v2997, %v3001
      %3003 = vst [vmem:[#allocation4] sm:$0x1] %v3002
      %s3004 = scalar_lea.vmem %s10, 32
      %v3005 = vld [vmem:[%s3004] sm:$0xf]
      %v3006 = vld [vmem:[%s3004 + $0x4] sm:$0xf]
      %v3007 = vld [vmem:[%s3004 + $0x8] sm:$0xf]
      %v3008 = vld [vmem:[%s3004 + $0xc] sm:$0xf]
      %v3009 = vld [vmem:[%s3004 + $0x10] sm:$0xf]
      %v3010 = vld [vmem:[%s3004 + $0x14] sm:$0xf]
      %v3011 = vld [vmem:[%s3004 + $0x18] sm:$0xf]
      %v3012 = vld [vmem:[%s3004 + $0x1c] sm:$0xf]
      %v3013 = vld [vmem:[%s11 + $0x1] sm:$0x1]
      %3015 = vset.pattern.permute.xlu0 0
      %3016 = vperm.xlu0 %3015, %v3013
      %v3017 = vpop.permute.xlu0 %3016
      %v3027 = vunpack.c.l.b16 %v3005
      %v3028 = vunpack.c.l.b16 %v3006
      %v3029 = vunpack.c.l.b16 %v3007
      %v3030 = vunpack.c.l.b16 %v3008
      %v3031 = vunpack.c.l.b16 %v3009
      %v3032 = vunpack.c.l.b16 %v3010
      %v3033 = vunpack.c.l.b16 %v3011
      %v3034 = vunpack.c.l.b16 %v3012
      %v3035 = vpack.c.b16 %v3028, %v3027
      %v3036 = vpack.c.b16 %v3030, %v3029
      %v3037 = vpack.c.b16 %v3032, %v3031
      %v3038 = vpack.c.b16 %v3034, %v3033
      %3043 = vmatpush.bf16.msra.mxu0 0
      %3044 = vmatpush.bf16.msra.mxu0 0
      %3045 = vmatpush.bf16.msra.mxu0 0
      %3046 = vmatpush.bf16.msra.mxu0 0
      %3047 = vmatpush.bf16.msra.mxu0 %v3038
      %3048 = vmatpush.bf16.msra.mxu0 %v3037
      %3049 = vmatpush.bf16.msra.mxu0 %v3036
      %3050 = vmatpush.bf16.msra.mxu0 %v3035
      %3051 = vmatmul.bf16.gmra.mxu0 %v2981
      %v3052 = vpop.f32.mrf.mxu0
      %v3053 = vadd.f32 %v3017, %v3052
      %v3054 = vpop.f32.mrf.mxu0
      %3055 = vdwg.mxu0
      %v3056 = vmax.f32 %v3053, 0.0
      %v3057 = vpack.c.bf16 %v3056, %v3056
      %v3059 = vshll.u32 %v3057, 16
      %vm3062 = vsmask.f32 7938
      %vm3063 = vmand %vm2998, %vm3062
      %v3064 = vld [vmem:[#allocation4] sm:$0x1]
      %v3065 = vsel %vm3063, %v3059, %v3064
      %3066 = vst [vmem:[#allocation4] sm:$0x1] %v3065
      %s3067 = scalar_lea.vmem %s10, 64
      %v3068 = vld [vmem:[%s3067] sm:$0xf]
      %v3069 = vld [vmem:[%s3067 + $0x4] sm:$0xf]
      %v3070 = vld [vmem:[%s3067 + $0x8] sm:$0xf]
      %v3071 = vld [vmem:[%s3067 + $0xc] sm:$0xf]
      %v3072 = vld [vmem:[%s3067 + $0x10] sm:$0xf]
      %v3073 = vld [vmem:[%s3067 + $0x14] sm:$0xf]
      %v3074 = vld [vmem:[%s3067 + $0x18] sm:$0xf]
      %v3075 = vld [vmem:[%s3067 + $0x1c] sm:$0xf]
      %v3076 = vld [vmem:[%s11 + $0x2] sm:$0x1]
      %3078 = vset.pattern.permute.xlu0 0
      %3079 = vperm.xlu0 %3078, %v3076
      %v3080 = vpop.permute.xlu0 %3079
      %v3090 = vunpack.c.l.b16 %v3068
      %v3091 = vunpack.c.l.b16 %v3069
      %v3092 = vunpack.c.l.b16 %v3070
      %v3093 = vunpack.c.l.b16 %v3071
      %v3094 = vunpack.c.l.b16 %v3072
      %v3095 = vunpack.c.l.b16 %v3073
      %v3096 = vunpack.c.l.b16 %v3074
      %v3097 = vunpack.c.l.b16 %v3075
      %v3098 = vpack.c.b16 %v3091, %v3090
      %v3099 = vpack.c.b16 %v3093, %v3092
      %v3100 = vpack.c.b16 %v3095, %v3094
      %v3101 = vpack.c.b16 %v3097, %v3096
      %3106 = vmatpush.bf16.msra.mxu0 0
      %3107 = vmatpush.bf16.msra.mxu0 0
      %3108 = vmatpush.bf16.msra.mxu0 0
      %3109 = vmatpush.bf16.msra.mxu0 0
      %3110 = vmatpush.bf16.msra.mxu0 %v3101
      %3111 = vmatpush.bf16.msra.mxu0 %v3100
      %3112 = vmatpush.bf16.msra.mxu0 %v3099
      %3113 = vmatpush.bf16.msra.mxu0 %v3098
      %3114 = vmatmul.bf16.gmra.mxu0 %v2981
      %v3115 = vpop.f32.mrf.mxu0
      %v3116 = vadd.f32 %v3080, %v3115
      %v3117 = vpop.f32.mrf.mxu0
      %3118 = vdwg.mxu0
      %v3119 = vmax.f32 %v3116, 0.0
      %v3120 = vpack.c.bf16 %v3119, %v3119
      %v3122 = vrot.slane %v3120, 7
      %vm3124 = vcmask 394241
      %vm3125 = vsmask.f32 1280
      %vm3126 = vmand %vm3124, %vm3125
      %v3127 = vld [vmem:[#allocation4] sm:$0x2]
      %v3128 = vsel %vm3126, %v3122, %v3127
      %3129 = vst [vmem:[#allocation4] sm:$0x2] %v3128
      %s3130 = scalar_lea.vmem %s10, 96
      %v3131 = vld [vmem:[%s3130] sm:$0xf]
      %v3132 = vld [vmem:[%s3130 + $0x4] sm:$0xf]
      %v3133 = vld [vmem:[%s3130 + $0x8] sm:$0xf]
      %v3134 = vld [vmem:[%s3130 + $0xc] sm:$0xf]
      %v3135 = vld [vmem:[%s3130 + $0x10] sm:$0xf]
      %v3136 = vld [vmem:[%s3130 + $0x14] sm:$0xf]
      %v3137 = vld [vmem:[%s3130 + $0x18] sm:$0xf]
      %v3138 = vld [vmem:[%s3130 + $0x1c] sm:$0xf]
      %v3139 = vld [vmem:[%s11 + $0x3] sm:$0x1]
      %3141 = vset.pattern.permute.xlu0 0
      %3142 = vperm.xlu0 %3141, %v3139
      %v3143 = vpop.permute.xlu0 %3142
      %v3153 = vunpack.c.l.b16 %v3131
      %v3154 = vunpack.c.l.b16 %v3132
      %v3155 = vunpack.c.l.b16 %v3133
      %v3156 = vunpack.c.l.b16 %v3134
      %v3157 = vunpack.c.l.b16 %v3135
      %v3158 = vunpack.c.l.b16 %v3136
      %v3159 = vunpack.c.l.b16 %v3137
      %v3160 = vunpack.c.l.b16 %v3138
      %v3161 = vpack.c.b16 %v3154, %v3153
      %v3162 = vpack.c.b16 %v3156, %v3155
      %v3163 = vpack.c.b16 %v3158, %v3157
      %v3164 = vpack.c.b16 %v3160, %v3159
      %3169 = vmatpush.bf16.msra.mxu0 0
      %3170 = vmatpush.bf16.msra.mxu0 0
      %3171 = vmatpush.bf16.msra.mxu0 0
      %3172 = vmatpush.bf16.msra.mxu0 0
      %3173 = vmatpush.bf16.msra.mxu0 %v3164
      %3174 = vmatpush.bf16.msra.mxu0 %v3163
      %3175 = vmatpush.bf16.msra.mxu0 %v3162
      %3176 = vmatpush.bf16.msra.mxu0 %v3161
      %3177 = vmatmul.bf16.gmra.mxu0 %v2981
      %v3178 = vpop.f32.mrf.mxu0
      %v3179 = vadd.f32 %v3143, %v3178
      %v3180 = vpop.f32.mrf.mxu0
      %3181 = vdwg.mxu0
      %v3182 = vmax.f32 %v3179, 0.0
      %v3183 = vpack.c.bf16 %v3182, %v3182
      %v3185 = vshll.u32 %v3183, 16
      %v3187 = vrot.slane %v3185, 7
      %vm3189 = vsmask.f32 7942
      %vm3190 = vmand %vm3124, %vm3189
      %v3191 = vld [vmem:[#allocation4] sm:$0x2]
      %v3192 = vsel %vm3190, %v3187, %v3191
      %3193 = vst [vmem:[#allocation4] sm:$0x2] %v3192
      %s3194 = scalar_lea.vmem %s10, 128
      %v3195 = vld [vmem:[%s3194] sm:$0xf]
      %v3196 = vld [vmem:[%s3194 + $0x4] sm:$0xf]
      %v3197 = vld [vmem:[%s3194 + $0x8] sm:$0xf]
      %v3198 = vld [vmem:[%s3194 + $0xc] sm:$0xf]
      %v3199 = vld [vmem:[%s3194 + $0x10] sm:$0xf]
      %v3200 = vld [vmem:[%s3194 + $0x14] sm:$0xf]
      %v3201 = vld [vmem:[%s3194 + $0x18] sm:$0xf]
      %v3202 = vld [vmem:[%s3194 + $0x1c] sm:$0xf]
      %v3203 = vld [vmem:[%s11 + $0x4] sm:$0x1]
      %3205 = vset.pattern.permute.xlu0 0
      %3206 = vperm.xlu0 %3205, %v3203
      %v3207 = vpop.permute.xlu0 %3206
      %v3217 = vunpack.c.l.b16 %v3195
      %v3218 = vunpack.c.l.b16 %v3196
      %v3219 = vunpack.c.l.b16 %v3197
      %v3220 = vunpack.c.l.b16 %v3198
      %v3221 = vunpack.c.l.b16 %v3199
      %v3222 = vunpack.c.l.b16 %v3200
      %v3223 = vunpack.c.l.b16 %v3201
      %v3224 = vunpack.c.l.b16 %v3202
      %v3225 = vpack.c.b16 %v3218, %v3217
      %v3226 = vpack.c.b16 %v3220, %v3219
      %v3227 = vpack.c.b16 %v3222, %v3221
      %v3228 = vpack.c.b16 %v3224, %v3223
      %3233 = vmatpush.bf16.msra.mxu0 0
      %3234 = vmatpush.bf16.msra.mxu0 0
      %3235 = vmatpush.bf16.msra.mxu0 0
      %3236 = vmatpush.bf16.msra.mxu0 0
      %3237 = vmatpush.bf16.msra.mxu0 %v3228
      %3238 = vmatpush.bf16.msra.mxu0 %v3227
      %3239 = vmatpush.bf16.msra.mxu0 %v3226
      %3240 = vmatpush.bf16.msra.mxu0 %v3225
      %3241 = vmatmul.bf16.gmra.mxu0 %v2981
      %v3242 = vpop.f32.mrf.mxu0
      %v3243 = vadd.f32 %v3207, %v3242
      %v3244 = vpop.f32.mrf.mxu0
      %3245 = vdwg.mxu0
      %v3246 = vmax.f32 %v3243, 0.0
      %v3247 = vpack.c.bf16 %v3246, %v3246
      %v3249 = vrot.slane %v3247, 6
      %vm3251 = vcmask 395266
      %vm3252 = vsmask.f32 2304
      %vm3253 = vmand %vm3251, %vm3252
      %v3254 = vld [vmem:[#allocation4] sm:$0x4]
      %v3255 = vsel %vm3253, %v3249, %v3254
      %3256 = vst [vmem:[#allocation4] sm:$0x4] %v3255
      %s3257 = scalar_lea.vmem %s10, 160
      %v3258 = vld [vmem:[%s3257] sm:$0xf]
      %v3259 = vld [vmem:[%s3257 + $0x4] sm:$0xf]
      %v3260 = vld [vmem:[%s3257 + $0x8] sm:$0xf]
      %v3261 = vld [vmem:[%s3257 + $0xc] sm:$0xf]
      %v3262 = vld [vmem:[%s3257 + $0x10] sm:$0xf]
      %v3263 = vld [vmem:[%s3257 + $0x14] sm:$0xf]
      %v3264 = vld [vmem:[%s3257 + $0x18] sm:$0xf]
      %v3265 = vld [vmem:[%s3257 + $0x1c] sm:$0xf]
      %v3266 = vld [vmem:[%s11 + $0x5] sm:$0x1]
      %3268 = vset.pattern.permute.xlu0 0
      %3269 = vperm.xlu0 %3268, %v3266
      %v3270 = vpop.permute.xlu0 %3269
      %v3280 = vunpack.c.l.b16 %v3258
      %v3281 = vunpack.c.l.b16 %v3259
      %v3282 = vunpack.c.l.b16 %v3260
      %v3283 = vunpack.c.l.b16 %v3261
      %v3284 = vunpack.c.l.b16 %v3262
      %v3285 = vunpack.c.l.b16 %v3263
      %v3286 = vunpack.c.l.b16 %v3264
      %v3287 = vunpack.c.l.b16 %v3265
      %v3288 = vpack.c.b16 %v3281, %v3280
      %v3289 = vpack.c.b16 %v3283, %v3282
      %v3290 = vpack.c.b16 %v3285, %v3284
      %v3291 = vpack.c.b16 %v3287, %v3286
      %3296 = vmatpush.bf16.msra.mxu0 0
      %3297 = vmatpush.bf16.msra.mxu0 0
      %3298 = vmatpush.bf16.msra.mxu0 0
      %3299 = vmatpush.bf16.msra.mxu0 0
      %3300 = vmatpush.bf16.msra.mxu0 %v3291
      %3301 = vmatpush.bf16.msra.mxu0 %v3290
      %3302 = vmatpush.bf16.msra.mxu0 %v3289
      %3303 = vmatpush.bf16.msra.mxu0 %v3288
      %3304 = vmatmul.bf16.gmra.mxu0 %v2981
      %v3305 = vpop.f32.mrf.mxu0
      %v3306 = vadd.f32 %v3270, %v3305
      %v3307 = vpop.f32.mrf.mxu0
      %3308 = vdwg.mxu0
      %v3309 = vmax.f32 %v3306, 0.0
      %v3310 = vpack.c.bf16 %v3309, %v3309
      %v3312 = vshll.u32 %v3310, 16
      %v3314 = vrot.slane %v3312, 6
      %vm3316 = vsmask.f32 7946
      %vm3317 = vmand %vm3251, %vm3316
      %v3318 = vld [vmem:[#allocation4] sm:$0x4]
      %v3319 = vsel %vm3317, %v3314, %v3318
      %3320 = vst [vmem:[#allocation4] sm:$0x4] %v3319
      %s3321 = scalar_lea.vmem %s10, 192
      %v3322 = vld [vmem:[%s3321] sm:$0xf]
      %v3323 = vld [vmem:[%s3321 + $0x4] sm:$0xf]
      %v3324 = vld [vmem:[%s3321 + $0x8] sm:$0xf]
      %v3325 = vld [vmem:[%s3321 + $0xc] sm:$0xf]
      %v3326 = vld [vmem:[%s3321 + $0x10] sm:$0xf]
      %v3327 = vld [vmem:[%s3321 + $0x14] sm:$0xf]
      %v3328 = vld [vmem:[%s3321 + $0x18] sm:$0xf]
      %v3329 = vld [vmem:[%s3321 + $0x1c] sm:$0xf]
      %v3330 = vld [vmem:[%s11 + $0x6] sm:$0x1]
      %3332 = vset.pattern.permute.xlu0 0
      %3333 = vperm.xlu0 %3332, %v3330
      %v3334 = vpop.permute.xlu0 %3333
      %v3344 = vunpack.c.l.b16 %v3322
      %v3345 = vunpack.c.l.b16 %v3323
      %v3346 = vunpack.c.l.b16 %v3324
      %v3347 = vunpack.c.l.b16 %v3325
      %v3348 = vunpack.c.l.b16 %v3326
      %v3349 = vunpack.c.l.b16 %v3327
      %v3350 = vunpack.c.l.b16 %v3328
      %v3351 = vunpack.c.l.b16 %v3329
      %v3352 = vpack.c.b16 %v3345, %v3344
      %v3353 = vpack.c.b16 %v3347, %v3346
      %v3354 = vpack.c.b16 %v3349, %v3348
      %v3355 = vpack.c.b16 %v3351, %v3350
      %3360 = vmatpush.bf16.msra.mxu0 0
      %3361 = vmatpush.bf16.msra.mxu0 0
      %3362 = vmatpush.bf16.msra.mxu0 0
      %3363 = vmatpush.bf16.msra.mxu0 0
      %3364 = vmatpush.bf16.msra.mxu0 %v3355
      %3365 = vmatpush.bf16.msra.mxu0 %v3354
      %3366 = vmatpush.bf16.msra.mxu0 %v3353
      %3367 = vmatpush.bf16.msra.mxu0 %v3352
      %3368 = vmatmul.bf16.gmra.mxu0 %v2981
      %v3369 = vpop.f32.mrf.mxu0
      %v3370 = vadd.f32 %v3334, %v3369
      %v3371 = vpop.f32.mrf.mxu0
      %3372 = vdwg.mxu0
      %v3373 = vmax.f32 %v3370, 0.0
      %v3374 = vpack.c.bf16 %v3373, %v3373
      %v3376 = vrot.slane %v3374, 5
      %vm3378 = vcmask 396291
      %vm3379 = vsmask.f32 3328
      %vm3380 = vmand %vm3378, %vm3379
      %v3381 = vld [vmem:[#allocation4] sm:$0x8]
      %v3382 = vsel %vm3380, %v3376, %v3381
      %3383 = vst [vmem:[#allocation4] sm:$0x8] %v3382
      %s3384 = scalar_lea.vmem %s10, 224
      %v3385 = vld [vmem:[%s3384] sm:$0xf]
      %v3386 = vld [vmem:[%s3384 + $0x4] sm:$0xf]
      %v3387 = vld [vmem:[%s3384 + $0x8] sm:$0xf]
      %v3388 = vld [vmem:[%s3384 + $0xc] sm:$0xf]
      %v3389 = vld [vmem:[%s3384 + $0x10] sm:$0xf]
      %v3390 = vld [vmem:[%s3384 + $0x14] sm:$0xf]
      %v3391 = vld [vmem:[%s3384 + $0x18] sm:$0xf]
      %v3392 = vld [vmem:[%s3384 + $0x1c] sm:$0xf]
      %v3393 = vld [vmem:[%s11 + $0x7] sm:$0x1]
      %3395 = vset.pattern.permute.xlu0 0
      %3396 = vperm.xlu0 %3395, %v3393
      %v3397 = vpop.permute.xlu0 %3396
      %v3407 = vunpack.c.l.b16 %v3385
      %v3408 = vunpack.c.l.b16 %v3386
      %v3409 = vunpack.c.l.b16 %v3387
      %v3410 = vunpack.c.l.b16 %v3388
      %v3411 = vunpack.c.l.b16 %v3389
      %v3412 = vunpack.c.l.b16 %v3390
      %v3413 = vunpack.c.l.b16 %v3391
      %v3414 = vunpack.c.l.b16 %v3392
      %v3415 = vpack.c.b16 %v3408, %v3407
      %v3416 = vpack.c.b16 %v3410, %v3409
      %v3417 = vpack.c.b16 %v3412, %v3411
      %v3418 = vpack.c.b16 %v3414, %v3413
      %3423 = vmatpush.bf16.msra.mxu0 0
      %3424 = vmatpush.bf16.msra.mxu0 0
      %3425 = vmatpush.bf16.msra.mxu0 0
      %3426 = vmatpush.bf16.msra.mxu0 0
      %3427 = vmatpush.bf16.msra.mxu0 %v3418
      %3428 = vmatpush.bf16.msra.mxu0 %v3417
      %3429 = vmatpush.bf16.msra.mxu0 %v3416
      %3430 = vmatpush.bf16.msra.mxu0 %v3415
      %3431 = vmatmul.bf16.gmra.mxu0 %v2981
      %v3432 = vpop.f32.mrf.mxu0
      %v3433 = vadd.f32 %v3397, %v3432
      %v3434 = vpop.f32.mrf.mxu0
      %3435 = vdwg.mxu0
      %v3436 = vmax.f32 %v3433, 0.0
      %v3437 = vpack.c.bf16 %v3436, %v3436
      %v3439 = vshll.u32 %v3437, 16
      %v3441 = vrot.slane %v3439, 5
      %vm3443 = vsmask.f32 7950
      %vm3444 = vmand %vm3378, %vm3443
      %v3445 = vld [vmem:[#allocation4] sm:$0x8]
      %v3446 = vsel %vm3444, %v3441, %v3445
      %3447 = vst [vmem:[#allocation4] sm:$0x8] %v3446
      %s3448 = scalar_lea.vmem %s10, 256
      %v3449 = vld [vmem:[%s3448] sm:$0xf]
      %v3450 = vld [vmem:[%s3448 + $0x4] sm:$0xf]
      %v3451 = vld [vmem:[%s3448 + $0x8] sm:$0xf]
      %v3452 = vld [vmem:[%s3448 + $0xc] sm:$0xf]
      %v3453 = vld [vmem:[%s3448 + $0x10] sm:$0xf]
      %v3454 = vld [vmem:[%s3448 + $0x14] sm:$0xf]
      %v3455 = vld [vmem:[%s3448 + $0x18] sm:$0xf]
      %v3456 = vld [vmem:[%s3448 + $0x1c] sm:$0xf]
      %v3457 = vld [vmem:[%s11 + $0x8] sm:$0x1]
      %3459 = vset.pattern.permute.xlu0 0
      %3460 = vperm.xlu0 %3459, %v3457
      %v3461 = vpop.permute.xlu0 %3460
      %v3471 = vunpack.c.l.b16 %v3449
      %v3472 = vunpack.c.l.b16 %v3450
      %v3473 = vunpack.c.l.b16 %v3451
      %v3474 = vunpack.c.l.b16 %v3452
      %v3475 = vunpack.c.l.b16 %v3453
      %v3476 = vunpack.c.l.b16 %v3454
      %v3477 = vunpack.c.l.b16 %v3455
      %v3478 = vunpack.c.l.b16 %v3456
      %v3479 = vpack.c.b16 %v3472, %v3471
      %v3480 = vpack.c.b16 %v3474, %v3473
      %v3481 = vpack.c.b16 %v3476, %v3475
      %v3482 = vpack.c.b16 %v3478, %v3477
      %3487 = vmatpush.bf16.msra.mxu0 0
      %3488 = vmatpush.bf16.msra.mxu0 0
      %3489 = vmatpush.bf16.msra.mxu0 0
      %3490 = vmatpush.bf16.msra.mxu0 0
      %3491 = vmatpush.bf16.msra.mxu0 %v3482
      %3492 = vmatpush.bf16.msra.mxu0 %v3481
      %3493 = vmatpush.bf16.msra.mxu0 %v3480
      %3494 = vmatpush.bf16.msra.mxu0 %v3479
      %3495 = vmatmul.bf16.gmra.mxu0 %v2981
      %v3496 = vpop.f32.mrf.mxu0
      %v3497 = vadd.f32 %v3461, %v3496
      %v3498 = vpop.f32.mrf.mxu0
      %3499 = vdwg.mxu0
      %v3500 = vmax.f32 %v3497, 0.0
      %v3501 = vpack.c.bf16 %v3500, %v3500
      %v3502 = vld [vmem:[#allocation4 + $0x4] sm:$0x1]
      %v3503 = vsel %vm3000, %v3501, %v3502
      %3504 = vst [vmem:[#allocation4 + $0x4] sm:$0x1] %v3503
      %s3505 = scalar_lea.vmem %s10, 288
      %v3506 = vld [vmem:[%s3505] sm:$0xf]
      %v3507 = vld [vmem:[%s3505 + $0x4] sm:$0xf]
      %v3508 = vld [vmem:[%s3505 + $0x8] sm:$0xf]
      %v3509 = vld [vmem:[%s3505 + $0xc] sm:$0xf]
      %v3510 = vld [vmem:[%s3505 + $0x10] sm:$0xf]
      %v3511 = vld [vmem:[%s3505 + $0x14] sm:$0xf]
      %v3512 = vld [vmem:[%s3505 + $0x18] sm:$0xf]
      %v3513 = vld [vmem:[%s3505 + $0x1c] sm:$0xf]
      %v3514 = vld [vmem:[%s11 + $0x9] sm:$0x1]
      %3516 = vset.pattern.permute.xlu0 0
      %3517 = vperm.xlu0 %3516, %v3514
      %v3518 = vpop.permute.xlu0 %3517
      %v3528 = vunpack.c.l.b16 %v3506
      %v3529 = vunpack.c.l.b16 %v3507
      %v3530 = vunpack.c.l.b16 %v3508
      %v3531 = vunpack.c.l.b16 %v3509
      %v3532 = vunpack.c.l.b16 %v3510
      %v3533 = vunpack.c.l.b16 %v3511
      %v3534 = vunpack.c.l.b16 %v3512
      %v3535 = vunpack.c.l.b16 %v3513
      %v3536 = vpack.c.b16 %v3529, %v3528
      %v3537 = vpack.c.b16 %v3531, %v3530
      %v3538 = vpack.c.b16 %v3533, %v3532
      %v3539 = vpack.c.b16 %v3535, %v3534
      %3544 = vmatpush.bf16.msra.mxu0 0
      %3545 = vmatpush.bf16.msra.mxu0 0
      %3546 = vmatpush.bf16.msra.mxu0 0
      %3547 = vmatpush.bf16.msra.mxu0 0
      %3548 = vmatpush.bf16.msra.mxu0 %v3539
      %3549 = vmatpush.bf16.msra.mxu0 %v3538
      %3550 = vmatpush.bf16.msra.mxu0 %v3537
      %3551 = vmatpush.bf16.msra.mxu0 %v3536
      %3552 = vmatmul.bf16.gmra.mxu0 %v2981
      %v3553 = vpop.f32.mrf.mxu0
      %v3554 = vadd.f32 %v3518, %v3553
      %v3555 = vpop.f32.mrf.mxu0
      %3556 = vdwg.mxu0
      %v3557 = vmax.f32 %v3554, 0.0
      %v3558 = vpack.c.bf16 %v3557, %v3557
      %v3560 = vshll.u32 %v3558, 16
      %v3563 = vld [vmem:[#allocation4 + $0x4] sm:$0x1]
      %v3564 = vsel %vm3063, %v3560, %v3563
      %3565 = vst [vmem:[#allocation4 + $0x4] sm:$0x1] %v3564
      %s3566 = scalar_lea.vmem %s10, 320
      %v3567 = vld [vmem:[%s3566] sm:$0xf]
      %v3568 = vld [vmem:[%s3566 + $0x4] sm:$0xf]
      %v3569 = vld [vmem:[%s3566 + $0x8] sm:$0xf]
      %v3570 = vld [vmem:[%s3566 + $0xc] sm:$0xf]
      %v3571 = vld [vmem:[%s3566 + $0x10] sm:$0xf]
      %v3572 = vld [vmem:[%s3566 + $0x14] sm:$0xf]
      %v3573 = vld [vmem:[%s3566 + $0x18] sm:$0xf]
      %v3574 = vld [vmem:[%s3566 + $0x1c] sm:$0xf]
      %v3575 = vld [vmem:[%s11 + $0xa] sm:$0x1]
      %3577 = vset.pattern.permute.xlu0 0
      %3578 = vperm.xlu0 %3577, %v3575
      %v3579 = vpop.permute.xlu0 %3578
      %v3589 = vunpack.c.l.b16 %v3567
      %v3590 = vunpack.c.l.b16 %v3568
      %v3591 = vunpack.c.l.b16 %v3569
      %v3592 = vunpack.c.l.b16 %v3570
      %v3593 = vunpack.c.l.b16 %v3571
      %v3594 = vunpack.c.l.b16 %v3572
      %v3595 = vunpack.c.l.b16 %v3573
      %v3596 = vunpack.c.l.b16 %v3574
      %v3597 = vpack.c.b16 %v3590, %v3589
      %v3598 = vpack.c.b16 %v3592, %v3591
      %v3599 = vpack.c.b16 %v3594, %v3593
      %v3600 = vpack.c.b16 %v3596, %v3595
      %3605 = vmatpush.bf16.msra.mxu0 0
      %3606 = vmatpush.bf16.msra.mxu0 0
      %3607 = vmatpush.bf16.msra.mxu0 0
      %3608 = vmatpush.bf16.msra.mxu0 0
      %3609 = vmatpush.bf16.msra.mxu0 %v3600
      %3610 = vmatpush.bf16.msra.mxu0 %v3599
      %3611 = vmatpush.bf16.msra.mxu0 %v3598
      %3612 = vmatpush.bf16.msra.mxu0 %v3597
      %3613 = vmatmul.bf16.gmra.mxu0 %v2981
      %v3614 = vpop.f32.mrf.mxu0
      %v3615 = vadd.f32 %v3579, %v3614
      %v3616 = vpop.f32.mrf.mxu0
      %3617 = vdwg.mxu0
      %v3618 = vmax.f32 %v3615, 0.0
      %v3619 = vpack.c.bf16 %v3618, %v3618
      %v3621 = vrot.slane %v3619, 7
      %v3623 = vld [vmem:[#allocation4 + $0x4] sm:$0x2]
      %v3624 = vsel %vm3126, %v3621, %v3623
      %3625 = vst [vmem:[#allocation4 + $0x4] sm:$0x2] %v3624
      %s3626 = scalar_lea.vmem %s10, 352
      %v3627 = vld [vmem:[%s3626] sm:$0xf]
      %v3628 = vld [vmem:[%s3626 + $0x4] sm:$0xf]
      %v3629 = vld [vmem:[%s3626 + $0x8] sm:$0xf]
      %v3630 = vld [vmem:[%s3626 + $0xc] sm:$0xf]
      %v3631 = vld [vmem:[%s3626 + $0x10] sm:$0xf]
      %v3632 = vld [vmem:[%s3626 + $0x14] sm:$0xf]
      %v3633 = vld [vmem:[%s3626 + $0x18] sm:$0xf]
      %v3634 = vld [vmem:[%s3626 + $0x1c] sm:$0xf]
      %v3635 = vld [vmem:[%s11 + $0xb] sm:$0x1]
      %3637 = vset.pattern.permute.xlu0 0
      %3638 = vperm.xlu0 %3637, %v3635
      %v3639 = vpop.permute.xlu0 %3638
      %v3649 = vunpack.c.l.b16 %v3627
      %v3650 = vunpack.c.l.b16 %v3628
      %v3651 = vunpack.c.l.b16 %v3629
      %v3652 = vunpack.c.l.b16 %v3630
      %v3653 = vunpack.c.l.b16 %v3631
      %v3654 = vunpack.c.l.b16 %v3632
      %v3655 = vunpack.c.l.b16 %v3633
      %v3656 = vunpack.c.l.b16 %v3634
      %v3657 = vpack.c.b16 %v3650, %v3649
      %v3658 = vpack.c.b16 %v3652, %v3651
      %v3659 = vpack.c.b16 %v3654, %v3653
      %v3660 = vpack.c.b16 %v3656, %v3655
      %3665 = vmatpush.bf16.msra.mxu0 0
      %3666 = vmatpush.bf16.msra.mxu0 0
      %3667 = vmatpush.bf16.msra.mxu0 0
      %3668 = vmatpush.bf16.msra.mxu0 0
      %3669 = vmatpush.bf16.msra.mxu0 %v3660
      %3670 = vmatpush.bf16.msra.mxu0 %v3659
      %3671 = vmatpush.bf16.msra.mxu0 %v3658
      %3672 = vmatpush.bf16.msra.mxu0 %v3657
      %3673 = vmatmul.bf16.gmra.mxu0 %v2981
      %v3674 = vpop.f32.mrf.mxu0
      %v3675 = vadd.f32 %v3639, %v3674
      %v3676 = vpop.f32.mrf.mxu0
      %3677 = vdwg.mxu0
      %v3678 = vmax.f32 %v3675, 0.0
      %v3679 = vpack.c.bf16 %v3678, %v3678
      %v3681 = vshll.u32 %v3679, 16
      %v3683 = vrot.slane %v3681, 7
      %v3685 = vld [vmem:[#allocation4 + $0x4] sm:$0x2]
      %v3686 = vsel %vm3190, %v3683, %v3685
      %3687 = vst [vmem:[#allocation4 + $0x4] sm:$0x2] %v3686
      %s3688 = scalar_lea.vmem %s10, 384
      %v3689 = vld [vmem:[%s3688] sm:$0xf]
      %v3690 = vld [vmem:[%s3688 + $0x4] sm:$0xf]
      %v3691 = vld [vmem:[%s3688 + $0x8] sm:$0xf]
      %v3692 = vld [vmem:[%s3688 + $0xc] sm:$0xf]
      %v3693 = vld [vmem:[%s3688 + $0x10] sm:$0xf]
      %v3694 = vld [vmem:[%s3688 + $0x14] sm:$0xf]
      %v3695 = vld [vmem:[%s3688 + $0x18] sm:$0xf]
      %v3696 = vld [vmem:[%s3688 + $0x1c] sm:$0xf]
      %v3697 = vld [vmem:[%s11 + $0xc] sm:$0x1]
      %3699 = vset.pattern.permute.xlu0 0
      %3700 = vperm.xlu0 %3699, %v3697
      %v3701 = vpop.permute.xlu0 %3700
      %v3711 = vunpack.c.l.b16 %v3689
      %v3712 = vunpack.c.l.b16 %v3690
      %v3713 = vunpack.c.l.b16 %v3691
      %v3714 = vunpack.c.l.b16 %v3692
      %v3715 = vunpack.c.l.b16 %v3693
      %v3716 = vunpack.c.l.b16 %v3694
      %v3717 = vunpack.c.l.b16 %v3695
      %v3718 = vunpack.c.l.b16 %v3696
      %v3719 = vpack.c.b16 %v3712, %v3711
      %v3720 = vpack.c.b16 %v3714, %v3713
      %v3721 = vpack.c.b16 %v3716, %v3715
      %v3722 = vpack.c.b16 %v3718, %v3717
      %3727 = vmatpush.bf16.msra.mxu0 0
      %3728 = vmatpush.bf16.msra.mxu0 0
      %3729 = vmatpush.bf16.msra.mxu0 0
      %3730 = vmatpush.bf16.msra.mxu0 0
      %3731 = vmatpush.bf16.msra.mxu0 %v3722
      %3732 = vmatpush.bf16.msra.mxu0 %v3721
      %3733 = vmatpush.bf16.msra.mxu0 %v3720
      %3734 = vmatpush.bf16.msra.mxu0 %v3719
      %3735 = vmatmul.bf16.gmra.mxu0 %v2981
      %v3736 = vpop.f32.mrf.mxu0
      %v3737 = vadd.f32 %v3701, %v3736
      %v3738 = vpop.f32.mrf.mxu0
      %3739 = vdwg.mxu0
      %v3740 = vmax.f32 %v3737, 0.0
      %v3741 = vpack.c.bf16 %v3740, %v3740
      %v3743 = vrot.slane %v3741, 6
      %v3745 = vld [vmem:[#allocation4 + $0x4] sm:$0x4]
      %v3746 = vsel %vm3253, %v3743, %v3745
      %3747 = vst [vmem:[#allocation4 + $0x4] sm:$0x4] %v3746
      %s3748 = scalar_lea.vmem %s10, 416
      %v3749 = vld [vmem:[%s3748] sm:$0xf]
      %v3750 = vld [vmem:[%s3748 + $0x4] sm:$0xf]
      %v3751 = vld [vmem:[%s3748 + $0x8] sm:$0xf]
      %v3752 = vld [vmem:[%s3748 + $0xc] sm:$0xf]
      %v3753 = vld [vmem:[%s3748 + $0x10] sm:$0xf]
      %v3754 = vld [vmem:[%s3748 + $0x14] sm:$0xf]
      %v3755 = vld [vmem:[%s3748 + $0x18] sm:$0xf]
      %v3756 = vld [vmem:[%s3748 + $0x1c] sm:$0xf]
      %v3757 = vld [vmem:[%s11 + $0xd] sm:$0x1]
      %3759 = vset.pattern.permute.xlu0 0
      %3760 = vperm.xlu0 %3759, %v3757
      %v3761 = vpop.permute.xlu0 %3760
      %v3771 = vunpack.c.l.b16 %v3749
      %v3772 = vunpack.c.l.b16 %v3750
      %v3773 = vunpack.c.l.b16 %v3751
      %v3774 = vunpack.c.l.b16 %v3752
      %v3775 = vunpack.c.l.b16 %v3753
      %v3776 = vunpack.c.l.b16 %v3754
      %v3777 = vunpack.c.l.b16 %v3755
      %v3778 = vunpack.c.l.b16 %v3756
      %v3779 = vpack.c.b16 %v3772, %v3771
      %v3780 = vpack.c.b16 %v3774, %v3773
      %v3781 = vpack.c.b16 %v3776, %v3775
      %v3782 = vpack.c.b16 %v3778, %v3777
      %3787 = vmatpush.bf16.msra.mxu0 0
      %3788 = vmatpush.bf16.msra.mxu0 0
      %3789 = vmatpush.bf16.msra.mxu0 0
      %3790 = vmatpush.bf16.msra.mxu0 0
      %3791 = vmatpush.bf16.msra.mxu0 %v3782
      %3792 = vmatpush.bf16.msra.mxu0 %v3781
      %3793 = vmatpush.bf16.msra.mxu0 %v3780
      %3794 = vmatpush.bf16.msra.mxu0 %v3779
      %3795 = vmatmul.bf16.gmra.mxu0 %v2981
      %v3796 = vpop.f32.mrf.mxu0
      %v3797 = vadd.f32 %v3761, %v3796
      %v3798 = vpop.f32.mrf.mxu0
      %3799 = vdwg.mxu0
      %v3800 = vmax.f32 %v3797, 0.0
      %v3801 = vpack.c.bf16 %v3800, %v3800
      %v3803 = vshll.u32 %v3801, 16
      %v3805 = vrot.slane %v3803, 6
      %v3807 = vld [vmem:[#allocation4 + $0x4] sm:$0x4]
      %v3808 = vsel %vm3317, %v3805, %v3807
      %3809 = vst [vmem:[#allocation4 + $0x4] sm:$0x4] %v3808
      %s3810 = scalar_lea.vmem %s10, 448
      %v3811 = vld [vmem:[%s3810] sm:$0xf]
      %v3812 = vld [vmem:[%s3810 + $0x4] sm:$0xf]
      %v3813 = vld [vmem:[%s3810 + $0x8] sm:$0xf]
      %v3814 = vld [vmem:[%s3810 + $0xc] sm:$0xf]
      %v3815 = vld [vmem:[%s3810 + $0x10] sm:$0xf]
      %v3816 = vld [vmem:[%s3810 + $0x14] sm:$0xf]
      %v3817 = vld [vmem:[%s3810 + $0x18] sm:$0xf]
      %v3818 = vld [vmem:[%s3810 + $0x1c] sm:$0xf]
      %v3819 = vld [vmem:[%s11 + $0xe] sm:$0x1]
      %3821 = vset.pattern.permute.xlu0 0
      %3822 = vperm.xlu0 %3821, %v3819
      %v3823 = vpop.permute.xlu0 %3822
      %v3833 = vunpack.c.l.b16 %v3811
      %v3834 = vunpack.c.l.b16 %v3812
      %v3835 = vunpack.c.l.b16 %v3813
      %v3836 = vunpack.c.l.b16 %v3814
      %v3837 = vunpack.c.l.b16 %v3815
      %v3838 = vunpack.c.l.b16 %v3816
      %v3839 = vunpack.c.l.b16 %v3817
      %v3840 = vunpack.c.l.b16 %v3818
      %v3841 = vpack.c.b16 %v3834, %v3833
      %v3842 = vpack.c.b16 %v3836, %v3835
      %v3843 = vpack.c.b16 %v3838, %v3837
      %v3844 = vpack.c.b16 %v3840, %v3839
      %3849 = vmatpush.bf16.msra.mxu0 0
      %3850 = vmatpush.bf16.msra.mxu0 0
      %3851 = vmatpush.bf16.msra.mxu0 0
      %3852 = vmatpush.bf16.msra.mxu0 0
      %3853 = vmatpush.bf16.msra.mxu0 %v3844
      %3854 = vmatpush.bf16.msra.mxu0 %v3843
      %3855 = vmatpush.bf16.msra.mxu0 %v3842
      %3856 = vmatpush.bf16.msra.mxu0 %v3841
      %3857 = vmatmul.bf16.gmra.mxu0 %v2981
      %v3858 = vpop.f32.mrf.mxu0
      %v3859 = vadd.f32 %v3823, %v3858
      %v3860 = vpop.f32.mrf.mxu0
      %3861 = vdwg.mxu0
      %v3862 = vmax.f32 %v3859, 0.0
      %v3863 = vpack.c.bf16 %v3862, %v3862
      %v3865 = vrot.slane %v3863, 5
      %v3867 = vld [vmem:[#allocation4 + $0x4] sm:$0x8]
      %v3868 = vsel %vm3380, %v3865, %v3867
      %3869 = vst [vmem:[#allocation4 + $0x4] sm:$0x8] %v3868
      %s3870 = scalar_lea.vmem %s10, 480
      %v3871 = vld [vmem:[%s3870] sm:$0xf]
      %v3872 = vld [vmem:[%s3870 + $0x4] sm:$0xf]
      %v3873 = vld [vmem:[%s3870 + $0x8] sm:$0xf]
      %v3874 = vld [vmem:[%s3870 + $0xc] sm:$0xf]
      %v3875 = vld [vmem:[%s3870 + $0x10] sm:$0xf]
      %v3876 = vld [vmem:[%s3870 + $0x14] sm:$0xf]
      %v3877 = vld [vmem:[%s3870 + $0x18] sm:$0xf]
      %v3878 = vld [vmem:[%s3870 + $0x1c] sm:$0xf]
      %v3879 = vld [vmem:[%s11 + $0xf] sm:$0x1]
      %3881 = vset.pattern.permute.xlu0 0
      %3882 = vperm.xlu0 %3881, %v3879
      %v3883 = vpop.permute.xlu0 %3882
      %v3893 = vunpack.c.l.b16 %v3871
      %v3894 = vunpack.c.l.b16 %v3872
      %v3895 = vunpack.c.l.b16 %v3873
      %v3896 = vunpack.c.l.b16 %v3874
      %v3897 = vunpack.c.l.b16 %v3875
      %v3898 = vunpack.c.l.b16 %v3876
      %v3899 = vunpack.c.l.b16 %v3877
      %v3900 = vunpack.c.l.b16 %v3878
      %v3901 = vpack.c.b16 %v3894, %v3893
      %v3902 = vpack.c.b16 %v3896, %v3895
      %v3903 = vpack.c.b16 %v3898, %v3897
      %v3904 = vpack.c.b16 %v3900, %v3899
      %3909 = vmatpush.bf16.msra.mxu0 0
      %3910 = vmatpush.bf16.msra.mxu0 0
      %3911 = vmatpush.bf16.msra.mxu0 0
      %3912 = vmatpush.bf16.msra.mxu0 0
      %3913 = vmatpush.bf16.msra.mxu0 %v3904
      %3914 = vmatpush.bf16.msra.mxu0 %v3903
      %3915 = vmatpush.bf16.msra.mxu0 %v3902
      %3916 = vmatpush.bf16.msra.mxu0 %v3901
      %3917 = vmatmul.bf16.gmra.mxu0 %v2981
      %v3918 = vpop.f32.mrf.mxu0
      %v3919 = vadd.f32 %v3883, %v3918
      %v3920 = vpop.f32.mrf.mxu0
      %3921 = vdwg.mxu0
      %v3922 = vmax.f32 %v3919, 0.0
      %v3923 = vpack.c.bf16 %v3922, %v3922
      %v3925 = vshll.u32 %v3923, 16
      %v3927 = vrot.slane %v3925, 5
      %v3929 = vld [vmem:[#allocation4 + $0x4] sm:$0x8]
      %v3930 = vsel %vm3444, %v3927, %v3929
      %3931 = vst [vmem:[#allocation4 + $0x4] sm:$0x8] %v3930
      %s3932 = scalar_lea.vmem %s10, 512
      %v3933 = vld [vmem:[%s3932] sm:$0xf]
      %v3934 = vld [vmem:[%s3932 + $0x4] sm:$0xf]
      %v3935 = vld [vmem:[%s3932 + $0x8] sm:$0xf]
      %v3936 = vld [vmem:[%s3932 + $0xc] sm:$0xf]
      %v3937 = vld [vmem:[%s3932 + $0x10] sm:$0xf]
      %v3938 = vld [vmem:[%s3932 + $0x14] sm:$0xf]
      %v3939 = vld [vmem:[%s3932 + $0x18] sm:$0xf]
      %v3940 = vld [vmem:[%s3932 + $0x1c] sm:$0xf]
      %v3941 = vld [vmem:[%s11 + $0x10] sm:$0x1]
      %3943 = vset.pattern.permute.xlu0 0
      %3944 = vperm.xlu0 %3943, %v3941
      %v3945 = vpop.permute.xlu0 %3944
      %v3955 = vunpack.c.l.b16 %v3933
      %v3956 = vunpack.c.l.b16 %v3934
      %v3957 = vunpack.c.l.b16 %v3935
      %v3958 = vunpack.c.l.b16 %v3936
      %v3959 = vunpack.c.l.b16 %v3937
      %v3960 = vunpack.c.l.b16 %v3938
      %v3961 = vunpack.c.l.b16 %v3939
      %v3962 = vunpack.c.l.b16 %v3940
      %v3963 = vpack.c.b16 %v3956, %v3955
      %v3964 = vpack.c.b16 %v3958, %v3957
      %v3965 = vpack.c.b16 %v3960, %v3959
      %v3966 = vpack.c.b16 %v3962, %v3961
      %3971 = vmatpush.bf16.msra.mxu0 0
      %3972 = vmatpush.bf16.msra.mxu0 0
      %3973 = vmatpush.bf16.msra.mxu0 0
      %3974 = vmatpush.bf16.msra.mxu0 0
      %3975 = vmatpush.bf16.msra.mxu0 %v3966
      %3976 = vmatpush.bf16.msra.mxu0 %v3965
      %3977 = vmatpush.bf16.msra.mxu0 %v3964
      %3978 = vmatpush.bf16.msra.mxu0 %v3963
      %3979 = vmatmul.bf16.gmra.mxu0 %v2981
      %v3980 = vpop.f32.mrf.mxu0
      %v3981 = vadd.f32 %v3945, %v3980
      %v3982 = vpop.f32.mrf.mxu0
      %3983 = vdwg.mxu0
      %v3984 = vmax.f32 %v3981, 0.0
      %v3985 = vpack.c.bf16 %v3984, %v3984
      %v3986 = vld [vmem:[#allocation4 + $0x8] sm:$0x1]
      %v3987 = vsel %vm3000, %v3985, %v3986
      %3988 = vst [vmem:[#allocation4 + $0x8] sm:$0x1] %v3987
      %s3989 = scalar_lea.vmem %s10, 544
      %v3990 = vld [vmem:[%s3989] sm:$0xf]
      %v3991 = vld [vmem:[%s3989 + $0x4] sm:$0xf]
      %v3992 = vld [vmem:[%s3989 + $0x8] sm:$0xf]
      %v3993 = vld [vmem:[%s3989 + $0xc] sm:$0xf]
      %v3994 = vld [vmem:[%s3989 + $0x10] sm:$0xf]
      %v3995 = vld [vmem:[%s3989 + $0x14] sm:$0xf]
      %v3996 = vld [vmem:[%s3989 + $0x18] sm:$0xf]
      %v3997 = vld [vmem:[%s3989 + $0x1c] sm:$0xf]
      %v3998 = vld [vmem:[%s11 + $0x11] sm:$0x1]
      %4000 = vset.pattern.permute.xlu0 0
      %4001 = vperm.xlu0 %4000, %v3998
      %v4002 = vpop.permute.xlu0 %4001
      %v4012 = vunpack.c.l.b16 %v3990
      %v4013 = vunpack.c.l.b16 %v3991
      %v4014 = vunpack.c.l.b16 %v3992
      %v4015 = vunpack.c.l.b16 %v3993
      %v4016 = vunpack.c.l.b16 %v3994
      %v4017 = vunpack.c.l.b16 %v3995
      %v4018 = vunpack.c.l.b16 %v3996
      %v4019 = vunpack.c.l.b16 %v3997
      %v4020 = vpack.c.b16 %v4013, %v4012
      %v4021 = vpack.c.b16 %v4015, %v4014
      %v4022 = vpack.c.b16 %v4017, %v4016
      %v4023 = vpack.c.b16 %v4019, %v4018
      %4028 = vmatpush.bf16.msra.mxu0 0
      %4029 = vmatpush.bf16.msra.mxu0 0
      %4030 = vmatpush.bf16.msra.mxu0 0
      %4031 = vmatpush.bf16.msra.mxu0 0
      %4032 = vmatpush.bf16.msra.mxu0 %v4023
      %4033 = vmatpush.bf16.msra.mxu0 %v4022
      %4034 = vmatpush.bf16.msra.mxu0 %v4021
      %4035 = vmatpush.bf16.msra.mxu0 %v4020
      %4036 = vmatmul.bf16.gmra.mxu0 %v2981
      %v4037 = vpop.f32.mrf.mxu0
      %v4038 = vadd.f32 %v4002, %v4037
      %v4039 = vpop.f32.mrf.mxu0
      %4040 = vdwg.mxu0
      %v4041 = vmax.f32 %v4038, 0.0
      %v4042 = vpack.c.bf16 %v4041, %v4041
      %v4044 = vshll.u32 %v4042, 16
      %v4047 = vld [vmem:[#allocation4 + $0x8] sm:$0x1]
      %v4048 = vsel %vm3063, %v4044, %v4047
      %4049 = vst [vmem:[#allocation4 + $0x8] sm:$0x1] %v4048
      %s4050 = scalar_lea.vmem %s10, 576
      %v4051 = vld [vmem:[%s4050] sm:$0xf]
      %v4052 = vld [vmem:[%s4050 + $0x4] sm:$0xf]
      %v4053 = vld [vmem:[%s4050 + $0x8] sm:$0xf]
      %v4054 = vld [vmem:[%s4050 + $0xc] sm:$0xf]
      %v4055 = vld [vmem:[%s4050 + $0x10] sm:$0xf]
      %v4056 = vld [vmem:[%s4050 + $0x14] sm:$0xf]
      %v4057 = vld [vmem:[%s4050 + $0x18] sm:$0xf]
      %v4058 = vld [vmem:[%s4050 + $0x1c] sm:$0xf]
      %v4059 = vld [vmem:[%s11 + $0x12] sm:$0x1]
      %4061 = vset.pattern.permute.xlu0 0
      %4062 = vperm.xlu0 %4061, %v4059
      %v4063 = vpop.permute.xlu0 %4062
      %v4073 = vunpack.c.l.b16 %v4051
      %v4074 = vunpack.c.l.b16 %v4052
      %v4075 = vunpack.c.l.b16 %v4053
      %v4076 = vunpack.c.l.b16 %v4054
      %v4077 = vunpack.c.l.b16 %v4055
      %v4078 = vunpack.c.l.b16 %v4056
      %v4079 = vunpack.c.l.b16 %v4057
      %v4080 = vunpack.c.l.b16 %v4058
      %v4081 = vpack.c.b16 %v4074, %v4073
      %v4082 = vpack.c.b16 %v4076, %v4075
      %v4083 = vpack.c.b16 %v4078, %v4077
      %v4084 = vpack.c.b16 %v4080, %v4079
      %4089 = vmatpush.bf16.msra.mxu0 0
      %4090 = vmatpush.bf16.msra.mxu0 0
      %4091 = vmatpush.bf16.msra.mxu0 0
      %4092 = vmatpush.bf16.msra.mxu0 0
      %4093 = vmatpush.bf16.msra.mxu0 %v4084
      %4094 = vmatpush.bf16.msra.mxu0 %v4083
      %4095 = vmatpush.bf16.msra.mxu0 %v4082
      %4096 = vmatpush.bf16.msra.mxu0 %v4081
      %4097 = vmatmul.bf16.gmra.mxu0 %v2981
      %v4098 = vpop.f32.mrf.mxu0
      %v4099 = vadd.f32 %v4063, %v4098
      %v4100 = vpop.f32.mrf.mxu0
      %4101 = vdwg.mxu0
      %v4102 = vmax.f32 %v4099, 0.0
      %v4103 = vpack.c.bf16 %v4102, %v4102
      %v4105 = vrot.slane %v4103, 7
      %v4107 = vld [vmem:[#allocation4 + $0x8] sm:$0x2]
      %v4108 = vsel %vm3126, %v4105, %v4107
      %4109 = vst [vmem:[#allocation4 + $0x8] sm:$0x2] %v4108
      %s4110 = scalar_lea.vmem %s10, 608
      %v4111 = vld [vmem:[%s4110] sm:$0xf]
      %v4112 = vld [vmem:[%s4110 + $0x4] sm:$0xf]
      %v4113 = vld [vmem:[%s4110 + $0x8] sm:$0xf]
      %v4114 = vld [vmem:[%s4110 + $0xc] sm:$0xf]
      %v4115 = vld [vmem:[%s4110 + $0x10] sm:$0xf]
      %v4116 = vld [vmem:[%s4110 + $0x14] sm:$0xf]
      %v4117 = vld [vmem:[%s4110 + $0x18] sm:$0xf]
      %v4118 = vld [vmem:[%s4110 + $0x1c] sm:$0xf]
      %v4119 = vld [vmem:[%s11 + $0x13] sm:$0x1]
      %4121 = vset.pattern.permute.xlu0 0
      %4122 = vperm.xlu0 %4121, %v4119
      %v4123 = vpop.permute.xlu0 %4122
      %v4133 = vunpack.c.l.b16 %v4111
      %v4134 = vunpack.c.l.b16 %v4112
      %v4135 = vunpack.c.l.b16 %v4113
      %v4136 = vunpack.c.l.b16 %v4114
      %v4137 = vunpack.c.l.b16 %v4115
      %v4138 = vunpack.c.l.b16 %v4116
      %v4139 = vunpack.c.l.b16 %v4117
      %v4140 = vunpack.c.l.b16 %v4118
      %v4141 = vpack.c.b16 %v4134, %v4133
      %v4142 = vpack.c.b16 %v4136, %v4135
      %v4143 = vpack.c.b16 %v4138, %v4137
      %v4144 = vpack.c.b16 %v4140, %v4139
      %4149 = vmatpush.bf16.msra.mxu0 0
      %4150 = vmatpush.bf16.msra.mxu0 0
      %4151 = vmatpush.bf16.msra.mxu0 0
      %4152 = vmatpush.bf16.msra.mxu0 0
      %4153 = vmatpush.bf16.msra.mxu0 %v4144
      %4154 = vmatpush.bf16.msra.mxu0 %v4143
      %4155 = vmatpush.bf16.msra.mxu0 %v4142
      %4156 = vmatpush.bf16.msra.mxu0 %v4141
      %4157 = vmatmul.bf16.gmra.mxu0 %v2981
      %v4158 = vpop.f32.mrf.mxu0
      %v4159 = vadd.f32 %v4123, %v4158
      %v4160 = vpop.f32.mrf.mxu0
      %4161 = vdwg.mxu0
      %v4162 = vmax.f32 %v4159, 0.0
      %v4163 = vpack.c.bf16 %v4162, %v4162
      %v4165 = vshll.u32 %v4163, 16
      %v4167 = vrot.slane %v4165, 7
      %v4169 = vld [vmem:[#allocation4 + $0x8] sm:$0x2]
      %v4170 = vsel %vm3190, %v4167, %v4169
      %4171 = vst [vmem:[#allocation4 + $0x8] sm:$0x2] %v4170
      %s4172 = scalar_lea.vmem %s10, 640
      %v4173 = vld [vmem:[%s4172] sm:$0xf]
      %v4174 = vld [vmem:[%s4172 + $0x4] sm:$0xf]
      %v4175 = vld [vmem:[%s4172 + $0x8] sm:$0xf]
      %v4176 = vld [vmem:[%s4172 + $0xc] sm:$0xf]
      %v4177 = vld [vmem:[%s4172 + $0x10] sm:$0xf]
      %v4178 = vld [vmem:[%s4172 + $0x14] sm:$0xf]
      %v4179 = vld [vmem:[%s4172 + $0x18] sm:$0xf]
      %v4180 = vld [vmem:[%s4172 + $0x1c] sm:$0xf]
      %v4181 = vld [vmem:[%s11 + $0x14] sm:$0x1]
      %4183 = vset.pattern.permute.xlu0 0
      %4184 = vperm.xlu0 %4183, %v4181
      %v4185 = vpop.permute.xlu0 %4184
      %v4195 = vunpack.c.l.b16 %v4173
      %v4196 = vunpack.c.l.b16 %v4174
      %v4197 = vunpack.c.l.b16 %v4175
      %v4198 = vunpack.c.l.b16 %v4176
      %v4199 = vunpack.c.l.b16 %v4177
      %v4200 = vunpack.c.l.b16 %v4178
      %v4201 = vunpack.c.l.b16 %v4179
      %v4202 = vunpack.c.l.b16 %v4180
      %v4203 = vpack.c.b16 %v4196, %v4195
      %v4204 = vpack.c.b16 %v4198, %v4197
      %v4205 = vpack.c.b16 %v4200, %v4199
      %v4206 = vpack.c.b16 %v4202, %v4201
      %4211 = vmatpush.bf16.msra.mxu0 0
      %4212 = vmatpush.bf16.msra.mxu0 0
      %4213 = vmatpush.bf16.msra.mxu0 0
      %4214 = vmatpush.bf16.msra.mxu0 0
      %4215 = vmatpush.bf16.msra.mxu0 %v4206
      %4216 = vmatpush.bf16.msra.mxu0 %v4205
      %4217 = vmatpush.bf16.msra.mxu0 %v4204
      %4218 = vmatpush.bf16.msra.mxu0 %v4203
      %4219 = vmatmul.bf16.gmra.mxu0 %v2981
      %v4220 = vpop.f32.mrf.mxu0
      %v4221 = vadd.f32 %v4185, %v4220
      %v4222 = vpop.f32.mrf.mxu0
      %4223 = vdwg.mxu0
      %v4224 = vmax.f32 %v4221, 0.0
      %v4225 = vpack.c.bf16 %v4224, %v4224
      %v4227 = vrot.slane %v4225, 6
      %v4229 = vld [vmem:[#allocation4 + $0x8] sm:$0x4]
      %v4230 = vsel %vm3253, %v4227, %v4229
      %4231 = vst [vmem:[#allocation4 + $0x8] sm:$0x4] %v4230
      %s4232 = scalar_lea.vmem %s10, 672
      %v4233 = vld [vmem:[%s4232] sm:$0xf]
      %v4234 = vld [vmem:[%s4232 + $0x4] sm:$0xf]
      %v4235 = vld [vmem:[%s4232 + $0x8] sm:$0xf]
      %v4236 = vld [vmem:[%s4232 + $0xc] sm:$0xf]
      %v4237 = vld [vmem:[%s4232 + $0x10] sm:$0xf]
      %v4238 = vld [vmem:[%s4232 + $0x14] sm:$0xf]
      %v4239 = vld [vmem:[%s4232 + $0x18] sm:$0xf]
      %v4240 = vld [vmem:[%s4232 + $0x1c] sm:$0xf]
      %v4241 = vld [vmem:[%s11 + $0x15] sm:$0x1]
      %4243 = vset.pattern.permute.xlu0 0
      %4244 = vperm.xlu0 %4243, %v4241
      %v4245 = vpop.permute.xlu0 %4244
      %v4255 = vunpack.c.l.b16 %v4233
      %v4256 = vunpack.c.l.b16 %v4234
      %v4257 = vunpack.c.l.b16 %v4235
      %v4258 = vunpack.c.l.b16 %v4236
      %v4259 = vunpack.c.l.b16 %v4237
      %v4260 = vunpack.c.l.b16 %v4238
      %v4261 = vunpack.c.l.b16 %v4239
      %v4262 = vunpack.c.l.b16 %v4240
      %v4263 = vpack.c.b16 %v4256, %v4255
      %v4264 = vpack.c.b16 %v4258, %v4257
      %v4265 = vpack.c.b16 %v4260, %v4259
      %v4266 = vpack.c.b16 %v4262, %v4261
      %4271 = vmatpush.bf16.msra.mxu0 0
      %4272 = vmatpush.bf16.msra.mxu0 0
      %4273 = vmatpush.bf16.msra.mxu0 0
      %4274 = vmatpush.bf16.msra.mxu0 0
      %4275 = vmatpush.bf16.msra.mxu0 %v4266
      %4276 = vmatpush.bf16.msra.mxu0 %v4265
      %4277 = vmatpush.bf16.msra.mxu0 %v4264
      %4278 = vmatpush.bf16.msra.mxu0 %v4263
      %4279 = vmatmul.bf16.gmra.mxu0 %v2981
      %v4280 = vpop.f32.mrf.mxu0
      %v4281 = vadd.f32 %v4245, %v4280
      %v4282 = vpop.f32.mrf.mxu0
      %4283 = vdwg.mxu0
      %v4284 = vmax.f32 %v4281, 0.0
      %v4285 = vpack.c.bf16 %v4284, %v4284
      %v4287 = vshll.u32 %v4285, 16
      %v4289 = vrot.slane %v4287, 6
      %v4291 = vld [vmem:[#allocation4 + $0x8] sm:$0x4]
      %v4292 = vsel %vm3317, %v4289, %v4291
      %4293 = vst [vmem:[#allocation4 + $0x8] sm:$0x4] %v4292
      %s4294 = scalar_lea.vmem %s10, 704
      %v4295 = vld [vmem:[%s4294] sm:$0xf]
      %v4296 = vld [vmem:[%s4294 + $0x4] sm:$0xf]
      %v4297 = vld [vmem:[%s4294 + $0x8] sm:$0xf]
      %v4298 = vld [vmem:[%s4294 + $0xc] sm:$0xf]
      %v4299 = vld [vmem:[%s4294 + $0x10] sm:$0xf]
      %v4300 = vld [vmem:[%s4294 + $0x14] sm:$0xf]
      %v4301 = vld [vmem:[%s4294 + $0x18] sm:$0xf]
      %v4302 = vld [vmem:[%s4294 + $0x1c] sm:$0xf]
      %v4303 = vld [vmem:[%s11 + $0x16] sm:$0x1]
      %4305 = vset.pattern.permute.xlu0 0
      %4306 = vperm.xlu0 %4305, %v4303
      %v4307 = vpop.permute.xlu0 %4306
      %v4317 = vunpack.c.l.b16 %v4295
      %v4318 = vunpack.c.l.b16 %v4296
      %v4319 = vunpack.c.l.b16 %v4297
      %v4320 = vunpack.c.l.b16 %v4298
      %v4321 = vunpack.c.l.b16 %v4299
      %v4322 = vunpack.c.l.b16 %v4300
      %v4323 = vunpack.c.l.b16 %v4301
      %v4324 = vunpack.c.l.b16 %v4302
      %v4325 = vpack.c.b16 %v4318, %v4317
      %v4326 = vpack.c.b16 %v4320, %v4319
      %v4327 = vpack.c.b16 %v4322, %v4321
      %v4328 = vpack.c.b16 %v4324, %v4323
      %4333 = vmatpush.bf16.msra.mxu0 0
      %4334 = vmatpush.bf16.msra.mxu0 0
      %4335 = vmatpush.bf16.msra.mxu0 0
      %4336 = vmatpush.bf16.msra.mxu0 0
      %4337 = vmatpush.bf16.msra.mxu0 %v4328
      %4338 = vmatpush.bf16.msra.mxu0 %v4327
      %4339 = vmatpush.bf16.msra.mxu0 %v4326
      %4340 = vmatpush.bf16.msra.mxu0 %v4325
      %4341 = vmatmul.bf16.gmra.mxu0 %v2981
      %v4342 = vpop.f32.mrf.mxu0
      %v4343 = vadd.f32 %v4307, %v4342
      %v4344 = vpop.f32.mrf.mxu0
      %4345 = vdwg.mxu0
      %v4346 = vmax.f32 %v4343, 0.0
      %v4347 = vpack.c.bf16 %v4346, %v4346
      %v4349 = vrot.slane %v4347, 5
      %v4351 = vld [vmem:[#allocation4 + $0x8] sm:$0x8]
      %v4352 = vsel %vm3380, %v4349, %v4351
      %4353 = vst [vmem:[#allocation4 + $0x8] sm:$0x8] %v4352
      %s4354 = scalar_lea.vmem %s10, 736
      %v4355 = vld [vmem:[%s4354] sm:$0xf]
      %v4356 = vld [vmem:[%s4354 + $0x4] sm:$0xf]
      %v4357 = vld [vmem:[%s4354 + $0x8] sm:$0xf]
      %v4358 = vld [vmem:[%s4354 + $0xc] sm:$0xf]
      %v4359 = vld [vmem:[%s4354 + $0x10] sm:$0xf]
      %v4360 = vld [vmem:[%s4354 + $0x14] sm:$0xf]
      %v4361 = vld [vmem:[%s4354 + $0x18] sm:$0xf]
      %v4362 = vld [vmem:[%s4354 + $0x1c] sm:$0xf]
      %v4363 = vld [vmem:[%s11 + $0x17] sm:$0x1]
      %4365 = vset.pattern.permute.xlu0 0
      %4366 = vperm.xlu0 %4365, %v4363
      %v4367 = vpop.permute.xlu0 %4366
      %v4377 = vunpack.c.l.b16 %v4355
      %v4378 = vunpack.c.l.b16 %v4356
      %v4379 = vunpack.c.l.b16 %v4357
      %v4380 = vunpack.c.l.b16 %v4358
      %v4381 = vunpack.c.l.b16 %v4359
      %v4382 = vunpack.c.l.b16 %v4360
      %v4383 = vunpack.c.l.b16 %v4361
      %v4384 = vunpack.c.l.b16 %v4362
      %v4385 = vpack.c.b16 %v4378, %v4377
      %v4386 = vpack.c.b16 %v4380, %v4379
      %v4387 = vpack.c.b16 %v4382, %v4381
      %v4388 = vpack.c.b16 %v4384, %v4383
      %4393 = vmatpush.bf16.msra.mxu0 0
      %4394 = vmatpush.bf16.msra.mxu0 0
      %4395 = vmatpush.bf16.msra.mxu0 0
      %4396 = vmatpush.bf16.msra.mxu0 0
      %4397 = vmatpush.bf16.msra.mxu0 %v4388
      %4398 = vmatpush.bf16.msra.mxu0 %v4387
      %4399 = vmatpush.bf16.msra.mxu0 %v4386
      %4400 = vmatpush.bf16.msra.mxu0 %v4385
      %4401 = vmatmul.bf16.gmra.mxu0 %v2981
      %v4402 = vpop.f32.mrf.mxu0
      %v4403 = vadd.f32 %v4367, %v4402
      %v4404 = vpop.f32.mrf.mxu0
      %4405 = vdwg.mxu0
      %v4406 = vmax.f32 %v4403, 0.0
      %v4407 = vpack.c.bf16 %v4406, %v4406
      %v4409 = vshll.u32 %v4407, 16
      %v4411 = vrot.slane %v4409, 5
      %v4413 = vld [vmem:[#allocation4 + $0x8] sm:$0x8]
      %v4414 = vsel %vm3444, %v4411, %v4413
      %4415 = vst [vmem:[#allocation4 + $0x8] sm:$0x8] %v4414
      %s4416 = scalar_lea.vmem %s10, 768
      %v4417 = vld [vmem:[%s4416] sm:$0xf]
      %v4418 = vld [vmem:[%s4416 + $0x4] sm:$0xf]
      %v4419 = vld [vmem:[%s4416 + $0x8] sm:$0xf]
      %v4420 = vld [vmem:[%s4416 + $0xc] sm:$0xf]
      %v4421 = vld [vmem:[%s4416 + $0x10] sm:$0xf]
      %v4422 = vld [vmem:[%s4416 + $0x14] sm:$0xf]
      %v4423 = vld [vmem:[%s4416 + $0x18] sm:$0xf]
      %v4424 = vld [vmem:[%s4416 + $0x1c] sm:$0xf]
      %v4425 = vld [vmem:[%s11 + $0x18] sm:$0x1]
      %4427 = vset.pattern.permute.xlu0 0
      %4428 = vperm.xlu0 %4427, %v4425
      %v4429 = vpop.permute.xlu0 %4428
      %v4439 = vunpack.c.l.b16 %v4417
      %v4440 = vunpack.c.l.b16 %v4418
      %v4441 = vunpack.c.l.b16 %v4419
      %v4442 = vunpack.c.l.b16 %v4420
      %v4443 = vunpack.c.l.b16 %v4421
      %v4444 = vunpack.c.l.b16 %v4422
      %v4445 = vunpack.c.l.b16 %v4423
      %v4446 = vunpack.c.l.b16 %v4424
      %v4447 = vpack.c.b16 %v4440, %v4439
      %v4448 = vpack.c.b16 %v4442, %v4441
      %v4449 = vpack.c.b16 %v4444, %v4443
      %v4450 = vpack.c.b16 %v4446, %v4445
      %4455 = vmatpush.bf16.msra.mxu0 0
      %4456 = vmatpush.bf16.msra.mxu0 0
      %4457 = vmatpush.bf16.msra.mxu0 0
      %4458 = vmatpush.bf16.msra.mxu0 0
      %4459 = vmatpush.bf16.msra.mxu0 %v4450
      %4460 = vmatpush.bf16.msra.mxu0 %v4449
      %4461 = vmatpush.bf16.msra.mxu0 %v4448
      %4462 = vmatpush.bf16.msra.mxu0 %v4447
      %4463 = vmatmul.bf16.gmra.mxu0 %v2981
      %v4464 = vpop.f32.mrf.mxu0
      %v4465 = vadd.f32 %v4429, %v4464
      %v4466 = vpop.f32.mrf.mxu0
      %4467 = vdwg.mxu0
      %v4468 = vmax.f32 %v4465, 0.0
      %v4469 = vpack.c.bf16 %v4468, %v4468
      %v4470 = vld [vmem:[#allocation4 + $0xc] sm:$0x1]
      %v4471 = vsel %vm3000, %v4469, %v4470
      %4472 = vst [vmem:[#allocation4 + $0xc] sm:$0x1] %v4471
      %s4473 = scalar_lea.vmem %s10, 800
      %v4474 = vld [vmem:[%s4473] sm:$0xf]
      %v4475 = vld [vmem:[%s4473 + $0x4] sm:$0xf]
      %v4476 = vld [vmem:[%s4473 + $0x8] sm:$0xf]
      %v4477 = vld [vmem:[%s4473 + $0xc] sm:$0xf]
      %v4478 = vld [vmem:[%s4473 + $0x10] sm:$0xf]
      %v4479 = vld [vmem:[%s4473 + $0x14] sm:$0xf]
      %v4480 = vld [vmem:[%s4473 + $0x18] sm:$0xf]
      %v4481 = vld [vmem:[%s4473 + $0x1c] sm:$0xf]
      %v4482 = vld [vmem:[%s11 + $0x19] sm:$0x1]
      %4484 = vset.pattern.permute.xlu0 0
      %4485 = vperm.xlu0 %4484, %v4482
      %v4486 = vpop.permute.xlu0 %4485
      %v4496 = vunpack.c.l.b16 %v4474
      %v4497 = vunpack.c.l.b16 %v4475
      %v4498 = vunpack.c.l.b16 %v4476
      %v4499 = vunpack.c.l.b16 %v4477
      %v4500 = vunpack.c.l.b16 %v4478
      %v4501 = vunpack.c.l.b16 %v4479
      %v4502 = vunpack.c.l.b16 %v4480
      %v4503 = vunpack.c.l.b16 %v4481
      %v4504 = vpack.c.b16 %v4497, %v4496
      %v4505 = vpack.c.b16 %v4499, %v4498
      %v4506 = vpack.c.b16 %v4501, %v4500
      %v4507 = vpack.c.b16 %v4503, %v4502
      %4512 = vmatpush.bf16.msra.mxu0 0
      %4513 = vmatpush.bf16.msra.mxu0 0
      %4514 = vmatpush.bf16.msra.mxu0 0
      %4515 = vmatpush.bf16.msra.mxu0 0
      %4516 = vmatpush.bf16.msra.mxu0 %v4507
      %4517 = vmatpush.bf16.msra.mxu0 %v4506
      %4518 = vmatpush.bf16.msra.mxu0 %v4505
      %4519 = vmatpush.bf16.msra.mxu0 %v4504
      %4520 = vmatmul.bf16.gmra.mxu0 %v2981
      %v4521 = vpop.f32.mrf.mxu0
      %v4522 = vadd.f32 %v4486, %v4521
      %v4523 = vpop.f32.mrf.mxu0
      %4524 = vdwg.mxu0
      %v4525 = vmax.f32 %v4522, 0.0
      %v4526 = vpack.c.bf16 %v4525, %v4525
      %v4528 = vshll.u32 %v4526, 16
      %v4531 = vld [vmem:[#allocation4 + $0xc] sm:$0x1]
      %v4532 = vsel %vm3063, %v4528, %v4531
      %4533 = vst [vmem:[#allocation4 + $0xc] sm:$0x1] %v4532
      %s4534 = scalar_lea.vmem %s10, 832
      %v4535 = vld [vmem:[%s4534] sm:$0xf]
      %v4536 = vld [vmem:[%s4534 + $0x4] sm:$0xf]
      %v4537 = vld [vmem:[%s4534 + $0x8] sm:$0xf]
      %v4538 = vld [vmem:[%s4534 + $0xc] sm:$0xf]
      %v4539 = vld [vmem:[%s4534 + $0x10] sm:$0xf]
      %v4540 = vld [vmem:[%s4534 + $0x14] sm:$0xf]
      %v4541 = vld [vmem:[%s4534 + $0x18] sm:$0xf]
      %v4542 = vld [vmem:[%s4534 + $0x1c] sm:$0xf]
      %v4543 = vld [vmem:[%s11 + $0x1a] sm:$0x1]
      %4545 = vset.pattern.permute.xlu0 0
      %4546 = vperm.xlu0 %4545, %v4543
      %v4547 = vpop.permute.xlu0 %4546
      %v4557 = vunpack.c.l.b16 %v4535
      %v4558 = vunpack.c.l.b16 %v4536
      %v4559 = vunpack.c.l.b16 %v4537
      %v4560 = vunpack.c.l.b16 %v4538
      %v4561 = vunpack.c.l.b16 %v4539
      %v4562 = vunpack.c.l.b16 %v4540
      %v4563 = vunpack.c.l.b16 %v4541
      %v4564 = vunpack.c.l.b16 %v4542
      %v4565 = vpack.c.b16 %v4558, %v4557
      %v4566 = vpack.c.b16 %v4560, %v4559
      %v4567 = vpack.c.b16 %v4562, %v4561
      %v4568 = vpack.c.b16 %v4564, %v4563
      %4573 = vmatpush.bf16.msra.mxu0 0
      %4574 = vmatpush.bf16.msra.mxu0 0
      %4575 = vmatpush.bf16.msra.mxu0 0
      %4576 = vmatpush.bf16.msra.mxu0 0
      %4577 = vmatpush.bf16.msra.mxu0 %v4568
      %4578 = vmatpush.bf16.msra.mxu0 %v4567
      %4579 = vmatpush.bf16.msra.mxu0 %v4566
      %4580 = vmatpush.bf16.msra.mxu0 %v4565
      %4581 = vmatmul.bf16.gmra.mxu0 %v2981
      %v4582 = vpop.f32.mrf.mxu0
      %v4583 = vadd.f32 %v4547, %v4582
      %v4584 = vpop.f32.mrf.mxu0
      %4585 = vdwg.mxu0
      %v4586 = vmax.f32 %v4583, 0.0
      %v4587 = vpack.c.bf16 %v4586, %v4586
      %v4589 = vrot.slane %v4587, 7
      %v4591 = vld [vmem:[#allocation4 + $0xc] sm:$0x2]
      %v4592 = vsel %vm3126, %v4589, %v4591
      %4593 = vst [vmem:[#allocation4 + $0xc] sm:$0x2] %v4592
      %s4594 = scalar_lea.vmem %s10, 864
      %v4595 = vld [vmem:[%s4594] sm:$0xf]
      %v4596 = vld [vmem:[%s4594 + $0x4] sm:$0xf]
      %v4597 = vld [vmem:[%s4594 + $0x8] sm:$0xf]
      %v4598 = vld [vmem:[%s4594 + $0xc] sm:$0xf]
      %v4599 = vld [vmem:[%s4594 + $0x10] sm:$0xf]
      %v4600 = vld [vmem:[%s4594 + $0x14] sm:$0xf]
      %v4601 = vld [vmem:[%s4594 + $0x18] sm:$0xf]
      %v4602 = vld [vmem:[%s4594 + $0x1c] sm:$0xf]
      %v4603 = vld [vmem:[%s11 + $0x1b] sm:$0x1]
      %4605 = vset.pattern.permute.xlu0 0
      %4606 = vperm.xlu0 %4605, %v4603
      %v4607 = vpop.permute.xlu0 %4606
      %v4617 = vunpack.c.l.b16 %v4595
      %v4618 = vunpack.c.l.b16 %v4596
      %v4619 = vunpack.c.l.b16 %v4597
      %v4620 = vunpack.c.l.b16 %v4598
      %v4621 = vunpack.c.l.b16 %v4599
      %v4622 = vunpack.c.l.b16 %v4600
      %v4623 = vunpack.c.l.b16 %v4601
      %v4624 = vunpack.c.l.b16 %v4602
      %v4625 = vpack.c.b16 %v4618, %v4617
      %v4626 = vpack.c.b16 %v4620, %v4619
      %v4627 = vpack.c.b16 %v4622, %v4621
      %v4628 = vpack.c.b16 %v4624, %v4623
      %4633 = vmatpush.bf16.msra.mxu0 0
      %4634 = vmatpush.bf16.msra.mxu0 0
      %4635 = vmatpush.bf16.msra.mxu0 0
      %4636 = vmatpush.bf16.msra.mxu0 0
      %4637 = vmatpush.bf16.msra.mxu0 %v4628
      %4638 = vmatpush.bf16.msra.mxu0 %v4627
      %4639 = vmatpush.bf16.msra.mxu0 %v4626
      %4640 = vmatpush.bf16.msra.mxu0 %v4625
      %4641 = vmatmul.bf16.gmra.mxu0 %v2981
      %v4642 = vpop.f32.mrf.mxu0
      %v4643 = vadd.f32 %v4607, %v4642
      %v4644 = vpop.f32.mrf.mxu0
      %4645 = vdwg.mxu0
      %v4646 = vmax.f32 %v4643, 0.0
      %v4647 = vpack.c.bf16 %v4646, %v4646
      %v4649 = vshll.u32 %v4647, 16
      %v4651 = vrot.slane %v4649, 7
      %v4653 = vld [vmem:[#allocation4 + $0xc] sm:$0x2]
      %v4654 = vsel %vm3190, %v4651, %v4653
      %4655 = vst [vmem:[#allocation4 + $0xc] sm:$0x2] %v4654
      %s4656 = scalar_lea.vmem %s10, 896
      %v4657 = vld [vmem:[%s4656] sm:$0xf]
      %v4658 = vld [vmem:[%s4656 + $0x4] sm:$0xf]
      %v4659 = vld [vmem:[%s4656 + $0x8] sm:$0xf]
      %v4660 = vld [vmem:[%s4656 + $0xc] sm:$0xf]
      %v4661 = vld [vmem:[%s4656 + $0x10] sm:$0xf]
      %v4662 = vld [vmem:[%s4656 + $0x14] sm:$0xf]
      %v4663 = vld [vmem:[%s4656 + $0x18] sm:$0xf]
      %v4664 = vld [vmem:[%s4656 + $0x1c] sm:$0xf]
      %v4665 = vld [vmem:[%s11 + $0x1c] sm:$0x1]
      %4667 = vset.pattern.permute.xlu0 0
      %4668 = vperm.xlu0 %4667, %v4665
      %v4669 = vpop.permute.xlu0 %4668
      %v4679 = vunpack.c.l.b16 %v4657
      %v4680 = vunpack.c.l.b16 %v4658
      %v4681 = vunpack.c.l.b16 %v4659
      %v4682 = vunpack.c.l.b16 %v4660
      %v4683 = vunpack.c.l.b16 %v4661
      %v4684 = vunpack.c.l.b16 %v4662
      %v4685 = vunpack.c.l.b16 %v4663
      %v4686 = vunpack.c.l.b16 %v4664
      %v4687 = vpack.c.b16 %v4680, %v4679
      %v4688 = vpack.c.b16 %v4682, %v4681
      %v4689 = vpack.c.b16 %v4684, %v4683
      %v4690 = vpack.c.b16 %v4686, %v4685
      %4695 = vmatpush.bf16.msra.mxu0 0
      %4696 = vmatpush.bf16.msra.mxu0 0
      %4697 = vmatpush.bf16.msra.mxu0 0
      %4698 = vmatpush.bf16.msra.mxu0 0
      %4699 = vmatpush.bf16.msra.mxu0 %v4690
      %4700 = vmatpush.bf16.msra.mxu0 %v4689
      %4701 = vmatpush.bf16.msra.mxu0 %v4688
      %4702 = vmatpush.bf16.msra.mxu0 %v4687
      %4703 = vmatmul.bf16.gmra.mxu0 %v2981
      %v4704 = vpop.f32.mrf.mxu0
      %v4705 = vadd.f32 %v4669, %v4704
      %v4706 = vpop.f32.mrf.mxu0
      %4707 = vdwg.mxu0
      %v4708 = vmax.f32 %v4705, 0.0
      %v4709 = vpack.c.bf16 %v4708, %v4708
      %v4711 = vrot.slane %v4709, 6
      %v4713 = vld [vmem:[#allocation4 + $0xc] sm:$0x4]
      %v4714 = vsel %vm3253, %v4711, %v4713
      %4715 = vst [vmem:[#allocation4 + $0xc] sm:$0x4] %v4714
      %s4716 = scalar_lea.vmem %s10, 928
      %v4717 = vld [vmem:[%s4716] sm:$0xf]
      %v4718 = vld [vmem:[%s4716 + $0x4] sm:$0xf]
      %v4719 = vld [vmem:[%s4716 + $0x8] sm:$0xf]
      %v4720 = vld [vmem:[%s4716 + $0xc] sm:$0xf]
      %v4721 = vld [vmem:[%s4716 + $0x10] sm:$0xf]
      %v4722 = vld [vmem:[%s4716 + $0x14] sm:$0xf]
      %v4723 = vld [vmem:[%s4716 + $0x18] sm:$0xf]
      %v4724 = vld [vmem:[%s4716 + $0x1c] sm:$0xf]
      %v4725 = vld [vmem:[%s11 + $0x1d] sm:$0x1]
      %4727 = vset.pattern.permute.xlu0 0
      %4728 = vperm.xlu0 %4727, %v4725
      %v4729 = vpop.permute.xlu0 %4728
      %v4739 = vunpack.c.l.b16 %v4717
      %v4740 = vunpack.c.l.b16 %v4718
      %v4741 = vunpack.c.l.b16 %v4719
      %v4742 = vunpack.c.l.b16 %v4720
      %v4743 = vunpack.c.l.b16 %v4721
      %v4744 = vunpack.c.l.b16 %v4722
      %v4745 = vunpack.c.l.b16 %v4723
      %v4746 = vunpack.c.l.b16 %v4724
      %v4747 = vpack.c.b16 %v4740, %v4739
      %v4748 = vpack.c.b16 %v4742, %v4741
      %v4749 = vpack.c.b16 %v4744, %v4743
      %v4750 = vpack.c.b16 %v4746, %v4745
      %4755 = vmatpush.bf16.msra.mxu0 0
      %4756 = vmatpush.bf16.msra.mxu0 0
      %4757 = vmatpush.bf16.msra.mxu0 0
      %4758 = vmatpush.bf16.msra.mxu0 0
      %4759 = vmatpush.bf16.msra.mxu0 %v4750
      %4760 = vmatpush.bf16.msra.mxu0 %v4749
      %4761 = vmatpush.bf16.msra.mxu0 %v4748
      %4762 = vmatpush.bf16.msra.mxu0 %v4747
      %4763 = vmatmul.bf16.gmra.mxu0 %v2981
      %v4764 = vpop.f32.mrf.mxu0
      %v4765 = vadd.f32 %v4729, %v4764
      %v4766 = vpop.f32.mrf.mxu0
      %4767 = vdwg.mxu0
      %v4768 = vmax.f32 %v4765, 0.0
      %v4769 = vpack.c.bf16 %v4768, %v4768
      %v4771 = vshll.u32 %v4769, 16
      %v4773 = vrot.slane %v4771, 6
      %v4775 = vld [vmem:[#allocation4 + $0xc] sm:$0x4]
      %v4776 = vsel %vm3317, %v4773, %v4775
      %4777 = vst [vmem:[#allocation4 + $0xc] sm:$0x4] %v4776
      %s4778 = scalar_lea.vmem %s10, 960
      %v4779 = vld [vmem:[%s4778] sm:$0xf]
      %v4780 = vld [vmem:[%s4778 + $0x4] sm:$0xf]
      %v4781 = vld [vmem:[%s4778 + $0x8] sm:$0xf]
      %v4782 = vld [vmem:[%s4778 + $0xc] sm:$0xf]
      %v4783 = vld [vmem:[%s4778 + $0x10] sm:$0xf]
      %v4784 = vld [vmem:[%s4778 + $0x14] sm:$0xf]
      %v4785 = vld [vmem:[%s4778 + $0x18] sm:$0xf]
      %v4786 = vld [vmem:[%s4778 + $0x1c] sm:$0xf]
      %v4787 = vld [vmem:[%s11 + $0x1e] sm:$0x1]
      %4789 = vset.pattern.permute.xlu0 0
      %4790 = vperm.xlu0 %4789, %v4787
      %v4791 = vpop.permute.xlu0 %4790
      %v4801 = vunpack.c.l.b16 %v4779
      %v4802 = vunpack.c.l.b16 %v4780
      %v4803 = vunpack.c.l.b16 %v4781
      %v4804 = vunpack.c.l.b16 %v4782
      %v4805 = vunpack.c.l.b16 %v4783
      %v4806 = vunpack.c.l.b16 %v4784
      %v4807 = vunpack.c.l.b16 %v4785
      %v4808 = vunpack.c.l.b16 %v4786
      %v4809 = vpack.c.b16 %v4802, %v4801
      %v4810 = vpack.c.b16 %v4804, %v4803
      %v4811 = vpack.c.b16 %v4806, %v4805
      %v4812 = vpack.c.b16 %v4808, %v4807
      %4817 = vmatpush.bf16.msra.mxu0 0
      %4818 = vmatpush.bf16.msra.mxu0 0
      %4819 = vmatpush.bf16.msra.mxu0 0
      %4820 = vmatpush.bf16.msra.mxu0 0
      %4821 = vmatpush.bf16.msra.mxu0 %v4812
      %4822 = vmatpush.bf16.msra.mxu0 %v4811
      %4823 = vmatpush.bf16.msra.mxu0 %v4810
      %4824 = vmatpush.bf16.msra.mxu0 %v4809
      %4825 = vmatmul.bf16.gmra.mxu0 %v2981
      %v4826 = vpop.f32.mrf.mxu0
      %v4827 = vadd.f32 %v4791, %v4826
      %v4828 = vpop.f32.mrf.mxu0
      %4829 = vdwg.mxu0
      %v4830 = vmax.f32 %v4827, 0.0
      %v4831 = vpack.c.bf16 %v4830, %v4830
      %v4833 = vrot.slane %v4831, 5
      %v4835 = vld [vmem:[#allocation4 + $0xc] sm:$0x8]
      %v4836 = vsel %vm3380, %v4833, %v4835
      %4837 = vst [vmem:[#allocation4 + $0xc] sm:$0x8] %v4836
      %s4838 = scalar_lea.vmem %s10, 992
      %v4839 = vld [vmem:[%s4838] sm:$0xf]
      %v4840 = vld [vmem:[%s4838 + $0x4] sm:$0xf]
      %v4841 = vld [vmem:[%s4838 + $0x8] sm:$0xf]
      %v4842 = vld [vmem:[%s4838 + $0xc] sm:$0xf]
      %v4843 = vld [vmem:[%s4838 + $0x10] sm:$0xf]
      %v4844 = vld [vmem:[%s4838 + $0x14] sm:$0xf]
      %v4845 = vld [vmem:[%s4838 + $0x18] sm:$0xf]
      %v4846 = vld [vmem:[%s4838 + $0x1c] sm:$0xf]
      %v4847 = vld [vmem:[%s11 + $0x1f] sm:$0x1]
      %4849 = vset.pattern.permute.xlu0 0
      %4850 = vperm.xlu0 %4849, %v4847
      %v4851 = vpop.permute.xlu0 %4850
      %v4861 = vunpack.c.l.b16 %v4839
      %v4862 = vunpack.c.l.b16 %v4840
      %v4863 = vunpack.c.l.b16 %v4841
      %v4864 = vunpack.c.l.b16 %v4842
      %v4865 = vunpack.c.l.b16 %v4843
      %v4866 = vunpack.c.l.b16 %v4844
      %v4867 = vunpack.c.l.b16 %v4845
      %v4868 = vunpack.c.l.b16 %v4846
      %v4869 = vpack.c.b16 %v4862, %v4861
      %v4870 = vpack.c.b16 %v4864, %v4863
      %v4871 = vpack.c.b16 %v4866, %v4865
      %v4872 = vpack.c.b16 %v4868, %v4867
      %4877 = vmatpush.bf16.msra.mxu0 0
      %4878 = vmatpush.bf16.msra.mxu0 0
      %4879 = vmatpush.bf16.msra.mxu0 0
      %4880 = vmatpush.bf16.msra.mxu0 0
      %4881 = vmatpush.bf16.msra.mxu0 %v4872
      %4882 = vmatpush.bf16.msra.mxu0 %v4871
      %4883 = vmatpush.bf16.msra.mxu0 %v4870
      %4884 = vmatpush.bf16.msra.mxu0 %v4869
      %4885 = vmatmul.bf16.gmra.mxu0 %v2981
      %v4886 = vpop.f32.mrf.mxu0
      %v4887 = vadd.f32 %v4851, %v4886
      %v4888 = vpop.f32.mrf.mxu0
      %4889 = vdwg.mxu0
      %v4890 = vmax.f32 %v4887, 0.0
      %v4891 = vpack.c.bf16 %v4890, %v4890
      %v4893 = vshll.u32 %v4891, 16
      %v4895 = vrot.slane %v4893, 5
      %v4897 = vld [vmem:[#allocation4 + $0xc] sm:$0x8]
      %v4898 = vsel %vm3444, %v4895, %v4897
      %4899 = vst [vmem:[#allocation4 + $0xc] sm:$0x8] %v4898
      %vm4900 = vcmask 519560
      %4901 = vst.msk [vmem:[#allocation4] sm:$0xf] %vm4900, 0
      %4902 = vst.msk [vmem:[#allocation4 + $0x4] sm:$0xf] %vm4900, 0
      %4903 = vst.msk [vmem:[#allocation4 + $0x8] sm:$0xf] %vm4900, 0
      %4904 = vst.msk [vmem:[#allocation4 + $0xc] sm:$0xf] %vm4900, 0
      %v4905 = vld [vmem:[#allocation4] sm:$0xf]
      %v4906 = vld [vmem:[#allocation4 + $0x4] sm:$0xf]
      %v4907 = vld [vmem:[#allocation4 + $0x8] sm:$0xf]
      %v4908 = vld [vmem:[#allocation4 + $0xc] sm:$0xf]
      %v4910 = vpack.i.b16 %v524, %v524
      %v4912 = vperm.slane %v4910, 1
      %v4913 = vunpack.c.l.bf16 %v4905
      %v4914 = vunpack.c.l.bf16 %v4906
      %v4915 = vunpack.c.l.bf16 %v4907
      %v4916 = vunpack.c.l.bf16 %v4908
      %v4917 = vunpack.c.l.bf16 %v4912
      %4919 = vrot.lane.b32.xlu0 %v4917, 1
      %v4920 = vpop.permute.xlu0 %4919
      %v4922 = vmul.f32 %v4913, %v4920
      %v4923 = vmul.f32 %v4914, %v4920
      %v4924 = vmul.f32 %v4915, %v4920
      %v4925 = vmul.f32 %v4916, %v4920
      %v4926 = vpack.c.bf16 %v4923, %v4922
      %v4927 = vpack.c.bf16 %v4925, %v4924
      %4928 = vrot.lane.b32.xlu0 %v4917, 8
      %v4929 = vpop.permute.xlu0 %4928
      %v4931 = vmul.f32 %v4913, %v4929
      %v4932 = vmul.f32 %v4914, %v4929
      %v4933 = vmul.f32 %v4915, %v4929
      %v4934 = vmul.f32 %v4916, %v4929
      %v4935 = vpack.c.bf16 %v4932, %v4931
      %v4936 = vpack.c.bf16 %v4934, %v4933
      %v4937 = vld [vmem:[%s13] sm:$0xff]
      %v4938 = vld [vmem:[%s13 + $0x8] sm:$0xff]
      %s4939 = scalar_lea.vmem %s12, 32
      %v4940 = vld [vmem:[%s4939] sm:$0xf]
      %v4941 = vld [vmem:[%s4939 + $0x4] sm:$0xf]
      %4943 = vset.pattern.permute.xlu0 0
      %4944 = vperm.xlu0 %4943, %v4937
      %v4945 = vpop.permute.xlu0 %4944
      %4948 = vset.pattern.permute.xlu0 0
      %4949 = vperm.xlu0 %4948, %v4938
      %v4950 = vpop.permute.xlu0 %4949
      %v4954 = vunpack.c.l.b16 %v4940
      %v4955 = vunpack.c.l.b16 %v4941
      %v4956 = vpack.c.b16 %v4955, %v4954
      %v4961 = vunpack.c.l.b16 %v4905
      %v4962 = vunpack.c.l.b16 %v4906
      %v4963 = vunpack.c.l.b16 %v4907
      %v4964 = vunpack.c.l.b16 %v4908
      %v4965 = vpack.c.b16 %v4962, %v4961
      %v4966 = vpack.c.b16 %v4964, %v4963
      %vm4969 = vcmask 261120
      %v4971 = vsel %vm4969, %v4956, 0
      %4973 = vmatpush.bf16.msra.mxu0 0
      %4974 = vmatpush.bf16.msra.mxu0 0
      %4975 = vmatpush.bf16.msra.mxu0 0
      %4976 = vmatpush.bf16.msra.mxu0 0
      %4977 = vmatpush.bf16.msra.mxu0 0
      %4978 = vmatpush.bf16.msra.mxu0 0
      %4979 = vmatpush.bf16.msra.mxu0 %v4966
      %4980 = vmatpush.bf16.msra.mxu0 %v4965
      %4981 = vmatmul.bf16.gmra.mxu0 %v4971
      %v4982 = vpop.f32.mrf.mxu0
      %v4983 = vadd.f32 %v4945, %v4982
      %v4984 = vpop.f32.mrf.mxu0
      %v4985 = vadd.f32 %v4950, %v4984
      %4986 = vdwg.mxu0
      %v4987 = vmax.f32 %v4983, 0.0
      %v4988 = vmax.f32 %v4985, 0.0
      %s4989 = scalar_lea.vmem %s12, 24
      %v4990 = vld [vmem:[%s4989] sm:$0xf]
      %v4991 = vld [vmem:[%s4989 + $0x4] sm:$0xf]
      %s4992 = scalar_lea.vmem %s12, 40
      %v4993 = vld [vmem:[%s4992] sm:$0xf]
      %v4994 = vld [vmem:[%s4992 + $0x4] sm:$0xf]
      %v4997 = vunpack.c.l.b16 %v4993
      %v4998 = vunpack.c.l.b16 %v4994
      %v4999 = vpack.c.b16 %v4998, %v4997
      %v5001 = vsel %vm4969, %v4999, 0
      %5003 = vmatpush.bf16.msra.mxu0 0
      %5004 = vmatpush.bf16.msra.mxu0 0
      %5005 = vmatpush.bf16.msra.mxu0 0
      %5006 = vmatpush.bf16.msra.mxu0 0
      %5007 = vmatpush.bf16.msra.mxu0 0
      %5008 = vmatpush.bf16.msra.mxu0 0
      %5009 = vmatpush.bf16.msra.mxu0 %v4966
      %5010 = vmatpush.bf16.msra.mxu0 %v4965
      %5011 = vmatmul.bf16.gmra.mxu0 %v5001
      %v5012 = vpop.f32.mrf.mxu0
      %v5013 = vadd.f32 0.0, %v5012
      %v5014 = vpop.f32.mrf.mxu0
      %v5015 = vadd.f32 0.0, %v5014
      %5016 = vdwg.mxu0
      %v5019 = vunpack.c.l.b16 %v4990
      %v5020 = vunpack.c.l.b16 %v4991
      %v5021 = vpack.c.b16 %v5020, %v5019
      %5024 = vrot.lane.b32.xlu0 %v4926, 127
      %v5025 = vpop.permute.xlu0 %5024
      %5026 = vrot.lane.b32.xlu0 %v4927, 127
      %v5027 = vpop.permute.xlu0 %5026
      %v5031 = vsel %vm4969, %v5021, 0
      %5033 = vmatpush.bf16.msra.mxu0 0
      %5034 = vmatpush.bf16.msra.mxu0 0
      %5035 = vmatpush.bf16.msra.mxu0 0
      %5036 = vmatpush.bf16.msra.mxu0 0
      %5037 = vmatpush.bf16.msra.mxu0 0
      %5038 = vmatpush.bf16.msra.mxu0 0
      %5039 = vmatpush.bf16.msra.mxu0 %v5027
      %5040 = vmatpush.bf16.msra.mxu0 %v5025
      %5041 = vmatmul.bf16.gmra.mxu0 %v5031
      %v5042 = vpop.f32.mrf.mxu0
      %v5043 = vadd.f32 %v5013, %v5042
      %v5044 = vpop.f32.mrf.mxu0
      %v5045 = vadd.f32 %v5015, %v5044
      %5046 = vdwg.mxu0
      %v5047 = vadd.f32 %v5043, %v4945
      %v5048 = vadd.f32 %v5045, %v4950
      %v5049 = vmax.f32 %v5047, 0.0
      %v5050 = vmax.f32 %v5048, 0.0
      %s5051 = scalar_lea.vmem %s12, 8
      %v5052 = vld [vmem:[%s5051] sm:$0xf]
      %v5053 = vld [vmem:[%s5051 + $0x4] sm:$0xf]
      %s5054 = scalar_lea.vmem %s12, 56
      %v5055 = vld [vmem:[%s5054] sm:$0xf]
      %v5056 = vld [vmem:[%s5054 + $0x4] sm:$0xf]
      %v5059 = vunpack.c.l.b16 %v5055
      %v5060 = vunpack.c.l.b16 %v5056
      %v5061 = vpack.c.b16 %v5060, %v5059
      %v5063 = vsel %vm4969, %v5061, 0
      %5065 = vmatpush.bf16.msra.mxu0 0
      %5066 = vmatpush.bf16.msra.mxu0 0
      %5067 = vmatpush.bf16.msra.mxu0 0
      %5068 = vmatpush.bf16.msra.mxu0 0
      %5069 = vmatpush.bf16.msra.mxu0 0
      %5070 = vmatpush.bf16.msra.mxu0 0
      %5071 = vmatpush.bf16.msra.mxu0 %v4966
      %5072 = vmatpush.bf16.msra.mxu0 %v4965
      %5073 = vmatmul.bf16.gmra.mxu0 %v5063
      %v5074 = vpop.f32.mrf.mxu0
      %v5075 = vadd.f32 0.0, %v5074
      %v5076 = vpop.f32.mrf.mxu0
      %v5077 = vadd.f32 0.0, %v5076
      %5078 = vdwg.mxu0
      %v5081 = vunpack.c.l.b16 %v5052
      %v5082 = vunpack.c.l.b16 %v5053
      %v5083 = vpack.c.b16 %v5082, %v5081
      %5084 = vrot.lane.b32.xlu0 %v4965, 121
      %v5085 = vpop.permute.xlu0 %5084
      %5086 = vrot.lane.b32.xlu0 %v4966, 121
      %v5087 = vpop.permute.xlu0 %5086
      %v5091 = vsel %vm4969, %v5083, 0
      %5093 = vmatpush.bf16.msra.mxu0 0
      %5094 = vmatpush.bf16.msra.mxu0 0
      %5095 = vmatpush.bf16.msra.mxu0 0
      %5096 = vmatpush.bf16.msra.mxu0 0
      %5097 = vmatpush.bf16.msra.mxu0 0
      %5098 = vmatpush.bf16.msra.mxu0 0
      %5099 = vmatpush.bf16.msra.mxu0 %v5087
      %5100 = vmatpush.bf16.msra.mxu0 %v5085
      %5101 = vmatmul.bf16.gmra.mxu0 %v5091
      %v5102 = vpop.f32.mrf.mxu0
      %v5103 = vadd.f32 %v5075, %v5102
      %v5104 = vpop.f32.mrf.mxu0
      %v5105 = vadd.f32 %v5077, %v5104
      %5106 = vdwg.mxu0
      %v5107 = vadd.f32 %v5103, %v4945
      %v5108 = vadd.f32 %v5105, %v4950
      %v5109 = vmax.f32 %v5107, 0.0
      %v5110 = vmax.f32 %v5108, 0.0
      %v5111 = vld [vmem:[%s12] sm:$0xf]
      %v5112 = vld [vmem:[%s12 + $0x4] sm:$0xf]
      %s5113 = scalar_lea.vmem %s12, 16
      %v5114 = vld [vmem:[%s5113] sm:$0xf]
      %v5115 = vld [vmem:[%s5113 + $0x4] sm:$0xf]
      %v5118 = vunpack.c.l.b16 %v5114
      %v5119 = vunpack.c.l.b16 %v5115
      %v5120 = vpack.c.b16 %v5119, %v5118
      %v5122 = vsel %vm4969, %v5120, 0
      %5124 = vmatpush.bf16.msra.mxu0 0
      %5125 = vmatpush.bf16.msra.mxu0 0
      %5126 = vmatpush.bf16.msra.mxu0 0
      %5127 = vmatpush.bf16.msra.mxu0 0
      %5128 = vmatpush.bf16.msra.mxu0 0
      %5129 = vmatpush.bf16.msra.mxu0 0
      %5130 = vmatpush.bf16.msra.mxu0 %v5087
      %5131 = vmatpush.bf16.msra.mxu0 %v5085
      %5132 = vmatmul.bf16.gmra.mxu0 %v5122
      %v5133 = vpop.f32.mrf.mxu0
      %v5134 = vadd.f32 0.0, %v5133
      %v5135 = vpop.f32.mrf.mxu0
      %v5136 = vadd.f32 0.0, %v5135
      %5137 = vdwg.mxu0
      %v5140 = vunpack.c.l.b16 %v5111
      %v5141 = vunpack.c.l.b16 %v5112
      %v5142 = vpack.c.b16 %v5141, %v5140
      %5145 = vrot.lane.b32.xlu0 %v4935, 120
      %v5146 = vpop.permute.xlu0 %5145
      %5147 = vrot.lane.b32.xlu0 %v4936, 120
      %v5148 = vpop.permute.xlu0 %5147
      %v5152 = vsel %vm4969, %v5142, 0
      %5154 = vmatpush.bf16.msra.mxu0 0
      %5155 = vmatpush.bf16.msra.mxu0 0
      %5156 = vmatpush.bf16.msra.mxu0 0
      %5157 = vmatpush.bf16.msra.mxu0 0
      %5158 = vmatpush.bf16.msra.mxu0 0
      %5159 = vmatpush.bf16.msra.mxu0 0
      %5160 = vmatpush.bf16.msra.mxu0 %v5148
      %5161 = vmatpush.bf16.msra.mxu0 %v5146
      %5162 = vmatmul.bf16.gmra.mxu0 %v5152
      %v5163 = vpop.f32.mrf.mxu0
      %v5164 = vadd.f32 %v5134, %v5163
      %v5165 = vpop.f32.mrf.mxu0
      %v5166 = vadd.f32 %v5136, %v5165
      %5167 = vdwg.mxu0
      %s5168 = scalar_lea.vmem %s12, 48
      %v5169 = vld [vmem:[%s5168] sm:$0xf]
      %v5170 = vld [vmem:[%s5168 + $0x4] sm:$0xf]
      %v5173 = vunpack.c.l.b16 %v5169
      %v5174 = vunpack.c.l.b16 %v5170
      %v5175 = vpack.c.b16 %v5174, %v5173
      %v5177 = vsel %vm4969, %v5175, 0
      %5179 = vmatpush.bf16.msra.mxu0 0
      %5180 = vmatpush.bf16.msra.mxu0 0
      %5181 = vmatpush.bf16.msra.mxu0 0
      %5182 = vmatpush.bf16.msra.mxu0 0
      %5183 = vmatpush.bf16.msra.mxu0 0
      %5184 = vmatpush.bf16.msra.mxu0 0
      %5185 = vmatpush.bf16.msra.mxu0 %v5027
      %5186 = vmatpush.bf16.msra.mxu0 %v5025
      %5187 = vmatmul.bf16.gmra.mxu0 %v5177
      %v5188 = vpop.f32.mrf.mxu0
      %v5189 = vadd.f32 0.0, %v5188
      %v5190 = vpop.f32.mrf.mxu0
      %v5191 = vadd.f32 0.0, %v5190
      %5192 = vdwg.mxu0
      %v5193 = vadd.f32 %v5164, %v5189
      %v5194 = vadd.f32 %v5166, %v5191
      %s5195 = scalar_lea.vmem %s12, 64
      %v5196 = vld [vmem:[%s5195] sm:$0xf]
      %v5197 = vld [vmem:[%s5195 + $0x4] sm:$0xf]
      %v5200 = vunpack.c.l.b16 %v5196
      %v5201 = vunpack.c.l.b16 %v5197
      %v5202 = vpack.c.b16 %v5201, %v5200
      %v5204 = vsel %vm4969, %v5202, 0
      %5206 = vmatpush.bf16.msra.mxu0 0
      %5207 = vmatpush.bf16.msra.mxu0 0
      %5208 = vmatpush.bf16.msra.mxu0 0
      %5209 = vmatpush.bf16.msra.mxu0 0
      %5210 = vmatpush.bf16.msra.mxu0 0
      %5211 = vmatpush.bf16.msra.mxu0 0
      %5212 = vmatpush.bf16.msra.mxu0 %v4966
      %5213 = vmatpush.bf16.msra.mxu0 %v4965
      %5214 = vmatmul.bf16.gmra.mxu0 %v5204
      %v5215 = vpop.f32.mrf.mxu0
      %v5216 = vadd.f32 0.0, %v5215
      %v5217 = vpop.f32.mrf.mxu0
      %v5218 = vadd.f32 0.0, %v5217
      %5219 = vdwg.mxu0
      %v5220 = vadd.f32 %v5193, %v5216
      %v5221 = vadd.f32 %v5194, %v5218
      %v5222 = vadd.f32 %v5220, %v4945
      %v5223 = vadd.f32 %v5221, %v4950
      %v5224 = vmax.f32 %v5222, 0.0
      %v5225 = vmax.f32 %v5223, 0.0
      %v5226 = vpack.c.bf16 %v4987, %v4987
      %v5227 = vpack.c.bf16 %v4988, %v4988
      %5228 = vst.msk [vmem:[#allocation5] sm:$0xf] %vm1174, %v5226
      %5229 = vst.msk [vmem:[#allocation5 + $0x4] sm:$0xf] %vm1174, %v5227
      %5230 = vst.msk [vmem:[#allocation5] sm:$0xf] %vm4900, 0
      %5231 = vst.msk [vmem:[#allocation5 + $0x4] sm:$0xf] %vm4900, 0
      %v5232 = vpack.c.bf16 %v5049, %v5049
      %v5233 = vpack.c.bf16 %v5050, %v5050
      %s5234 = scalar_lea.vmem [#allocation5], 8
      %5235 = vst.msk [vmem:[%s5234] sm:$0xf] %vm1174, %v5232
      %5236 = vst.msk [vmem:[%s5234 + $0x4] sm:$0xf] %vm1174, %v5233
      %5237 = vst.msk [vmem:[%s5234] sm:$0xf] %vm4900, 0
      %5238 = vst.msk [vmem:[%s5234 + $0x4] sm:$0xf] %vm4900, 0
      %v5239 = vpack.c.bf16 %v5109, %v5109
      %v5240 = vpack.c.bf16 %v5110, %v5110
      %s5241 = scalar_lea.vmem [#allocation5], 16
      %5242 = vst.msk [vmem:[%s5241] sm:$0xf] %vm1174, %v5239
      %5243 = vst.msk [vmem:[%s5241 + $0x4] sm:$0xf] %vm1174, %v5240
      %5244 = vst.msk [vmem:[%s5241] sm:$0xf] %vm4900, 0
      %5245 = vst.msk [vmem:[%s5241 + $0x4] sm:$0xf] %vm4900, 0
      %v5246 = vpack.c.bf16 %v5224, %v5224
      %v5247 = vpack.c.bf16 %v5225, %v5225
      %s5248 = scalar_lea.vmem [#allocation5], 24
      %5249 = vst.msk [vmem:[%s5248] sm:$0xf] %vm1174, %v5246
      %5250 = vst.msk [vmem:[%s5248 + $0x4] sm:$0xf] %vm1174, %v5247
      %5251 = vst.msk [vmem:[%s5248] sm:$0xf] %vm4900, 0
      %5252 = vst.msk [vmem:[%s5248 + $0x4] sm:$0xf] %vm4900, 0
      %v5253 = vld [vmem:[#allocation6] sm:$0x1]
      %v5254 = vld [vmem:[#allocation5] sm:$0xf]
      %v5255 = vld [vmem:[#allocation5 + $0x4] sm:$0xf]
      %v5256 = vld [vmem:[%s5234] sm:$0xf]
      %v5257 = vld [vmem:[%s5234 + $0x4] sm:$0xf]
      %v5258 = vld [vmem:[%s5241] sm:$0xf]
      %v5259 = vld [vmem:[%s5241 + $0x4] sm:$0xf]
      %v5260 = vld [vmem:[%s5248] sm:$0xf]
      %v5261 = vld [vmem:[%s5248 + $0x4] sm:$0xf]
      %s5262 = scalar_lea.vmem %s14, 4
      %v5263 = vld [vmem:[%s5262] sm:$0x1]
      %s5264 = scalar_lea.vmem %s14, 3
      %v5265 = vld [vmem:[%s5264] sm:$0x1]
      %s5266 = scalar_lea.vmem %s14, 5
      %v5267 = vld [vmem:[%s5266] sm:$0x1]
      %v5270 = vunpack.c.l.b16 %v5254
      %v5271 = vunpack.c.l.b16 %v5255
      %v5272 = vpack.c.b16 %v5271, %v5270
      %v5275 = vsel %vm697, %v5267, 0
      %5277 = vmatpush.bf16.msra.mxu0 0
      %5278 = vmatpush.bf16.msra.mxu0 0
      %5279 = vmatpush.bf16.msra.mxu0 0
      %5280 = vmatpush.bf16.msra.mxu0 0
      %5281 = vmatpush.bf16.msra.mxu0 0
      %5282 = vmatpush.bf16.msra.mxu0 0
      %5283 = vmatpush.bf16.msra.mxu0 0
      %5284 = vmatpush.bf16.msra.mxu0 %v5272
      %5285 = vmatmul.bf16.gmra.mxu0 %v5275
      %v5286 = vpop.f32.mrf.mxu0
      %v5287 = vadd.f32 0.0, %v5286
      %v5288 = vpop.f32.mrf.mxu0
      %5289 = vdwg.mxu0
      %v5292 = vunpack.c.l.b16 %v5256
      %v5293 = vunpack.c.l.b16 %v5257
      %v5294 = vpack.c.b16 %v5293, %v5292
      %v5297 = vsel %vm697, %v5265, 0
      %5299 = vmatpush.bf16.msra.mxu0 0
      %5300 = vmatpush.bf16.msra.mxu0 0
      %5301 = vmatpush.bf16.msra.mxu0 0
      %5302 = vmatpush.bf16.msra.mxu0 0
      %5303 = vmatpush.bf16.msra.mxu0 0
      %5304 = vmatpush.bf16.msra.mxu0 0
      %5305 = vmatpush.bf16.msra.mxu0 0
      %5306 = vmatpush.bf16.msra.mxu0 %v5294
      %5307 = vmatmul.bf16.gmra.mxu0 %v5297
      %v5308 = vpop.f32.mrf.mxu0
      %v5309 = vadd.f32 %v5287, %v5308
      %v5310 = vpop.f32.mrf.mxu0
      %5311 = vdwg.mxu0
      %s5312 = scalar_lea.vmem %s14, 1
      %v5313 = vld [vmem:[%s5312] sm:$0x1]
      %s5314 = scalar_lea.vmem %s14, 7
      %v5315 = vld [vmem:[%s5314] sm:$0x1]
      %v5317 = vsel %vm697, %v5315, 0
      %5319 = vmatpush.bf16.msra.mxu0 0
      %5320 = vmatpush.bf16.msra.mxu0 0
      %5321 = vmatpush.bf16.msra.mxu0 0
      %5322 = vmatpush.bf16.msra.mxu0 0
      %5323 = vmatpush.bf16.msra.mxu0 0
      %5324 = vmatpush.bf16.msra.mxu0 0
      %5325 = vmatpush.bf16.msra.mxu0 0
      %5326 = vmatpush.bf16.msra.mxu0 %v5272
      %5327 = vmatmul.bf16.gmra.mxu0 %v5317
      %v5328 = vpop.f32.mrf.mxu0
      %v5329 = vadd.f32 0.0, %v5328
      %v5330 = vpop.f32.mrf.mxu0
      %5331 = vdwg.mxu0
      %v5334 = vunpack.c.l.b16 %v5258
      %v5335 = vunpack.c.l.b16 %v5259
      %v5336 = vpack.c.b16 %v5335, %v5334
      %v5339 = vsel %vm697, %v5313, 0
      %5341 = vmatpush.bf16.msra.mxu0 0
      %5342 = vmatpush.bf16.msra.mxu0 0
      %5343 = vmatpush.bf16.msra.mxu0 0
      %5344 = vmatpush.bf16.msra.mxu0 0
      %5345 = vmatpush.bf16.msra.mxu0 0
      %5346 = vmatpush.bf16.msra.mxu0 0
      %5347 = vmatpush.bf16.msra.mxu0 0
      %5348 = vmatpush.bf16.msra.mxu0 %v5336
      %5349 = vmatmul.bf16.gmra.mxu0 %v5339
      %v5350 = vpop.f32.mrf.mxu0
      %v5351 = vadd.f32 %v5329, %v5350
      %v5352 = vpop.f32.mrf.mxu0
      %5353 = vdwg.mxu0
      %v5354 = vld [vmem:[%s14] sm:$0x1]
      %s5355 = scalar_lea.vmem %s14, 2
      %v5356 = vld [vmem:[%s5355] sm:$0x1]
      %v5358 = vsel %vm697, %v5356, 0
      %5360 = vmatpush.bf16.msra.mxu0 0
      %5361 = vmatpush.bf16.msra.mxu0 0
      %5362 = vmatpush.bf16.msra.mxu0 0
      %5363 = vmatpush.bf16.msra.mxu0 0
      %5364 = vmatpush.bf16.msra.mxu0 0
      %5365 = vmatpush.bf16.msra.mxu0 0
      %5366 = vmatpush.bf16.msra.mxu0 0
      %5367 = vmatpush.bf16.msra.mxu0 %v5336
      %5368 = vmatmul.bf16.gmra.mxu0 %v5358
      %v5369 = vpop.f32.mrf.mxu0
      %v5370 = vadd.f32 0.0, %v5369
      %v5371 = vpop.f32.mrf.mxu0
      %5372 = vdwg.mxu0
      %v5375 = vunpack.c.l.b16 %v5260
      %v5376 = vunpack.c.l.b16 %v5261
      %v5377 = vpack.c.b16 %v5376, %v5375
      %v5380 = vsel %vm697, %v5354, 0
      %5382 = vmatpush.bf16.msra.mxu0 0
      %5383 = vmatpush.bf16.msra.mxu0 0
      %5384 = vmatpush.bf16.msra.mxu0 0
      %5385 = vmatpush.bf16.msra.mxu0 0
      %5386 = vmatpush.bf16.msra.mxu0 0
      %5387 = vmatpush.bf16.msra.mxu0 0
      %5388 = vmatpush.bf16.msra.mxu0 0
      %5389 = vmatpush.bf16.msra.mxu0 %v5377
      %5390 = vmatmul.bf16.gmra.mxu0 %v5380
      %v5391 = vpop.f32.mrf.mxu0
      %v5392 = vadd.f32 %v5370, %v5391
      %v5393 = vpop.f32.mrf.mxu0
      %5394 = vdwg.mxu0
      %s5395 = scalar_lea.vmem %s14, 6
      %v5396 = vld [vmem:[%s5395] sm:$0x1]
      %v5398 = vsel %vm697, %v5396, 0
      %5400 = vmatpush.bf16.msra.mxu0 0
      %5401 = vmatpush.bf16.msra.mxu0 0
      %5402 = vmatpush.bf16.msra.mxu0 0
      %5403 = vmatpush.bf16.msra.mxu0 0
      %5404 = vmatpush.bf16.msra.mxu0 0
      %5405 = vmatpush.bf16.msra.mxu0 0
      %5406 = vmatpush.bf16.msra.mxu0 0
      %5407 = vmatpush.bf16.msra.mxu0 %v5294
      %5408 = vmatmul.bf16.gmra.mxu0 %v5398
      %v5409 = vpop.f32.mrf.mxu0
      %v5410 = vadd.f32 0.0, %v5409
      %v5411 = vpop.f32.mrf.mxu0
      %5412 = vdwg.mxu0
      %v5413 = vadd.f32 %v5392, %v5410
      %s5414 = scalar_lea.vmem %s14, 8
      %v5415 = vld [vmem:[%s5414] sm:$0x1]
      %v5417 = vsel %vm697, %v5415, 0
      %5419 = vmatpush.bf16.msra.mxu0 0
      %5420 = vmatpush.bf16.msra.mxu0 0
      %5421 = vmatpush.bf16.msra.mxu0 0
      %5422 = vmatpush.bf16.msra.mxu0 0
      %5423 = vmatpush.bf16.msra.mxu0 0
      %5424 = vmatpush.bf16.msra.mxu0 0
      %5425 = vmatpush.bf16.msra.mxu0 0
      %5426 = vmatpush.bf16.msra.mxu0 %v5272
      %5427 = vmatmul.bf16.gmra.mxu0 %v5417
      %v5428 = vpop.f32.mrf.mxu0
      %v5429 = vadd.f32 0.0, %v5428
      %v5430 = vpop.f32.mrf.mxu0
      %5431 = vdwg.mxu0
      %v5432 = vadd.f32 %v5413, %v5429
      %5434 = vset.pattern.permute.xlu0 0
      %5435 = vperm.xlu0 %5434, %v5253
      %v5436 = vpop.permute.xlu0 %5435
      %v5438 = vperm.slane %v5436, 0
      %v5440 = vsel %vm697, %v5263, 0
      %5442 = vmatpush.bf16.msra.mxu0 0
      %5443 = vmatpush.bf16.msra.mxu0 0
      %5444 = vmatpush.bf16.msra.mxu0 0
      %5445 = vmatpush.bf16.msra.mxu0 0
      %5446 = vmatpush.bf16.msra.mxu0 0
      %5447 = vmatpush.bf16.msra.mxu0 0
      %5448 = vmatpush.bf16.msra.mxu0 0
      %5449 = vmatpush.bf16.msra.mxu0 %v5272
      %5450 = vmatmul.bf16.gmra.mxu0 %v5440
      %v5451 = vpop.f32.mrf.mxu0
      %v5452 = vadd.f32 %v5438, %v5451
      %v5453 = vpop.f32.mrf.mxu0
      %5454 = vdwg.mxu0
      %vm5455 = vcmp.ge.f32.partialorder %v5452, 0.0
      %v5456 = vmul.f32 %v5452, 0.01
      %v5457 = vsel %vm5455, %v5452, %v5456
      %vm5458 = vcmask 393216
      %5459 = vst.msk [vmem:[%s521] sm:$0x1] %vm5458, %v5457
      %v5460 = vadd.f32 %v5309, %v5438
      %vm5461 = vcmp.ge.f32.partialorder %v5460, 0.0
      %v5462 = vmul.f32 %v5460, 0.01
      %v5463 = vsel %vm5461, %v5460, %v5462
      %s5464 = scalar_lea.vmem %s521, 1
      %5465 = vst.msk [vmem:[%s5464] sm:$0x1] %vm5458, %v5463
      %v5466 = vadd.f32 %v5351, %v5438
      %vm5467 = vcmp.ge.f32.partialorder %v5466, 0.0
      %v5468 = vmul.f32 %v5466, 0.01
      %v5469 = vsel %vm5467, %v5466, %v5468
      %s5470 = scalar_lea.vmem %s521, 4
      %5471 = vst.msk [vmem:[%s5470] sm:$0x1] %vm5458, %v5469
      %v5472 = vadd.f32 %v5432, %v5438
      %vm5473 = vcmp.ge.f32.partialorder %v5472, 0.0
      %v5474 = vmul.f32 %v5472, 0.01
      %v5475 = vsel %vm5473, %v5472, %v5474
      %s5476 = scalar_lea.vmem %s521, 5
      %5477 = vst.msk [vmem:[%s5476] sm:$0x1] %vm5458, %v5475
      %v5478 = vld [vmem:[%s5234] sm:$0xf]
      %v5479 = vld [vmem:[%s5234 + $0x4] sm:$0xf]
      %v5480 = vld [vmem:[#allocation5] sm:$0xf]
      %v5481 = vld [vmem:[#allocation5 + $0x4] sm:$0xf]
      %v5482 = vunpack.c.l.bf16 %v5480
      %v5483 = vunpack.c.l.bf16 %v5481
      %v5484 = vmul.f32 %v5482, %v4920
      %v5485 = vmul.f32 %v5483, %v4920
      %v5486 = vpack.c.bf16 %v5485, %v5484
      %v5487 = vld [vmem:[%s5248] sm:$0xf]
      %v5488 = vld [vmem:[%s5248 + $0x4] sm:$0xf]
      %v5489 = vld [vmem:[%s5241] sm:$0xf]
      %v5490 = vld [vmem:[%s5241 + $0x4] sm:$0xf]
      %v5491 = vunpack.c.l.bf16 %v5489
      %v5492 = vunpack.c.l.bf16 %v5490
      %v5493 = vmul.f32 %v5491, %v4920
      %v5494 = vmul.f32 %v5492, %v4920
      %v5495 = vpack.c.bf16 %v5494, %v5493
      %v5496 = vld [vmem:[%s5262] sm:$0x1]
      %v5497 = vld [vmem:[%s5264] sm:$0x1]
      %v5498 = vld [vmem:[%s5266] sm:$0x1]
      %v5501 = vunpack.c.l.b16 %v5478
      %v5502 = vunpack.c.l.b16 %v5479
      %v5503 = vpack.c.b16 %v5502, %v5501
      %v5506 = vsel %vm697, %v5498, 0
      %5508 = vmatpush.bf16.msra.mxu0 0
      %5509 = vmatpush.bf16.msra.mxu0 0
      %5510 = vmatpush.bf16.msra.mxu0 0
      %5511 = vmatpush.bf16.msra.mxu0 0
      %5512 = vmatpush.bf16.msra.mxu0 0
      %5513 = vmatpush.bf16.msra.mxu0 0
      %5514 = vmatpush.bf16.msra.mxu0 0
      %5515 = vmatpush.bf16.msra.mxu0 %v5503
      %5516 = vmatmul.bf16.gmra.mxu0 %v5506
      %v5517 = vpop.f32.mrf.mxu0
      %v5518 = vadd.f32 0.0, %v5517
      %v5519 = vpop.f32.mrf.mxu0
      %5520 = vdwg.mxu0
      %5522 = vrot.lane.b32.xlu0 %v5486, 127
      %v5523 = vpop.permute.xlu0 %5522
      %v5526 = vsel %vm697, %v5497, 0
      %5528 = vmatpush.bf16.msra.mxu0 0
      %5529 = vmatpush.bf16.msra.mxu0 0
      %5530 = vmatpush.bf16.msra.mxu0 0
      %5531 = vmatpush.bf16.msra.mxu0 0
      %5532 = vmatpush.bf16.msra.mxu0 0
      %5533 = vmatpush.bf16.msra.mxu0 0
      %5534 = vmatpush.bf16.msra.mxu0 0
      %5535 = vmatpush.bf16.msra.mxu0 %v5523
      %5536 = vmatmul.bf16.gmra.mxu0 %v5526
      %v5537 = vpop.f32.mrf.mxu0
      %v5538 = vadd.f32 %v5518, %v5537
      %v5539 = vpop.f32.mrf.mxu0
      %5540 = vdwg.mxu0
      %v5541 = vld [vmem:[%s5312] sm:$0x1]
      %v5542 = vld [vmem:[%s5314] sm:$0x1]
      %v5544 = vsel %vm697, %v5542, 0
      %5546 = vmatpush.bf16.msra.mxu0 0
      %5547 = vmatpush.bf16.msra.mxu0 0
      %5548 = vmatpush.bf16.msra.mxu0 0
      %5549 = vmatpush.bf16.msra.mxu0 0
      %5550 = vmatpush.bf16.msra.mxu0 0
      %5551 = vmatpush.bf16.msra.mxu0 0
      %5552 = vmatpush.bf16.msra.mxu0 0
      %5553 = vmatpush.bf16.msra.mxu0 %v5503
      %5554 = vmatmul.bf16.gmra.mxu0 %v5544
      %v5555 = vpop.f32.mrf.mxu0
      %v5556 = vadd.f32 0.0, %v5555
      %v5557 = vpop.f32.mrf.mxu0
      %5558 = vdwg.mxu0
      %v5561 = vunpack.c.l.b16 %v5487
      %v5562 = vunpack.c.l.b16 %v5488
      %v5563 = vpack.c.b16 %v5562, %v5561
      %v5566 = vsel %vm697, %v5541, 0
      %5568 = vmatpush.bf16.msra.mxu0 0
      %5569 = vmatpush.bf16.msra.mxu0 0
      %5570 = vmatpush.bf16.msra.mxu0 0
      %5571 = vmatpush.bf16.msra.mxu0 0
      %5572 = vmatpush.bf16.msra.mxu0 0
      %5573 = vmatpush.bf16.msra.mxu0 0
      %5574 = vmatpush.bf16.msra.mxu0 0
      %5575 = vmatpush.bf16.msra.mxu0 %v5563
      %5576 = vmatmul.bf16.gmra.mxu0 %v5566
      %v5577 = vpop.f32.mrf.mxu0
      %v5578 = vadd.f32 %v5556, %v5577
      %v5579 = vpop.f32.mrf.mxu0
      %5580 = vdwg.mxu0
      %v5581 = vld [vmem:[%s14] sm:$0x1]
      %v5582 = vld [vmem:[%s5355] sm:$0x1]
      %v5584 = vsel %vm697, %v5582, 0
      %5586 = vmatpush.bf16.msra.mxu0 0
      %5587 = vmatpush.bf16.msra.mxu0 0
      %5588 = vmatpush.bf16.msra.mxu0 0
      %5589 = vmatpush.bf16.msra.mxu0 0
      %5590 = vmatpush.bf16.msra.mxu0 0
      %5591 = vmatpush.bf16.msra.mxu0 0
      %5592 = vmatpush.bf16.msra.mxu0 0
      %5593 = vmatpush.bf16.msra.mxu0 %v5563
      %5594 = vmatmul.bf16.gmra.mxu0 %v5584
      %v5595 = vpop.f32.mrf.mxu0
      %v5596 = vadd.f32 0.0, %v5595
      %v5597 = vpop.f32.mrf.mxu0
      %5598 = vdwg.mxu0
      %5600 = vrot.lane.b32.xlu0 %v5495, 127
      %v5601 = vpop.permute.xlu0 %5600
      %v5604 = vsel %vm697, %v5581, 0
      %5606 = vmatpush.bf16.msra.mxu0 0
      %5607 = vmatpush.bf16.msra.mxu0 0
      %5608 = vmatpush.bf16.msra.mxu0 0
      %5609 = vmatpush.bf16.msra.mxu0 0
      %5610 = vmatpush.bf16.msra.mxu0 0
      %5611 = vmatpush.bf16.msra.mxu0 0
      %5612 = vmatpush.bf16.msra.mxu0 0
      %5613 = vmatpush.bf16.msra.mxu0 %v5601
      %5614 = vmatmul.bf16.gmra.mxu0 %v5604
      %v5615 = vpop.f32.mrf.mxu0
      %v5616 = vadd.f32 %v5596, %v5615
      %v5617 = vpop.f32.mrf.mxu0
      %5618 = vdwg.mxu0
      %v5619 = vld [vmem:[%s5395] sm:$0x1]
      %v5621 = vsel %vm697, %v5619, 0
      %5623 = vmatpush.bf16.msra.mxu0 0
      %5624 = vmatpush.bf16.msra.mxu0 0
      %5625 = vmatpush.bf16.msra.mxu0 0
      %5626 = vmatpush.bf16.msra.mxu0 0
      %5627 = vmatpush.bf16.msra.mxu0 0
      %5628 = vmatpush.bf16.msra.mxu0 0
      %5629 = vmatpush.bf16.msra.mxu0 0
      %5630 = vmatpush.bf16.msra.mxu0 %v5523
      %5631 = vmatmul.bf16.gmra.mxu0 %v5621
      %v5632 = vpop.f32.mrf.mxu0
      %v5633 = vadd.f32 0.0, %v5632
      %v5634 = vpop.f32.mrf.mxu0
      %5635 = vdwg.mxu0
      %v5636 = vadd.f32 %v5616, %v5633
      %v5637 = vld [vmem:[%s5414] sm:$0x1]
      %v5639 = vsel %vm697, %v5637, 0
      %5641 = vmatpush.bf16.msra.mxu0 0
      %5642 = vmatpush.bf16.msra.mxu0 0
      %5643 = vmatpush.bf16.msra.mxu0 0
      %5644 = vmatpush.bf16.msra.mxu0 0
      %5645 = vmatpush.bf16.msra.mxu0 0
      %5646 = vmatpush.bf16.msra.mxu0 0
      %5647 = vmatpush.bf16.msra.mxu0 0
      %5648 = vmatpush.bf16.msra.mxu0 %v5503
      %5649 = vmatmul.bf16.gmra.mxu0 %v5639
      %v5650 = vpop.f32.mrf.mxu0
      %v5651 = vadd.f32 0.0, %v5650
      %v5652 = vpop.f32.mrf.mxu0
      %5653 = vdwg.mxu0
      %v5654 = vadd.f32 %v5636, %v5651
      %v5656 = vsel %vm697, %v5496, 0
      %5658 = vmatpush.bf16.msra.mxu0 0
      %5659 = vmatpush.bf16.msra.mxu0 0
      %5660 = vmatpush.bf16.msra.mxu0 0
      %5661 = vmatpush.bf16.msra.mxu0 0
      %5662 = vmatpush.bf16.msra.mxu0 0
      %5663 = vmatpush.bf16.msra.mxu0 0
      %5664 = vmatpush.bf16.msra.mxu0 0
      %5665 = vmatpush.bf16.msra.mxu0 %v5503
      %5666 = vmatmul.bf16.gmra.mxu0 %v5656
      %v5667 = vpop.f32.mrf.mxu0
      %v5668 = vadd.f32 %v5438, %v5667
      %v5669 = vpop.f32.mrf.mxu0
      %5670 = vdwg.mxu0
      %vm5671 = vcmp.ge.f32.partialorder %v5668, 0.0
      %v5672 = vmul.f32 %v5668, 0.01
      %v5673 = vsel %vm5671, %v5668, %v5672
      %s5674 = scalar_lea.vmem %s521, 2
      %5675 = vst.msk [vmem:[%s5674] sm:$0x1] %vm5458, %v5673
      %v5676 = vadd.f32 %v5538, %v5438
      %vm5677 = vcmp.ge.f32.partialorder %v5676, 0.0
      %v5678 = vmul.f32 %v5676, 0.01
      %v5679 = vsel %vm5677, %v5676, %v5678
      %s5680 = scalar_lea.vmem %s521, 3
      %5681 = vst.msk [vmem:[%s5680] sm:$0x1] %vm5458, %v5679
      %v5682 = vadd.f32 %v5578, %v5438
      %vm5683 = vcmp.ge.f32.partialorder %v5682, 0.0
      %v5684 = vmul.f32 %v5682, 0.01
      %v5685 = vsel %vm5683, %v5682, %v5684
      %s5686 = scalar_lea.vmem %s521, 6
      %5687 = vst.msk [vmem:[%s5686] sm:$0x1] %vm5458, %v5685
      %v5688 = vadd.f32 %v5654, %v5438
      %vm5689 = vcmp.ge.f32.partialorder %v5688, 0.0
      %v5690 = vmul.f32 %v5688, 0.01
      %v5691 = vsel %vm5689, %v5688, %v5690
      %s5692 = scalar_lea.vmem %s521, 7
      %5693 = vst.msk [vmem:[%s5692] sm:$0x1] %vm5458, %v5691
      %v5694 = vld [vmem:[%s5241] sm:$0xf]
      %v5695 = vld [vmem:[%s5241 + $0x4] sm:$0xf]
      %v5696 = vld [vmem:[%s5248] sm:$0xf]
      %v5697 = vld [vmem:[%s5248 + $0x4] sm:$0xf]
      %v5698 = vld [vmem:[#allocation5] sm:$0xf]
      %v5699 = vld [vmem:[#allocation5 + $0x4] sm:$0xf]
      %v5700 = vld [vmem:[%s5234] sm:$0xf]
      %v5701 = vld [vmem:[%s5234 + $0x4] sm:$0xf]
      %v5702 = vld [vmem:[%s5262] sm:$0x1]
      %v5703 = vld [vmem:[%s5264] sm:$0x1]
      %v5704 = vld [vmem:[%s5266] sm:$0x1]
      %v5707 = vunpack.c.l.b16 %v5694
      %v5708 = vunpack.c.l.b16 %v5695
      %v5709 = vpack.c.b16 %v5708, %v5707
      %v5712 = vsel %vm697, %v5704, 0
      %5714 = vmatpush.bf16.msra.mxu0 0
      %5715 = vmatpush.bf16.msra.mxu0 0
      %5716 = vmatpush.bf16.msra.mxu0 0
      %5717 = vmatpush.bf16.msra.mxu0 0
      %5718 = vmatpush.bf16.msra.mxu0 0
      %5719 = vmatpush.bf16.msra.mxu0 0
      %5720 = vmatpush.bf16.msra.mxu0 0
      %5721 = vmatpush.bf16.msra.mxu0 %v5709
      %5722 = vmatmul.bf16.gmra.mxu0 %v5712
      %v5723 = vpop.f32.mrf.mxu0
      %v5724 = vadd.f32 0.0, %v5723
      %v5725 = vpop.f32.mrf.mxu0
      %5726 = vdwg.mxu0
      %v5729 = vunpack.c.l.b16 %v5696
      %v5730 = vunpack.c.l.b16 %v5697
      %v5731 = vpack.c.b16 %v5730, %v5729
      %v5734 = vsel %vm697, %v5703, 0
      %5736 = vmatpush.bf16.msra.mxu0 0
      %5737 = vmatpush.bf16.msra.mxu0 0
      %5738 = vmatpush.bf16.msra.mxu0 0
      %5739 = vmatpush.bf16.msra.mxu0 0
      %5740 = vmatpush.bf16.msra.mxu0 0
      %5741 = vmatpush.bf16.msra.mxu0 0
      %5742 = vmatpush.bf16.msra.mxu0 0
      %5743 = vmatpush.bf16.msra.mxu0 %v5731
      %5744 = vmatmul.bf16.gmra.mxu0 %v5734
      %v5745 = vpop.f32.mrf.mxu0
      %v5746 = vadd.f32 %v5724, %v5745
      %v5747 = vpop.f32.mrf.mxu0
      %5748 = vdwg.mxu0
      %v5749 = vld [vmem:[%s5312] sm:$0x1]
      %v5750 = vld [vmem:[%s5314] sm:$0x1]
      %v5752 = vsel %vm697, %v5750, 0
      %5754 = vmatpush.bf16.msra.mxu0 0
      %5755 = vmatpush.bf16.msra.mxu0 0
      %5756 = vmatpush.bf16.msra.mxu0 0
      %5757 = vmatpush.bf16.msra.mxu0 0
      %5758 = vmatpush.bf16.msra.mxu0 0
      %5759 = vmatpush.bf16.msra.mxu0 0
      %5760 = vmatpush.bf16.msra.mxu0 0
      %5761 = vmatpush.bf16.msra.mxu0 %v5709
      %5762 = vmatmul.bf16.gmra.mxu0 %v5752
      %v5763 = vpop.f32.mrf.mxu0
      %v5764 = vadd.f32 0.0, %v5763
      %v5765 = vpop.f32.mrf.mxu0
      %5766 = vdwg.mxu0
      %v5769 = vunpack.c.l.b16 %v5698
      %v5770 = vunpack.c.l.b16 %v5699
      %v5771 = vpack.c.b16 %v5770, %v5769
      %5772 = vrot.lane.b32.xlu0 %v5771, 121
      %v5773 = vpop.permute.xlu0 %5772
      %v5776 = vsel %vm697, %v5749, 0
      %5778 = vmatpush.bf16.msra.mxu0 0
      %5779 = vmatpush.bf16.msra.mxu0 0
      %5780 = vmatpush.bf16.msra.mxu0 0
      %5781 = vmatpush.bf16.msra.mxu0 0
      %5782 = vmatpush.bf16.msra.mxu0 0
      %5783 = vmatpush.bf16.msra.mxu0 0
      %5784 = vmatpush.bf16.msra.mxu0 0
      %5785 = vmatpush.bf16.msra.mxu0 %v5773
      %5786 = vmatmul.bf16.gmra.mxu0 %v5776
      %v5787 = vpop.f32.mrf.mxu0
      %v5788 = vadd.f32 %v5764, %v5787
      %v5789 = vpop.f32.mrf.mxu0
      %5790 = vdwg.mxu0
      %v5791 = vld [vmem:[%s14] sm:$0x1]
      %v5792 = vld [vmem:[%s5355] sm:$0x1]
      %v5794 = vsel %vm697, %v5792, 0
      %5796 = vmatpush.bf16.msra.mxu0 0
      %5797 = vmatpush.bf16.msra.mxu0 0
      %5798 = vmatpush.bf16.msra.mxu0 0
      %5799 = vmatpush.bf16.msra.mxu0 0
      %5800 = vmatpush.bf16.msra.mxu0 0
      %5801 = vmatpush.bf16.msra.mxu0 0
      %5802 = vmatpush.bf16.msra.mxu0 0
      %5803 = vmatpush.bf16.msra.mxu0 %v5773
      %5804 = vmatmul.bf16.gmra.mxu0 %v5794
      %v5805 = vpop.f32.mrf.mxu0
      %v5806 = vadd.f32 0.0, %v5805
      %v5807 = vpop.f32.mrf.mxu0
      %5808 = vdwg.mxu0
      %v5811 = vunpack.c.l.b16 %v5700
      %v5812 = vunpack.c.l.b16 %v5701
      %v5813 = vpack.c.b16 %v5812, %v5811
      %5814 = vrot.lane.b32.xlu0 %v5813, 121
      %v5815 = vpop.permute.xlu0 %5814
      %v5818 = vsel %vm697, %v5791, 0
      %5820 = vmatpush.bf16.msra.mxu0 0
      %5821 = vmatpush.bf16.msra.mxu0 0
      %5822 = vmatpush.bf16.msra.mxu0 0
      %5823 = vmatpush.bf16.msra.mxu0 0
      %5824 = vmatpush.bf16.msra.mxu0 0
      %5825 = vmatpush.bf16.msra.mxu0 0
      %5826 = vmatpush.bf16.msra.mxu0 0
      %5827 = vmatpush.bf16.msra.mxu0 %v5815
      %5828 = vmatmul.bf16.gmra.mxu0 %v5818
      %v5829 = vpop.f32.mrf.mxu0
      %v5830 = vadd.f32 %v5806, %v5829
      %v5831 = vpop.f32.mrf.mxu0
      %5832 = vdwg.mxu0
      %v5833 = vld [vmem:[%s5395] sm:$0x1]
      %v5835 = vsel %vm697, %v5833, 0
      %5837 = vmatpush.bf16.msra.mxu0 0
      %5838 = vmatpush.bf16.msra.mxu0 0
      %5839 = vmatpush.bf16.msra.mxu0 0
      %5840 = vmatpush.bf16.msra.mxu0 0
      %5841 = vmatpush.bf16.msra.mxu0 0
      %5842 = vmatpush.bf16.msra.mxu0 0
      %5843 = vmatpush.bf16.msra.mxu0 0
      %5844 = vmatpush.bf16.msra.mxu0 %v5731
      %5845 = vmatmul.bf16.gmra.mxu0 %v5835
      %v5846 = vpop.f32.mrf.mxu0
      %v5847 = vadd.f32 0.0, %v5846
      %v5848 = vpop.f32.mrf.mxu0
      %5849 = vdwg.mxu0
      %v5850 = vadd.f32 %v5830, %v5847
      %v5851 = vld [vmem:[%s5414] sm:$0x1]
      %v5853 = vsel %vm697, %v5851, 0
      %5855 = vmatpush.bf16.msra.mxu0 0
      %5856 = vmatpush.bf16.msra.mxu0 0
      %5857 = vmatpush.bf16.msra.mxu0 0
      %5858 = vmatpush.bf16.msra.mxu0 0
      %5859 = vmatpush.bf16.msra.mxu0 0
      %5860 = vmatpush.bf16.msra.mxu0 0
      %5861 = vmatpush.bf16.msra.mxu0 0
      %5862 = vmatpush.bf16.msra.mxu0 %v5709
      %5863 = vmatmul.bf16.gmra.mxu0 %v5853
      %v5864 = vpop.f32.mrf.mxu0
      %v5865 = vadd.f32 0.0, %v5864
      %v5866 = vpop.f32.mrf.mxu0
      %5867 = vdwg.mxu0
      %v5868 = vadd.f32 %v5850, %v5865
      %v5870 = vsel %vm697, %v5702, 0
      %5872 = vmatpush.bf16.msra.mxu0 0
      %5873 = vmatpush.bf16.msra.mxu0 0
      %5874 = vmatpush.bf16.msra.mxu0 0
      %5875 = vmatpush.bf16.msra.mxu0 0
      %5876 = vmatpush.bf16.msra.mxu0 0
      %5877 = vmatpush.bf16.msra.mxu0 0
      %5878 = vmatpush.bf16.msra.mxu0 0
      %5879 = vmatpush.bf16.msra.mxu0 %v5709
      %5880 = vmatmul.bf16.gmra.mxu0 %v5870
      %v5881 = vpop.f32.mrf.mxu0
      %v5882 = vadd.f32 %v5438, %v5881
      %v5883 = vpop.f32.mrf.mxu0
      %5884 = vdwg.mxu0
      %vm5885 = vcmp.ge.f32.partialorder %v5882, 0.0
      %v5886 = vmul.f32 %v5882, 0.01
      %v5887 = vsel %vm5885, %v5882, %v5886
      %s5888 = scalar_lea.vmem %s521, 8
      %5889 = vst.msk [vmem:[%s5888] sm:$0x1] %vm5458, %v5887
      %v5890 = vadd.f32 %v5746, %v5438
      %vm5891 = vcmp.ge.f32.partialorder %v5890, 0.0
      %v5892 = vmul.f32 %v5890, 0.01
      %v5893 = vsel %vm5891, %v5890, %v5892
      %s5894 = scalar_lea.vmem %s521, 9
      %5895 = vst.msk [vmem:[%s5894] sm:$0x1] %vm5458, %v5893
      %v5896 = vadd.f32 %v5788, %v5438
      %vm5897 = vcmp.ge.f32.partialorder %v5896, 0.0
      %v5898 = vmul.f32 %v5896, 0.01
      %v5899 = vsel %vm5897, %v5896, %v5898
      %s5900 = scalar_lea.vmem %s521, 12
      %5901 = vst.msk [vmem:[%s5900] sm:$0x1] %vm5458, %v5899
      %v5902 = vadd.f32 %v5868, %v5438
      %vm5903 = vcmp.ge.f32.partialorder %v5902, 0.0
      %v5904 = vmul.f32 %v5902, 0.01
      %v5905 = vsel %vm5903, %v5902, %v5904
      %s5906 = scalar_lea.vmem %s521, 13
      %5907 = vst.msk [vmem:[%s5906] sm:$0x1] %vm5458, %v5905
      %v5908 = vld [vmem:[%s5248] sm:$0xf]
      %v5909 = vld [vmem:[%s5248 + $0x4] sm:$0xf]
      %v5910 = vld [vmem:[%s5241] sm:$0xf]
      %v5911 = vld [vmem:[%s5241 + $0x4] sm:$0xf]
      %v5912 = vunpack.c.l.bf16 %v5910
      %v5913 = vunpack.c.l.bf16 %v5911
      %v5914 = vmul.f32 %v5912, %v4920
      %v5915 = vmul.f32 %v5913, %v4920
      %v5916 = vpack.c.bf16 %v5915, %v5914
      %v5917 = vld [vmem:[%s5234] sm:$0xf]
      %v5918 = vld [vmem:[%s5234 + $0x4] sm:$0xf]
      %v5919 = vld [vmem:[#allocation5] sm:$0xf]
      %v5920 = vld [vmem:[#allocation5 + $0x4] sm:$0xf]
      %v5921 = vunpack.c.l.bf16 %v5919
      %v5922 = vunpack.c.l.bf16 %v5920
      %v5923 = vmul.f32 %v5921, %v4929
      %v5924 = vmul.f32 %v5922, %v4929
      %v5925 = vpack.c.bf16 %v5924, %v5923
      %v5926 = vld [vmem:[%s5262] sm:$0x1]
      %v5927 = vld [vmem:[%s5264] sm:$0x1]
      %v5928 = vld [vmem:[%s5266] sm:$0x1]
      %v5931 = vunpack.c.l.b16 %v5908
      %v5932 = vunpack.c.l.b16 %v5909
      %v5933 = vpack.c.b16 %v5932, %v5931
      %v5936 = vsel %vm697, %v5928, 0
      %5938 = vmatpush.bf16.msra.mxu0 0
      %5939 = vmatpush.bf16.msra.mxu0 0
      %5940 = vmatpush.bf16.msra.mxu0 0
      %5941 = vmatpush.bf16.msra.mxu0 0
      %5942 = vmatpush.bf16.msra.mxu0 0
      %5943 = vmatpush.bf16.msra.mxu0 0
      %5944 = vmatpush.bf16.msra.mxu0 0
      %5945 = vmatpush.bf16.msra.mxu0 %v5933
      %5946 = vmatmul.bf16.gmra.mxu0 %v5936
      %v5947 = vpop.f32.mrf.mxu0
      %v5948 = vadd.f32 0.0, %v5947
      %v5949 = vpop.f32.mrf.mxu0
      %5950 = vdwg.mxu0
      %5952 = vrot.lane.b32.xlu0 %v5916, 127
      %v5953 = vpop.permute.xlu0 %5952
      %v5956 = vsel %vm697, %v5927, 0
      %5958 = vmatpush.bf16.msra.mxu0 0
      %5959 = vmatpush.bf16.msra.mxu0 0
      %5960 = vmatpush.bf16.msra.mxu0 0
      %5961 = vmatpush.bf16.msra.mxu0 0
      %5962 = vmatpush.bf16.msra.mxu0 0
      %5963 = vmatpush.bf16.msra.mxu0 0
      %5964 = vmatpush.bf16.msra.mxu0 0
      %5965 = vmatpush.bf16.msra.mxu0 %v5953
      %5966 = vmatmul.bf16.gmra.mxu0 %v5956
      %v5967 = vpop.f32.mrf.mxu0
      %v5968 = vadd.f32 %v5948, %v5967
      %v5969 = vpop.f32.mrf.mxu0
      %5970 = vdwg.mxu0
      %v5971 = vld [vmem:[%s5312] sm:$0x1]
      %v5972 = vld [vmem:[%s5314] sm:$0x1]
      %v5974 = vsel %vm697, %v5972, 0
      %5976 = vmatpush.bf16.msra.mxu0 0
      %5977 = vmatpush.bf16.msra.mxu0 0
      %5978 = vmatpush.bf16.msra.mxu0 0
      %5979 = vmatpush.bf16.msra.mxu0 0
      %5980 = vmatpush.bf16.msra.mxu0 0
      %5981 = vmatpush.bf16.msra.mxu0 0
      %5982 = vmatpush.bf16.msra.mxu0 0
      %5983 = vmatpush.bf16.msra.mxu0 %v5933
      %5984 = vmatmul.bf16.gmra.mxu0 %v5974
      %v5985 = vpop.f32.mrf.mxu0
      %v5986 = vadd.f32 0.0, %v5985
      %v5987 = vpop.f32.mrf.mxu0
      %5988 = vdwg.mxu0
      %v5991 = vunpack.c.l.b16 %v5917
      %v5992 = vunpack.c.l.b16 %v5918
      %v5993 = vpack.c.b16 %v5992, %v5991
      %5994 = vrot.lane.b32.xlu0 %v5993, 121
      %v5995 = vpop.permute.xlu0 %5994
      %v5998 = vsel %vm697, %v5971, 0
      %6000 = vmatpush.bf16.msra.mxu0 0
      %6001 = vmatpush.bf16.msra.mxu0 0
      %6002 = vmatpush.bf16.msra.mxu0 0
      %6003 = vmatpush.bf16.msra.mxu0 0
      %6004 = vmatpush.bf16.msra.mxu0 0
      %6005 = vmatpush.bf16.msra.mxu0 0
      %6006 = vmatpush.bf16.msra.mxu0 0
      %6007 = vmatpush.bf16.msra.mxu0 %v5995
      %6008 = vmatmul.bf16.gmra.mxu0 %v5998
      %v6009 = vpop.f32.mrf.mxu0
      %v6010 = vadd.f32 %v5986, %v6009
      %v6011 = vpop.f32.mrf.mxu0
      %6012 = vdwg.mxu0
      %v6013 = vld [vmem:[%s14] sm:$0x1]
      %v6014 = vld [vmem:[%s5355] sm:$0x1]
      %v6016 = vsel %vm697, %v6014, 0
      %6018 = vmatpush.bf16.msra.mxu0 0
      %6019 = vmatpush.bf16.msra.mxu0 0
      %6020 = vmatpush.bf16.msra.mxu0 0
      %6021 = vmatpush.bf16.msra.mxu0 0
      %6022 = vmatpush.bf16.msra.mxu0 0
      %6023 = vmatpush.bf16.msra.mxu0 0
      %6024 = vmatpush.bf16.msra.mxu0 0
      %6025 = vmatpush.bf16.msra.mxu0 %v5995
      %6026 = vmatmul.bf16.gmra.mxu0 %v6016
      %v6027 = vpop.f32.mrf.mxu0
      %v6028 = vadd.f32 0.0, %v6027
      %v6029 = vpop.f32.mrf.mxu0
      %6030 = vdwg.mxu0
      %6032 = vrot.lane.b32.xlu0 %v5925, 120
      %v6033 = vpop.permute.xlu0 %6032
      %v6036 = vsel %vm697, %v6013, 0
      %6038 = vmatpush.bf16.msra.mxu0 0
      %6039 = vmatpush.bf16.msra.mxu0 0
      %6040 = vmatpush.bf16.msra.mxu0 0
      %6041 = vmatpush.bf16.msra.mxu0 0
      %6042 = vmatpush.bf16.msra.mxu0 0
      %6043 = vmatpush.bf16.msra.mxu0 0
      %6044 = vmatpush.bf16.msra.mxu0 0
      %6045 = vmatpush.bf16.msra.mxu0 %v6033
      %6046 = vmatmul.bf16.gmra.mxu0 %v6036
      %v6047 = vpop.f32.mrf.mxu0
      %v6048 = vadd.f32 %v6028, %v6047
      %v6049 = vpop.f32.mrf.mxu0
      %6050 = vdwg.mxu0
      %v6051 = vld [vmem:[%s5395] sm:$0x1]
      %v6053 = vsel %vm697, %v6051, 0
      %6055 = vmatpush.bf16.msra.mxu0 0
      %6056 = vmatpush.bf16.msra.mxu0 0
      %6057 = vmatpush.bf16.msra.mxu0 0
      %6058 = vmatpush.bf16.msra.mxu0 0
      %6059 = vmatpush.bf16.msra.mxu0 0
      %6060 = vmatpush.bf16.msra.mxu0 0
      %6061 = vmatpush.bf16.msra.mxu0 0
      %6062 = vmatpush.bf16.msra.mxu0 %v5953
      %6063 = vmatmul.bf16.gmra.mxu0 %v6053
      %v6064 = vpop.f32.mrf.mxu0
      %v6065 = vadd.f32 0.0, %v6064
      %v6066 = vpop.f32.mrf.mxu0
      %6067 = vdwg.mxu0
      %v6068 = vadd.f32 %v6048, %v6065
      %v6069 = vld [vmem:[%s5414] sm:$0x1]
      %v6071 = vsel %vm697, %v6069, 0
      %6073 = vmatpush.bf16.msra.mxu0 0
      %6074 = vmatpush.bf16.msra.mxu0 0
      %6075 = vmatpush.bf16.msra.mxu0 0
      %6076 = vmatpush.bf16.msra.mxu0 0
      %6077 = vmatpush.bf16.msra.mxu0 0
      %6078 = vmatpush.bf16.msra.mxu0 0
      %6079 = vmatpush.bf16.msra.mxu0 0
      %6080 = vmatpush.bf16.msra.mxu0 %v5933
      %6081 = vmatmul.bf16.gmra.mxu0 %v6071
      %v6082 = vpop.f32.mrf.mxu0
      %v6083 = vadd.f32 0.0, %v6082
      %v6084 = vpop.f32.mrf.mxu0
      %6085 = vdwg.mxu0
      %v6086 = vadd.f32 %v6068, %v6083
      %v6088 = vsel %vm697, %v5926, 0
      %6090 = vmatpush.bf16.msra.mxu0 0
      %6091 = vmatpush.bf16.msra.mxu0 0
      %6092 = vmatpush.bf16.msra.mxu0 0
      %6093 = vmatpush.bf16.msra.mxu0 0
      %6094 = vmatpush.bf16.msra.mxu0 0
      %6095 = vmatpush.bf16.msra.mxu0 0
      %6096 = vmatpush.bf16.msra.mxu0 0
      %6097 = vmatpush.bf16.msra.mxu0 %v5933
      %6098 = vmatmul.bf16.gmra.mxu0 %v6088
      %v6099 = vpop.f32.mrf.mxu0
      %v6100 = vadd.f32 %v5438, %v6099
      %v6101 = vpop.f32.mrf.mxu0
      %6102 = vdwg.mxu0
      %vm6103 = vcmp.ge.f32.partialorder %v6100, 0.0
      %v6104 = vmul.f32 %v6100, 0.01
      %v6105 = vsel %vm6103, %v6100, %v6104
      %s6106 = scalar_lea.vmem %s521, 10
      %6107 = vst.msk [vmem:[%s6106] sm:$0x1] %vm5458, %v6105
      %v6108 = vadd.f32 %v5968, %v5438
      %vm6109 = vcmp.ge.f32.partialorder %v6108, 0.0
      %v6110 = vmul.f32 %v6108, 0.01
      %v6111 = vsel %vm6109, %v6108, %v6110
      %s6112 = scalar_lea.vmem %s521, 11
      %6113 = vst.msk [vmem:[%s6112] sm:$0x1] %vm5458, %v6111
      %v6114 = vadd.f32 %v6010, %v5438
      %vm6115 = vcmp.ge.f32.partialorder %v6114, 0.0
      %v6116 = vmul.f32 %v6114, 0.01
      %v6117 = vsel %vm6115, %v6114, %v6116
      %s6118 = scalar_lea.vmem %s521, 14
      %6119 = vst.msk [vmem:[%s6118] sm:$0x1] %vm5458, %v6117
      %v6120 = vadd.f32 %v6086, %v5438
      %vm6121 = vcmp.ge.f32.partialorder %v6120, 0.0
      %v6122 = vmul.f32 %v6120, 0.01
      %v6123 = vsel %vm6121, %v6120, %v6122
      %s6124 = scalar_lea.vmem %s521, 15
      %6125 = vst.msk [vmem:[%s6124] sm:$0x1] %vm5458, %v6123
      %p6126 = scmp.lt.s32.totalorder %s29, 1
      %s6127 = scalar_select %p6126, %s29, 1
      %s6128 = smul.addr %s6127, 16
      %s6129 = scalar_lea.vmem %s16, %s6128
      // Predicated region
      $region85: #{context_autoencoder.1} parent=83 // pred_check
        %p6130 = pneg %p388
      $region86: #{context_autoencoder.1} parent=83 // pred_check_branch
        %6132 = sbr.rel (%p6130) target = $region88
      $region87: #{context_autoencoder.1} parent=83 // pred_region
        _
      $region88: #{context_autoencoder.1} parent=83 // pred_fallthru
        _
    $region84: #{context_autoencoder.1} parent=5 // pred_fallthru
      _
    %p6133 = scmp.le.s32.totalorder 2, %s24
    // Predicated region
    $region89: #{context_autoencoder.1} parent=5 // pred_check
      %p6134 = pneg %p6133
    $region90: #{context_autoencoder.1} parent=5 // pred_check_branch
      %6136 = sbr.rel (%p6134) target = $region92
    $region91: #{context_autoencoder.1} parent=5 // pred_region
      %s6137 = ssub.s32 %s24, 2
      // Predicated region
      $region93: #{context_autoencoder.1} parent=91 // pred_check
        %p6138 = pneg %p394
      $region94: #{context_autoencoder.1} parent=91 // pred_check_branch
        %6140 = sbr.rel (%p6138) target = $region96
      $region95: #{context_autoencoder.1} parent=91 // pred_region
        %p6141 = scmp.lt.s32.totalorder %s30, 1
        %s6142 = scalar_select %p6141, %s30, 1
        %s6143 = smul.addr %s6142, 16
        %s6144 = scalar_lea.vmem %s16, %s6143
      $region96: #{context_autoencoder.1} parent=91 // pred_fallthru
        _
    $region92: #{context_autoencoder.1} parent=5 // pred_fallthru
      _
  $region6: #{context_autoencoder.1} parent=0 // loop_footer
    %s28 = sadd.s32 1, %s24
  $region7: #{context_autoencoder.1} parent=0 // loop_footer_branch
    %23 = sbr.rel target = $region3
  $region8: #{context_autoencoder.1} parent=0 // loop_exit
    _

</llo_original>
